<compile_context>
chip_gen: v5e
topology: v5e:2x2
jax: 0.10.0
libtpu: 0.0.40
codegen_flags: <defaults>
</compile_context>

<pallas_src>
import functools

import jax
import jax.numpy as jnp
from jax import lax
from jax.experimental import pallas as pl
from jax.experimental.pallas import tpu as pltpu

EXPANSION = 4
BN_EPS = 1e-5
LANE = 128


def _round_up(v, m):
    return ((v + m - 1) // m) * m


# ----------------------------------------------------------------------------
# Fused BottleNeck kernel, stride == 1 (one batch image per grid step).
#
# Layouts (all "full-width"):
#   x_ref   : (1, h*w_row, cin_p)  image col j sits at column j+1 of each row
#   y1p_ref : (r_alloc, cmid_p)    bf16; rows [t_pad*w_row, t_pad*w_row+h*w_row)
#                                  hold y1 in the same full-width layout,
#                                  everything else is zero (conv padding)
#   o_ref   : (1, h*w_row, cout_p) same layout as x (cropped by the wrapper)
# 3x3 tap (dy, dx) of output flat index m reads y1p row
#   m + (t_pad - 1 + dy)*w_row + (dx - 1)   -- a contiguous window per tap.
# ----------------------------------------------------------------------------
def _bottleneck_s1_kernel(x_ref, mask_ref, w1_ref, b1_ref, w2_ref, b2_ref,
                          w3_ref, b3_ref, *rest, h, w_row, t_pad, m_tile,
                          has_proj):
    if has_proj:
        ws_ref, bs_ref, o_ref, y1p_ref = rest
    else:
        o_ref, y1p_ref = rest

    cmid_p = y1p_ref.shape[1]
    m_total = h * w_row
    base = t_pad * w_row                     # first interior row of y1p
    r_alloc = y1p_ref.shape[0]

    # Zero only the halo rows (top / bottom).  The interior is fully
    # overwritten below and the pad columns are zeroed via the mask, so the
    # old full-buffer clear (and its store-slot cost) is gone.
    y1p_ref[0:base, :] = jnp.zeros((base, cmid_p), y1p_ref.dtype)
    y1p_ref[base + m_total:r_alloc, :] = jnp.zeros(
        (r_alloc - base - m_total, cmid_p), y1p_ref.dtype)

    chunks = [(m0, min(m_tile, m_total - m0)) for m0 in range(0, m_total, m_tile)]

    # ---- conv1: 1x1 (BN folded) + bias + ReLU, pad columns masked, one
    #      aligned dense bf16 store per chunk into the full-width slab.
    for m0, ml in chunks:
        y1 = jnp.dot(x_ref[0, m0:m0 + ml, :], w1_ref[...],
                     preferred_element_type=jnp.float32)
        y1 = jnp.maximum(y1 + b1_ref[...], 0.0) * mask_ref[m0:m0 + ml, :]
        y1p_ref[base + m0:base + m0 + ml, :] = y1.astype(jnp.bfloat16)

    # ---- conv2 (3x3, pad=1) as 9 shifted full-width windows with a local f32
    #      accumulator, then conv3 (1x1) + shortcut + residual ReLU, per chunk.
    for m0, ml in chunks:
        acc = None
        for t in range(9):
            dy, dx = divmod(t, 3)
            off = m0 + (t_pad - 1 + dy) * w_row + (dx - 1)
            d = jnp.dot(y1p_ref[off:off + ml, :], w2_ref[t],
                        preferred_element_type=jnp.float32)
            acc = d if acc is None else acc + d
        y2 = jnp.maximum(acc + b2_ref[...], 0.0).astype(jnp.bfloat16)

        z = jnp.dot(y2, w3_ref[...], preferred_element_type=jnp.float32) + b3_ref[...]

        xs = x_ref[0, m0:m0 + ml, :]
        if has_proj:
            sc = jnp.dot(xs, ws_ref[...],
                         preferred_element_type=jnp.float32) + bs_ref[...]
        else:
            sc = xs.astype(jnp.float32)

        o_ref[0, m0:m0 + ml, :] = jnp.maximum(z + sc, 0.0).astype(o_ref.dtype)


# ----------------------------------------------------------------------------
# BottleNeck forward (public wrapper: PyTorch-style NCHW in / NCHW out)
# ----------------------------------------------------------------------------
def bottleneck_forward(x_nchw, params, stride):
    if stride != 1:
        # TODO(synk): in-kernel stride-2 path (even/odd deinterleave); fall
        # back to the XLA path so module semantics hold for any stride.
        return reference_forward(x_nchw, params, stride)

    x = jnp.transpose(x_nchw, (0, 2, 3, 1))            # NHWC, channels on lanes
    n, h, w, cin = x.shape
    cmid = params["w1"].shape[1]
    cout = params["w3"].shape[1]
    has_proj = params["ws"] is not None
    assert has_proj or cin == cout, "identity shortcut requires cin == cout"

    cin_p, cmid_p, cout_p = (_round_up(c, LANE) for c in (cin, cmid, cout))

    # Full-width layout: each image row stored as w_row pixels
    # (1 left pad + w image + right pads up to a multiple of 8).
    w_row = _round_up(w + 2, 8)
    t_pad = 2                                           # top halo rows in y1p
    m_total = h * w_row
    r_alloc = (h + 2 * t_pad) * w_row                   # covers max tap read
    m_tile = min(128, m_total)                          # conv row sub-tile

    def padw(a, rows, cols):
        return jnp.pad(a, ((0, rows - a.shape[0]),
                           (0, cols - a.shape[1]))).astype(jnp.bfloat16)

    def padb(b, cols):
        return jnp.pad(b, (0, cols - b.shape[0])).reshape(1, cols).astype(jnp.float32)

    # BN scale already folded into the weights (init_params); here we only
    # zero-pad channels to lane width and cast weights to bf16 for the MXU.
    w1k = padw(params["w1"], cin_p, cmid_p)
    b1k = padb(params["b1"], cmid_p)
    w2 = params["w2"].reshape(9, cmid, cmid)
    w2k = jnp.pad(w2, ((0, 0), (0, cmid_p - cmid),
                       (0, cmid_p - cmid))).astype(jnp.bfloat16)
    b2k = padb(params["b2"], cmid_p)
    w3k = padw(params["w3"], cmid_p, cout_p)
    b3k = padb(params["b3"], cout_p)

    # Input as a flat full-width bf16 slab (image col j at column j+1).
    xk = jnp.pad(x, ((0, 0), (0, 0), (1, w_row - w - 1), (0, cin_p - cin)))
    xk = xk.astype(jnp.bfloat16).reshape(n, m_total, cin_p)

    # Column-validity mask: zeroes conv1's relu(bias) leakage in pad columns
    # (those columns are the 3x3 conv's zero padding).
    col = jnp.arange(w_row)
    mask = jnp.tile(((col >= 1) & (col <= w)).astype(jnp.float32), h)
    mask = mask.reshape(m_total, 1)

    args = [xk, mask, w1k, b1k, w2k, b2k, w3k, b3k]
    in_specs = [
        pl.BlockSpec((1, m_total, cin_p), lambda i: (i, 0, 0)),
        pl.BlockSpec((m_total, 1), lambda i: (0, 0)),
        pl.BlockSpec((cin_p, cmid_p), lambda i: (0, 0)),
        pl.BlockSpec((1, cmid_p), lambda i: (0, 0)),
        pl.BlockSpec((9, cmid_p, cmid_p), lambda i: (0, 0, 0)),
        pl.BlockSpec((1, cmid_p), lambda i: (0, 0)),
        pl.BlockSpec((cmid_p, cout_p), lambda i: (0, 0)),
        pl.BlockSpec((1, cout_p), lambda i: (0, 0)),
    ]
    if has_proj:
        args += [padw(params["ws"], cin_p, cout_p), padb(params["bs"], cout_p)]
        in_specs += [pl.BlockSpec((cin_p, cout_p), lambda i: (0, 0)),
                     pl.BlockSpec((1, cout_p), lambda i: (0, 0))]

    kernel = functools.partial(_bottleneck_s1_kernel, h=h, w_row=w_row,
                               t_pad=t_pad, m_tile=m_tile, has_proj=has_proj)

    # VMEM budget: double-buffered x / out / mask tiles + resident weights
    # (still double-buffered) + bf16 y1p scratch + per-chunk temporaries.
    wbytes = sum(int(a.size) * a.dtype.itemsize for a in args[2:])
    io_bytes = (m_total * cin_p * 2            # x tile (bf16)
                + m_total * cout_p * 2         # out tile (bf16)
                + m_total * LANE * 4)          # mask tile (lane-padded f32)
    scratch_bytes = r_alloc * cmid_p * 2
    temp_bytes = 8 * m_tile * max(cmid_p, cout_p) * 4
    vmem_limit = int(min(max(2 * (io_bytes + wbytes) + scratch_bytes
                             + temp_bytes + (4 << 20), 16 << 20), 64 << 20))

    out = pl.pallas_call(
        kernel,
        out_shape=jax.ShapeDtypeStruct((n, m_total, cout_p), jnp.bfloat16),
        grid=(n,),
        in_specs=in_specs,
        out_specs=pl.BlockSpec((1, m_total, cout_p), lambda i: (i, 0, 0)),
        scratch_shapes=[pltpu.VMEM((r_alloc, cmid_p), jnp.bfloat16)],
        compiler_params=pltpu.CompilerParams(
            dimension_semantics=("parallel",),
            vmem_limit_bytes=vmem_limit),
    )(*args)

    # Crop full-width pads / channel padding, back to NCHW f32 (API parity).
    out = out.reshape(n, h, w_row, cout_p)[:, :, 1:w + 1, :cout]
    return jnp.transpose(out, (0, 3, 1, 2)).astype(jnp.float32)


# ----------------------------------------------------------------------------
# Deterministic synthetic parameters (BN in inference mode, scale folded in)
# ----------------------------------------------------------------------------
def init_params(key, in_channels, out_channels, stride):
    cmid = out_channels
    cout = out_channels * EXPANSION
    ks = jax.random.split(key, 16)

    def bn(kg, kb, km, kv, c):
        gamma = 1.0 + 0.1 * jax.random.normal(kg, (c,), jnp.float32)
        beta = 0.1 * jax.random.normal(kb, (c,), jnp.float32)
        mean = 0.1 * jax.random.normal(km, (c,), jnp.float32)
        var = 1.0 + 0.1 * jax.random.uniform(kv, (c,), jnp.float32)
        scale = gamma / jnp.sqrt(var + BN_EPS)
        bias = beta - mean * scale
        return scale, bias

    p = {}
    w1 = 0.2 * jax.random.normal(ks[0], (in_channels, cmid), jnp.float32)
    s1, b1 = bn(ks[1], ks[2], ks[3], ks[4], cmid)
    p["w1"], p["b1"] = w1 * s1[None, :], b1

    w2 = 0.2 * jax.random.normal(ks[5], (3, 3, cmid, cmid), jnp.float32)
    s2, b2 = bn(ks[6], ks[7], ks[8], ks[9], cmid)
    p["w2"], p["b2"] = w2 * s2[None, None, None, :], b2

    w3 = 0.2 * jax.random.normal(ks[10], (cmid, cout), jnp.float32)
    s3, b3 = bn(ks[11], ks[12], ks[13], ks[14], cout)
    p["w3"], p["b3"] = w3 * s3[None, :], b3

    if stride != 1 or in_channels != cout:
        ks2 = jax.random.split(ks[15], 5)
        ws = 0.2 * jax.random.normal(ks2[0], (in_channels, cout), jnp.float32)
        ss, bs = bn(ks2[1], ks2[2], ks2[3], ks2[4], cout)
        p["ws"], p["bs"] = ws * ss[None, :], bs
    else:
        p["ws"] = p["bs"] = None
    return p


# ----------------------------------------------------------------------------
# Pure-JAX reference (bf16 matmuls with f32 accumulation, like the kernel)
# ----------------------------------------------------------------------------
def reference_forward(x_nchw, params, stride):
    x = jnp.transpose(x_nchw, (0, 2, 3, 1)).astype(jnp.float32)
    dn = ("NHWC", "HWIO", "NHWC")

    def conv(inp, wgt, b, strd, pad):
        y = lax.conv_general_dilated(inp.astype(jnp.bfloat16),
                                     wgt.astype(jnp.bfloat16),
                                     (strd, strd), pad, dimension_numbers=dn,
                                     preferred_element_type=jnp.float32)
        return y + b.reshape(1, 1, 1, -1)

    cin, cmid = params["w1"].shape
    y = jax.nn.relu(conv(x, params["w1"].reshape(1, 1, cin, cmid),
                         params["b1"], 1, "VALID"))
    y = jax.nn.relu(conv(y, params["w2"], params["b2"], stride, [(1, 1), (1, 1)]))
    cmid2, cout = params["w3"].shape
    y = conv(y, params["w3"].reshape(1, 1, cmid2, cout), params["b3"], 1, "VALID")
    if params["ws"] is not None:
        sc = conv(x, params["ws"].reshape(1, 1, cin, cout), params["bs"],
                  stride, "VALID")
    else:
        sc = x.astype(jnp.bfloat16).astype(jnp.float32)
    return jnp.transpose(jax.nn.relu(y + sc), (0, 3, 1, 2))


if __name__ == "__main__":
    key = jax.random.PRNGKey(0)
    fwd = jax.jit(bottleneck_forward, static_argnums=(2,))

    # Config 1: projection shortcut (in_channels != out_channels * expansion).
    k_x, k_p, k_x2, k_p2 = jax.random.split(key, 4)
    N, IN_CH, OUT_CH, HW, STRIDE = 2, 4, 4, 16, 1
    x = jax.random.normal(k_x, (N, IN_CH, HW, HW), jnp.float32)      # NCHW
    params = init_params(k_p, IN_CH, OUT_CH, STRIDE)

    out = jax.block_until_ready(fwd(x, params, STRIDE))
    ref = jax.block_until_ready(reference_forward(x, params, STRIDE))
    assert out.shape == (N, OUT_CH * EXPANSION, HW, HW), out.shape
    assert jnp.allclose(out, ref, rtol=2e-2, atol=2e-2), (
        "mismatch vs reference (proj): %f" % float(jnp.max(jnp.abs(out - ref))))

    # Config 2: identity shortcut (in_channels == out_channels * expansion).
    IN_CH2, OUT_CH2 = 16, 4
    x2 = jax.random.normal(k_x2, (N, IN_CH2, HW, HW), jnp.float32)
    params2 = init_params(k_p2, IN_CH2, OUT_CH2, 1)
    out2 = jax.block_until_ready(fwd(x2, params2, 1))
    ref2 = jax.block_until_ready(reference_forward(x2, params2, 1))
    assert out2.shape == (N, OUT_CH2 * EXPANSION, HW, HW), out2.shape
    assert jnp.allclose(out2, ref2, rtol=2e-2, atol=2e-2), (
        "mismatch vs reference (identity): %f" % float(jnp.max(jnp.abs(out2 - ref2))))

    print("KERNEL_OK")
</pallas_src>

<mosaic_0001>
module attributes {stable_mosaic.version = 11 : i64} {
  func.func @_bottleneck_s1_kernel(%arg0: i32, %arg1: memref<1x384x128xbf16, #tpu.memory_space<vmem>>, %arg2: memref<384x1xf32, #tpu.memory_space<vmem>>, %arg3: memref<128x128xbf16, #tpu.memory_space<vmem>>, %arg4: memref<1x128xf32, #tpu.memory_space<vmem>>, %arg5: memref<9x128x128xbf16, #tpu.memory_space<vmem>>, %arg6: memref<1x128xf32, #tpu.memory_space<vmem>>, %arg7: memref<128x128xbf16, #tpu.memory_space<vmem>>, %arg8: memref<1x128xf32, #tpu.memory_space<vmem>>, %arg9: memref<128x128xbf16, #tpu.memory_space<vmem>>, %arg10: memref<1x128xf32, #tpu.memory_space<vmem>>, %arg11: memref<1x384x128xbf16, #tpu.memory_space<vmem>>, %arg12: memref<480x128xbf16, #tpu.memory_space<vmem>>) attributes {dimension_semantics = [#tpu.dimension_semantics<parallel>], iteration_bounds = array<i64: 2>, scalar_prefetch = 0 : i64, scratch_operands = 1 : i64, tpu.core_type = #tpu.core_type<tc>, window_params = [{transform_indices = @transform_0, window_bounds = array<i64: 1, 384, 128>}, {pipeline_mode = #tpu.pipeline_mode<synchronous>, transform_indices = @transform_1, window_bounds = array<i64: 384, 1>}, {pipeline_mode = #tpu.pipeline_mode<synchronous>, transform_indices = @transform_2, window_bounds = array<i64: 128, 128>}, {pipeline_mode = #tpu.pipeline_mode<synchronous>, transform_indices = @transform_3, window_bounds = array<i64: 1, 128>}, {pipeline_mode = #tpu.pipeline_mode<synchronous>, transform_indices = @transform_4, window_bounds = array<i64: 9, 128, 128>}, {pipeline_mode = #tpu.pipeline_mode<synchronous>, transform_indices = @transform_5, window_bounds = array<i64: 1, 128>}, {pipeline_mode = #tpu.pipeline_mode<synchronous>, transform_indices = @transform_6, window_bounds = array<i64: 128, 128>}, {pipeline_mode = #tpu.pipeline_mode<synchronous>, transform_indices = @transform_7, window_bounds = array<i64: 1, 128>}, {pipeline_mode = #tpu.pipeline_mode<synchronous>, transform_indices = @transform_8, window_bounds = array<i64: 128, 128>}, {pipeline_mode = #tpu.pipeline_mode<synchronous>, transform_indices = @transform_9, window_bounds = array<i64: 1, 128>}, {transform_indices = @transform_10, window_bounds = array<i64: 1, 384, 128>}]} {
    %cst = arith.constant 0.000000e+00 : bf16
    %0 = vector.broadcast %cst : bf16 to vector<48x128xbf16>
    %c0 = arith.constant 0 : index
    %c0_0 = arith.constant 0 : index
    %1 = vector.load %arg12[%c0, %c0_0] : memref<480x128xbf16, #tpu.memory_space<vmem>>, vector<48x128xbf16>
    tpu.vector_store %arg12[%c0, %c0_0], %0 {strides = array<i32>} : memref<480x128xbf16, #tpu.memory_space<vmem>>, vector<48x128xbf16>,
    %cst_1 = arith.constant 0.000000e+00 : bf16
    %2 = vector.broadcast %cst_1 : bf16 to vector<48x128xbf16>
    %c432 = arith.constant 432 : index
    %c0_2 = arith.constant 0 : index
    %3 = vector.load %arg12[%c432, %c0_2] : memref<480x128xbf16, #tpu.memory_space<vmem>>, vector<48x128xbf16>
    tpu.vector_store %arg12[%c432, %c0_2], %2 {strides = array<i32>} : memref<480x128xbf16, #tpu.memory_space<vmem>>, vector<48x128xbf16>,
    %c0_3 = arith.constant 0 : index
    %c0_4 = arith.constant 0 : index
    %c0_5 = arith.constant 0 : index
    %4 = vector.load %arg1[%c0_3, %c0_4, %c0_5] : memref<1x384x128xbf16, #tpu.memory_space<vmem>>, vector<1x128x128xbf16>
    %5 = vector.shape_cast %4 : vector<1x128x128xbf16> to vector<128x128xbf16>
    %c0_6 = arith.constant 0 : index
    %c0_7 = arith.constant 0 : index
    %6 = vector.load %arg3[%c0_6, %c0_7] : memref<128x128xbf16, #tpu.memory_space<vmem>>, vector<128x128xbf16>
    %cst_8 = arith.constant dense<0.000000e+00> : vector<128x128xf32>
    %7 = tpu.matmul %5, %6, %cst_8 {dimension_numbers = #tpu.dot_dimension_numbers<[1], [0], [0], [1], [0, 0, 1, 1], [], []>} : vector<128x128xbf16>, vector<128x128xbf16>, vector<128x128xf32> -> vector<128x128xf32>
    %c0_9 = arith.constant 0 : index
    %c0_10 = arith.constant 0 : index
    %8 = vector.load %arg4[%c0_9, %c0_10] : memref<1x128xf32, #tpu.memory_space<vmem>>, vector<1x128xf32>
    %9 = vector.broadcast %8 : vector<1x128xf32> to vector<128x128xf32>
    %10 = arith.addf %7, %9 : vector<128x128xf32>
    %cst_11 = arith.constant 0.000000e+00 : f32
    %11 = vector.broadcast %cst_11 : f32 to vector<128x128xf32>
    %12 = arith.maximumf %10, %11 : vector<128x128xf32>
    %c0_12 = arith.constant 0 : index
    %c0_13 = arith.constant 0 : index
    %13 = vector.load %arg2[%c0_12, %c0_13] : memref<384x1xf32, #tpu.memory_space<vmem>>, vector<128x1xf32>
    %14 = vector.broadcast %13 : vector<128x1xf32> to vector<128x128xf32>
    %15 = arith.mulf %12, %14 : vector<128x128xf32>
    %16 = arith.truncf %15 : vector<128x128xf32> to vector<128x128xbf16>
    %c48 = arith.constant 48 : index
    %c0_14 = arith.constant 0 : index
    %17 = vector.load %arg12[%c48, %c0_14] : memref<480x128xbf16, #tpu.memory_space<vmem>>, vector<128x128xbf16>
    tpu.vector_store %arg12[%c48, %c0_14], %16 {strides = array<i32>} : memref<480x128xbf16, #tpu.memory_space<vmem>>, vector<128x128xbf16>,
    %c0_15 = arith.constant 0 : index
    %c128 = arith.constant 128 : index
    %c0_16 = arith.constant 0 : index
    %18 = vector.load %arg1[%c0_15, %c128, %c0_16] : memref<1x384x128xbf16, #tpu.memory_space<vmem>>, vector<1x128x128xbf16>
    %19 = vector.shape_cast %18 : vector<1x128x128xbf16> to vector<128x128xbf16>
    %c0_17 = arith.constant 0 : index
    %c0_18 = arith.constant 0 : index
    %20 = vector.load %arg3[%c0_17, %c0_18] : memref<128x128xbf16, #tpu.memory_space<vmem>>, vector<128x128xbf16>
    %cst_19 = arith.constant dense<0.000000e+00> : vector<128x128xf32>
    %21 = tpu.matmul %19, %20, %cst_19 {dimension_numbers = #tpu.dot_dimension_numbers<[1], [0], [0], [1], [0, 0, 1, 1], [], []>} : vector<128x128xbf16>, vector<128x128xbf16>, vector<128x128xf32> -> vector<128x128xf32>
    %c0_20 = arith.constant 0 : index
    %c0_21 = arith.constant 0 : index
    %22 = vector.load %arg4[%c0_20, %c0_21] : memref<1x128xf32, #tpu.memory_space<vmem>>, vector<1x128xf32>
    %23 = vector.broadcast %22 : vector<1x128xf32> to vector<128x128xf32>
    %24 = arith.addf %21, %23 : vector<128x128xf32>
    %cst_22 = arith.constant 0.000000e+00 : f32
    %25 = vector.broadcast %cst_22 : f32 to vector<128x128xf32>
    %26 = arith.maximumf %24, %25 : vector<128x128xf32>
    %c128_23 = arith.constant 128 : index
    %c0_24 = arith.constant 0 : index
    %27 = vector.load %arg2[%c128_23, %c0_24] : memref<384x1xf32, #tpu.memory_space<vmem>>, vector<128x1xf32>
    %28 = vector.broadcast %27 : vector<128x1xf32> to vector<128x128xf32>
    %29 = arith.mulf %26, %28 : vector<128x128xf32>
    %30 = arith.truncf %29 : vector<128x128xf32> to vector<128x128xbf16>
    %c176 = arith.constant 176 : index
    %c0_25 = arith.constant 0 : index
    %31 = vector.load %arg12[%c176, %c0_25] : memref<480x128xbf16, #tpu.memory_space<vmem>>, vector<128x128xbf16>
    tpu.vector_store %arg12[%c176, %c0_25], %30 {strides = array<i32>} : memref<480x128xbf16, #tpu.memory_space<vmem>>, vector<128x128xbf16>,
    %c0_26 = arith.constant 0 : index
    %c256 = arith.constant 256 : index
    %c0_27 = arith.constant 0 : index
    %32 = vector.load %arg1[%c0_26, %c256, %c0_27] : memref<1x384x128xbf16, #tpu.memory_space<vmem>>, vector<1x128x128xbf16>
    %33 = vector.shape_cast %32 : vector<1x128x128xbf16> to vector<128x128xbf16>
    %c0_28 = arith.constant 0 : index
    %c0_29 = arith.constant 0 : index
    %34 = vector.load %arg3[%c0_28, %c0_29] : memref<128x128xbf16, #tpu.memory_space<vmem>>, vector<128x128xbf16>
    %cst_30 = arith.constant dense<0.000000e+00> : vector<128x128xf32>
    %35 = tpu.matmul %33, %34, %cst_30 {dimension_numbers = #tpu.dot_dimension_numbers<[1], [0], [0], [1], [0, 0, 1, 1], [], []>} : vector<128x128xbf16>, vector<128x128xbf16>, vector<128x128xf32> -> vector<128x128xf32>
    %c0_31 = arith.constant 0 : index
    %c0_32 = arith.constant 0 : index
    %36 = vector.load %arg4[%c0_31, %c0_32] : memref<1x128xf32, #tpu.memory_space<vmem>>, vector<1x128xf32>
    %37 = vector.broadcast %36 : vector<1x128xf32> to vector<128x128xf32>
    %38 = arith.addf %35, %37 : vector<128x128xf32>
    %cst_33 = arith.constant 0.000000e+00 : f32
    %39 = vector.broadcast %cst_33 : f32 to vector<128x128xf32>
    %40 = arith.maximumf %38, %39 : vector<128x128xf32>
    %c256_34 = arith.constant 256 : index
    %c0_35 = arith.constant 0 : index
    %41 = vector.load %arg2[%c256_34, %c0_35] : memref<384x1xf32, #tpu.memory_space<vmem>>, vector<128x1xf32>
    %42 = vector.broadcast %41 : vector<128x1xf32> to vector<128x128xf32>
    %43 = arith.mulf %40, %42 : vector<128x128xf32>
    %44 = arith.truncf %43 : vector<128x128xf32> to vector<128x128xbf16>
    %c304 = arith.constant 304 : index
    %c0_36 = arith.constant 0 : index
    %45 = vector.load %arg12[%c304, %c0_36] : memref<480x128xbf16, #tpu.memory_space<vmem>>, vector<128x128xbf16>
    tpu.vector_store %arg12[%c304, %c0_36], %44 {strides = array<i32>} : memref<480x128xbf16, #tpu.memory_space<vmem>>, vector<128x128xbf16>,
    %c23 = arith.constant 23 : index
    %c0_37 = arith.constant 0 : index
    %46 = vector.load %arg12[%c23, %c0_37] : memref<480x128xbf16, #tpu.memory_space<vmem>>, vector<128x128xbf16>
    %c0_38 = arith.constant 0 : index
    %c0_39 = arith.constant 0 : index
    %c0_40 = arith.constant 0 : index
    %47 = vector.load %arg5[%c0_38, %c0_39, %c0_40] : memref<9x128x128xbf16, #tpu.memory_space<vmem>>, vector<1x128x128xbf16>
    %48 = vector.shape_cast %47 : vector<1x128x128xbf16> to vector<128x128xbf16>
    %cst_41 = arith.constant dense<0.000000e+00> : vector<128x128xf32>
    %49 = tpu.matmul %46, %48, %cst_41 {dimension_numbers = #tpu.dot_dimension_numbers<[1], [0], [0], [1], [0, 0, 1, 1], [], []>} : vector<128x128xbf16>, vector<128x128xbf16>, vector<128x128xf32> -> vector<128x128xf32>
    %c24 = arith.constant 24 : index
    %c0_42 = arith.constant 0 : index
    %50 = vector.load %arg12[%c24, %c0_42] : memref<480x128xbf16, #tpu.memory_space<vmem>>, vector<128x128xbf16>
    %c1 = arith.constant 1 : index
    %c0_43 = arith.constant 0 : index
    %c0_44 = arith.constant 0 : index
    %51 = vector.load %arg5[%c1, %c0_43, %c0_44] : memref<9x128x128xbf16, #tpu.memory_space<vmem>>, vector<1x128x128xbf16>
    %52 = vector.shape_cast %51 : vector<1x128x128xbf16> to vector<128x128xbf16>
    %cst_45 = arith.constant dense<0.000000e+00> : vector<128x128xf32>
    %53 = tpu.matmul %50, %52, %cst_45 {dimension_numbers = #tpu.dot_dimension_numbers<[1], [0], [0], [1], [0, 0, 1, 1], [], []>} : vector<128x128xbf16>, vector<128x128xbf16>, vector<128x128xf32> -> vector<128x128xf32>
    %54 = arith.addf %49, %53 : vector<128x128xf32>
    %c25 = arith.constant 25 : index
    %c0_46 = arith.constant 0 : index
    %55 = vector.load %arg12[%c25, %c0_46] : memref<480x128xbf16, #tpu.memory_space<vmem>>, vector<128x128xbf16>
    %c2 = arith.constant 2 : index
    %c0_47 = arith.constant 0 : index
    %c0_48 = arith.constant 0 : index
    %56 = vector.load %arg5[%c2, %c0_47, %c0_48] : memref<9x128x128xbf16, #tpu.memory_space<vmem>>, vector<1x128x128xbf16>
    %57 = vector.shape_cast %56 : vector<1x128x128xbf16> to vector<128x128xbf16>
    %cst_49 = arith.constant dense<0.000000e+00> : vector<128x128xf32>
    %58 = tpu.matmul %55, %57, %cst_49 {dimension_numbers = #tpu.dot_dimension_numbers<[1], [0], [0], [1], [0, 0, 1, 1], [], []>} : vector<128x128xbf16>, vector<128x128xbf16>, vector<128x128xf32> -> vector<128x128xf32>
    %59 = arith.addf %54, %58 : vector<128x128xf32>
    %c47 = arith.constant 47 : index
    %c0_50 = arith.constant 0 : index
    %60 = vector.load %arg12[%c47, %c0_50] : memref<480x128xbf16, #tpu.memory_space<vmem>>, vector<128x128xbf16>
    %c3 = arith.constant 3 : index
    %c0_51 = arith.constant 0 : index
    %c0_52 = arith.constant 0 : index
    %61 = vector.load %arg5[%c3, %c0_51, %c0_52] : memref<9x128x128xbf16, #tpu.memory_space<vmem>>, vector<1x128x128xbf16>
    %62 = vector.shape_cast %61 : vector<1x128x128xbf16> to vector<128x128xbf16>
    %cst_53 = arith.constant dense<0.000000e+00> : vector<128x128xf32>
    %63 = tpu.matmul %60, %62, %cst_53 {dimension_numbers = #tpu.dot_dimension_numbers<[1], [0], [0], [1], [0, 0, 1, 1], [], []>} : vector<128x128xbf16>, vector<128x128xbf16>, vector<128x128xf32> -> vector<128x128xf32>
    %64 = arith.addf %59, %63 : vector<128x128xf32>
    %c48_54 = arith.constant 48 : index
    %c0_55 = arith.constant 0 : index
    %65 = vector.load %arg12[%c48_54, %c0_55] : memref<480x128xbf16, #tpu.memory_space<vmem>>, vector<128x128xbf16>
    %c4 = arith.constant 4 : index
    %c0_56 = arith.constant 0 : index
    %c0_57 = arith.constant 0 : index
    %66 = vector.load %arg5[%c4, %c0_56, %c0_57] : memref<9x128x128xbf16, #tpu.memory_space<vmem>>, vector<1x128x128xbf16>
    %67 = vector.shape_cast %66 : vector<1x128x128xbf16> to vector<128x128xbf16>
    %cst_58 = arith.constant dense<0.000000e+00> : vector<128x128xf32>
    %68 = tpu.matmul %65, %67, %cst_58 {dimension_numbers = #tpu.dot_dimension_numbers<[1], [0], [0], [1], [0, 0, 1, 1], [], []>} : vector<128x128xbf16>, vector<128x128xbf16>, vector<128x128xf32> -> vector<128x128xf32>
    %69 = arith.addf %64, %68 : vector<128x128xf32>
    %c49 = arith.constant 49 : index
    %c0_59 = arith.constant 0 : index
    %70 = vector.load %arg12[%c49, %c0_59] : memref<480x128xbf16, #tpu.memory_space<vmem>>, vector<128x128xbf16>
    %c5 = arith.constant 5 : index
    %c0_60 = arith.constant 0 : index
    %c0_61 = arith.constant 0 : index
    %71 = vector.load %arg5[%c5, %c0_60, %c0_61] : memref<9x128x128xbf16, #tpu.memory_space<vmem>>, vector<1x128x128xbf16>
    %72 = vector.shape_cast %71 : vector<1x128x128xbf16> to vector<128x128xbf16>
    %cst_62 = arith.constant dense<0.000000e+00> : vector<128x128xf32>
    %73 = tpu.matmul %70, %72, %cst_62 {dimension_numbers = #tpu.dot_dimension_numbers<[1], [0], [0], [1], [0, 0, 1, 1], [], []>} : vector<128x128xbf16>, vector<128x128xbf16>, vector<128x128xf32> -> vector<128x128xf32>
    %74 = arith.addf %69, %73 : vector<128x128xf32>
    %c71 = arith.constant 71 : index
    %c0_63 = arith.constant 0 : index
    %75 = vector.load %arg12[%c71, %c0_63] : memref<480x128xbf16, #tpu.memory_space<vmem>>, vector<128x128xbf16>
    %c6 = arith.constant 6 : index
    %c0_64 = arith.constant 0 : index
    %c0_65 = arith.constant 0 : index
    %76 = vector.load %arg5[%c6, %c0_64, %c0_65] : memref<9x128x128xbf16, #tpu.memory_space<vmem>>, vector<1x128x128xbf16>
    %77 = vector.shape_cast %76 : vector<1x128x128xbf16> to vector<128x128xbf16>
    %cst_66 = arith.constant dense<0.000000e+00> : vector<128x128xf32>
    %78 = tpu.matmul %75, %77, %cst_66 {dimension_numbers = #tpu.dot_dimension_numbers<[1], [0], [0], [1], [0, 0, 1, 1], [], []>} : vector<128x128xbf16>, vector<128x128xbf16>, vector<128x128xf32> -> vector<128x128xf32>
    %79 = arith.addf %74, %78 : vector<128x128xf32>
    %c72 = arith.constant 72 : index
    %c0_67 = arith.constant 0 : index
    %80 = vector.load %arg12[%c72, %c0_67] : memref<480x128xbf16, #tpu.memory_space<vmem>>, vector<128x128xbf16>
    %c7 = arith.constant 7 : index
    %c0_68 = arith.constant 0 : index
    %c0_69 = arith.constant 0 : index
    %81 = vector.load %arg5[%c7, %c0_68, %c0_69] : memref<9x128x128xbf16, #tpu.memory_space<vmem>>, vector<1x128x128xbf16>
    %82 = vector.shape_cast %81 : vector<1x128x128xbf16> to vector<128x128xbf16>
    %cst_70 = arith.constant dense<0.000000e+00> : vector<128x128xf32>
    %83 = tpu.matmul %80, %82, %cst_70 {dimension_numbers = #tpu.dot_dimension_numbers<[1], [0], [0], [1], [0, 0, 1, 1], [], []>} : vector<128x128xbf16>, vector<128x128xbf16>, vector<128x128xf32> -> vector<128x128xf32>
    %84 = arith.addf %79, %83 : vector<128x128xf32>
    %c73 = arith.constant 73 : index
    %c0_71 = arith.constant 0 : index
    %85 = vector.load %arg12[%c73, %c0_71] : memref<480x128xbf16, #tpu.memory_space<vmem>>, vector<128x128xbf16>
    %c8 = arith.constant 8 : index
    %c0_72 = arith.constant 0 : index
    %c0_73 = arith.constant 0 : index
    %86 = vector.load %arg5[%c8, %c0_72, %c0_73] : memref<9x128x128xbf16, #tpu.memory_space<vmem>>, vector<1x128x128xbf16>
    %87 = vector.shape_cast %86 : vector<1x128x128xbf16> to vector<128x128xbf16>
    %cst_74 = arith.constant dense<0.000000e+00> : vector<128x128xf32>
    %88 = tpu.matmul %85, %87, %cst_74 {dimension_numbers = #tpu.dot_dimension_numbers<[1], [0], [0], [1], [0, 0, 1, 1], [], []>} : vector<128x128xbf16>, vector<128x128xbf16>, vector<128x128xf32> -> vector<128x128xf32>
    %89 = arith.addf %84, %88 : vector<128x128xf32>
    %c0_75 = arith.constant 0 : index
    %c0_76 = arith.constant 0 : index
    %90 = vector.load %arg6[%c0_75, %c0_76] : memref<1x128xf32, #tpu.memory_space<vmem>>, vector<1x128xf32>
    %91 = vector.broadcast %90 : vector<1x128xf32> to vector<128x128xf32>
    %92 = arith.addf %89, %91 : vector<128x128xf32>
    %cst_77 = arith.constant 0.000000e+00 : f32
    %93 = vector.broadcast %cst_77 : f32 to vector<128x128xf32>
    %94 = arith.maximumf %92, %93 : vector<128x128xf32>
    %95 = arith.truncf %94 : vector<128x128xf32> to vector<128x128xbf16>
    %c0_78 = arith.constant 0 : index
    %c0_79 = arith.constant 0 : index
    %96 = vector.load %arg7[%c0_78, %c0_79] : memref<128x128xbf16, #tpu.memory_space<vmem>>, vector<128x128xbf16>
    %cst_80 = arith.constant dense<0.000000e+00> : vector<128x128xf32>
    %97 = tpu.matmul %95, %96, %cst_80 {dimension_numbers = #tpu.dot_dimension_numbers<[1], [0], [0], [1], [0, 0, 1, 1], [], []>} : vector<128x128xbf16>, vector<128x128xbf16>, vector<128x128xf32> -> vector<128x128xf32>
    %c0_81 = arith.constant 0 : index
    %c0_82 = arith.constant 0 : index
    %98 = vector.load %arg8[%c0_81, %c0_82] : memref<1x128xf32, #tpu.memory_space<vmem>>, vector<1x128xf32>
    %99 = vector.broadcast %98 : vector<1x128xf32> to vector<128x128xf32>
    %100 = arith.addf %97, %99 : vector<128x128xf32>
    %c0_83 = arith.constant 0 : index
    %c0_84 = arith.constant 0 : index
    %c0_85 = arith.constant 0 : index
    %101 = vector.load %arg1[%c0_83, %c0_84, %c0_85] : memref<1x384x128xbf16, #tpu.memory_space<vmem>>, vector<1x128x128xbf16>
    %102 = vector.shape_cast %101 : vector<1x128x128xbf16> to vector<128x128xbf16>
    %c0_86 = arith.constant 0 : index
    %c0_87 = arith.constant 0 : index
    %103 = vector.load %arg9[%c0_86, %c0_87] : memref<128x128xbf16, #tpu.memory_space<vmem>>, vector<128x128xbf16>
    %cst_88 = arith.constant dense<0.000000e+00> : vector<128x128xf32>
    %104 = tpu.matmul %102, %103, %cst_88 {dimension_numbers = #tpu.dot_dimension_numbers<[1], [0], [0], [1], [0, 0, 1, 1], [], []>} : vector<128x128xbf16>, vector<128x128xbf16>, vector<128x128xf32> -> vector<128x128xf32>
    %c0_89 = arith.constant 0 : index
    %c0_90 = arith.constant 0 : index
    %105 = vector.load %arg10[%c0_89, %c0_90] : memref<1x128xf32, #tpu.memory_space<vmem>>, vector<1x128xf32>
    %106 = vector.broadcast %105 : vector<1x128xf32> to vector<128x128xf32>
    %107 = arith.addf %104, %106 : vector<128x128xf32>
    %108 = arith.addf %100, %107 : vector<128x128xf32>
    %cst_91 = arith.constant 0.000000e+00 : f32
    %109 = vector.broadcast %cst_91 : f32 to vector<128x128xf32>
    %110 = arith.maximumf %108, %109 : vector<128x128xf32>
    %111 = arith.truncf %110 : vector<128x128xf32> to vector<128x128xbf16>
    %c0_92 = arith.constant 0 : index
    %c0_93 = arith.constant 0 : index
    %c0_94 = arith.constant 0 : index
    %112 = vector.load %arg11[%c0_92, %c0_93, %c0_94] : memref<1x384x128xbf16, #tpu.memory_space<vmem>>, vector<1x128x128xbf16>
    %113 = vector.shape_cast %112 : vector<1x128x128xbf16> to vector<128x128xbf16>
    %114 = vector.shape_cast %111 : vector<128x128xbf16> to vector<1x128x128xbf16>
    tpu.vector_store %arg11[%c0_92, %c0_93, %c0_94], %114 {strides = array<i32>} : memref<1x384x128xbf16, #tpu.memory_space<vmem>>, vector<1x128x128xbf16>,
    %c151 = arith.constant 151 : index
    %c0_95 = arith.constant 0 : index
    %115 = vector.load %arg12[%c151, %c0_95] : memref<480x128xbf16, #tpu.memory_space<vmem>>, vector<128x128xbf16>
    %c0_96 = arith.constant 0 : index
    %c0_97 = arith.constant 0 : index
    %c0_98 = arith.constant 0 : index
    %116 = vector.load %arg5[%c0_96, %c0_97, %c0_98] : memref<9x128x128xbf16, #tpu.memory_space<vmem>>, vector<1x128x128xbf16>
    %117 = vector.shape_cast %116 : vector<1x128x128xbf16> to vector<128x128xbf16>
    %cst_99 = arith.constant dense<0.000000e+00> : vector<128x128xf32>
    %118 = tpu.matmul %115, %117, %cst_99 {dimension_numbers = #tpu.dot_dimension_numbers<[1], [0], [0], [1], [0, 0, 1, 1], [], []>} : vector<128x128xbf16>, vector<128x128xbf16>, vector<128x128xf32> -> vector<128x128xf32>
    %c152 = arith.constant 152 : index
    %c0_100 = arith.constant 0 : index
    %119 = vector.load %arg12[%c152, %c0_100] : memref<480x128xbf16, #tpu.memory_space<vmem>>, vector<128x128xbf16>
    %c1_101 = arith.constant 1 : index
    %c0_102 = arith.constant 0 : index
    %c0_103 = arith.constant 0 : index
    %120 = vector.load %arg5[%c1_101, %c0_102, %c0_103] : memref<9x128x128xbf16, #tpu.memory_space<vmem>>, vector<1x128x128xbf16>
    %121 = vector.shape_cast %120 : vector<1x128x128xbf16> to vector<128x128xbf16>
    %cst_104 = arith.constant dense<0.000000e+00> : vector<128x128xf32>
    %122 = tpu.matmul %119, %121, %cst_104 {dimension_numbers = #tpu.dot_dimension_numbers<[1], [0], [0], [1], [0, 0, 1, 1], [], []>} : vector<128x128xbf16>, vector<128x128xbf16>, vector<128x128xf32> -> vector<128x128xf32>
    %123 = arith.addf %118, %122 : vector<128x128xf32>
    %c153 = arith.constant 153 : index
    %c0_105 = arith.constant 0 : index
    %124 = vector.load %arg12[%c153, %c0_105] : memref<480x128xbf16, #tpu.memory_space<vmem>>, vector<128x128xbf16>
    %c2_106 = arith.constant 2 : index
    %c0_107 = arith.constant 0 : index
    %c0_108 = arith.constant 0 : index
    %125 = vector.load %arg5[%c2_106, %c0_107, %c0_108] : memref<9x128x128xbf16, #tpu.memory_space<vmem>>, vector<1x128x128xbf16>
    %126 = vector.shape_cast %125 : vector<1x128x128xbf16> to vector<128x128xbf16>
    %cst_109 = arith.constant dense<0.000000e+00> : vector<128x128xf32>
    %127 = tpu.matmul %124, %126, %cst_109 {dimension_numbers = #tpu.dot_dimension_numbers<[1], [0], [0], [1], [0, 0, 1, 1], [], []>} : vector<128x128xbf16>, vector<128x128xbf16>, vector<128x128xf32> -> vector<128x128xf32>
    %128 = arith.addf %123, %127 : vector<128x128xf32>
    %c175 = arith.constant 175 : index
    %c0_110 = arith.constant 0 : index
    %129 = vector.load %arg12[%c175, %c0_110] : memref<480x128xbf16, #tpu.memory_space<vmem>>, vector<128x128xbf16>
    %c3_111 = arith.constant 3 : index
    %c0_112 = arith.constant 0 : index
    %c0_113 = arith.constant 0 : index
    %130 = vector.load %arg5[%c3_111, %c0_112, %c0_113] : memref<9x128x128xbf16, #tpu.memory_space<vmem>>, vector<1x128x128xbf16>
    %131 = vector.shape_cast %130 : vector<1x128x128xbf16> to vector<128x128xbf16>
    %cst_114 = arith.constant dense<0.000000e+00> : vector<128x128xf32>
    %132 = tpu.matmul %129, %131, %cst_114 {dimension_numbers = #tpu.dot_dimension_numbers<[1], [0], [0], [1], [0, 0, 1, 1], [], []>} : vector<128x128xbf16>, vector<128x128xbf16>, vector<128x128xf32> -> vector<128x128xf32>
    %133 = arith.addf %128, %132 : vector<128x128xf32>
    %c176_115 = arith.constant 176 : index
    %c0_116 = arith.constant 0 : index
    %134 = vector.load %arg12[%c176_115, %c0_116] : memref<480x128xbf16, #tpu.memory_space<vmem>>, vector<128x128xbf16>
    %c4_117 = arith.constant 4 : index
    %c0_118 = arith.constant 0 : index
    %c0_119 = arith.constant 0 : index
    %135 = vector.load %arg5[%c4_117, %c0_118, %c0_119] : memref<9x128x128xbf16, #tpu.memory_space<vmem>>, vector<1x128x128xbf16>
    %136 = vector.shape_cast %135 : vector<1x128x128xbf16> to vector<128x128xbf16>
    %cst_120 = arith.constant dense<0.000000e+00> : vector<128x128xf32>
    %137 = tpu.matmul %134, %136, %cst_120 {dimension_numbers = #tpu.dot_dimension_numbers<[1], [0], [0], [1], [0, 0, 1, 1], [], []>} : vector<128x128xbf16>, vector<128x128xbf16>, vector<128x128xf32> -> vector<128x128xf32>
    %138 = arith.addf %133, %137 : vector<128x128xf32>
    %c177 = arith.constant 177 : index
    %c0_121 = arith.constant 0 : index
    %139 = vector.load %arg12[%c177, %c0_121] : memref<480x128xbf16, #tpu.memory_space<vmem>>, vector<128x128xbf16>
    %c5_122 = arith.constant 5 : index
    %c0_123 = arith.constant 0 : index
    %c0_124 = arith.constant 0 : index
    %140 = vector.load %arg5[%c5_122, %c0_123, %c0_124] : memref<9x128x128xbf16, #tpu.memory_space<vmem>>, vector<1x128x128xbf16>
    %141 = vector.shape_cast %140 : vector<1x128x128xbf16> to vector<128x128xbf16>
    %cst_125 = arith.constant dense<0.000000e+00> : vector<128x128xf32>
    %142 = tpu.matmul %139, %141, %cst_125 {dimension_numbers = #tpu.dot_dimension_numbers<[1], [0], [0], [1], [0, 0, 1, 1], [], []>} : vector<128x128xbf16>, vector<128x128xbf16>, vector<128x128xf32> -> vector<128x128xf32>
    %143 = arith.addf %138, %142 : vector<128x128xf32>
    %c199 = arith.constant 199 : index
    %c0_126 = arith.constant 0 : index
    %144 = vector.load %arg12[%c199, %c0_126] : memref<480x128xbf16, #tpu.memory_space<vmem>>, vector<128x128xbf16>
    %c6_127 = arith.constant 6 : index
    %c0_128 = arith.constant 0 : index
    %c0_129 = arith.constant 0 : index
    %145 = vector.load %arg5[%c6_127, %c0_128, %c0_129] : memref<9x128x128xbf16, #tpu.memory_space<vmem>>, vector<1x128x128xbf16>
    %146 = vector.shape_cast %145 : vector<1x128x128xbf16> to vector<128x128xbf16>
    %cst_130 = arith.constant dense<0.000000e+00> : vector<128x128xf32>
    %147 = tpu.matmul %144, %146, %cst_130 {dimension_numbers = #tpu.dot_dimension_numbers<[1], [0], [0], [1], [0, 0, 1, 1], [], []>} : vector<128x128xbf16>, vector<128x128xbf16>, vector<128x128xf32> -> vector<128x128xf32>
    %148 = arith.addf %143, %147 : vector<128x128xf32>
    %c200 = arith.constant 200 : index
    %c0_131 = arith.constant 0 : index
    %149 = vector.load %arg12[%c200, %c0_131] : memref<480x128xbf16, #tpu.memory_space<vmem>>, vector<128x128xbf16>
    %c7_132 = arith.constant 7 : index
    %c0_133 = arith.constant 0 : index
    %c0_134 = arith.constant 0 : index
    %150 = vector.load %arg5[%c7_132, %c0_133, %c0_134] : memref<9x128x128xbf16, #tpu.memory_space<vmem>>, vector<1x128x128xbf16>
    %151 = vector.shape_cast %150 : vector<1x128x128xbf16> to vector<128x128xbf16>
    %cst_135 = arith.constant dense<0.000000e+00> : vector<128x128xf32>
    %152 = tpu.matmul %149, %151, %cst_135 {dimension_numbers = #tpu.dot_dimension_numbers<[1], [0], [0], [1], [0, 0, 1, 1], [], []>} : vector<128x128xbf16>, vector<128x128xbf16>, vector<128x128xf32> -> vector<128x128xf32>
    %153 = arith.addf %148, %152 : vector<128x128xf32>
    %c201 = arith.constant 201 : index
    %c0_136 = arith.constant 0 : index
    %154 = vector.load %arg12[%c201, %c0_136] : memref<480x128xbf16, #tpu.memory_space<vmem>>, vector<128x128xbf16>
    %c8_137 = arith.constant 8 : index
    %c0_138 = arith.constant 0 : index
    %c0_139 = arith.constant 0 : index
    %155 = vector.load %arg5[%c8_137, %c0_138, %c0_139] : memref<9x128x128xbf16, #tpu.memory_space<vmem>>, vector<1x128x128xbf16>
    %156 = vector.shape_cast %155 : vector<1x128x128xbf16> to vector<128x128xbf16>
    %cst_140 = arith.constant dense<0.000000e+00> : vector<128x128xf32>
    %157 = tpu.matmul %154, %156, %cst_140 {dimension_numbers = #tpu.dot_dimension_numbers<[1], [0], [0], [1], [0, 0, 1, 1], [], []>} : vector<128x128xbf16>, vector<128x128xbf16>, vector<128x128xf32> -> vector<128x128xf32>
    %158 = arith.addf %153, %157 : vector<128x128xf32>
    %c0_141 = arith.constant 0 : index
    %c0_142 = arith.constant 0 : index
    %159 = vector.load %arg6[%c0_141, %c0_142] : memref<1x128xf32, #tpu.memory_space<vmem>>, vector<1x128xf32>
    %160 = vector.broadcast %159 : vector<1x128xf32> to vector<128x128xf32>
    %161 = arith.addf %158, %160 : vector<128x128xf32>
    %cst_143 = arith.constant 0.000000e+00 : f32
    %162 = vector.broadcast %cst_143 : f32 to vector<128x128xf32>
    %163 = arith.maximumf %161, %162 : vector<128x128xf32>
    %164 = arith.truncf %163 : vector<128x128xf32> to vector<128x128xbf16>
    %c0_144 = arith.constant 0 : index
    %c0_145 = arith.constant 0 : index
    %165 = vector.load %arg7[%c0_144, %c0_145] : memref<128x128xbf16, #tpu.memory_space<vmem>>, vector<128x128xbf16>
    %cst_146 = arith.constant dense<0.000000e+00> : vector<128x128xf32>
    %166 = tpu.matmul %164, %165, %cst_146 {dimension_numbers = #tpu.dot_dimension_numbers<[1], [0], [0], [1], [0, 0, 1, 1], [], []>} : vector<128x128xbf16>, vector<128x128xbf16>, vector<128x128xf32> -> vector<128x128xf32>
    %c0_147 = arith.constant 0 : index
    %c0_148 = arith.constant 0 : index
    %167 = vector.load %arg8[%c0_147, %c0_148] : memref<1x128xf32, #tpu.memory_space<vmem>>, vector<1x128xf32>
    %168 = vector.broadcast %167 : vector<1x128xf32> to vector<128x128xf32>
    %169 = arith.addf %166, %168 : vector<128x128xf32>
    %c0_149 = arith.constant 0 : index
    %c128_150 = arith.constant 128 : index
    %c0_151 = arith.constant 0 : index
    %170 = vector.load %arg1[%c0_149, %c128_150, %c0_151] : memref<1x384x128xbf16, #tpu.memory_space<vmem>>, vector<1x128x128xbf16>
    %171 = vector.shape_cast %170 : vector<1x128x128xbf16> to vector<128x128xbf16>
    %c0_152 = arith.constant 0 : index
    %c0_153 = arith.constant 0 : index
    %172 = vector.load %arg9[%c0_152, %c0_153] : memref<128x128xbf16, #tpu.memory_space<vmem>>, vector<128x128xbf16>
    %cst_154 = arith.constant dense<0.000000e+00> : vector<128x128xf32>
    %173 = tpu.matmul %171, %172, %cst_154 {dimension_numbers = #tpu.dot_dimension_numbers<[1], [0], [0], [1], [0, 0, 1, 1], [], []>} : vector<128x128xbf16>, vector<128x128xbf16>, vector<128x128xf32> -> vector<128x128xf32>
    %c0_155 = arith.constant 0 : index
    %c0_156 = arith.constant 0 : index
    %174 = vector.load %arg10[%c0_155, %c0_156] : memref<1x128xf32, #tpu.memory_space<vmem>>, vector<1x128xf32>
    %175 = vector.broadcast %174 : vector<1x128xf32> to vector<128x128xf32>
    %176 = arith.addf %173, %175 : vector<128x128xf32>
    %177 = arith.addf %169, %176 : vector<128x128xf32>
    %cst_157 = arith.constant 0.000000e+00 : f32
    %178 = vector.broadcast %cst_157 : f32 to vector<128x128xf32>
    %179 = arith.maximumf %177, %178 : vector<128x128xf32>
    %180 = arith.truncf %179 : vector<128x128xf32> to vector<128x128xbf16>
    %c0_158 = arith.constant 0 : index
    %c128_159 = arith.constant 128 : index
    %c0_160 = arith.constant 0 : index
    %181 = vector.load %arg11[%c0_158, %c128_159, %c0_160] : memref<1x384x128xbf16, #tpu.memory_space<vmem>>, vector<1x128x128xbf16>
    %182 = vector.shape_cast %181 : vector<1x128x128xbf16> to vector<128x128xbf16>
    %183 = vector.shape_cast %180 : vector<128x128xbf16> to vector<1x128x128xbf16>
    tpu.vector_store %arg11[%c0_158, %c128_159, %c0_160], %183 {strides = array<i32>} : memref<1x384x128xbf16, #tpu.memory_space<vmem>>, vector<1x128x128xbf16>,
    %c279 = arith.constant 279 : index
    %c0_161 = arith.constant 0 : index
    %184 = vector.load %arg12[%c279, %c0_161] : memref<480x128xbf16, #tpu.memory_space<vmem>>, vector<128x128xbf16>
    %c0_162 = arith.constant 0 : index
    %c0_163 = arith.constant 0 : index
    %c0_164 = arith.constant 0 : index
    %185 = vector.load %arg5[%c0_162, %c0_163, %c0_164] : memref<9x128x128xbf16, #tpu.memory_space<vmem>>, vector<1x128x128xbf16>
    %186 = vector.shape_cast %185 : vector<1x128x128xbf16> to vector<128x128xbf16>
    %cst_165 = arith.constant dense<0.000000e+00> : vector<128x128xf32>
    %187 = tpu.matmul %184, %186, %cst_165 {dimension_numbers = #tpu.dot_dimension_numbers<[1], [0], [0], [1], [0, 0, 1, 1], [], []>} : vector<128x128xbf16>, vector<128x128xbf16>, vector<128x128xf32> -> vector<128x128xf32>
    %c280 = arith.constant 280 : index
    %c0_166 = arith.constant 0 : index
    %188 = vector.load %arg12[%c280, %c0_166] : memref<480x128xbf16, #tpu.memory_space<vmem>>, vector<128x128xbf16>
    %c1_167 = arith.constant 1 : index
    %c0_168 = arith.constant 0 : index
    %c0_169 = arith.constant 0 : index
    %189 = vector.load %arg5[%c1_167, %c0_168, %c0_169] : memref<9x128x128xbf16, #tpu.memory_space<vmem>>, vector<1x128x128xbf16>
    %190 = vector.shape_cast %189 : vector<1x128x128xbf16> to vector<128x128xbf16>
    %cst_170 = arith.constant dense<0.000000e+00> : vector<128x128xf32>
    %191 = tpu.matmul %188, %190, %cst_170 {dimension_numbers = #tpu.dot_dimension_numbers<[1], [0], [0], [1], [0, 0, 1, 1], [], []>} : vector<128x128xbf16>, vector<128x128xbf16>, vector<128x128xf32> -> vector<128x128xf32>
    %192 = arith.addf %187, %191 : vector<128x128xf32>
    %c281 = arith.constant 281 : index
    %c0_171 = arith.constant 0 : index
    %193 = vector.load %arg12[%c281, %c0_171] : memref<480x128xbf16, #tpu.memory_space<vmem>>, vector<128x128xbf16>
    %c2_172 = arith.constant 2 : index
    %c0_173 = arith.constant 0 : index
    %c0_174 = arith.constant 0 : index
    %194 = vector.load %arg5[%c2_172, %c0_173, %c0_174] : memref<9x128x128xbf16, #tpu.memory_space<vmem>>, vector<1x128x128xbf16>
    %195 = vector.shape_cast %194 : vector<1x128x128xbf16> to vector<128x128xbf16>
    %cst_175 = arith.constant dense<0.000000e+00> : vector<128x128xf32>
    %196 = tpu.matmul %193, %195, %cst_175 {dimension_numbers = #tpu.dot_dimension_numbers<[1], [0], [0], [1], [0, 0, 1, 1], [], []>} : vector<128x128xbf16>, vector<128x128xbf16>, vector<128x128xf32> -> vector<128x128xf32>
    %197 = arith.addf %192, %196 : vector<128x128xf32>
    %c303 = arith.constant 303 : index
    %c0_176 = arith.constant 0 : index
    %198 = vector.load %arg12[%c303, %c0_176] : memref<480x128xbf16, #tpu.memory_space<vmem>>, vector<128x128xbf16>
    %c3_177 = arith.constant 3 : index
    %c0_178 = arith.constant 0 : index
    %c0_179 = arith.constant 0 : index
    %199 = vector.load %arg5[%c3_177, %c0_178, %c0_179] : memref<9x128x128xbf16, #tpu.memory_space<vmem>>, vector<1x128x128xbf16>
    %200 = vector.shape_cast %199 : vector<1x128x128xbf16> to vector<128x128xbf16>
    %cst_180 = arith.constant dense<0.000000e+00> : vector<128x128xf32>
    %201 = tpu.matmul %198, %200, %cst_180 {dimension_numbers = #tpu.dot_dimension_numbers<[1], [0], [0], [1], [0, 0, 1, 1], [], []>} : vector<128x128xbf16>, vector<128x128xbf16>, vector<128x128xf32> -> vector<128x128xf32>
    %202 = arith.addf %197, %201 : vector<128x128xf32>
    %c304_181 = arith.constant 304 : index
    %c0_182 = arith.constant 0 : index
    %203 = vector.load %arg12[%c304_181, %c0_182] : memref<480x128xbf16, #tpu.memory_space<vmem>>, vector<128x128xbf16>
    %c4_183 = arith.constant 4 : index
    %c0_184 = arith.constant 0 : index
    %c0_185 = arith.constant 0 : index
    %204 = vector.load %arg5[%c4_183, %c0_184, %c0_185] : memref<9x128x128xbf16, #tpu.memory_space<vmem>>, vector<1x128x128xbf16>
    %205 = vector.shape_cast %204 : vector<1x128x128xbf16> to vector<128x128xbf16>
    %cst_186 = arith.constant dense<0.000000e+00> : vector<128x128xf32>
    %206 = tpu.matmul %203, %205, %cst_186 {dimension_numbers = #tpu.dot_dimension_numbers<[1], [0], [0], [1], [0, 0, 1, 1], [], []>} : vector<128x128xbf16>, vector<128x128xbf16>, vector<128x128xf32> -> vector<128x128xf32>
    %207 = arith.addf %202, %206 : vector<128x128xf32>
    %c305 = arith.constant 305 : index
    %c0_187 = arith.constant 0 : index
    %208 = vector.load %arg12[%c305, %c0_187] : memref<480x128xbf16, #tpu.memory_space<vmem>>, vector<128x128xbf16>
    %c5_188 = arith.constant 5 : index
    %c0_189 = arith.constant 0 : index
    %c0_190 = arith.constant 0 : index
    %209 = vector.load %arg5[%c5_188, %c0_189, %c0_190] : memref<9x128x128xbf16, #tpu.memory_space<vmem>>, vector<1x128x128xbf16>
    %210 = vector.shape_cast %209 : vector<1x128x128xbf16> to vector<128x128xbf16>
    %cst_191 = arith.constant dense<0.000000e+00> : vector<128x128xf32>
    %211 = tpu.matmul %208, %210, %cst_191 {dimension_numbers = #tpu.dot_dimension_numbers<[1], [0], [0], [1], [0, 0, 1, 1], [], []>} : vector<128x128xbf16>, vector<128x128xbf16>, vector<128x128xf32> -> vector<128x128xf32>
    %212 = arith.addf %207, %211 : vector<128x128xf32>
    %c327 = arith.constant 327 : index
    %c0_192 = arith.constant 0 : index
    %213 = vector.load %arg12[%c327, %c0_192] : memref<480x128xbf16, #tpu.memory_space<vmem>>, vector<128x128xbf16>
    %c6_193 = arith.constant 6 : index
    %c0_194 = arith.constant 0 : index
    %c0_195 = arith.constant 0 : index
    %214 = vector.load %arg5[%c6_193, %c0_194, %c0_195] : memref<9x128x128xbf16, #tpu.memory_space<vmem>>, vector<1x128x128xbf16>
    %215 = vector.shape_cast %214 : vector<1x128x128xbf16> to vector<128x128xbf16>
    %cst_196 = arith.constant dense<0.000000e+00> : vector<128x128xf32>
    %216 = tpu.matmul %213, %215, %cst_196 {dimension_numbers = #tpu.dot_dimension_numbers<[1], [0], [0], [1], [0, 0, 1, 1], [], []>} : vector<128x128xbf16>, vector<128x128xbf16>, vector<128x128xf32> -> vector<128x128xf32>
    %217 = arith.addf %212, %216 : vector<128x128xf32>
    %c328 = arith.constant 328 : index
    %c0_197 = arith.constant 0 : index
    %218 = vector.load %arg12[%c328, %c0_197] : memref<480x128xbf16, #tpu.memory_space<vmem>>, vector<128x128xbf16>
    %c7_198 = arith.constant 7 : index
    %c0_199 = arith.constant 0 : index
    %c0_200 = arith.constant 0 : index
    %219 = vector.load %arg5[%c7_198, %c0_199, %c0_200] : memref<9x128x128xbf16, #tpu.memory_space<vmem>>, vector<1x128x128xbf16>
    %220 = vector.shape_cast %219 : vector<1x128x128xbf16> to vector<128x128xbf16>
    %cst_201 = arith.constant dense<0.000000e+00> : vector<128x128xf32>
    %221 = tpu.matmul %218, %220, %cst_201 {dimension_numbers = #tpu.dot_dimension_numbers<[1], [0], [0], [1], [0, 0, 1, 1], [], []>} : vector<128x128xbf16>, vector<128x128xbf16>, vector<128x128xf32> -> vector<128x128xf32>
    %222 = arith.addf %217, %221 : vector<128x128xf32>
    %c329 = arith.constant 329 : index
    %c0_202 = arith.constant 0 : index
    %223 = vector.load %arg12[%c329, %c0_202] : memref<480x128xbf16, #tpu.memory_space<vmem>>, vector<128x128xbf16>
    %c8_203 = arith.constant 8 : index
    %c0_204 = arith.constant 0 : index
    %c0_205 = arith.constant 0 : index
    %224 = vector.load %arg5[%c8_203, %c0_204, %c0_205] : memref<9x128x128xbf16, #tpu.memory_space<vmem>>, vector<1x128x128xbf16>
    %225 = vector.shape_cast %224 : vector<1x128x128xbf16> to vector<128x128xbf16>
    %cst_206 = arith.constant dense<0.000000e+00> : vector<128x128xf32>
    %226 = tpu.matmul %223, %225, %cst_206 {dimension_numbers = #tpu.dot_dimension_numbers<[1], [0], [0], [1], [0, 0, 1, 1], [], []>} : vector<128x128xbf16>, vector<128x128xbf16>, vector<128x128xf32> -> vector<128x128xf32>
    %227 = arith.addf %222, %226 : vector<128x128xf32>
    %c0_207 = arith.constant 0 : index
    %c0_208 = arith.constant 0 : index
    %228 = vector.load %arg6[%c0_207, %c0_208] : memref<1x128xf32, #tpu.memory_space<vmem>>, vector<1x128xf32>
    %229 = vector.broadcast %228 : vector<1x128xf32> to vector<128x128xf32>
    %230 = arith.addf %227, %229 : vector<128x128xf32>
    %cst_209 = arith.constant 0.000000e+00 : f32
    %231 = vector.broadcast %cst_209 : f32 to vector<128x128xf32>
    %232 = arith.maximumf %230, %231 : vector<128x128xf32>
    %233 = arith.truncf %232 : vector<128x128xf32> to vector<128x128xbf16>
    %c0_210 = arith.constant 0 : index
    %c0_211 = arith.constant 0 : index
    %234 = vector.load %arg7[%c0_210, %c0_211] : memref<128x128xbf16, #tpu.memory_space<vmem>>, vector<128x128xbf16>
    %cst_212 = arith.constant dense<0.000000e+00> : vector<128x128xf32>
    %235 = tpu.matmul %233, %234, %cst_212 {dimension_numbers = #tpu.dot_dimension_numbers<[1], [0], [0], [1], [0, 0, 1, 1], [], []>} : vector<128x128xbf16>, vector<128x128xbf16>, vector<128x128xf32> -> vector<128x128xf32>
    %c0_213 = arith.constant 0 : index
    %c0_214 = arith.constant 0 : index
    %236 = vector.load %arg8[%c0_213, %c0_214] : memref<1x128xf32, #tpu.memory_space<vmem>>, vector<1x128xf32>
    %237 = vector.broadcast %236 : vector<1x128xf32> to vector<128x128xf32>
    %238 = arith.addf %235, %237 : vector<128x128xf32>
    %c0_215 = arith.constant 0 : index
    %c256_216 = arith.constant 256 : index
    %c0_217 = arith.constant 0 : index
    %239 = vector.load %arg1[%c0_215, %c256_216, %c0_217] : memref<1x384x128xbf16, #tpu.memory_space<vmem>>, vector<1x128x128xbf16>
    %240 = vector.shape_cast %239 : vector<1x128x128xbf16> to vector<128x128xbf16>
    %c0_218 = arith.constant 0 : index
    %c0_219 = arith.constant 0 : index
    %241 = vector.load %arg9[%c0_218, %c0_219] : memref<128x128xbf16, #tpu.memory_space<vmem>>, vector<128x128xbf16>
    %cst_220 = arith.constant dense<0.000000e+00> : vector<128x128xf32>
    %242 = tpu.matmul %240, %241, %cst_220 {dimension_numbers = #tpu.dot_dimension_numbers<[1], [0], [0], [1], [0, 0, 1, 1], [], []>} : vector<128x128xbf16>, vector<128x128xbf16>, vector<128x128xf32> -> vector<128x128xf32>
    %c0_221 = arith.constant 0 : index
    %c0_222 = arith.constant 0 : index
    %243 = vector.load %arg10[%c0_221, %c0_222] : memref<1x128xf32, #tpu.memory_space<vmem>>, vector<1x128xf32>
    %244 = vector.broadcast %243 : vector<1x128xf32> to vector<128x128xf32>
    %245 = arith.addf %242, %244 : vector<128x128xf32>
    %246 = arith.addf %238, %245 : vector<128x128xf32>
    %cst_223 = arith.constant 0.000000e+00 : f32
    %247 = vector.broadcast %cst_223 : f32 to vector<128x128xf32>
    %248 = arith.maximumf %246, %247 : vector<128x128xf32>
    %249 = arith.truncf %248 : vector<128x128xf32> to vector<128x128xbf16>
    %c0_224 = arith.constant 0 : index
    %c256_225 = arith.constant 256 : index
    %c0_226 = arith.constant 0 : index
    %250 = vector.load %arg11[%c0_224, %c256_225, %c0_226] : memref<1x384x128xbf16, #tpu.memory_space<vmem>>, vector<1x128x128xbf16>
    %251 = vector.shape_cast %250 : vector<1x128x128xbf16> to vector<128x128xbf16>
    %252 = vector.shape_cast %249 : vector<128x128xbf16> to vector<1x128x128xbf16>
    tpu.vector_store %arg11[%c0_224, %c256_225, %c0_226], %252 {strides = array<i32>} : memref<1x384x128xbf16, #tpu.memory_space<vmem>>, vector<1x128x128xbf16>,
    return
  }
  func.func @transform_0(%arg0: i32) -> (i32, i32, i32) {
    %c0_i32 = arith.constant 0 : i32
    %c0_i32_0 = arith.constant 0 : i32
    %c0_i32_1 = arith.constant 0 : i32
    return %arg0, %c0_i32, %c0_i32_0 : i32, i32, i32
  }
  func.func @transform_1(%arg0: i32) -> (i32, i32) {
    %c0_i32 = arith.constant 0 : i32
    %c0_i32_0 = arith.constant 0 : i32
    %c0_i32_1 = arith.constant 0 : i32
    return %c0_i32, %c0_i32_0 : i32, i32
  }
  func.func @transform_2(%arg0: i32) -> (i32, i32) {
    %c0_i32 = arith.constant 0 : i32
    %c0_i32_0 = arith.constant 0 : i32
    %c0_i32_1 = arith.constant 0 : i32
    return %c0_i32, %c0_i32_0 : i32, i32
  }
  func.func @transform_3(%arg0: i32) -> (i32, i32) {
    %c0_i32 = arith.constant 0 : i32
    %c0_i32_0 = arith.constant 0 : i32
    %c0_i32_1 = arith.constant 0 : i32
    return %c0_i32, %c0_i32_0 : i32, i32
  }
  func.func @transform_4(%arg0: i32) -> (i32, i32, i32) {
    %c0_i32 = arith.constant 0 : i32
    %c0_i32_0 = arith.constant 0 : i32
    %c0_i32_1 = arith.constant 0 : i32
    %c0_i32_2 = arith.constant 0 : i32
    return %c0_i32, %c0_i32_0, %c0_i32_1 : i32, i32, i32
  }
  func.func @transform_5(%arg0: i32) -> (i32, i32) {
    %c0_i32 = arith.constant 0 : i32
    %c0_i32_0 = arith.constant 0 : i32
    %c0_i32_1 = arith.constant 0 : i32
    return %c0_i32, %c0_i32_0 : i32, i32
  }
  func.func @transform_6(%arg0: i32) -> (i32, i32) {
    %c0_i32 = arith.constant 0 : i32
    %c0_i32_0 = arith.constant 0 : i32
    %c0_i32_1 = arith.constant 0 : i32
    return %c0_i32, %c0_i32_0 : i32, i32
  }
  func.func @transform_7(%arg0: i32) -> (i32, i32) {
    %c0_i32 = arith.constant 0 : i32
    %c0_i32_0 = arith.constant 0 : i32
    %c0_i32_1 = arith.constant 0 : i32
    return %c0_i32, %c0_i32_0 : i32, i32
  }
  func.func @transform_8(%arg0: i32) -> (i32, i32) {
    %c0_i32 = arith.constant 0 : i32
    %c0_i32_0 = arith.constant 0 : i32
    %c0_i32_1 = arith.constant 0 : i32
    return %c0_i32, %c0_i32_0 : i32, i32
  }
  func.func @transform_9(%arg0: i32) -> (i32, i32) {
    %c0_i32 = arith.constant 0 : i32
    %c0_i32_0 = arith.constant 0 : i32
    %c0_i32_1 = arith.constant 0 : i32
    return %c0_i32, %c0_i32_0 : i32, i32
  }
  func.func @transform_10(%arg0: i32) -> (i32, i32, i32) {
    %c0_i32 = arith.constant 0 : i32
    %c0_i32_0 = arith.constant 0 : i32
    %c0_i32_1 = arith.constant 0 : i32
    return %arg0, %c0_i32, %c0_i32_0 : i32, i32, i32
  }
}

</mosaic_0001>

<llo_original>
// kernel: tile.8
$region0: #{tile.8}
  #allocation0 [shape = 's32[1]{0}', space=sflag, size = 0x4, scoped, tag = 'scoped memory for tile.8']
  %s0 = inlined_call_operand.vmem [shape: f32[24], index: 0, kind: input, shape index: {}]
  %s1 = inlined_call_operand.vmem [shape: f32[16,24], index: 1, kind: output, shape index: {}]
  // Predicated region
  $region2: #{tile.8} parent=0 // pred_check
    _
  $region3: #{tile.8} parent=0 // pred_check_branch
    %3 = sbr.rel (0) target = $region5
  $region4: #{tile.8} parent=0 // pred_region
    _
  $region5: #{tile.8} parent=0 // pred_fallthru
    _
  %v4 = vld [vmem:[%s0] ss:$0 sm:$0xff]
  %5 = vst [vmem:[%s1] sm:$0xff] %v4
  %s6 = scalar_lea.vmem %s1, 8
  %7 = vst [vmem:[%s6] sm:$0xff] %v4

// kernel: tile.0
$region0: #{tile.0}
  %s0 = inlined_call_operand.vmem [shape: f32[16,24], index: 0, kind: input, shape index: {}]
  %s1 = inlined_call_operand.vmem [shape: f32[384,1], index: 1, kind: output, shape index: {}]
  %v2 = vld [vmem:[%s0] sm:$0xff]
  %vm3 = vcmask 7168
  %4 = vst.msk [vmem:[%s1] ss:$24 sm:$0xf] %vm3, %v2
  %5 = vst.msk [vmem:[%s1] ss:$24 sm:$0xf0] %vm3, %v2
  %s6 = scalar_lea.vmem %s0, 8
  %v7 = vld [vmem:[%s6] sm:$0xff]
  %vm8 = vcmask 7168
  %s9 = scalar_lea.vmem %s1, 192
  %10 = vst.msk [vmem:[%s9] ss:$24 sm:$0xf] %vm8, %v7
  %s11 = scalar_lea.vmem %s1, 192
  %12 = vst.msk [vmem:[%s11] ss:$24 sm:$0xf0] %vm8, %v7
  %v13 = vld.sshfl [vmem:[%s0] sm:$0xff pattern:$0x56741230]
  %14 = vrot.lane.b32.xlu0 %v13, 127
  %v15 = vpop.permute.xlu0 %14
  %vm16 = vcmask 7168
  %s17 = scalar_lea.vmem %s1, 1
  %18 = vst.msk [vmem:[%s17] ss:$72 sm:$0x3] %vm16, %v15
  %s19 = scalar_lea.vmem %s1, 97
  %20 = vst.msk [vmem:[%s19] ss:$-24 sm:$0xc] %vm16, %v15
  %s21 = scalar_lea.vmem %s1, 4294967105
  %22 = vst.msk [vmem:[%s21] ss:$72 sm:$0x30] %vm16, %v15
  %s23 = scalar_lea.vmem %s1, 289
  %24 = vst.msk [vmem:[%s23] ss:$-24 sm:$0xc0] %vm16, %v15
  %s25 = scalar_lea.vmem %s0, 8
  %v26 = vld.sshfl [vmem:[%s25] sm:$0xff pattern:$0x56741230]
  %27 = vrot.lane.b32.xlu0 %v26, 127
  %v28 = vpop.permute.xlu0 %27
  %vm29 = vcmask 7168
  %s30 = scalar_lea.vmem %s1, 193
  %31 = vst.msk [vmem:[%s30] ss:$72 sm:$0x3] %vm29, %v28
  %s32 = scalar_lea.vmem %s1, 289
  %33 = vst.msk [vmem:[%s32] ss:$-24 sm:$0xc] %vm29, %v28
  %s34 = scalar_lea.vmem %s1, 1
  %35 = vst.msk [vmem:[%s34] ss:$72 sm:$0x30] %vm29, %v28
  %s36 = scalar_lea.vmem %s1, 481
  %37 = vst.msk [vmem:[%s36] ss:$-24 sm:$0xc0] %vm29, %v28
  %v38 = vld.sshfl [vmem:[%s0] sm:$0xff pattern:$0x56741230]
  %39 = vrot.lane.b32.xlu0 %v38, 126
  %v40 = vpop.permute.xlu0 %39
  %vm41 = vcmask 7168
  %s42 = scalar_lea.vmem %s1, 2
  %43 = vst.msk [vmem:[%s42] ss:$72 sm:$0x3] %vm41, %v40
  %s44 = scalar_lea.vmem %s1, 98
  %45 = vst.msk [vmem:[%s44] ss:$-24 sm:$0xc] %vm41, %v40
  %s46 = scalar_lea.vmem %s1, 4294967106
  %47 = vst.msk [vmem:[%s46] ss:$72 sm:$0x30] %vm41, %v40
  %s48 = scalar_lea.vmem %s1, 290
  %49 = vst.msk [vmem:[%s48] ss:$-24 sm:$0xc0] %vm41, %v40
  %s50 = scalar_lea.vmem %s0, 8
  %v51 = vld.sshfl [vmem:[%s50] sm:$0xff pattern:$0x56741230]
  %52 = vrot.lane.b32.xlu0 %v51, 126
  %v53 = vpop.permute.xlu0 %52
  %vm54 = vcmask 7168
  %s55 = scalar_lea.vmem %s1, 194
  %56 = vst.msk [vmem:[%s55] ss:$72 sm:$0x3] %vm54, %v53
  %s57 = scalar_lea.vmem %s1, 290
  %58 = vst.msk [vmem:[%s57] ss:$-24 sm:$0xc] %vm54, %v53
  %s59 = scalar_lea.vmem %s1, 2
  %60 = vst.msk [vmem:[%s59] ss:$72 sm:$0x30] %vm54, %v53
  %s61 = scalar_lea.vmem %s1, 482
  %62 = vst.msk [vmem:[%s61] ss:$-24 sm:$0xc0] %vm54, %v53
  %v63 = vld.sshfl [vmem:[%s0] sm:$0xff pattern:$0x56741230]
  %64 = vrot.lane.b32.xlu0 %v63, 125
  %v65 = vpop.permute.xlu0 %64
  %vm66 = vcmask 7168
  %s67 = scalar_lea.vmem %s1, 3
  %68 = vst.msk [vmem:[%s67] ss:$72 sm:$0x3] %vm66, %v65
  %s69 = scalar_lea.vmem %s1, 99
  %70 = vst.msk [vmem:[%s69] ss:$-24 sm:$0xc] %vm66, %v65
  %s71 = scalar_lea.vmem %s1, 4294967107
  %72 = vst.msk [vmem:[%s71] ss:$72 sm:$0x30] %vm66, %v65
  %s73 = scalar_lea.vmem %s1, 291
  %74 = vst.msk [vmem:[%s73] ss:$-24 sm:$0xc0] %vm66, %v65
  %s75 = scalar_lea.vmem %s0, 8
  %v76 = vld.sshfl [vmem:[%s75] sm:$0xff pattern:$0x56741230]
  %77 = vrot.lane.b32.xlu0 %v76, 125
  %v78 = vpop.permute.xlu0 %77
  %vm79 = vcmask 7168
  %s80 = scalar_lea.vmem %s1, 195
  %81 = vst.msk [vmem:[%s80] ss:$72 sm:$0x3] %vm79, %v78
  %s82 = scalar_lea.vmem %s1, 291
  %83 = vst.msk [vmem:[%s82] ss:$-24 sm:$0xc] %vm79, %v78
  %s84 = scalar_lea.vmem %s1, 3
  %85 = vst.msk [vmem:[%s84] ss:$72 sm:$0x30] %vm79, %v78
  %s86 = scalar_lea.vmem %s1, 483
  %87 = vst.msk [vmem:[%s86] ss:$-24 sm:$0xc0] %vm79, %v78
  %v88 = vld.sshfl [vmem:[%s0] sm:$0xff pattern:$0x56741230]
  %89 = vrot.lane.b32.xlu0 %v88, 124
  %v90 = vpop.permute.xlu0 %89
  %vm91 = vcmask 7168
  %s92 = scalar_lea.vmem %s1, 4
  %93 = vst.msk [vmem:[%s92] ss:$72 sm:$0x3] %vm91, %v90
  %s94 = scalar_lea.vmem %s1, 100
  %95 = vst.msk [vmem:[%s94] ss:$-24 sm:$0xc] %vm91, %v90
  %s96 = scalar_lea.vmem %s1, 4294967108
  %97 = vst.msk [vmem:[%s96] ss:$72 sm:$0x30] %vm91, %v90
  %s98 = scalar_lea.vmem %s1, 292
  %99 = vst.msk [vmem:[%s98] ss:$-24 sm:$0xc0] %vm91, %v90
  %s100 = scalar_lea.vmem %s0, 8
  %v101 = vld.sshfl [vmem:[%s100] sm:$0xff pattern:$0x56741230]
  %102 = vrot.lane.b32.xlu0 %v101, 124
  %v103 = vpop.permute.xlu0 %102
  %vm104 = vcmask 7168
  %s105 = scalar_lea.vmem %s1, 196
  %106 = vst.msk [vmem:[%s105] ss:$72 sm:$0x3] %vm104, %v103
  %s107 = scalar_lea.vmem %s1, 292
  %108 = vst.msk [vmem:[%s107] ss:$-24 sm:$0xc] %vm104, %v103
  %s109 = scalar_lea.vmem %s1, 4
  %110 = vst.msk [vmem:[%s109] ss:$72 sm:$0x30] %vm104, %v103
  %s111 = scalar_lea.vmem %s1, 484
  %112 = vst.msk [vmem:[%s111] ss:$-24 sm:$0xc0] %vm104, %v103
  %v113 = vld.sshfl [vmem:[%s0] sm:$0xff pattern:$0x56741230]
  %114 = vrot.lane.b32.xlu0 %v113, 123
  %v115 = vpop.permute.xlu0 %114
  %vm116 = vcmask 7168
  %s117 = scalar_lea.vmem %s1, 5
  %118 = vst.msk [vmem:[%s117] ss:$72 sm:$0x3] %vm116, %v115
  %s119 = scalar_lea.vmem %s1, 101
  %120 = vst.msk [vmem:[%s119] ss:$-24 sm:$0xc] %vm116, %v115
  %s121 = scalar_lea.vmem %s1, 4294967109
  %122 = vst.msk [vmem:[%s121] ss:$72 sm:$0x30] %vm116, %v115
  %s123 = scalar_lea.vmem %s1, 293
  %124 = vst.msk [vmem:[%s123] ss:$-24 sm:$0xc0] %vm116, %v115
  %s125 = scalar_lea.vmem %s0, 8
  %v126 = vld.sshfl [vmem:[%s125] sm:$0xff pattern:$0x56741230]
  %127 = vrot.lane.b32.xlu0 %v126, 123
  %v128 = vpop.permute.xlu0 %127
  %vm129 = vcmask 7168
  %s130 = scalar_lea.vmem %s1, 197
  %131 = vst.msk [vmem:[%s130] ss:$72 sm:$0x3] %vm129, %v128
  %s132 = scalar_lea.vmem %s1, 293
  %133 = vst.msk [vmem:[%s132] ss:$-24 sm:$0xc] %vm129, %v128
  %s134 = scalar_lea.vmem %s1, 5
  %135 = vst.msk [vmem:[%s134] ss:$72 sm:$0x30] %vm129, %v128
  %s136 = scalar_lea.vmem %s1, 485
  %137 = vst.msk [vmem:[%s136] ss:$-24 sm:$0xc0] %vm129, %v128
  %v138 = vld.sshfl [vmem:[%s0] sm:$0xff pattern:$0x56741230]
  %139 = vrot.lane.b32.xlu0 %v138, 122
  %v140 = vpop.permute.xlu0 %139
  %vm141 = vcmask 7168
  %s142 = scalar_lea.vmem %s1, 6
  %143 = vst.msk [vmem:[%s142] ss:$72 sm:$0x3] %vm141, %v140
  %s144 = scalar_lea.vmem %s1, 102
  %145 = vst.msk [vmem:[%s144] ss:$-24 sm:$0xc] %vm141, %v140
  %s146 = scalar_lea.vmem %s1, 4294967110
  %147 = vst.msk [vmem:[%s146] ss:$72 sm:$0x30] %vm141, %v140
  %s148 = scalar_lea.vmem %s1, 294
  %149 = vst.msk [vmem:[%s148] ss:$-24 sm:$0xc0] %vm141, %v140
  %s150 = scalar_lea.vmem %s0, 8
  %v151 = vld.sshfl [vmem:[%s150] sm:$0xff pattern:$0x56741230]
  %152 = vrot.lane.b32.xlu0 %v151, 122
  %v153 = vpop.permute.xlu0 %152
  %vm154 = vcmask 7168
  %s155 = scalar_lea.vmem %s1, 198
  %156 = vst.msk [vmem:[%s155] ss:$72 sm:$0x3] %vm154, %v153
  %s157 = scalar_lea.vmem %s1, 294
  %158 = vst.msk [vmem:[%s157] ss:$-24 sm:$0xc] %vm154, %v153
  %s159 = scalar_lea.vmem %s1, 6
  %160 = vst.msk [vmem:[%s159] ss:$72 sm:$0x30] %vm154, %v153
  %s161 = scalar_lea.vmem %s1, 486
  %162 = vst.msk [vmem:[%s161] ss:$-24 sm:$0xc0] %vm154, %v153
  %v163 = vld.sshfl [vmem:[%s0] sm:$0xff pattern:$0x56741230]
  %164 = vrot.lane.b32.xlu0 %v163, 121
  %v165 = vpop.permute.xlu0 %164
  %vm166 = vcmask 7168
  %s167 = scalar_lea.vmem %s1, 7
  %168 = vst.msk [vmem:[%s167] ss:$72 sm:$0x3] %vm166, %v165
  %s169 = scalar_lea.vmem %s1, 103
  %170 = vst.msk [vmem:[%s169] ss:$-24 sm:$0xc] %vm166, %v165
  %s171 = scalar_lea.vmem %s1, 4294967111
  %172 = vst.msk [vmem:[%s171] ss:$72 sm:$0x30] %vm166, %v165
  %s173 = scalar_lea.vmem %s1, 295
  %174 = vst.msk [vmem:[%s173] ss:$-24 sm:$0xc0] %vm166, %v165
  %s175 = scalar_lea.vmem %s0, 8
  %v176 = vld.sshfl [vmem:[%s175] sm:$0xff pattern:$0x56741230]
  %177 = vrot.lane.b32.xlu0 %v176, 121
  %v178 = vpop.permute.xlu0 %177
  %vm179 = vcmask 7168
  %s180 = scalar_lea.vmem %s1, 199
  %181 = vst.msk [vmem:[%s180] ss:$72 sm:$0x3] %vm179, %v178
  %s182 = scalar_lea.vmem %s1, 295
  %183 = vst.msk [vmem:[%s182] ss:$-24 sm:$0xc] %vm179, %v178
  %s184 = scalar_lea.vmem %s1, 7
  %185 = vst.msk [vmem:[%s184] ss:$72 sm:$0x30] %vm179, %v178
  %s186 = scalar_lea.vmem %s1, 487
  %187 = vst.msk [vmem:[%s186] ss:$-24 sm:$0xc0] %vm179, %v178
  %v188 = vld.sshfl [vmem:[%s0] sm:$0xff pattern:$0x67452301]
  %189 = vrot.lane.b32.xlu0 %v188, 120
  %v190 = vpop.permute.xlu0 %189
  %vm191 = vcmask 7168
  %s192 = scalar_lea.vmem %s1, 32
  %193 = vst.msk [vmem:[%s192] ss:$-24 sm:$0x3] %vm191, %v190
  %s194 = scalar_lea.vmem %s1, 128
  %195 = vst.msk [vmem:[%s194] ss:$-24 sm:$0xc] %vm191, %v190
  %s196 = scalar_lea.vmem %s1, 224
  %197 = vst.msk [vmem:[%s196] ss:$-24 sm:$0x30] %vm191, %v190
  %s198 = scalar_lea.vmem %s1, 320
  %199 = vst.msk [vmem:[%s198] ss:$-24 sm:$0xc0] %vm191, %v190
  %s200 = scalar_lea.vmem %s0, 8
  %v201 = vld.sshfl [vmem:[%s200] sm:$0xff pattern:$0x67452301]
  %202 = vrot.lane.b32.xlu0 %v201, 120
  %v203 = vpop.permute.xlu0 %202
  %vm204 = vcmask 7168
  %s205 = scalar_lea.vmem %s1, 224
  %206 = vst.msk [vmem:[%s205] ss:$-24 sm:$0x3] %vm204, %v203
  %s207 = scalar_lea.vmem %s1, 320
  %208 = vst.msk [vmem:[%s207] ss:$-24 sm:$0xc] %vm204, %v203
  %s209 = scalar_lea.vmem %s1, 416
  %210 = vst.msk [vmem:[%s209] ss:$-24 sm:$0x30] %vm204, %v203
  %s211 = scalar_lea.vmem %s1, 512
  %212 = vst.msk [vmem:[%s211] ss:$-24 sm:$0xc0] %vm204, %v203
  %v213 = vld.sshfl [vmem:[%s0] sm:$0xff pattern:$0x67452301]
  %214 = vrot.lane.b32.xlu0 %v213, 119
  %v215 = vpop.permute.xlu0 %214
  %vm216 = vcmask 7168
  %s217 = scalar_lea.vmem %s1, 33
  %218 = vst.msk [vmem:[%s217] ss:$-24 sm:$0x3] %vm216, %v215
  %s219 = scalar_lea.vmem %s1, 129
  %220 = vst.msk [vmem:[%s219] ss:$-24 sm:$0xc] %vm216, %v215
  %s221 = scalar_lea.vmem %s1, 225
  %222 = vst.msk [vmem:[%s221] ss:$-24 sm:$0x30] %vm216, %v215
  %s223 = scalar_lea.vmem %s1, 321
  %224 = vst.msk [vmem:[%s223] ss:$-24 sm:$0xc0] %vm216, %v215
  %s225 = scalar_lea.vmem %s0, 8
  %v226 = vld.sshfl [vmem:[%s225] sm:$0xff pattern:$0x67452301]
  %227 = vrot.lane.b32.xlu0 %v226, 119
  %v228 = vpop.permute.xlu0 %227
  %vm229 = vcmask 7168
  %s230 = scalar_lea.vmem %s1, 225
  %231 = vst.msk [vmem:[%s230] ss:$-24 sm:$0x3] %vm229, %v228
  %s232 = scalar_lea.vmem %s1, 321
  %233 = vst.msk [vmem:[%s232] ss:$-24 sm:$0xc] %vm229, %v228
  %s234 = scalar_lea.vmem %s1, 417
  %235 = vst.msk [vmem:[%s234] ss:$-24 sm:$0x30] %vm229, %v228
  %s236 = scalar_lea.vmem %s1, 513
  %237 = vst.msk [vmem:[%s236] ss:$-24 sm:$0xc0] %vm229, %v228
  %v238 = vld.sshfl [vmem:[%s0] sm:$0xff pattern:$0x67452301]
  %239 = vrot.lane.b32.xlu0 %v238, 118
  %v240 = vpop.permute.xlu0 %239
  %vm241 = vcmask 7168
  %s242 = scalar_lea.vmem %s1, 34
  %243 = vst.msk [vmem:[%s242] ss:$-24 sm:$0x3] %vm241, %v240
  %s244 = scalar_lea.vmem %s1, 130
  %245 = vst.msk [vmem:[%s244] ss:$-24 sm:$0xc] %vm241, %v240
  %s246 = scalar_lea.vmem %s1, 226
  %247 = vst.msk [vmem:[%s246] ss:$-24 sm:$0x30] %vm241, %v240
  %s248 = scalar_lea.vmem %s1, 322
  %249 = vst.msk [vmem:[%s248] ss:$-24 sm:$0xc0] %vm241, %v240
  %s250 = scalar_lea.vmem %s0, 8
  %v251 = vld.sshfl [vmem:[%s250] sm:$0xff pattern:$0x67452301]
  %252 = vrot.lane.b32.xlu0 %v251, 118
  %v253 = vpop.permute.xlu0 %252
  %vm254 = vcmask 7168
  %s255 = scalar_lea.vmem %s1, 226
  %256 = vst.msk [vmem:[%s255] ss:$-24 sm:$0x3] %vm254, %v253
  %s257 = scalar_lea.vmem %s1, 322
  %258 = vst.msk [vmem:[%s257] ss:$-24 sm:$0xc] %vm254, %v253
  %s259 = scalar_lea.vmem %s1, 418
  %260 = vst.msk [vmem:[%s259] ss:$-24 sm:$0x30] %vm254, %v253
  %s261 = scalar_lea.vmem %s1, 514
  %262 = vst.msk [vmem:[%s261] ss:$-24 sm:$0xc0] %vm254, %v253
  %v263 = vld.sshfl [vmem:[%s0] sm:$0xff pattern:$0x67452301]
  %264 = vrot.lane.b32.xlu0 %v263, 117
  %v265 = vpop.permute.xlu0 %264
  %vm266 = vcmask 7168
  %s267 = scalar_lea.vmem %s1, 35
  %268 = vst.msk [vmem:[%s267] ss:$-24 sm:$0x3] %vm266, %v265
  %s269 = scalar_lea.vmem %s1, 131
  %270 = vst.msk [vmem:[%s269] ss:$-24 sm:$0xc] %vm266, %v265
  %s271 = scalar_lea.vmem %s1, 227
  %272 = vst.msk [vmem:[%s271] ss:$-24 sm:$0x30] %vm266, %v265
  %s273 = scalar_lea.vmem %s1, 323
  %274 = vst.msk [vmem:[%s273] ss:$-24 sm:$0xc0] %vm266, %v265
  %s275 = scalar_lea.vmem %s0, 8
  %v276 = vld.sshfl [vmem:[%s275] sm:$0xff pattern:$0x67452301]
  %277 = vrot.lane.b32.xlu0 %v276, 117
  %v278 = vpop.permute.xlu0 %277
  %vm279 = vcmask 7168
  %s280 = scalar_lea.vmem %s1, 227
  %281 = vst.msk [vmem:[%s280] ss:$-24 sm:$0x3] %vm279, %v278
  %s282 = scalar_lea.vmem %s1, 323
  %283 = vst.msk [vmem:[%s282] ss:$-24 sm:$0xc] %vm279, %v278
  %s284 = scalar_lea.vmem %s1, 419
  %285 = vst.msk [vmem:[%s284] ss:$-24 sm:$0x30] %vm279, %v278
  %s286 = scalar_lea.vmem %s1, 515
  %287 = vst.msk [vmem:[%s286] ss:$-24 sm:$0xc0] %vm279, %v278
  %v288 = vld.sshfl [vmem:[%s0] sm:$0xff pattern:$0x67452301]
  %289 = vrot.lane.b32.xlu0 %v288, 116
  %v290 = vpop.permute.xlu0 %289
  %vm291 = vcmask 7168
  %s292 = scalar_lea.vmem %s1, 36
  %293 = vst.msk [vmem:[%s292] ss:$-24 sm:$0x3] %vm291, %v290
  %s294 = scalar_lea.vmem %s1, 132
  %295 = vst.msk [vmem:[%s294] ss:$-24 sm:$0xc] %vm291, %v290
  %s296 = scalar_lea.vmem %s1, 228
  %297 = vst.msk [vmem:[%s296] ss:$-24 sm:$0x30] %vm291, %v290
  %s298 = scalar_lea.vmem %s1, 324
  %299 = vst.msk [vmem:[%s298] ss:$-24 sm:$0xc0] %vm291, %v290
  %s300 = scalar_lea.vmem %s0, 8
  %v301 = vld.sshfl [vmem:[%s300] sm:$0xff pattern:$0x67452301]
  %302 = vrot.lane.b32.xlu0 %v301, 116
  %v303 = vpop.permute.xlu0 %302
  %vm304 = vcmask 7168
  %s305 = scalar_lea.vmem %s1, 228
  %306 = vst.msk [vmem:[%s305] ss:$-24 sm:$0x3] %vm304, %v303
  %s307 = scalar_lea.vmem %s1, 324
  %308 = vst.msk [vmem:[%s307] ss:$-24 sm:$0xc] %vm304, %v303
  %s309 = scalar_lea.vmem %s1, 420
  %310 = vst.msk [vmem:[%s309] ss:$-24 sm:$0x30] %vm304, %v303
  %s311 = scalar_lea.vmem %s1, 516
  %312 = vst.msk [vmem:[%s311] ss:$-24 sm:$0xc0] %vm304, %v303
  %v313 = vld.sshfl [vmem:[%s0] sm:$0xff pattern:$0x67452301]
  %314 = vrot.lane.b32.xlu0 %v313, 115
  %v315 = vpop.permute.xlu0 %314
  %vm316 = vcmask 7168
  %s317 = scalar_lea.vmem %s1, 37
  %318 = vst.msk [vmem:[%s317] ss:$-24 sm:$0x3] %vm316, %v315
  %s319 = scalar_lea.vmem %s1, 133
  %320 = vst.msk [vmem:[%s319] ss:$-24 sm:$0xc] %vm316, %v315
  %s321 = scalar_lea.vmem %s1, 229
  %322 = vst.msk [vmem:[%s321] ss:$-24 sm:$0x30] %vm316, %v315
  %s323 = scalar_lea.vmem %s1, 325
  %324 = vst.msk [vmem:[%s323] ss:$-24 sm:$0xc0] %vm316, %v315
  %s325 = scalar_lea.vmem %s0, 8
  %v326 = vld.sshfl [vmem:[%s325] sm:$0xff pattern:$0x67452301]
  %327 = vrot.lane.b32.xlu0 %v326, 115
  %v328 = vpop.permute.xlu0 %327
  %vm329 = vcmask 7168
  %s330 = scalar_lea.vmem %s1, 229
  %331 = vst.msk [vmem:[%s330] ss:$-24 sm:$0x3] %vm329, %v328
  %s332 = scalar_lea.vmem %s1, 325
  %333 = vst.msk [vmem:[%s332] ss:$-24 sm:$0xc] %vm329, %v328
  %s334 = scalar_lea.vmem %s1, 421
  %335 = vst.msk [vmem:[%s334] ss:$-24 sm:$0x30] %vm329, %v328
  %s336 = scalar_lea.vmem %s1, 517
  %337 = vst.msk [vmem:[%s336] ss:$-24 sm:$0xc0] %vm329, %v328
  %v338 = vld.sshfl [vmem:[%s0] sm:$0xff pattern:$0x67452301]
  %339 = vrot.lane.b32.xlu0 %v338, 114
  %v340 = vpop.permute.xlu0 %339
  %vm341 = vcmask 7168
  %s342 = scalar_lea.vmem %s1, 38
  %343 = vst.msk [vmem:[%s342] ss:$-24 sm:$0x3] %vm341, %v340
  %s344 = scalar_lea.vmem %s1, 134
  %345 = vst.msk [vmem:[%s344] ss:$-24 sm:$0xc] %vm341, %v340
  %s346 = scalar_lea.vmem %s1, 230
  %347 = vst.msk [vmem:[%s346] ss:$-24 sm:$0x30] %vm341, %v340
  %s348 = scalar_lea.vmem %s1, 326
  %349 = vst.msk [vmem:[%s348] ss:$-24 sm:$0xc0] %vm341, %v340
  %s350 = scalar_lea.vmem %s0, 8
  %v351 = vld.sshfl [vmem:[%s350] sm:$0xff pattern:$0x67452301]
  %352 = vrot.lane.b32.xlu0 %v351, 114
  %v353 = vpop.permute.xlu0 %352
  %vm354 = vcmask 7168
  %s355 = scalar_lea.vmem %s1, 230
  %356 = vst.msk [vmem:[%s355] ss:$-24 sm:$0x3] %vm354, %v353
  %s357 = scalar_lea.vmem %s1, 326
  %358 = vst.msk [vmem:[%s357] ss:$-24 sm:$0xc] %vm354, %v353
  %s359 = scalar_lea.vmem %s1, 422
  %360 = vst.msk [vmem:[%s359] ss:$-24 sm:$0x30] %vm354, %v353
  %s361 = scalar_lea.vmem %s1, 518
  %362 = vst.msk [vmem:[%s361] ss:$-24 sm:$0xc0] %vm354, %v353
  %v363 = vld.sshfl [vmem:[%s0] sm:$0xff pattern:$0x67452301]
  %364 = vrot.lane.b32.xlu0 %v363, 113
  %v365 = vpop.permute.xlu0 %364
  %vm366 = vcmask 7168
  %s367 = scalar_lea.vmem %s1, 39
  %368 = vst.msk [vmem:[%s367] ss:$-24 sm:$0x3] %vm366, %v365
  %s369 = scalar_lea.vmem %s1, 135
  %370 = vst.msk [vmem:[%s369] ss:$-24 sm:$0xc] %vm366, %v365
  %s371 = scalar_lea.vmem %s1, 231
  %372 = vst.msk [vmem:[%s371] ss:$-24 sm:$0x30] %vm366, %v365
  %s373 = scalar_lea.vmem %s1, 327
  %374 = vst.msk [vmem:[%s373] ss:$-24 sm:$0xc0] %vm366, %v365
  %s375 = scalar_lea.vmem %s0, 8
  %v376 = vld.sshfl [vmem:[%s375] sm:$0xff pattern:$0x67452301]
  %377 = vrot.lane.b32.xlu0 %v376, 113
  %v378 = vpop.permute.xlu0 %377
  %vm379 = vcmask 7168
  %s380 = scalar_lea.vmem %s1, 231
  %381 = vst.msk [vmem:[%s380] ss:$-24 sm:$0x3] %vm379, %v378
  %s382 = scalar_lea.vmem %s1, 327
  %383 = vst.msk [vmem:[%s382] ss:$-24 sm:$0xc] %vm379, %v378
  %s384 = scalar_lea.vmem %s1, 423
  %385 = vst.msk [vmem:[%s384] ss:$-24 sm:$0x30] %vm379, %v378
  %s386 = scalar_lea.vmem %s1, 519
  %387 = vst.msk [vmem:[%s386] ss:$-24 sm:$0xc0] %vm379, %v378
  %v388 = vld.sshfl [vmem:[%s0] sm:$0xff pattern:$0x74563012]
  %389 = vrot.lane.b32.xlu0 %v388, 112
  %v390 = vpop.permute.xlu0 %389
  %vm391 = vcmask 7168
  %s392 = scalar_lea.vmem %s1, 64
  %393 = vst.msk [vmem:[%s392] ss:$-24 sm:$0x7] %vm391, %v390
  %s394 = scalar_lea.vmem %s1, 4294967168
  %395 = vst.msk [vmem:[%s394] ss:$72 sm:$0x18] %vm391, %v390
  %s396 = scalar_lea.vmem %s1, 256
  %397 = vst.msk [vmem:[%s396] ss:$-24 sm:$0x60] %vm391, %v390
  %s398 = scalar_lea.vmem %s1, 177
  %399 = vst.msk [vmem:[%s398] sm:$0x80] %vm391, %v390
  %s400 = scalar_lea.vmem %s0, 8
  %v401 = vld.sshfl [vmem:[%s400] sm:$0xff pattern:$0x74563012]
  %402 = vrot.lane.b32.xlu0 %v401, 112
  %v403 = vpop.permute.xlu0 %402
  %vm404 = vcmask 7168
  %s405 = scalar_lea.vmem %s1, 256
  %406 = vst.msk [vmem:[%s405] ss:$-24 sm:$0x7] %vm404, %v403
  %s407 = scalar_lea.vmem %s1, 64
  %408 = vst.msk [vmem:[%s407] ss:$72 sm:$0x18] %vm404, %v403
  %s409 = scalar_lea.vmem %s1, 448
  %410 = vst.msk [vmem:[%s409] ss:$-24 sm:$0x60] %vm404, %v403
  %s411 = scalar_lea.vmem %s1, 369
  %412 = vst.msk [vmem:[%s411] sm:$0x80] %vm404, %v403
  %v413 = vld.sshfl [vmem:[%s0] sm:$0xff pattern:$0x74563012]
  %414 = vrot.lane.b32.xlu0 %v413, 111
  %v415 = vpop.permute.xlu0 %414
  %vm416 = vcmask 7168
  %s417 = scalar_lea.vmem %s1, 65
  %418 = vst.msk [vmem:[%s417] ss:$-24 sm:$0x7] %vm416, %v415
  %s419 = scalar_lea.vmem %s1, 4294967169
  %420 = vst.msk [vmem:[%s419] ss:$72 sm:$0x18] %vm416, %v415
  %s421 = scalar_lea.vmem %s1, 257
  %422 = vst.msk [vmem:[%s421] ss:$-24 sm:$0x60] %vm416, %v415
  %s423 = scalar_lea.vmem %s1, 178
  %424 = vst.msk [vmem:[%s423] sm:$0x80] %vm416, %v415
  %s425 = scalar_lea.vmem %s0, 8
  %v426 = vld.sshfl [vmem:[%s425] sm:$0xff pattern:$0x74563012]
  %427 = vrot.lane.b32.xlu0 %v426, 111
  %v428 = vpop.permute.xlu0 %427
  %vm429 = vcmask 7168
  %s430 = scalar_lea.vmem %s1, 257
  %431 = vst.msk [vmem:[%s430] ss:$-24 sm:$0x7] %vm429, %v428
  %s432 = scalar_lea.vmem %s1, 65
  %433 = vst.msk [vmem:[%s432] ss:$72 sm:$0x18] %vm429, %v428
  %s434 = scalar_lea.vmem %s1, 449
  %435 = vst.msk [vmem:[%s434] ss:$-24 sm:$0x60] %vm429, %v428
  %s436 = scalar_lea.vmem %s1, 370
  %437 = vst.msk [vmem:[%s436] sm:$0x80] %vm429, %v428
  %v438 = vld.sshfl [vmem:[%s0] sm:$0xff pattern:$0x74563012]
  %439 = vrot.lane.b32.xlu0 %v438, 110
  %v440 = vpop.permute.xlu0 %439
  %vm441 = vcmask 7168
  %s442 = scalar_lea.vmem %s1, 66
  %443 = vst.msk [vmem:[%s442] ss:$-24 sm:$0x7] %vm441, %v440
  %s444 = scalar_lea.vmem %s1, 4294967170
  %445 = vst.msk [vmem:[%s444] ss:$72 sm:$0x18] %vm441, %v440
  %s446 = scalar_lea.vmem %s1, 258
  %447 = vst.msk [vmem:[%s446] ss:$-24 sm:$0x60] %vm441, %v440
  %s448 = scalar_lea.vmem %s1, 179
  %449 = vst.msk [vmem:[%s448] sm:$0x80] %vm441, %v440
  %s450 = scalar_lea.vmem %s0, 8
  %v451 = vld.sshfl [vmem:[%s450] sm:$0xff pattern:$0x74563012]
  %452 = vrot.lane.b32.xlu0 %v451, 110
  %v453 = vpop.permute.xlu0 %452
  %vm454 = vcmask 7168
  %s455 = scalar_lea.vmem %s1, 258
  %456 = vst.msk [vmem:[%s455] ss:$-24 sm:$0x7] %vm454, %v453
  %s457 = scalar_lea.vmem %s1, 66
  %458 = vst.msk [vmem:[%s457] ss:$72 sm:$0x18] %vm454, %v453
  %s459 = scalar_lea.vmem %s1, 450
  %460 = vst.msk [vmem:[%s459] ss:$-24 sm:$0x60] %vm454, %v453
  %s461 = scalar_lea.vmem %s1, 371
  %462 = vst.msk [vmem:[%s461] sm:$0x80] %vm454, %v453
  %v463 = vld.sshfl [vmem:[%s0] sm:$0xff pattern:$0x74563012]
  %464 = vrot.lane.b32.xlu0 %v463, 109
  %v465 = vpop.permute.xlu0 %464
  %vm466 = vcmask 7168
  %s467 = scalar_lea.vmem %s1, 67
  %468 = vst.msk [vmem:[%s467] ss:$-24 sm:$0x7] %vm466, %v465
  %s469 = scalar_lea.vmem %s1, 4294967171
  %470 = vst.msk [vmem:[%s469] ss:$72 sm:$0x18] %vm466, %v465
  %s471 = scalar_lea.vmem %s1, 259
  %472 = vst.msk [vmem:[%s471] ss:$-24 sm:$0x60] %vm466, %v465
  %s473 = scalar_lea.vmem %s1, 180
  %474 = vst.msk [vmem:[%s473] sm:$0x80] %vm466, %v465
  %s475 = scalar_lea.vmem %s0, 8
  %v476 = vld.sshfl [vmem:[%s475] sm:$0xff pattern:$0x74563012]
  %477 = vrot.lane.b32.xlu0 %v476, 109
  %v478 = vpop.permute.xlu0 %477
  %vm479 = vcmask 7168
  %s480 = scalar_lea.vmem %s1, 259
  %481 = vst.msk [vmem:[%s480] ss:$-24 sm:$0x7] %vm479, %v478
  %s482 = scalar_lea.vmem %s1, 67
  %483 = vst.msk [vmem:[%s482] ss:$72 sm:$0x18] %vm479, %v478
  %s484 = scalar_lea.vmem %s1, 451
  %485 = vst.msk [vmem:[%s484] ss:$-24 sm:$0x60] %vm479, %v478
  %s486 = scalar_lea.vmem %s1, 372
  %487 = vst.msk [vmem:[%s486] sm:$0x80] %vm479, %v478
  %v488 = vld.sshfl [vmem:[%s0] sm:$0xff pattern:$0x74563012]
  %489 = vrot.lane.b32.xlu0 %v488, 108
  %v490 = vpop.permute.xlu0 %489
  %vm491 = vcmask 7168
  %s492 = scalar_lea.vmem %s1, 68
  %493 = vst.msk [vmem:[%s492] ss:$-24 sm:$0x7] %vm491, %v490
  %s494 = scalar_lea.vmem %s1, 4294967172
  %495 = vst.msk [vmem:[%s494] ss:$72 sm:$0x18] %vm491, %v490
  %s496 = scalar_lea.vmem %s1, 260
  %497 = vst.msk [vmem:[%s496] ss:$-24 sm:$0x60] %vm491, %v490
  %s498 = scalar_lea.vmem %s1, 181
  %499 = vst.msk [vmem:[%s498] sm:$0x80] %vm491, %v490
  %s500 = scalar_lea.vmem %s0, 8
  %v501 = vld.sshfl [vmem:[%s500] sm:$0xff pattern:$0x74563012]
  %502 = vrot.lane.b32.xlu0 %v501, 108
  %v503 = vpop.permute.xlu0 %502
  %vm504 = vcmask 7168
  %s505 = scalar_lea.vmem %s1, 260
  %506 = vst.msk [vmem:[%s505] ss:$-24 sm:$0x7] %vm504, %v503
  %s507 = scalar_lea.vmem %s1, 68
  %508 = vst.msk [vmem:[%s507] ss:$72 sm:$0x18] %vm504, %v503
  %s509 = scalar_lea.vmem %s1, 452
  %510 = vst.msk [vmem:[%s509] ss:$-24 sm:$0x60] %vm504, %v503
  %s511 = scalar_lea.vmem %s1, 373
  %512 = vst.msk [vmem:[%s511] sm:$0x80] %vm504, %v503
  %v513 = vld.sshfl [vmem:[%s0] sm:$0xff pattern:$0x74563012]
  %514 = vrot.lane.b32.xlu0 %v513, 107
  %v515 = vpop.permute.xlu0 %514
  %vm516 = vcmask 7168
  %s517 = scalar_lea.vmem %s1, 69
  %518 = vst.msk [vmem:[%s517] ss:$-24 sm:$0x7] %vm516, %v515
  %s519 = scalar_lea.vmem %s1, 4294967173
  %520 = vst.msk [vmem:[%s519] ss:$72 sm:$0x18] %vm516, %v515
  %s521 = scalar_lea.vmem %s1, 261
  %522 = vst.msk [vmem:[%s521] ss:$-24 sm:$0x60] %vm516, %v515
  %s523 = scalar_lea.vmem %s1, 182
  %524 = vst.msk [vmem:[%s523] sm:$0x80] %vm516, %v515
  %s525 = scalar_lea.vmem %s0, 8
  %v526 = vld.sshfl [vmem:[%s525] sm:$0xff pattern:$0x74563012]
  %527 = vrot.lane.b32.xlu0 %v526, 107
  %v528 = vpop.permute.xlu0 %527
  %vm529 = vcmask 7168
  %s530 = scalar_lea.vmem %s1, 261
  %531 = vst.msk [vmem:[%s530] ss:$-24 sm:$0x7] %vm529, %v528
  %s532 = scalar_lea.vmem %s1, 69
  %533 = vst.msk [vmem:[%s532] ss:$72 sm:$0x18] %vm529, %v528
  %s534 = scalar_lea.vmem %s1, 453
  %535 = vst.msk [vmem:[%s534] ss:$-24 sm:$0x60] %vm529, %v528
  %s536 = scalar_lea.vmem %s1, 374
  %537 = vst.msk [vmem:[%s536] sm:$0x80] %vm529, %v528
  %v538 = vld.sshfl [vmem:[%s0] sm:$0xff pattern:$0x74563012]
  %539 = vrot.lane.b32.xlu0 %v538, 106
  %v540 = vpop.permute.xlu0 %539
  %vm541 = vcmask 7168
  %s542 = scalar_lea.vmem %s1, 70
  %543 = vst.msk [vmem:[%s542] ss:$-24 sm:$0x7] %vm541, %v540
  %s544 = scalar_lea.vmem %s1, 4294967174
  %545 = vst.msk [vmem:[%s544] ss:$72 sm:$0x18] %vm541, %v540
  %s546 = scalar_lea.vmem %s1, 262
  %547 = vst.msk [vmem:[%s546] ss:$-24 sm:$0x60] %vm541, %v540
  %s548 = scalar_lea.vmem %s1, 183
  %549 = vst.msk [vmem:[%s548] sm:$0x80] %vm541, %v540
  %s550 = scalar_lea.vmem %s0, 8
  %v551 = vld.sshfl [vmem:[%s550] sm:$0xff pattern:$0x74563012]
  %552 = vrot.lane.b32.xlu0 %v551, 106
  %v553 = vpop.permute.xlu0 %552
  %vm554 = vcmask 7168
  %s555 = scalar_lea.vmem %s1, 262
  %556 = vst.msk [vmem:[%s555] ss:$-24 sm:$0x7] %vm554, %v553
  %s557 = scalar_lea.vmem %s1, 70
  %558 = vst.msk [vmem:[%s557] ss:$72 sm:$0x18] %vm554, %v553
  %s559 = scalar_lea.vmem %s1, 454
  %560 = vst.msk [vmem:[%s559] ss:$-24 sm:$0x60] %vm554, %v553
  %s561 = scalar_lea.vmem %s1, 375
  %562 = vst.msk [vmem:[%s561] sm:$0x80] %vm554, %v553
  %v563 = vld.sshfl [vmem:[%s0] sm:$0xff pattern:$0x74563012]
  %564 = vrot.lane.b32.xlu0 %v563, 105
  %v565 = vpop.permute.xlu0 %564
  %vm566 = vcmask 7168
  %s567 = scalar_lea.vmem %s1, 71
  %568 = vst.msk [vmem:[%s567] ss:$-24 sm:$0x7] %vm566, %v565
  %s569 = scalar_lea.vmem %s1, 4294967175
  %570 = vst.msk [vmem:[%s569] ss:$72 sm:$0x18] %vm566, %v565
  %s571 = scalar_lea.vmem %s1, 263
  %572 = vst.msk [vmem:[%s571] ss:$-24 sm:$0x60] %vm566, %v565
  %s573 = scalar_lea.vmem %s1, 184
  %574 = vst.msk [vmem:[%s573] sm:$0x80] %vm566, %v565
  %s575 = scalar_lea.vmem %s0, 8
  %v576 = vld.sshfl [vmem:[%s575] sm:$0xff pattern:$0x74563012]
  %577 = vrot.lane.b32.xlu0 %v576, 105
  %v578 = vpop.permute.xlu0 %577
  %vm579 = vcmask 7168
  %s580 = scalar_lea.vmem %s1, 263
  %581 = vst.msk [vmem:[%s580] ss:$-24 sm:$0x7] %vm579, %v578
  %s582 = scalar_lea.vmem %s1, 71
  %583 = vst.msk [vmem:[%s582] ss:$72 sm:$0x18] %vm579, %v578
  %s584 = scalar_lea.vmem %s1, 455
  %585 = vst.msk [vmem:[%s584] ss:$-24 sm:$0x60] %vm579, %v578
  %s586 = scalar_lea.vmem %s1, 376
  %587 = vst.msk [vmem:[%s586] sm:$0x80] %vm579, %v578

// kernel: bottleneck_forward.1
$region0: #{bottleneck_forward.1}
  #allocation0 [shape = 'u32[]', space=smem, size = 0x4, offset = 0x4, fixed_abs, tag = 'smem constant byte address 0x4 - core index']
  #allocation1 [shape = 'u32[72,128]{1,0:T(1,128)}', space=vmem, size = 0x9000, scoped, tag = 'internal scratch']
  #allocation2 [shape = 'bf16[480,128]{1,0:T(8,128)(2,1)}', space=vmem, size = 0x1e000, scoped, tag = 'scratch operand']
  %s0 = inlined_call_operand.vmem [shape: bf16[2,384,128], index: 0, kind: input, shape index: {}]
  %s1 = inlined_call_operand.vmem [shape: f32[384,1], index: 1, kind: input, shape index: {}]
  %s2 = inlined_call_operand.vmem [shape: bf16[128,128], index: 2, kind: input, shape index: {}]
  %s3 = inlined_call_operand.vmem [shape: f32[1,128], index: 3, kind: input, shape index: {}]
  %s4 = inlined_call_operand.vmem [shape: bf16[9,128,128], index: 4, kind: input, shape index: {}]
  %s5 = inlined_call_operand.vmem [shape: f32[1,128], index: 5, kind: input, shape index: {}]
  %s6 = inlined_call_operand.vmem [shape: bf16[128,128], index: 6, kind: input, shape index: {}]
  %s7 = inlined_call_operand.vmem [shape: f32[1,128], index: 7, kind: input, shape index: {}]
  %s8 = inlined_call_operand.vmem [shape: bf16[128,128], index: 8, kind: input, shape index: {}]
  %s9 = inlined_call_operand.vmem [shape: f32[1,128], index: 9, kind: input, shape index: {}]
  %s10 = inlined_call_operand.vmem [shape: bf16[2,384,128], index: 10, kind: output, shape index: {}]
  %s11 = sld [smem:[#allocation0]]
  $region73: #{bottleneck_forward.1} parent=0
    _
  %s13 = ssub.s32 1, %s11
  %s14 = scalar_select 0, %s13, %s11
  loop: start=0, step=1, limit=4
  $region2: #{bottleneck_forward.1} parent=0 // loop_pre_header
    _
  $region3: #{bottleneck_forward.1} parent=0 // loop_header
    %s16 = sphi 0, %s20
    %p17 = scmp.ge.s32.totalorder %s16, 4
    %s26 = sphi 0, %s28
    %s29 = sphi 0, %s26
    %s30 = sphi 0, %s29
    %s46 = sphi 0, %s30
    %s50 = sphi 0, %s50
    %s52 = sphi 0, %s50
    %s53 = sphi 0, %s52
    %s67 = sphi 0, %s53
    %s71 = sphi 0, %s71
    %s73 = sphi 0, %s71
    %s74 = sphi 0, %s73
    %s88 = sphi 0, %s74
    %s92 = sphi 0, %s92
    %s94 = sphi 0, %s92
    %s95 = sphi 0, %s94
    %s109 = sphi 0, %s95
    %s113 = sphi 0, %s113
    %s115 = sphi 0, %s113
    %s116 = sphi 0, %s115
    %s130 = sphi 0, %s116
    %s134 = sphi 0, %s134
    %s136 = sphi 0, %s134
    %s137 = sphi 0, %s136
    %s151 = sphi 0, %s137
    %s155 = sphi 0, %s155
    %s157 = sphi 0, %s155
    %s158 = sphi 0, %s157
    %s172 = sphi 0, %s158
    %s176 = sphi 0, %s176
    %s178 = sphi 0, %s176
    %s179 = sphi 0, %s178
    %s193 = sphi 0, %s179
    %s197 = sphi 0, %s197
    %s199 = sphi 0, %s197
    %s200 = sphi 0, %s199
    %s214 = sphi 0, %s200
    %s218 = sphi 0, %s218
    %s220 = sphi 0, %s218
    %s221 = sphi 0, %s220
    %s235 = sphi 0, %s221
    %s241 = sphi 0, %s243
    %s244 = sphi 0, %s241
    %s245 = sphi 0, %s244
    %s261 = sphi 0, %s245
  $region4: #{bottleneck_forward.1} parent=0 // loop_header_branch
    %19 = sbr.rel (%p17) target = $region8
  $region5: #{bottleneck_forward.1} parent=0 // loop_body
    %s21 = ssub.s32 %s16, 1
    %s22 = ssub.s32 %s16, 2
    %s23 = sadd.s32 %s16, 1
    %s24 = ssub.s32 %s16, %s23
    %p25 = scmp.eq.s32.totalorder %s24, 0
    %s27 = sadd.s32 %s26, 1
    %s28 = scalar_select %p25, %s26, %s27
    %p31 = pneg %p25
    %p32 = scmp.eq.s32.totalorder %s16, 1
    %p33 = por %p31, %p32
    %p34 = scmp.ne.s32.totalorder %s26, %s29
    %p35 = scmp.eq.s32.totalorder %s16, 0
    %p36 = por %p34, %p35
    %p37 = scmp.ne.s32.totalorder %s26, %s29
    %p38 = scmp.eq.s32.totalorder %s21, 1
    %p39 = por %p37, %p38
    %p40 = scmp.ne.s32.totalorder %s29, %s30
    %p41 = scmp.eq.s32.totalorder %s21, 0
    %p42 = por %p40, %p41
    %p43 = scmp.ne.s32.totalorder %s29, %s30
    %p44 = scmp.eq.s32.totalorder %s22, 1
    %p45 = por %p43, %p44
    %p47 = scmp.ne.s32.totalorder %s30, %s46
    %p48 = scmp.eq.s32.totalorder %s22, 0
    %p49 = por %p47, %p48
    %s51 = sadd.s32 %s50, 1
    %p54 = scmp.eq.s32.totalorder %s16, 1
    %p55 = scmp.ne.s32.totalorder %s50, %s52
    %p56 = scmp.eq.s32.totalorder %s16, 0
    %p57 = por %p55, %p56
    %p58 = scmp.ne.s32.totalorder %s50, %s52
    %p59 = scmp.eq.s32.totalorder %s21, 1
    %p60 = por %p58, %p59
    %p61 = scmp.ne.s32.totalorder %s52, %s53
    %p62 = scmp.eq.s32.totalorder %s21, 0
    %p63 = por %p61, %p62
    %p64 = scmp.ne.s32.totalorder %s52, %s53
    %p65 = scmp.eq.s32.totalorder %s22, 1
    %p66 = por %p64, %p65
    %p68 = scmp.ne.s32.totalorder %s53, %s67
    %p69 = scmp.eq.s32.totalorder %s22, 0
    %p70 = por %p68, %p69
    %s72 = sadd.s32 %s71, 1
    %p75 = scmp.eq.s32.totalorder %s16, 1
    %p76 = scmp.ne.s32.totalorder %s71, %s73
    %p77 = scmp.eq.s32.totalorder %s16, 0
    %p78 = por %p76, %p77
    %p79 = scmp.ne.s32.totalorder %s71, %s73
    %p80 = scmp.eq.s32.totalorder %s21, 1
    %p81 = por %p79, %p80
    %p82 = scmp.ne.s32.totalorder %s73, %s74
    %p83 = scmp.eq.s32.totalorder %s21, 0
    %p84 = por %p82, %p83
    %p85 = scmp.ne.s32.totalorder %s73, %s74
    %p86 = scmp.eq.s32.totalorder %s22, 1
    %p87 = por %p85, %p86
    %p89 = scmp.ne.s32.totalorder %s74, %s88
    %p90 = scmp.eq.s32.totalorder %s22, 0
    %p91 = por %p89, %p90
    %s93 = sadd.s32 %s92, 1
    %p96 = scmp.eq.s32.totalorder %s16, 1
    %p97 = scmp.ne.s32.totalorder %s92, %s94
    %p98 = scmp.eq.s32.totalorder %s16, 0
    %p99 = por %p97, %p98
    %p100 = scmp.ne.s32.totalorder %s92, %s94
    %p101 = scmp.eq.s32.totalorder %s21, 1
    %p102 = por %p100, %p101
    %p103 = scmp.ne.s32.totalorder %s94, %s95
    %p104 = scmp.eq.s32.totalorder %s21, 0
    %p105 = por %p103, %p104
    %p106 = scmp.ne.s32.totalorder %s94, %s95
    %p107 = scmp.eq.s32.totalorder %s22, 1
    %p108 = por %p106, %p107
    %p110 = scmp.ne.s32.totalorder %s95, %s109
    %p111 = scmp.eq.s32.totalorder %s22, 0
    %p112 = por %p110, %p111
    %s114 = sadd.s32 %s113, 1
    %p117 = scmp.eq.s32.totalorder %s16, 1
    %p118 = scmp.ne.s32.totalorder %s113, %s115
    %p119 = scmp.eq.s32.totalorder %s16, 0
    %p120 = por %p118, %p119
    %p121 = scmp.ne.s32.totalorder %s113, %s115
    %p122 = scmp.eq.s32.totalorder %s21, 1
    %p123 = por %p121, %p122
    %p124 = scmp.ne.s32.totalorder %s115, %s116
    %p125 = scmp.eq.s32.totalorder %s21, 0
    %p126 = por %p124, %p125
    %p127 = scmp.ne.s32.totalorder %s115, %s116
    %p128 = scmp.eq.s32.totalorder %s22, 1
    %p129 = por %p127, %p128
    %p131 = scmp.ne.s32.totalorder %s116, %s130
    %p132 = scmp.eq.s32.totalorder %s22, 0
    %p133 = por %p131, %p132
    %s135 = sadd.s32 %s134, 1
    %p138 = scmp.eq.s32.totalorder %s16, 1
    %p139 = scmp.ne.s32.totalorder %s134, %s136
    %p140 = scmp.eq.s32.totalorder %s16, 0
    %p141 = por %p139, %p140
    %p142 = scmp.ne.s32.totalorder %s134, %s136
    %p143 = scmp.eq.s32.totalorder %s21, 1
    %p144 = por %p142, %p143
    %p145 = scmp.ne.s32.totalorder %s136, %s137
    %p146 = scmp.eq.s32.totalorder %s21, 0
    %p147 = por %p145, %p146
    %p148 = scmp.ne.s32.totalorder %s136, %s137
    %p149 = scmp.eq.s32.totalorder %s22, 1
    %p150 = por %p148, %p149
    %p152 = scmp.ne.s32.totalorder %s137, %s151
    %p153 = scmp.eq.s32.totalorder %s22, 0
    %p154 = por %p152, %p153
    %s156 = sadd.s32 %s155, 1
    %p159 = scmp.eq.s32.totalorder %s16, 1
    %p160 = scmp.ne.s32.totalorder %s155, %s157
    %p161 = scmp.eq.s32.totalorder %s16, 0
    %p162 = por %p160, %p161
    %p163 = scmp.ne.s32.totalorder %s155, %s157
    %p164 = scmp.eq.s32.totalorder %s21, 1
    %p165 = por %p163, %p164
    %p166 = scmp.ne.s32.totalorder %s157, %s158
    %p167 = scmp.eq.s32.totalorder %s21, 0
    %p168 = por %p166, %p167
    %p169 = scmp.ne.s32.totalorder %s157, %s158
    %p170 = scmp.eq.s32.totalorder %s22, 1
    %p171 = por %p169, %p170
    %p173 = scmp.ne.s32.totalorder %s158, %s172
    %p174 = scmp.eq.s32.totalorder %s22, 0
    %p175 = por %p173, %p174
    %s177 = sadd.s32 %s176, 1
    %p180 = scmp.eq.s32.totalorder %s16, 1
    %p181 = scmp.ne.s32.totalorder %s176, %s178
    %p182 = scmp.eq.s32.totalorder %s16, 0
    %p183 = por %p181, %p182
    %p184 = scmp.ne.s32.totalorder %s176, %s178
    %p185 = scmp.eq.s32.totalorder %s21, 1
    %p186 = por %p184, %p185
    %p187 = scmp.ne.s32.totalorder %s178, %s179
    %p188 = scmp.eq.s32.totalorder %s21, 0
    %p189 = por %p187, %p188
    %p190 = scmp.ne.s32.totalorder %s178, %s179
    %p191 = scmp.eq.s32.totalorder %s22, 1
    %p192 = por %p190, %p191
    %p194 = scmp.ne.s32.totalorder %s179, %s193
    %p195 = scmp.eq.s32.totalorder %s22, 0
    %p196 = por %p194, %p195
    %s198 = sadd.s32 %s197, 1
    %p201 = scmp.eq.s32.totalorder %s16, 1
    %p202 = scmp.ne.s32.totalorder %s197, %s199
    %p203 = scmp.eq.s32.totalorder %s16, 0
    %p204 = por %p202, %p203
    %p205 = scmp.ne.s32.totalorder %s197, %s199
    %p206 = scmp.eq.s32.totalorder %s21, 1
    %p207 = por %p205, %p206
    %p208 = scmp.ne.s32.totalorder %s199, %s200
    %p209 = scmp.eq.s32.totalorder %s21, 0
    %p210 = por %p208, %p209
    %p211 = scmp.ne.s32.totalorder %s199, %s200
    %p212 = scmp.eq.s32.totalorder %s22, 1
    %p213 = por %p211, %p212
    %p215 = scmp.ne.s32.totalorder %s200, %s214
    %p216 = scmp.eq.s32.totalorder %s22, 0
    %p217 = por %p215, %p216
    %s219 = sadd.s32 %s218, 1
    %p222 = scmp.eq.s32.totalorder %s16, 1
    %p223 = scmp.ne.s32.totalorder %s218, %s220
    %p224 = scmp.eq.s32.totalorder %s16, 0
    %p225 = por %p223, %p224
    %p226 = scmp.ne.s32.totalorder %s218, %s220
    %p227 = scmp.eq.s32.totalorder %s21, 1
    %p228 = por %p226, %p227
    %p229 = scmp.ne.s32.totalorder %s220, %s221
    %p230 = scmp.eq.s32.totalorder %s21, 0
    %p231 = por %p229, %p230
    %p232 = scmp.ne.s32.totalorder %s220, %s221
    %p233 = scmp.eq.s32.totalorder %s22, 1
    %p234 = por %p232, %p233
    %p236 = scmp.ne.s32.totalorder %s221, %s235
    %p237 = scmp.eq.s32.totalorder %s22, 0
    %p238 = por %p236, %p237
    %s239 = ssub.s32 %s16, %s23
    %p240 = scmp.eq.s32.totalorder %s239, 0
    %s242 = sadd.s32 %s241, 1
    %s243 = scalar_select %p240, %s241, %s242
    %p246 = pneg %p240
    %p247 = scmp.eq.s32.totalorder %s16, 1
    %p248 = por %p246, %p247
    %p249 = scmp.ne.s32.totalorder %s241, %s244
    %p250 = scmp.eq.s32.totalorder %s16, 0
    %p251 = por %p249, %p250
    %p252 = scmp.ne.s32.totalorder %s241, %s244
    %p253 = scmp.eq.s32.totalorder %s21, 1
    %p254 = por %p252, %p253
    %p255 = scmp.ne.s32.totalorder %s244, %s245
    %p256 = scmp.eq.s32.totalorder %s21, 0
    %p257 = por %p255, %p256
    %p258 = scmp.ne.s32.totalorder %s244, %s245
    %p259 = scmp.eq.s32.totalorder %s22, 1
    %p260 = por %p258, %p259
    %p262 = scmp.ne.s32.totalorder %s245, %s261
    %p263 = scmp.eq.s32.totalorder %s22, 0
    %p264 = por %p262, %p263
    %p265 = scmp.le.s32.totalorder 1, %s16
    %p266 = scmp.lt.s32.totalorder %s16, 3
    %p267 = pnand %p265, %p266
    %p268 = pneg %p267
    // Predicated region
    $region9: #{bottleneck_forward.1} parent=5 // pred_check
      _
    $region10: #{bottleneck_forward.1} parent=5 // pred_check_branch
      %270 = sbr.rel (%p267) target = $region12
    $region11: #{bottleneck_forward.1} parent=5 // pred_region
      %s271 = ssub.s32 %s16, 1
      // Predicated region
      $region13: #{bottleneck_forward.1} parent=11 // pred_check
        %p272 = pneg %p63
      $region14: #{bottleneck_forward.1} parent=11 // pred_check_branch
        %274 = sbr.rel (%p272) target = $region16
      $region15: #{bottleneck_forward.1} parent=11 // pred_region
        _
      $region16: #{bottleneck_forward.1} parent=11 // pred_fallthru
        _
      // Predicated region
      $region17: #{bottleneck_forward.1} parent=11 // pred_check
        %p275 = pneg %p84
      $region18: #{bottleneck_forward.1} parent=11 // pred_check_branch
        %277 = sbr.rel (%p275) target = $region20
      $region19: #{bottleneck_forward.1} parent=11 // pred_region
        _
      $region20: #{bottleneck_forward.1} parent=11 // pred_fallthru
        _
      // Predicated region
      $region21: #{bottleneck_forward.1} parent=11 // pred_check
        %p278 = pneg %p105
      $region22: #{bottleneck_forward.1} parent=11 // pred_check_branch
        %280 = sbr.rel (%p278) target = $region24
      $region23: #{bottleneck_forward.1} parent=11 // pred_region
        _
      $region24: #{bottleneck_forward.1} parent=11 // pred_fallthru
        _
      // Predicated region
      $region25: #{bottleneck_forward.1} parent=11 // pred_check
        %p281 = pneg %p126
      $region26: #{bottleneck_forward.1} parent=11 // pred_check_branch
        %283 = sbr.rel (%p281) target = $region28
      $region27: #{bottleneck_forward.1} parent=11 // pred_region
        _
      $region28: #{bottleneck_forward.1} parent=11 // pred_fallthru
        _
      // Predicated region
      $region29: #{bottleneck_forward.1} parent=11 // pred_check
        %p284 = pneg %p147
      $region30: #{bottleneck_forward.1} parent=11 // pred_check_branch
        %286 = sbr.rel (%p284) target = $region32
      $region31: #{bottleneck_forward.1} parent=11 // pred_region
        _
      $region32: #{bottleneck_forward.1} parent=11 // pred_fallthru
        _
      // Predicated region
      $region33: #{bottleneck_forward.1} parent=11 // pred_check
        %p287 = pneg %p168
      $region34: #{bottleneck_forward.1} parent=11 // pred_check_branch
        %289 = sbr.rel (%p287) target = $region36
      $region35: #{bottleneck_forward.1} parent=11 // pred_region
        _
      $region36: #{bottleneck_forward.1} parent=11 // pred_fallthru
        _
      // Predicated region
      $region37: #{bottleneck_forward.1} parent=11 // pred_check
        %p290 = pneg %p189
      $region38: #{bottleneck_forward.1} parent=11 // pred_check_branch
        %292 = sbr.rel (%p290) target = $region40
      $region39: #{bottleneck_forward.1} parent=11 // pred_region
        _
      $region40: #{bottleneck_forward.1} parent=11 // pred_fallthru
        _
      // Predicated region
      $region41: #{bottleneck_forward.1} parent=11 // pred_check
        %p293 = pneg %p210
      $region42: #{bottleneck_forward.1} parent=11 // pred_check_branch
        %295 = sbr.rel (%p293) target = $region44
      $region43: #{bottleneck_forward.1} parent=11 // pred_region
        _
      $region44: #{bottleneck_forward.1} parent=11 // pred_fallthru
        _
      // Predicated region
      $region45: #{bottleneck_forward.1} parent=11 // pred_check
        %p296 = pneg %p231
      $region46: #{bottleneck_forward.1} parent=11 // pred_check_branch
        %298 = sbr.rel (%p296) target = $region48
      $region47: #{bottleneck_forward.1} parent=11 // pred_region
        _
      $region48: #{bottleneck_forward.1} parent=11 // pred_fallthru
        _
    $region12: #{bottleneck_forward.1} parent=5 // pred_fallthru
      _
    %p299 = scmp.lt.s32.totalorder %s16, 2
    // Predicated region
    $region49: #{bottleneck_forward.1} parent=5 // pred_check
      %p300 = pneg %p299
    $region50: #{bottleneck_forward.1} parent=5 // pred_check_branch
      %302 = sbr.rel (%p300) target = $region52
    $region51: #{bottleneck_forward.1} parent=5 // pred_region
      // Predicated region
      $region53: #{bottleneck_forward.1} parent=51 // pred_check
        %p303 = pneg %p36
      $region54: #{bottleneck_forward.1} parent=51 // pred_check_branch
        %305 = sbr.rel (%p303) target = $region56
      $region55: #{bottleneck_forward.1} parent=51 // pred_region
        %p306 = scmp.lt.s32.totalorder %s16, 1
        %s307 = scalar_select %p306, %s16, 1
        %s308 = smul.addr %s307, 48
        %s309 = smul.addr %s308, 4
        %s310 = scalar_lea.vmem %s0, %s309
      $region56: #{bottleneck_forward.1} parent=51 // pred_fallthru
        _
    $region52: #{bottleneck_forward.1} parent=5 // pred_fallthru
      _
    %p311 = scmp.le.s32.totalorder 1, %s16
    %p312 = scmp.lt.s32.totalorder %s16, 3
    %p313 = pnand %p311, %p312
    %p314 = pneg %p313
    // Predicated region
    $region57: #{bottleneck_forward.1} parent=5 // pred_check
      _
    $region58: #{bottleneck_forward.1} parent=5 // pred_check_branch
      %316 = sbr.rel (%p313) target = $region60
    $region59: #{bottleneck_forward.1} parent=5 // pred_region
      %s317 = ssub.s32 %s16, 1
      %p318 = scmp.lt.s32.totalorder %s21, 1
      %s319 = scalar_select %p318, %s21, 1
      %s320 = smul.addr %s319, 48
      %s321 = smul.addr %s320, 4
      %s322 = scalar_lea.vmem %s0, %s321
      %p323 = pneg %p42
      %p324 = pneg %p39
      %p325 = pneg %p63
      %p326 = pneg %p60
      %p327 = pneg %p84
      %p328 = pneg %p81
      %p329 = pneg %p105
      %p330 = pneg %p102
      %p331 = pneg %p126
      %p332 = pneg %p123
      %p333 = pneg %p147
      %p334 = pneg %p144
      %p335 = pneg %p168
      %p336 = pneg %p165
      %p337 = pneg %p189
      %p338 = pneg %p186
      %p339 = pneg %p210
      %p340 = pneg %p207
      %p341 = pneg %p231
      %p342 = pneg %p228
      %p343 = pneg %p257
      %p344 = pneg %p254
      %p345 = scmp.lt.s32.totalorder %s21, 1
      %s346 = scalar_select %p345, %s21, 1
      %s347 = smul.addr %s346, 48
      %s348 = smul.addr %s347, 4
      %s349 = scalar_lea.vmem %s10, %s348
      %p350 = scmp.lt.s32.totalorder %s21, 1
      %s351 = scalar_select %p350, %s21, 1
      %s352 = smul.addr %s351, 48
      %s353 = smul.addr %s352, 4
      %s354 = scalar_lea.vmem %s0, %s353
      %p355 = scmp.lt.s32.totalorder %s21, 1
      %s356 = scalar_select %p355, %s21, 1
      %s357 = smul.addr %s356, 48
      %s358 = smul.addr %s357, 4
      %s359 = scalar_lea.vmem %s10, %s358
      %361 = vst [vmem:[#allocation2] sm:$0xf] 0
      %362 = vst [vmem:[#allocation2 + $0x4] sm:$0xf] 0
      %363 = vst [vmem:[#allocation2 + $0x8] sm:$0xf] 0
      %364 = vst [vmem:[#allocation2 + $0xc] sm:$0xf] 0
      %365 = vst [vmem:[#allocation2 + $0x10] sm:$0xf] 0
      %366 = vst [vmem:[#allocation2 + $0x14] sm:$0xf] 0
      %367 = vst [vmem:[#allocation2 + $0xd8] sm:$0xf] 0
      %368 = vst [vmem:[#allocation2 + $0xdc] sm:$0xf] 0
      %369 = vst [vmem:[#allocation2 + $0xe0] sm:$0xf] 0
      %370 = vst [vmem:[#allocation2 + $0xe4] sm:$0xf] 0
      %371 = vst [vmem:[#allocation2 + $0xe8] sm:$0xf] 0
      %372 = vst [vmem:[#allocation2 + $0xec] sm:$0xf] 0
      %v373 = vld [vmem:[%s354] sm:$0xf]
      %v374 = vld [vmem:[%s354 + $0x4] sm:$0xf]
      %v375 = vld [vmem:[%s354 + $0x8] sm:$0xf]
      %v376 = vld [vmem:[%s354 + $0xc] sm:$0xf]
      %v377 = vld [vmem:[%s354 + $0x10] sm:$0xf]
      %v378 = vld [vmem:[%s354 + $0x14] sm:$0xf]
      %v379 = vld [vmem:[%s354 + $0x18] sm:$0xf]
      %v380 = vld [vmem:[%s354 + $0x1c] sm:$0xf]
      %v381 = vld [vmem:[%s354 + $0x20] sm:$0xf]
      %v382 = vld [vmem:[%s354 + $0x24] sm:$0xf]
      %v383 = vld [vmem:[%s354 + $0x28] sm:$0xf]
      %v384 = vld [vmem:[%s354 + $0x2c] sm:$0xf]
      %v385 = vld [vmem:[%s354 + $0x30] sm:$0xf]
      %v386 = vld [vmem:[%s354 + $0x34] sm:$0xf]
      %v387 = vld [vmem:[%s354 + $0x38] sm:$0xf]
      %v388 = vld [vmem:[%s354 + $0x3c] sm:$0xf]
      %v389 = vld [vmem:[%s2] sm:$0xf]
      %v390 = vld [vmem:[%s2 + $0x4] sm:$0xf]
      %v391 = vld [vmem:[%s2 + $0x8] sm:$0xf]
      %v392 = vld [vmem:[%s2 + $0xc] sm:$0xf]
      %v393 = vld [vmem:[%s2 + $0x10] sm:$0xf]
      %v394 = vld [vmem:[%s2 + $0x14] sm:$0xf]
      %v395 = vld [vmem:[%s2 + $0x18] sm:$0xf]
      %v396 = vld [vmem:[%s2 + $0x1c] sm:$0xf]
      %v397 = vld [vmem:[%s2 + $0x20] sm:$0xf]
      %v398 = vld [vmem:[%s2 + $0x24] sm:$0xf]
      %v399 = vld [vmem:[%s2 + $0x28] sm:$0xf]
      %v400 = vld [vmem:[%s2 + $0x2c] sm:$0xf]
      %v401 = vld [vmem:[%s2 + $0x30] sm:$0xf]
      %v402 = vld [vmem:[%s2 + $0x34] sm:$0xf]
      %v403 = vld [vmem:[%s2 + $0x38] sm:$0xf]
      %v404 = vld [vmem:[%s2 + $0x3c] sm:$0xf]
      %v405 = vld [vmem:[%s3] sm:$0x1]
      %v407 = vperm.slane %v405, 0
      %v425 = vunpack.c.l.b16 %v373
      %v426 = vunpack.c.l.b16 %v374
      %v427 = vunpack.c.l.b16 %v375
      %v428 = vunpack.c.l.b16 %v376
      %v429 = vunpack.c.l.b16 %v377
      %v430 = vunpack.c.l.b16 %v378
      %v431 = vunpack.c.l.b16 %v379
      %v432 = vunpack.c.l.b16 %v380
      %v433 = vunpack.c.l.b16 %v381
      %v434 = vunpack.c.l.b16 %v382
      %v435 = vunpack.c.l.b16 %v383
      %v436 = vunpack.c.l.b16 %v384
      %v437 = vunpack.c.l.b16 %v385
      %v438 = vunpack.c.l.b16 %v386
      %v439 = vunpack.c.l.b16 %v387
      %v440 = vunpack.c.l.b16 %v388
      %v441 = vpack.c.b16 %v426, %v425
      %v442 = vpack.c.b16 %v428, %v427
      %v443 = vpack.c.b16 %v430, %v429
      %v444 = vpack.c.b16 %v432, %v431
      %v445 = vpack.c.b16 %v434, %v433
      %v446 = vpack.c.b16 %v436, %v435
      %v447 = vpack.c.b16 %v438, %v437
      %v448 = vpack.c.b16 %v440, %v439
      %v473 = vunpack.c.l.b16 %v389
      %v474 = vunpack.c.l.b16 %v390
      %v475 = vunpack.c.l.b16 %v391
      %v476 = vunpack.c.l.b16 %v392
      %v477 = vunpack.c.l.b16 %v393
      %v478 = vunpack.c.l.b16 %v394
      %v479 = vunpack.c.l.b16 %v395
      %v480 = vunpack.c.l.b16 %v396
      %v481 = vunpack.c.l.b16 %v397
      %v482 = vunpack.c.l.b16 %v398
      %v483 = vunpack.c.l.b16 %v399
      %v484 = vunpack.c.l.b16 %v400
      %v485 = vunpack.c.l.b16 %v401
      %v486 = vunpack.c.l.b16 %v402
      %v487 = vunpack.c.l.b16 %v403
      %v488 = vunpack.c.l.b16 %v404
      %v489 = vpack.c.b16 %v474, %v473
      %v490 = vpack.c.b16 %v476, %v475
      %v491 = vpack.c.b16 %v478, %v477
      %v492 = vpack.c.b16 %v480, %v479
      %v493 = vpack.c.b16 %v482, %v481
      %v494 = vpack.c.b16 %v484, %v483
      %v495 = vpack.c.b16 %v486, %v485
      %v496 = vpack.c.b16 %v488, %v487
      %505 = vmatpush.bf16.msra.mxu0 %v496
      %506 = vmatpush.bf16.msra.mxu0 %v495
      %507 = vmatpush.bf16.msra.mxu0 %v494
      %508 = vmatpush.bf16.msra.mxu0 %v493
      %509 = vmatpush.bf16.msra.mxu0 %v492
      %510 = vmatpush.bf16.msra.mxu0 %v491
      %511 = vmatpush.bf16.msra.mxu0 %v490
      %512 = vmatpush.bf16.msra.mxu0 %v489
      %513 = vmatmul.bf16.gmra.mxu0 %v441
      %v514 = vpop.f32.mrf.mxu0
      %v515 = vadd.f32 %v407, %v514
      %v516 = vpop.f32.mrf.mxu0
      %v517 = vadd.f32 %v407, %v516
      %518 = vmatmul.bf16.gmra.mxu0 %v442
      %v519 = vpop.f32.mrf.mxu0
      %v520 = vadd.f32 %v407, %v519
      %v521 = vpop.f32.mrf.mxu0
      %v522 = vadd.f32 %v407, %v521
      %523 = vmatmul.bf16.gmra.mxu0 %v443
      %v524 = vpop.f32.mrf.mxu0
      %v525 = vadd.f32 %v407, %v524
      %v526 = vpop.f32.mrf.mxu0
      %v527 = vadd.f32 %v407, %v526
      %528 = vmatmul.bf16.gmra.mxu0 %v444
      %v529 = vpop.f32.mrf.mxu0
      %v530 = vadd.f32 %v407, %v529
      %v531 = vpop.f32.mrf.mxu0
      %v532 = vadd.f32 %v407, %v531
      %533 = vmatmul.bf16.gmra.mxu0 %v445
      %v534 = vpop.f32.mrf.mxu0
      %v535 = vadd.f32 %v407, %v534
      %v536 = vpop.f32.mrf.mxu0
      %v537 = vadd.f32 %v407, %v536
      %538 = vmatmul.bf16.gmra.mxu0 %v446
      %v539 = vpop.f32.mrf.mxu0
      %v540 = vadd.f32 %v407, %v539
      %v541 = vpop.f32.mrf.mxu0
      %v542 = vadd.f32 %v407, %v541
      %543 = vmatmul.bf16.gmra.mxu0 %v447
      %v544 = vpop.f32.mrf.mxu0
      %v545 = vadd.f32 %v407, %v544
      %v546 = vpop.f32.mrf.mxu0
      %v547 = vadd.f32 %v407, %v546
      %548 = vmatmul.bf16.gmra.mxu0 %v448
      %v549 = vpop.f32.mrf.mxu0
      %v550 = vadd.f32 %v407, %v549
      %v551 = vpop.f32.mrf.mxu0
      %v552 = vadd.f32 %v407, %v551
      %553 = vdwg.mxu0
      %v554 = vmax.f32 %v515, 0.0
      %v555 = vmax.f32 %v517, 0.0
      %v556 = vmax.f32 %v520, 0.0
      %v557 = vmax.f32 %v522, 0.0
      %v558 = vmax.f32 %v525, 0.0
      %v559 = vmax.f32 %v527, 0.0
      %v560 = vmax.f32 %v530, 0.0
      %v561 = vmax.f32 %v532, 0.0
      %v562 = vmax.f32 %v535, 0.0
      %v563 = vmax.f32 %v537, 0.0
      %v564 = vmax.f32 %v540, 0.0
      %v565 = vmax.f32 %v542, 0.0
      %v566 = vmax.f32 %v545, 0.0
      %v567 = vmax.f32 %v547, 0.0
      %v568 = vmax.f32 %v550, 0.0
      %v569 = vmax.f32 %v552, 0.0
      %v570 = vld [vmem:[%s1] sm:$0xff]
      %v571 = vld [vmem:[%s1 + $0x8] sm:$0xff]
      %v572 = vld [vmem:[%s1 + $0x10] sm:$0xff]
      %v573 = vld [vmem:[%s1 + $0x18] sm:$0xff]
      %v574 = vld [vmem:[%s1 + $0x20] sm:$0xff]
      %v575 = vld [vmem:[%s1 + $0x28] sm:$0xff]
      %v576 = vld [vmem:[%s1 + $0x30] sm:$0xff]
      %v577 = vld [vmem:[%s1 + $0x38] sm:$0xff]
      %v578 = vld [vmem:[%s1 + $0x40] sm:$0xff]
      %v579 = vld [vmem:[%s1 + $0x48] sm:$0xff]
      %v580 = vld [vmem:[%s1 + $0x50] sm:$0xff]
      %v581 = vld [vmem:[%s1 + $0x58] sm:$0xff]
      %v582 = vld [vmem:[%s1 + $0x60] sm:$0xff]
      %v583 = vld [vmem:[%s1 + $0x68] sm:$0xff]
      %v584 = vld [vmem:[%s1 + $0x70] sm:$0xff]
      %v585 = vld [vmem:[%s1 + $0x78] sm:$0xff]
      %587 = vset.pattern.permute.xlu0 0
      %588 = vperm.xlu0 %587, %v570
      %v589 = vpop.permute.xlu0 %588
      %592 = vset.pattern.permute.xlu0 0
      %593 = vperm.xlu0 %592, %v571
      %v594 = vpop.permute.xlu0 %593
      %597 = vset.pattern.permute.xlu0 0
      %598 = vperm.xlu0 %597, %v572
      %v599 = vpop.permute.xlu0 %598
      %602 = vset.pattern.permute.xlu0 0
      %603 = vperm.xlu0 %602, %v573
      %v604 = vpop.permute.xlu0 %603
      %607 = vset.pattern.permute.xlu0 0
      %608 = vperm.xlu0 %607, %v574
      %v609 = vpop.permute.xlu0 %608
      %612 = vset.pattern.permute.xlu0 0
      %613 = vperm.xlu0 %612, %v575
      %v614 = vpop.permute.xlu0 %613
      %617 = vset.pattern.permute.xlu0 0
      %618 = vperm.xlu0 %617, %v576
      %v619 = vpop.permute.xlu0 %618
      %622 = vset.pattern.permute.xlu0 0
      %623 = vperm.xlu0 %622, %v577
      %v624 = vpop.permute.xlu0 %623
      %627 = vset.pattern.permute.xlu0 0
      %628 = vperm.xlu0 %627, %v578
      %v629 = vpop.permute.xlu0 %628
      %632 = vset.pattern.permute.xlu0 0
      %633 = vperm.xlu0 %632, %v579
      %v634 = vpop.permute.xlu0 %633
      %637 = vset.pattern.permute.xlu0 0
      %638 = vperm.xlu0 %637, %v580
      %v639 = vpop.permute.xlu0 %638
      %642 = vset.pattern.permute.xlu0 0
      %643 = vperm.xlu0 %642, %v581
      %v644 = vpop.permute.xlu0 %643
      %647 = vset.pattern.permute.xlu0 0
      %648 = vperm.xlu0 %647, %v582
      %v649 = vpop.permute.xlu0 %648
      %652 = vset.pattern.permute.xlu0 0
      %653 = vperm.xlu0 %652, %v583
      %v654 = vpop.permute.xlu0 %653
      %657 = vset.pattern.permute.xlu0 0
      %658 = vperm.xlu0 %657, %v584
      %v659 = vpop.permute.xlu0 %658
      %662 = vset.pattern.permute.xlu0 0
      %663 = vperm.xlu0 %662, %v585
      %v664 = vpop.permute.xlu0 %663
      %v666 = vmul.f32 %v554, %v589
      %v667 = vmul.f32 %v555, %v594
      %v668 = vmul.f32 %v556, %v599
      %v669 = vmul.f32 %v557, %v604
      %v670 = vmul.f32 %v558, %v609
      %v671 = vmul.f32 %v559, %v614
      %v672 = vmul.f32 %v560, %v619
      %v673 = vmul.f32 %v561, %v624
      %v674 = vmul.f32 %v562, %v629
      %v675 = vmul.f32 %v563, %v634
      %v676 = vmul.f32 %v564, %v639
      %v677 = vmul.f32 %v565, %v644
      %v678 = vmul.f32 %v566, %v649
      %v679 = vmul.f32 %v567, %v654
      %v680 = vmul.f32 %v568, %v659
      %v681 = vmul.f32 %v569, %v664
      %v682 = vpack.c.bf16 %v666, %v666
      %v683 = vpack.c.bf16 %v667, %v667
      %v684 = vpack.c.bf16 %v668, %v668
      %v685 = vpack.c.bf16 %v669, %v669
      %v686 = vpack.c.bf16 %v670, %v670
      %v687 = vpack.c.bf16 %v671, %v671
      %v688 = vpack.c.bf16 %v672, %v672
      %v689 = vpack.c.bf16 %v673, %v673
      %v690 = vpack.c.bf16 %v674, %v674
      %v691 = vpack.c.bf16 %v675, %v675
      %v692 = vpack.c.bf16 %v676, %v676
      %v693 = vpack.c.bf16 %v677, %v677
      %v694 = vpack.c.bf16 %v678, %v678
      %v695 = vpack.c.bf16 %v679, %v679
      %v696 = vpack.c.bf16 %v680, %v680
      %v697 = vpack.c.bf16 %v681, %v681
      %698 = vst [vmem:[#allocation2 + $0x18] sm:$0xf] %v682
      %699 = vst [vmem:[#allocation2 + $0x1c] sm:$0xf] %v683
      %700 = vst [vmem:[#allocation2 + $0x20] sm:$0xf] %v684
      %701 = vst [vmem:[#allocation2 + $0x24] sm:$0xf] %v685
      %702 = vst [vmem:[#allocation2 + $0x28] sm:$0xf] %v686
      %703 = vst [vmem:[#allocation2 + $0x2c] sm:$0xf] %v687
      %704 = vst [vmem:[#allocation2 + $0x30] sm:$0xf] %v688
      %705 = vst [vmem:[#allocation2 + $0x34] sm:$0xf] %v689
      %706 = vst [vmem:[#allocation2 + $0x38] sm:$0xf] %v690
      %707 = vst [vmem:[#allocation2 + $0x3c] sm:$0xf] %v691
      %708 = vst [vmem:[#allocation2 + $0x40] sm:$0xf] %v692
      %709 = vst [vmem:[#allocation2 + $0x44] sm:$0xf] %v693
      %710 = vst [vmem:[#allocation2 + $0x48] sm:$0xf] %v694
      %711 = vst [vmem:[#allocation2 + $0x4c] sm:$0xf] %v695
      %712 = vst [vmem:[#allocation2 + $0x50] sm:$0xf] %v696
      %713 = vst [vmem:[#allocation2 + $0x54] sm:$0xf] %v697
      %v714 = vld [vmem:[%s354 + $0x40] sm:$0xf]
      %v715 = vld [vmem:[%s354 + $0x44] sm:$0xf]
      %v716 = vld [vmem:[%s354 + $0x48] sm:$0xf]
      %v717 = vld [vmem:[%s354 + $0x4c] sm:$0xf]
      %v718 = vld [vmem:[%s354 + $0x50] sm:$0xf]
      %v719 = vld [vmem:[%s354 + $0x54] sm:$0xf]
      %v720 = vld [vmem:[%s354 + $0x58] sm:$0xf]
      %v721 = vld [vmem:[%s354 + $0x5c] sm:$0xf]
      %v722 = vld [vmem:[%s354 + $0x60] sm:$0xf]
      %v723 = vld [vmem:[%s354 + $0x64] sm:$0xf]
      %v724 = vld [vmem:[%s354 + $0x68] sm:$0xf]
      %v725 = vld [vmem:[%s354 + $0x6c] sm:$0xf]
      %v726 = vld [vmem:[%s354 + $0x70] sm:$0xf]
      %v727 = vld [vmem:[%s354 + $0x74] sm:$0xf]
      %v728 = vld [vmem:[%s354 + $0x78] sm:$0xf]
      %v729 = vld [vmem:[%s354 + $0x7c] sm:$0xf]
      %v730 = vld [vmem:[%s2] sm:$0xf]
      %v731 = vld [vmem:[%s2 + $0x4] sm:$0xf]
      %v732 = vld [vmem:[%s2 + $0x8] sm:$0xf]
      %v733 = vld [vmem:[%s2 + $0xc] sm:$0xf]
      %v734 = vld [vmem:[%s2 + $0x10] sm:$0xf]
      %v735 = vld [vmem:[%s2 + $0x14] sm:$0xf]
      %v736 = vld [vmem:[%s2 + $0x18] sm:$0xf]
      %v737 = vld [vmem:[%s2 + $0x1c] sm:$0xf]
      %v738 = vld [vmem:[%s2 + $0x20] sm:$0xf]
      %v739 = vld [vmem:[%s2 + $0x24] sm:$0xf]
      %v740 = vld [vmem:[%s2 + $0x28] sm:$0xf]
      %v741 = vld [vmem:[%s2 + $0x2c] sm:$0xf]
      %v742 = vld [vmem:[%s2 + $0x30] sm:$0xf]
      %v743 = vld [vmem:[%s2 + $0x34] sm:$0xf]
      %v744 = vld [vmem:[%s2 + $0x38] sm:$0xf]
      %v745 = vld [vmem:[%s2 + $0x3c] sm:$0xf]
      %v746 = vld [vmem:[%s3] sm:$0x1]
      %v748 = vperm.slane %v746, 0
      %v766 = vunpack.c.l.b16 %v714
      %v767 = vunpack.c.l.b16 %v715
      %v768 = vunpack.c.l.b16 %v716
      %v769 = vunpack.c.l.b16 %v717
      %v770 = vunpack.c.l.b16 %v718
      %v771 = vunpack.c.l.b16 %v719
      %v772 = vunpack.c.l.b16 %v720
      %v773 = vunpack.c.l.b16 %v721
      %v774 = vunpack.c.l.b16 %v722
      %v775 = vunpack.c.l.b16 %v723
      %v776 = vunpack.c.l.b16 %v724
      %v777 = vunpack.c.l.b16 %v725
      %v778 = vunpack.c.l.b16 %v726
      %v779 = vunpack.c.l.b16 %v727
      %v780 = vunpack.c.l.b16 %v728
      %v781 = vunpack.c.l.b16 %v729
      %v782 = vpack.c.b16 %v767, %v766
      %v783 = vpack.c.b16 %v769, %v768
      %v784 = vpack.c.b16 %v771, %v770
      %v785 = vpack.c.b16 %v773, %v772
      %v786 = vpack.c.b16 %v775, %v774
      %v787 = vpack.c.b16 %v777, %v776
      %v788 = vpack.c.b16 %v779, %v778
      %v789 = vpack.c.b16 %v781, %v780
      %v814 = vunpack.c.l.b16 %v730
      %v815 = vunpack.c.l.b16 %v731
      %v816 = vunpack.c.l.b16 %v732
      %v817 = vunpack.c.l.b16 %v733
      %v818 = vunpack.c.l.b16 %v734
      %v819 = vunpack.c.l.b16 %v735
      %v820 = vunpack.c.l.b16 %v736
      %v821 = vunpack.c.l.b16 %v737
      %v822 = vunpack.c.l.b16 %v738
      %v823 = vunpack.c.l.b16 %v739
      %v824 = vunpack.c.l.b16 %v740
      %v825 = vunpack.c.l.b16 %v741
      %v826 = vunpack.c.l.b16 %v742
      %v827 = vunpack.c.l.b16 %v743
      %v828 = vunpack.c.l.b16 %v744
      %v829 = vunpack.c.l.b16 %v745
      %v830 = vpack.c.b16 %v815, %v814
      %v831 = vpack.c.b16 %v817, %v816
      %v832 = vpack.c.b16 %v819, %v818
      %v833 = vpack.c.b16 %v821, %v820
      %v834 = vpack.c.b16 %v823, %v822
      %v835 = vpack.c.b16 %v825, %v824
      %v836 = vpack.c.b16 %v827, %v826
      %v837 = vpack.c.b16 %v829, %v828
      %846 = vmatpush.bf16.msra.mxu0 %v837
      %847 = vmatpush.bf16.msra.mxu0 %v836
      %848 = vmatpush.bf16.msra.mxu0 %v835
      %849 = vmatpush.bf16.msra.mxu0 %v834
      %850 = vmatpush.bf16.msra.mxu0 %v833
      %851 = vmatpush.bf16.msra.mxu0 %v832
      %852 = vmatpush.bf16.msra.mxu0 %v831
      %853 = vmatpush.bf16.msra.mxu0 %v830
      %854 = vmatmul.bf16.gmra.mxu0 %v782
      %v855 = vpop.f32.mrf.mxu0
      %v856 = vadd.f32 %v748, %v855
      %v857 = vpop.f32.mrf.mxu0
      %v858 = vadd.f32 %v748, %v857
      %859 = vmatmul.bf16.gmra.mxu0 %v783
      %v860 = vpop.f32.mrf.mxu0
      %v861 = vadd.f32 %v748, %v860
      %v862 = vpop.f32.mrf.mxu0
      %v863 = vadd.f32 %v748, %v862
      %864 = vmatmul.bf16.gmra.mxu0 %v784
      %v865 = vpop.f32.mrf.mxu0
      %v866 = vadd.f32 %v748, %v865
      %v867 = vpop.f32.mrf.mxu0
      %v868 = vadd.f32 %v748, %v867
      %869 = vmatmul.bf16.gmra.mxu0 %v785
      %v870 = vpop.f32.mrf.mxu0
      %v871 = vadd.f32 %v748, %v870
      %v872 = vpop.f32.mrf.mxu0
      %v873 = vadd.f32 %v748, %v872
      %874 = vmatmul.bf16.gmra.mxu0 %v786
      %v875 = vpop.f32.mrf.mxu0
      %v876 = vadd.f32 %v748, %v875
      %v877 = vpop.f32.mrf.mxu0
      %v878 = vadd.f32 %v748, %v877
      %879 = vmatmul.bf16.gmra.mxu0 %v787
      %v880 = vpop.f32.mrf.mxu0
      %v881 = vadd.f32 %v748, %v880
      %v882 = vpop.f32.mrf.mxu0
      %v883 = vadd.f32 %v748, %v882
      %884 = vmatmul.bf16.gmra.mxu0 %v788
      %v885 = vpop.f32.mrf.mxu0
      %v886 = vadd.f32 %v748, %v885
      %v887 = vpop.f32.mrf.mxu0
      %v888 = vadd.f32 %v748, %v887
      %889 = vmatmul.bf16.gmra.mxu0 %v789
      %v890 = vpop.f32.mrf.mxu0
      %v891 = vadd.f32 %v748, %v890
      %v892 = vpop.f32.mrf.mxu0
      %v893 = vadd.f32 %v748, %v892
      %894 = vdwg.mxu0
      %v895 = vmax.f32 %v856, 0.0
      %v896 = vmax.f32 %v858, 0.0
      %v897 = vmax.f32 %v861, 0.0
      %v898 = vmax.f32 %v863, 0.0
      %v899 = vmax.f32 %v866, 0.0
      %v900 = vmax.f32 %v868, 0.0
      %v901 = vmax.f32 %v871, 0.0
      %v902 = vmax.f32 %v873, 0.0
      %v903 = vmax.f32 %v876, 0.0
      %v904 = vmax.f32 %v878, 0.0
      %v905 = vmax.f32 %v881, 0.0
      %v906 = vmax.f32 %v883, 0.0
      %v907 = vmax.f32 %v886, 0.0
      %v908 = vmax.f32 %v888, 0.0
      %v909 = vmax.f32 %v891, 0.0
      %v910 = vmax.f32 %v893, 0.0
      %v911 = vld [vmem:[%s1 + $0x80] sm:$0xff]
      %v912 = vld [vmem:[%s1 + $0x88] sm:$0xff]
      %v913 = vld [vmem:[%s1 + $0x90] sm:$0xff]
      %v914 = vld [vmem:[%s1 + $0x98] sm:$0xff]
      %v915 = vld [vmem:[%s1 + $0xa0] sm:$0xff]
      %v916 = vld [vmem:[%s1 + $0xa8] sm:$0xff]
      %v917 = vld [vmem:[%s1 + $0xb0] sm:$0xff]
      %v918 = vld [vmem:[%s1 + $0xb8] sm:$0xff]
      %v919 = vld [vmem:[%s1 + $0xc0] sm:$0xff]
      %v920 = vld [vmem:[%s1 + $0xc8] sm:$0xff]
      %v921 = vld [vmem:[%s1 + $0xd0] sm:$0xff]
      %v922 = vld [vmem:[%s1 + $0xd8] sm:$0xff]
      %v923 = vld [vmem:[%s1 + $0xe0] sm:$0xff]
      %v924 = vld [vmem:[%s1 + $0xe8] sm:$0xff]
      %v925 = vld [vmem:[%s1 + $0xf0] sm:$0xff]
      %v926 = vld [vmem:[%s1 + $0xf8] sm:$0xff]
      %928 = vset.pattern.permute.xlu0 0
      %929 = vperm.xlu0 %928, %v911
      %v930 = vpop.permute.xlu0 %929
      %933 = vset.pattern.permute.xlu0 0
      %934 = vperm.xlu0 %933, %v912
      %v935 = vpop.permute.xlu0 %934
      %938 = vset.pattern.permute.xlu0 0
      %939 = vperm.xlu0 %938, %v913
      %v940 = vpop.permute.xlu0 %939
      %943 = vset.pattern.permute.xlu0 0
      %944 = vperm.xlu0 %943, %v914
      %v945 = vpop.permute.xlu0 %944
      %948 = vset.pattern.permute.xlu0 0
      %949 = vperm.xlu0 %948, %v915
      %v950 = vpop.permute.xlu0 %949
      %953 = vset.pattern.permute.xlu0 0
      %954 = vperm.xlu0 %953, %v916
      %v955 = vpop.permute.xlu0 %954
      %958 = vset.pattern.permute.xlu0 0
      %959 = vperm.xlu0 %958, %v917
      %v960 = vpop.permute.xlu0 %959
      %963 = vset.pattern.permute.xlu0 0
      %964 = vperm.xlu0 %963, %v918
      %v965 = vpop.permute.xlu0 %964
      %968 = vset.pattern.permute.xlu0 0
      %969 = vperm.xlu0 %968, %v919
      %v970 = vpop.permute.xlu0 %969
      %973 = vset.pattern.permute.xlu0 0
      %974 = vperm.xlu0 %973, %v920
      %v975 = vpop.permute.xlu0 %974
      %978 = vset.pattern.permute.xlu0 0
      %979 = vperm.xlu0 %978, %v921
      %v980 = vpop.permute.xlu0 %979
      %983 = vset.pattern.permute.xlu0 0
      %984 = vperm.xlu0 %983, %v922
      %v985 = vpop.permute.xlu0 %984
      %988 = vset.pattern.permute.xlu0 0
      %989 = vperm.xlu0 %988, %v923
      %v990 = vpop.permute.xlu0 %989
      %993 = vset.pattern.permute.xlu0 0
      %994 = vperm.xlu0 %993, %v924
      %v995 = vpop.permute.xlu0 %994
      %998 = vset.pattern.permute.xlu0 0
      %999 = vperm.xlu0 %998, %v925
      %v1000 = vpop.permute.xlu0 %999
      %1003 = vset.pattern.permute.xlu0 0
      %1004 = vperm.xlu0 %1003, %v926
      %v1005 = vpop.permute.xlu0 %1004
      %v1007 = vmul.f32 %v895, %v930
      %v1008 = vmul.f32 %v896, %v935
      %v1009 = vmul.f32 %v897, %v940
      %v1010 = vmul.f32 %v898, %v945
      %v1011 = vmul.f32 %v899, %v950
      %v1012 = vmul.f32 %v900, %v955
      %v1013 = vmul.f32 %v901, %v960
      %v1014 = vmul.f32 %v902, %v965
      %v1015 = vmul.f32 %v903, %v970
      %v1016 = vmul.f32 %v904, %v975
      %v1017 = vmul.f32 %v905, %v980
      %v1018 = vmul.f32 %v906, %v985
      %v1019 = vmul.f32 %v907, %v990
      %v1020 = vmul.f32 %v908, %v995
      %v1021 = vmul.f32 %v909, %v1000
      %v1022 = vmul.f32 %v910, %v1005
      %v1023 = vpack.c.bf16 %v1007, %v1007
      %v1024 = vpack.c.bf16 %v1008, %v1008
      %v1025 = vpack.c.bf16 %v1009, %v1009
      %v1026 = vpack.c.bf16 %v1010, %v1010
      %v1027 = vpack.c.bf16 %v1011, %v1011
      %v1028 = vpack.c.bf16 %v1012, %v1012
      %v1029 = vpack.c.bf16 %v1013, %v1013
      %v1030 = vpack.c.bf16 %v1014, %v1014
      %v1031 = vpack.c.bf16 %v1015, %v1015
      %v1032 = vpack.c.bf16 %v1016, %v1016
      %v1033 = vpack.c.bf16 %v1017, %v1017
      %v1034 = vpack.c.bf16 %v1018, %v1018
      %v1035 = vpack.c.bf16 %v1019, %v1019
      %v1036 = vpack.c.bf16 %v1020, %v1020
      %v1037 = vpack.c.bf16 %v1021, %v1021
      %v1038 = vpack.c.bf16 %v1022, %v1022
      %1039 = vst [vmem:[#allocation2 + $0x58] sm:$0xf] %v1023
      %1040 = vst [vmem:[#allocation2 + $0x5c] sm:$0xf] %v1024
      %1041 = vst [vmem:[#allocation2 + $0x60] sm:$0xf] %v1025
      %1042 = vst [vmem:[#allocation2 + $0x64] sm:$0xf] %v1026
      %1043 = vst [vmem:[#allocation2 + $0x68] sm:$0xf] %v1027
      %1044 = vst [vmem:[#allocation2 + $0x6c] sm:$0xf] %v1028
      %1045 = vst [vmem:[#allocation2 + $0x70] sm:$0xf] %v1029
      %1046 = vst [vmem:[#allocation2 + $0x74] sm:$0xf] %v1030
      %1047 = vst [vmem:[#allocation2 + $0x78] sm:$0xf] %v1031
      %1048 = vst [vmem:[#allocation2 + $0x7c] sm:$0xf] %v1032
      %1049 = vst [vmem:[#allocation2 + $0x80] sm:$0xf] %v1033
      %1050 = vst [vmem:[#allocation2 + $0x84] sm:$0xf] %v1034
      %1051 = vst [vmem:[#allocation2 + $0x88] sm:$0xf] %v1035
      %1052 = vst [vmem:[#allocation2 + $0x8c] sm:$0xf] %v1036
      %1053 = vst [vmem:[#allocation2 + $0x90] sm:$0xf] %v1037
      %1054 = vst [vmem:[#allocation2 + $0x94] sm:$0xf] %v1038
      %v1055 = vld [vmem:[%s354 + $0x80] sm:$0xf]
      %v1056 = vld [vmem:[%s354 + $0x84] sm:$0xf]
      %v1057 = vld [vmem:[%s354 + $0x88] sm:$0xf]
      %v1058 = vld [vmem:[%s354 + $0x8c] sm:$0xf]
      %v1059 = vld [vmem:[%s354 + $0x90] sm:$0xf]
      %v1060 = vld [vmem:[%s354 + $0x94] sm:$0xf]
      %v1061 = vld [vmem:[%s354 + $0x98] sm:$0xf]
      %v1062 = vld [vmem:[%s354 + $0x9c] sm:$0xf]
      %v1063 = vld [vmem:[%s354 + $0xa0] sm:$0xf]
      %v1064 = vld [vmem:[%s354 + $0xa4] sm:$0xf]
      %v1065 = vld [vmem:[%s354 + $0xa8] sm:$0xf]
      %v1066 = vld [vmem:[%s354 + $0xac] sm:$0xf]
      %v1067 = vld [vmem:[%s354 + $0xb0] sm:$0xf]
      %v1068 = vld [vmem:[%s354 + $0xb4] sm:$0xf]
      %v1069 = vld [vmem:[%s354 + $0xb8] sm:$0xf]
      %v1070 = vld [vmem:[%s354 + $0xbc] sm:$0xf]
      %v1071 = vld [vmem:[%s2] sm:$0xf]
      %v1072 = vld [vmem:[%s2 + $0x4] sm:$0xf]
      %v1073 = vld [vmem:[%s2 + $0x8] sm:$0xf]
      %v1074 = vld [vmem:[%s2 + $0xc] sm:$0xf]
      %v1075 = vld [vmem:[%s2 + $0x10] sm:$0xf]
      %v1076 = vld [vmem:[%s2 + $0x14] sm:$0xf]
      %v1077 = vld [vmem:[%s2 + $0x18] sm:$0xf]
      %v1078 = vld [vmem:[%s2 + $0x1c] sm:$0xf]
      %v1079 = vld [vmem:[%s2 + $0x20] sm:$0xf]
      %v1080 = vld [vmem:[%s2 + $0x24] sm:$0xf]
      %v1081 = vld [vmem:[%s2 + $0x28] sm:$0xf]
      %v1082 = vld [vmem:[%s2 + $0x2c] sm:$0xf]
      %v1083 = vld [vmem:[%s2 + $0x30] sm:$0xf]
      %v1084 = vld [vmem:[%s2 + $0x34] sm:$0xf]
      %v1085 = vld [vmem:[%s2 + $0x38] sm:$0xf]
      %v1086 = vld [vmem:[%s2 + $0x3c] sm:$0xf]
      %v1087 = vld [vmem:[%s3] sm:$0x1]
      %v1089 = vperm.slane %v1087, 0
      %v1107 = vunpack.c.l.b16 %v1055
      %v1108 = vunpack.c.l.b16 %v1056
      %v1109 = vunpack.c.l.b16 %v1057
      %v1110 = vunpack.c.l.b16 %v1058
      %v1111 = vunpack.c.l.b16 %v1059
      %v1112 = vunpack.c.l.b16 %v1060
      %v1113 = vunpack.c.l.b16 %v1061
      %v1114 = vunpack.c.l.b16 %v1062
      %v1115 = vunpack.c.l.b16 %v1063
      %v1116 = vunpack.c.l.b16 %v1064
      %v1117 = vunpack.c.l.b16 %v1065
      %v1118 = vunpack.c.l.b16 %v1066
      %v1119 = vunpack.c.l.b16 %v1067
      %v1120 = vunpack.c.l.b16 %v1068
      %v1121 = vunpack.c.l.b16 %v1069
      %v1122 = vunpack.c.l.b16 %v1070
      %v1123 = vpack.c.b16 %v1108, %v1107
      %v1124 = vpack.c.b16 %v1110, %v1109
      %v1125 = vpack.c.b16 %v1112, %v1111
      %v1126 = vpack.c.b16 %v1114, %v1113
      %v1127 = vpack.c.b16 %v1116, %v1115
      %v1128 = vpack.c.b16 %v1118, %v1117
      %v1129 = vpack.c.b16 %v1120, %v1119
      %v1130 = vpack.c.b16 %v1122, %v1121
      %v1155 = vunpack.c.l.b16 %v1071
      %v1156 = vunpack.c.l.b16 %v1072
      %v1157 = vunpack.c.l.b16 %v1073
      %v1158 = vunpack.c.l.b16 %v1074
      %v1159 = vunpack.c.l.b16 %v1075
      %v1160 = vunpack.c.l.b16 %v1076
      %v1161 = vunpack.c.l.b16 %v1077
      %v1162 = vunpack.c.l.b16 %v1078
      %v1163 = vunpack.c.l.b16 %v1079
      %v1164 = vunpack.c.l.b16 %v1080
      %v1165 = vunpack.c.l.b16 %v1081
      %v1166 = vunpack.c.l.b16 %v1082
      %v1167 = vunpack.c.l.b16 %v1083
      %v1168 = vunpack.c.l.b16 %v1084
      %v1169 = vunpack.c.l.b16 %v1085
      %v1170 = vunpack.c.l.b16 %v1086
      %v1171 = vpack.c.b16 %v1156, %v1155
      %v1172 = vpack.c.b16 %v1158, %v1157
      %v1173 = vpack.c.b16 %v1160, %v1159
      %v1174 = vpack.c.b16 %v1162, %v1161
      %v1175 = vpack.c.b16 %v1164, %v1163
      %v1176 = vpack.c.b16 %v1166, %v1165
      %v1177 = vpack.c.b16 %v1168, %v1167
      %v1178 = vpack.c.b16 %v1170, %v1169
      %1187 = vmatpush.bf16.msra.mxu0 %v1178
      %1188 = vmatpush.bf16.msra.mxu0 %v1177
      %1189 = vmatpush.bf16.msra.mxu0 %v1176
      %1190 = vmatpush.bf16.msra.mxu0 %v1175
      %1191 = vmatpush.bf16.msra.mxu0 %v1174
      %1192 = vmatpush.bf16.msra.mxu0 %v1173
      %1193 = vmatpush.bf16.msra.mxu0 %v1172
      %1194 = vmatpush.bf16.msra.mxu0 %v1171
      %1195 = vmatmul.bf16.gmra.mxu0 %v1123
      %v1196 = vpop.f32.mrf.mxu0
      %v1197 = vadd.f32 %v1089, %v1196
      %v1198 = vpop.f32.mrf.mxu0
      %v1199 = vadd.f32 %v1089, %v1198
      %1200 = vmatmul.bf16.gmra.mxu0 %v1124
      %v1201 = vpop.f32.mrf.mxu0
      %v1202 = vadd.f32 %v1089, %v1201
      %v1203 = vpop.f32.mrf.mxu0
      %v1204 = vadd.f32 %v1089, %v1203
      %1205 = vmatmul.bf16.gmra.mxu0 %v1125
      %v1206 = vpop.f32.mrf.mxu0
      %v1207 = vadd.f32 %v1089, %v1206
      %v1208 = vpop.f32.mrf.mxu0
      %v1209 = vadd.f32 %v1089, %v1208
      %1210 = vmatmul.bf16.gmra.mxu0 %v1126
      %v1211 = vpop.f32.mrf.mxu0
      %v1212 = vadd.f32 %v1089, %v1211
      %v1213 = vpop.f32.mrf.mxu0
      %v1214 = vadd.f32 %v1089, %v1213
      %1215 = vmatmul.bf16.gmra.mxu0 %v1127
      %v1216 = vpop.f32.mrf.mxu0
      %v1217 = vadd.f32 %v1089, %v1216
      %v1218 = vpop.f32.mrf.mxu0
      %v1219 = vadd.f32 %v1089, %v1218
      %1220 = vmatmul.bf16.gmra.mxu0 %v1128
      %v1221 = vpop.f32.mrf.mxu0
      %v1222 = vadd.f32 %v1089, %v1221
      %v1223 = vpop.f32.mrf.mxu0
      %v1224 = vadd.f32 %v1089, %v1223
      %1225 = vmatmul.bf16.gmra.mxu0 %v1129
      %v1226 = vpop.f32.mrf.mxu0
      %v1227 = vadd.f32 %v1089, %v1226
      %v1228 = vpop.f32.mrf.mxu0
      %v1229 = vadd.f32 %v1089, %v1228
      %1230 = vmatmul.bf16.gmra.mxu0 %v1130
      %v1231 = vpop.f32.mrf.mxu0
      %v1232 = vadd.f32 %v1089, %v1231
      %v1233 = vpop.f32.mrf.mxu0
      %v1234 = vadd.f32 %v1089, %v1233
      %1235 = vdwg.mxu0
      %v1236 = vmax.f32 %v1197, 0.0
      %v1237 = vmax.f32 %v1199, 0.0
      %v1238 = vmax.f32 %v1202, 0.0
      %v1239 = vmax.f32 %v1204, 0.0
      %v1240 = vmax.f32 %v1207, 0.0
      %v1241 = vmax.f32 %v1209, 0.0
      %v1242 = vmax.f32 %v1212, 0.0
      %v1243 = vmax.f32 %v1214, 0.0
      %v1244 = vmax.f32 %v1217, 0.0
      %v1245 = vmax.f32 %v1219, 0.0
      %v1246 = vmax.f32 %v1222, 0.0
      %v1247 = vmax.f32 %v1224, 0.0
      %v1248 = vmax.f32 %v1227, 0.0
      %v1249 = vmax.f32 %v1229, 0.0
      %v1250 = vmax.f32 %v1232, 0.0
      %v1251 = vmax.f32 %v1234, 0.0
      %v1252 = vld [vmem:[%s1 + $0x100] sm:$0xff]
      %v1253 = vld [vmem:[%s1 + $0x108] sm:$0xff]
      %v1254 = vld [vmem:[%s1 + $0x110] sm:$0xff]
      %v1255 = vld [vmem:[%s1 + $0x118] sm:$0xff]
      %v1256 = vld [vmem:[%s1 + $0x120] sm:$0xff]
      %v1257 = vld [vmem:[%s1 + $0x128] sm:$0xff]
      %v1258 = vld [vmem:[%s1 + $0x130] sm:$0xff]
      %v1259 = vld [vmem:[%s1 + $0x138] sm:$0xff]
      %v1260 = vld [vmem:[%s1 + $0x140] sm:$0xff]
      %v1261 = vld [vmem:[%s1 + $0x148] sm:$0xff]
      %v1262 = vld [vmem:[%s1 + $0x150] sm:$0xff]
      %v1263 = vld [vmem:[%s1 + $0x158] sm:$0xff]
      %v1264 = vld [vmem:[%s1 + $0x160] sm:$0xff]
      %v1265 = vld [vmem:[%s1 + $0x168] sm:$0xff]
      %v1266 = vld [vmem:[%s1 + $0x170] sm:$0xff]
      %v1267 = vld [vmem:[%s1 + $0x178] sm:$0xff]
      %1269 = vset.pattern.permute.xlu0 0
      %1270 = vperm.xlu0 %1269, %v1252
      %v1271 = vpop.permute.xlu0 %1270
      %1274 = vset.pattern.permute.xlu0 0
      %1275 = vperm.xlu0 %1274, %v1253
      %v1276 = vpop.permute.xlu0 %1275
      %1279 = vset.pattern.permute.xlu0 0
      %1280 = vperm.xlu0 %1279, %v1254
      %v1281 = vpop.permute.xlu0 %1280
      %1284 = vset.pattern.permute.xlu0 0
      %1285 = vperm.xlu0 %1284, %v1255
      %v1286 = vpop.permute.xlu0 %1285
      %1289 = vset.pattern.permute.xlu0 0
      %1290 = vperm.xlu0 %1289, %v1256
      %v1291 = vpop.permute.xlu0 %1290
      %1294 = vset.pattern.permute.xlu0 0
      %1295 = vperm.xlu0 %1294, %v1257
      %v1296 = vpop.permute.xlu0 %1295
      %1299 = vset.pattern.permute.xlu0 0
      %1300 = vperm.xlu0 %1299, %v1258
      %v1301 = vpop.permute.xlu0 %1300
      %1304 = vset.pattern.permute.xlu0 0
      %1305 = vperm.xlu0 %1304, %v1259
      %v1306 = vpop.permute.xlu0 %1305
      %1309 = vset.pattern.permute.xlu0 0
      %1310 = vperm.xlu0 %1309, %v1260
      %v1311 = vpop.permute.xlu0 %1310
      %1314 = vset.pattern.permute.xlu0 0
      %1315 = vperm.xlu0 %1314, %v1261
      %v1316 = vpop.permute.xlu0 %1315
      %1319 = vset.pattern.permute.xlu0 0
      %1320 = vperm.xlu0 %1319, %v1262
      %v1321 = vpop.permute.xlu0 %1320
      %1324 = vset.pattern.permute.xlu0 0
      %1325 = vperm.xlu0 %1324, %v1263
      %v1326 = vpop.permute.xlu0 %1325
      %1329 = vset.pattern.permute.xlu0 0
      %1330 = vperm.xlu0 %1329, %v1264
      %v1331 = vpop.permute.xlu0 %1330
      %1334 = vset.pattern.permute.xlu0 0
      %1335 = vperm.xlu0 %1334, %v1265
      %v1336 = vpop.permute.xlu0 %1335
      %1339 = vset.pattern.permute.xlu0 0
      %1340 = vperm.xlu0 %1339, %v1266
      %v1341 = vpop.permute.xlu0 %1340
      %1344 = vset.pattern.permute.xlu0 0
      %1345 = vperm.xlu0 %1344, %v1267
      %v1346 = vpop.permute.xlu0 %1345
      %v1348 = vmul.f32 %v1236, %v1271
      %v1349 = vmul.f32 %v1237, %v1276
      %v1350 = vmul.f32 %v1238, %v1281
      %v1351 = vmul.f32 %v1239, %v1286
      %v1352 = vmul.f32 %v1240, %v1291
      %v1353 = vmul.f32 %v1241, %v1296
      %v1354 = vmul.f32 %v1242, %v1301
      %v1355 = vmul.f32 %v1243, %v1306
      %v1356 = vmul.f32 %v1244, %v1311
      %v1357 = vmul.f32 %v1245, %v1316
      %v1358 = vmul.f32 %v1246, %v1321
      %v1359 = vmul.f32 %v1247, %v1326
      %v1360 = vmul.f32 %v1248, %v1331
      %v1361 = vmul.f32 %v1249, %v1336
      %v1362 = vmul.f32 %v1250, %v1341
      %v1363 = vmul.f32 %v1251, %v1346
      %v1364 = vpack.c.bf16 %v1348, %v1348
      %v1365 = vpack.c.bf16 %v1349, %v1349
      %v1366 = vpack.c.bf16 %v1350, %v1350
      %v1367 = vpack.c.bf16 %v1351, %v1351
      %v1368 = vpack.c.bf16 %v1352, %v1352
      %v1369 = vpack.c.bf16 %v1353, %v1353
      %v1370 = vpack.c.bf16 %v1354, %v1354
      %v1371 = vpack.c.bf16 %v1355, %v1355
      %v1372 = vpack.c.bf16 %v1356, %v1356
      %v1373 = vpack.c.bf16 %v1357, %v1357
      %v1374 = vpack.c.bf16 %v1358, %v1358
      %v1375 = vpack.c.bf16 %v1359, %v1359
      %v1376 = vpack.c.bf16 %v1360, %v1360
      %v1377 = vpack.c.bf16 %v1361, %v1361
      %v1378 = vpack.c.bf16 %v1362, %v1362
      %v1379 = vpack.c.bf16 %v1363, %v1363
      %1380 = vst [vmem:[#allocation2 + $0x98] sm:$0xf] %v1364
      %1381 = vst [vmem:[#allocation2 + $0x9c] sm:$0xf] %v1365
      %1382 = vst [vmem:[#allocation2 + $0xa0] sm:$0xf] %v1366
      %1383 = vst [vmem:[#allocation2 + $0xa4] sm:$0xf] %v1367
      %1384 = vst [vmem:[#allocation2 + $0xa8] sm:$0xf] %v1368
      %1385 = vst [vmem:[#allocation2 + $0xac] sm:$0xf] %v1369
      %1386 = vst [vmem:[#allocation2 + $0xb0] sm:$0xf] %v1370
      %1387 = vst [vmem:[#allocation2 + $0xb4] sm:$0xf] %v1371
      %1388 = vst [vmem:[#allocation2 + $0xb8] sm:$0xf] %v1372
      %1389 = vst [vmem:[#allocation2 + $0xbc] sm:$0xf] %v1373
      %1390 = vst [vmem:[#allocation2 + $0xc0] sm:$0xf] %v1374
      %1391 = vst [vmem:[#allocation2 + $0xc4] sm:$0xf] %v1375
      %1392 = vst [vmem:[#allocation2 + $0xc8] sm:$0xf] %v1376
      %1393 = vst [vmem:[#allocation2 + $0xcc] sm:$0xf] %v1377
      %1394 = vst [vmem:[#allocation2 + $0xd0] sm:$0xf] %v1378
      %1395 = vst [vmem:[#allocation2 + $0xd4] sm:$0xf] %v1379
      %v1396 = vld [vmem:[#allocation2 + $0x8] sm:$0x8]
      %v1397 = vld [vmem:[#allocation2 + $0xc] sm:$0xf]
      %v1398 = vld [vmem:[#allocation2 + $0x10] sm:$0xf]
      %v1399 = vld [vmem:[#allocation2 + $0x14] sm:$0xf]
      %v1400 = vld [vmem:[#allocation2 + $0x18] sm:$0xf]
      %v1401 = vld [vmem:[#allocation2 + $0x1c] sm:$0xf]
      %v1402 = vld [vmem:[#allocation2 + $0x20] sm:$0xf]
      %v1403 = vld [vmem:[#allocation2 + $0x24] sm:$0xf]
      %v1404 = vld [vmem:[#allocation2 + $0x28] sm:$0xf]
      %v1405 = vld [vmem:[#allocation2 + $0x2c] sm:$0xf]
      %v1406 = vld [vmem:[#allocation2 + $0x30] sm:$0xf]
      %v1407 = vld [vmem:[#allocation2 + $0x34] sm:$0xf]
      %v1408 = vld [vmem:[#allocation2 + $0x38] sm:$0xf]
      %v1409 = vld [vmem:[#allocation2 + $0x3c] sm:$0xf]
      %v1410 = vld [vmem:[#allocation2 + $0x40] sm:$0xf]
      %v1411 = vld [vmem:[#allocation2 + $0x44] sm:$0xf]
      %v1412 = vld [vmem:[#allocation2 + $0x48] sm:$0xf]
      %v1413 = vld [vmem:[%s4] sm:$0xf]
      %v1414 = vld [vmem:[%s4 + $0x4] sm:$0xf]
      %v1415 = vld [vmem:[%s4 + $0x8] sm:$0xf]
      %v1416 = vld [vmem:[%s4 + $0xc] sm:$0xf]
      %v1417 = vld [vmem:[%s4 + $0x10] sm:$0xf]
      %v1418 = vld [vmem:[%s4 + $0x14] sm:$0xf]
      %v1419 = vld [vmem:[%s4 + $0x18] sm:$0xf]
      %v1420 = vld [vmem:[%s4 + $0x1c] sm:$0xf]
      %v1421 = vld [vmem:[%s4 + $0x20] sm:$0xf]
      %v1422 = vld [vmem:[%s4 + $0x24] sm:$0xf]
      %v1423 = vld [vmem:[%s4 + $0x28] sm:$0xf]
      %v1424 = vld [vmem:[%s4 + $0x2c] sm:$0xf]
      %v1425 = vld [vmem:[%s4 + $0x30] sm:$0xf]
      %v1426 = vld [vmem:[%s4 + $0x34] sm:$0xf]
      %v1427 = vld [vmem:[%s4 + $0x38] sm:$0xf]
      %v1428 = vld [vmem:[%s4 + $0x3c] sm:$0xf]
      %s1429 = scalar_lea.vmem %s4, 64
      %v1430 = vld [vmem:[%s1429] sm:$0xf]
      %v1431 = vld [vmem:[%s1429 + $0x4] sm:$0xf]
      %v1432 = vld [vmem:[%s1429 + $0x8] sm:$0xf]
      %v1433 = vld [vmem:[%s1429 + $0xc] sm:$0xf]
      %v1434 = vld [vmem:[%s1429 + $0x10] sm:$0xf]
      %v1435 = vld [vmem:[%s1429 + $0x14] sm:$0xf]
      %v1436 = vld [vmem:[%s1429 + $0x18] sm:$0xf]
      %v1437 = vld [vmem:[%s1429 + $0x1c] sm:$0xf]
      %v1438 = vld [vmem:[%s1429 + $0x20] sm:$0xf]
      %v1439 = vld [vmem:[%s1429 + $0x24] sm:$0xf]
      %v1440 = vld [vmem:[%s1429 + $0x28] sm:$0xf]
      %v1441 = vld [vmem:[%s1429 + $0x2c] sm:$0xf]
      %v1442 = vld [vmem:[%s1429 + $0x30] sm:$0xf]
      %v1443 = vld [vmem:[%s1429 + $0x34] sm:$0xf]
      %v1444 = vld [vmem:[%s1429 + $0x38] sm:$0xf]
      %v1445 = vld [vmem:[%s1429 + $0x3c] sm:$0xf]
      %v1462 = vunpack.c.l.b16 %v1397
      %v1463 = vunpack.c.l.b16 %v1398
      %v1464 = vunpack.c.l.b16 %v1399
      %v1465 = vunpack.c.l.b16 %v1400
      %v1466 = vunpack.c.l.b16 %v1401
      %v1467 = vunpack.c.l.b16 %v1402
      %v1468 = vunpack.c.l.b16 %v1403
      %v1469 = vunpack.c.l.b16 %v1404
      %v1470 = vunpack.c.l.b16 %v1405
      %v1471 = vunpack.c.l.b16 %v1406
      %v1472 = vunpack.c.l.b16 %v1407
      %v1473 = vunpack.c.l.b16 %v1408
      %v1474 = vunpack.c.l.b16 %v1409
      %v1475 = vunpack.c.l.b16 %v1410
      %v1476 = vunpack.c.l.b16 %v1411
      %v1477 = vunpack.c.l.b16 %v1412
      %v1478 = vpack.c.b16 %v1463, %v1462
      %v1479 = vpack.c.b16 %v1465, %v1464
      %v1480 = vpack.c.b16 %v1467, %v1466
      %v1481 = vpack.c.b16 %v1469, %v1468
      %v1482 = vpack.c.b16 %v1471, %v1470
      %v1483 = vpack.c.b16 %v1473, %v1472
      %v1484 = vpack.c.b16 %v1475, %v1474
      %v1485 = vpack.c.b16 %v1477, %v1476
      %v1510 = vunpack.c.l.b16 %v1430
      %v1511 = vunpack.c.l.b16 %v1431
      %v1512 = vunpack.c.l.b16 %v1432
      %v1513 = vunpack.c.l.b16 %v1433
      %v1514 = vunpack.c.l.b16 %v1434
      %v1515 = vunpack.c.l.b16 %v1435
      %v1516 = vunpack.c.l.b16 %v1436
      %v1517 = vunpack.c.l.b16 %v1437
      %v1518 = vunpack.c.l.b16 %v1438
      %v1519 = vunpack.c.l.b16 %v1439
      %v1520 = vunpack.c.l.b16 %v1440
      %v1521 = vunpack.c.l.b16 %v1441
      %v1522 = vunpack.c.l.b16 %v1442
      %v1523 = vunpack.c.l.b16 %v1443
      %v1524 = vunpack.c.l.b16 %v1444
      %v1525 = vunpack.c.l.b16 %v1445
      %v1526 = vpack.c.b16 %v1511, %v1510
      %v1527 = vpack.c.b16 %v1513, %v1512
      %v1528 = vpack.c.b16 %v1515, %v1514
      %v1529 = vpack.c.b16 %v1517, %v1516
      %v1530 = vpack.c.b16 %v1519, %v1518
      %v1531 = vpack.c.b16 %v1521, %v1520
      %v1532 = vpack.c.b16 %v1523, %v1522
      %v1533 = vpack.c.b16 %v1525, %v1524
      %1542 = vmatpush.bf16.msra.mxu0 %v1533
      %1543 = vmatpush.bf16.msra.mxu0 %v1532
      %1544 = vmatpush.bf16.msra.mxu0 %v1531
      %1545 = vmatpush.bf16.msra.mxu0 %v1530
      %1546 = vmatpush.bf16.msra.mxu0 %v1529
      %1547 = vmatpush.bf16.msra.mxu0 %v1528
      %1548 = vmatpush.bf16.msra.mxu0 %v1527
      %1549 = vmatpush.bf16.msra.mxu0 %v1526
      %1550 = vmatmul.bf16.gmra.mxu0 %v1478
      %v1551 = vpop.f32.mrf.mxu0
      %v1552 = vadd.f32 0.0, %v1551
      %v1553 = vpop.f32.mrf.mxu0
      %v1554 = vadd.f32 0.0, %v1553
      %1555 = vmatmul.bf16.gmra.mxu0 %v1479
      %v1556 = vpop.f32.mrf.mxu0
      %v1557 = vadd.f32 0.0, %v1556
      %v1558 = vpop.f32.mrf.mxu0
      %v1559 = vadd.f32 0.0, %v1558
      %1560 = vmatmul.bf16.gmra.mxu0 %v1480
      %v1561 = vpop.f32.mrf.mxu0
      %v1562 = vadd.f32 0.0, %v1561
      %v1563 = vpop.f32.mrf.mxu0
      %v1564 = vadd.f32 0.0, %v1563
      %1565 = vmatmul.bf16.gmra.mxu0 %v1481
      %v1566 = vpop.f32.mrf.mxu0
      %v1567 = vadd.f32 0.0, %v1566
      %v1568 = vpop.f32.mrf.mxu0
      %v1569 = vadd.f32 0.0, %v1568
      %1570 = vmatmul.bf16.gmra.mxu0 %v1482
      %v1571 = vpop.f32.mrf.mxu0
      %v1572 = vadd.f32 0.0, %v1571
      %v1573 = vpop.f32.mrf.mxu0
      %v1574 = vadd.f32 0.0, %v1573
      %1575 = vmatmul.bf16.gmra.mxu0 %v1483
      %v1576 = vpop.f32.mrf.mxu0
      %v1577 = vadd.f32 0.0, %v1576
      %v1578 = vpop.f32.mrf.mxu0
      %v1579 = vadd.f32 0.0, %v1578
      %1580 = vmatmul.bf16.gmra.mxu0 %v1484
      %v1581 = vpop.f32.mrf.mxu0
      %v1582 = vadd.f32 0.0, %v1581
      %v1583 = vpop.f32.mrf.mxu0
      %v1584 = vadd.f32 0.0, %v1583
      %1585 = vmatmul.bf16.gmra.mxu0 %v1485
      %v1586 = vpop.f32.mrf.mxu0
      %v1587 = vadd.f32 0.0, %v1586
      %v1588 = vpop.f32.mrf.mxu0
      %v1589 = vadd.f32 0.0, %v1588
      %1590 = vdwg.mxu0
      %v1592 = vunpack.c.l.b16 %v1396
      %v1593 = vpack.c.b16 %v1462, %v1592
      %v1594 = vpack.c.b16 %v1464, %v1463
      %v1595 = vpack.c.b16 %v1466, %v1465
      %v1596 = vpack.c.b16 %v1468, %v1467
      %v1597 = vpack.c.b16 %v1470, %v1469
      %v1598 = vpack.c.b16 %v1472, %v1471
      %v1599 = vpack.c.b16 %v1474, %v1473
      %v1600 = vpack.c.b16 %v1476, %v1475
      %v1601 = vpack.c.b16 %v1477, %v1477
      %vm1602 = vsmask.f32 4352
      %v1604 = vshrl.u32 %v1593, 16
      %v1606 = vrot.slane %v1604, 3
      %v1607 = vshll.u32 %v1593, 16
      %v1609 = vrot.slane %v1607, 4
      %v1610 = vor.u32 %v1606, %v1609
      %v1612 = vshrl.u32 %v1594, 16
      %v1614 = vrot.slane %v1612, 3
      %v1615 = vshll.u32 %v1594, 16
      %v1617 = vrot.slane %v1615, 4
      %v1618 = vor.u32 %v1614, %v1617
      %v1619 = vsel %vm1602, %v1610, %v1618
      %v1621 = vshrl.u32 %v1595, 16
      %v1623 = vrot.slane %v1621, 3
      %v1624 = vshll.u32 %v1595, 16
      %v1626 = vrot.slane %v1624, 4
      %v1627 = vor.u32 %v1623, %v1626
      %v1628 = vsel %vm1602, %v1618, %v1627
      %v1630 = vshrl.u32 %v1596, 16
      %v1632 = vrot.slane %v1630, 3
      %v1633 = vshll.u32 %v1596, 16
      %v1635 = vrot.slane %v1633, 4
      %v1636 = vor.u32 %v1632, %v1635
      %v1637 = vsel %vm1602, %v1627, %v1636
      %v1639 = vshrl.u32 %v1597, 16
      %v1641 = vrot.slane %v1639, 3
      %v1642 = vshll.u32 %v1597, 16
      %v1644 = vrot.slane %v1642, 4
      %v1645 = vor.u32 %v1641, %v1644
      %v1646 = vsel %vm1602, %v1636, %v1645
      %v1648 = vshrl.u32 %v1598, 16
      %v1650 = vrot.slane %v1648, 3
      %v1651 = vshll.u32 %v1598, 16
      %v1653 = vrot.slane %v1651, 4
      %v1654 = vor.u32 %v1650, %v1653
      %v1655 = vsel %vm1602, %v1645, %v1654
      %v1657 = vshrl.u32 %v1599, 16
      %v1659 = vrot.slane %v1657, 3
      %v1660 = vshll.u32 %v1599, 16
      %v1662 = vrot.slane %v1660, 4
      %v1663 = vor.u32 %v1659, %v1662
      %v1664 = vsel %vm1602, %v1654, %v1663
      %v1666 = vshrl.u32 %v1600, 16
      %v1668 = vrot.slane %v1666, 3
      %v1669 = vshll.u32 %v1600, 16
      %v1671 = vrot.slane %v1669, 4
      %v1672 = vor.u32 %v1668, %v1671
      %v1673 = vsel %vm1602, %v1663, %v1672
      %v1675 = vshrl.u32 %v1601, 16
      %v1677 = vrot.slane %v1675, 3
      %v1678 = vshll.u32 %v1601, 16
      %v1680 = vrot.slane %v1678, 4
      %v1681 = vor.u32 %v1677, %v1680
      %v1682 = vsel %vm1602, %v1672, %v1681
      %v1707 = vunpack.c.l.b16 %v1413
      %v1708 = vunpack.c.l.b16 %v1414
      %v1709 = vunpack.c.l.b16 %v1415
      %v1710 = vunpack.c.l.b16 %v1416
      %v1711 = vunpack.c.l.b16 %v1417
      %v1712 = vunpack.c.l.b16 %v1418
      %v1713 = vunpack.c.l.b16 %v1419
      %v1714 = vunpack.c.l.b16 %v1420
      %v1715 = vunpack.c.l.b16 %v1421
      %v1716 = vunpack.c.l.b16 %v1422
      %v1717 = vunpack.c.l.b16 %v1423
      %v1718 = vunpack.c.l.b16 %v1424
      %v1719 = vunpack.c.l.b16 %v1425
      %v1720 = vunpack.c.l.b16 %v1426
      %v1721 = vunpack.c.l.b16 %v1427
      %v1722 = vunpack.c.l.b16 %v1428
      %v1723 = vpack.c.b16 %v1708, %v1707
      %v1724 = vpack.c.b16 %v1710, %v1709
      %v1725 = vpack.c.b16 %v1712, %v1711
      %v1726 = vpack.c.b16 %v1714, %v1713
      %v1727 = vpack.c.b16 %v1716, %v1715
      %v1728 = vpack.c.b16 %v1718, %v1717
      %v1729 = vpack.c.b16 %v1720, %v1719
      %v1730 = vpack.c.b16 %v1722, %v1721
      %1739 = vmatpush.bf16.msra.mxu0 %v1730
      %1740 = vmatpush.bf16.msra.mxu0 %v1729
      %1741 = vmatpush.bf16.msra.mxu0 %v1728
      %1742 = vmatpush.bf16.msra.mxu0 %v1727
      %1743 = vmatpush.bf16.msra.mxu0 %v1726
      %1744 = vmatpush.bf16.msra.mxu0 %v1725
      %1745 = vmatpush.bf16.msra.mxu0 %v1724
      %1746 = vmatpush.bf16.msra.mxu0 %v1723
      %1747 = vmatmul.bf16.gmra.mxu0 %v1619
      %v1748 = vpop.f32.mrf.mxu0
      %v1749 = vadd.f32 %v1552, %v1748
      %v1750 = vpop.f32.mrf.mxu0
      %v1751 = vadd.f32 %v1554, %v1750
      %1752 = vmatmul.bf16.gmra.mxu0 %v1628
      %v1753 = vpop.f32.mrf.mxu0
      %v1754 = vadd.f32 %v1557, %v1753
      %v1755 = vpop.f32.mrf.mxu0
      %v1756 = vadd.f32 %v1559, %v1755
      %1757 = vmatmul.bf16.gmra.mxu0 %v1637
      %v1758 = vpop.f32.mrf.mxu0
      %v1759 = vadd.f32 %v1562, %v1758
      %v1760 = vpop.f32.mrf.mxu0
      %v1761 = vadd.f32 %v1564, %v1760
      %1762 = vmatmul.bf16.gmra.mxu0 %v1646
      %v1763 = vpop.f32.mrf.mxu0
      %v1764 = vadd.f32 %v1567, %v1763
      %v1765 = vpop.f32.mrf.mxu0
      %v1766 = vadd.f32 %v1569, %v1765
      %1767 = vmatmul.bf16.gmra.mxu0 %v1655
      %v1768 = vpop.f32.mrf.mxu0
      %v1769 = vadd.f32 %v1572, %v1768
      %v1770 = vpop.f32.mrf.mxu0
      %v1771 = vadd.f32 %v1574, %v1770
      %1772 = vmatmul.bf16.gmra.mxu0 %v1664
      %v1773 = vpop.f32.mrf.mxu0
      %v1774 = vadd.f32 %v1577, %v1773
      %v1775 = vpop.f32.mrf.mxu0
      %v1776 = vadd.f32 %v1579, %v1775
      %1777 = vmatmul.bf16.gmra.mxu0 %v1673
      %v1778 = vpop.f32.mrf.mxu0
      %v1779 = vadd.f32 %v1582, %v1778
      %v1780 = vpop.f32.mrf.mxu0
      %v1781 = vadd.f32 %v1584, %v1780
      %1782 = vmatmul.bf16.gmra.mxu0 %v1682
      %v1783 = vpop.f32.mrf.mxu0
      %v1784 = vadd.f32 %v1587, %v1783
      %v1785 = vpop.f32.mrf.mxu0
      %v1786 = vadd.f32 %v1589, %v1785
      %1787 = vdwg.mxu0
      %v1788 = vld [vmem:[#allocation2 + $0xc] sm:$0xf]
      %v1789 = vld [vmem:[#allocation2 + $0x10] sm:$0xf]
      %v1790 = vld [vmem:[#allocation2 + $0x14] sm:$0xf]
      %v1791 = vld [vmem:[#allocation2 + $0x18] sm:$0xf]
      %v1792 = vld [vmem:[#allocation2 + $0x1c] sm:$0xf]
      %v1793 = vld [vmem:[#allocation2 + $0x20] sm:$0xf]
      %v1794 = vld [vmem:[#allocation2 + $0x24] sm:$0xf]
      %v1795 = vld [vmem:[#allocation2 + $0x28] sm:$0xf]
      %v1796 = vld [vmem:[#allocation2 + $0x2c] sm:$0xf]
      %v1797 = vld [vmem:[#allocation2 + $0x30] sm:$0xf]
      %v1798 = vld [vmem:[#allocation2 + $0x34] sm:$0xf]
      %v1799 = vld [vmem:[#allocation2 + $0x38] sm:$0xf]
      %v1800 = vld [vmem:[#allocation2 + $0x3c] sm:$0xf]
      %v1801 = vld [vmem:[#allocation2 + $0x40] sm:$0xf]
      %v1802 = vld [vmem:[#allocation2 + $0x44] sm:$0xf]
      %v1803 = vld [vmem:[#allocation2 + $0x48] sm:$0xf]
      %v1804 = vld [vmem:[#allocation2 + $0x4c] sm:$0x1]
      %s1805 = scalar_lea.vmem %s4, 128
      %v1806 = vld [vmem:[%s1805] sm:$0xf]
      %v1807 = vld [vmem:[%s1805 + $0x4] sm:$0xf]
      %v1808 = vld [vmem:[%s1805 + $0x8] sm:$0xf]
      %v1809 = vld [vmem:[%s1805 + $0xc] sm:$0xf]
      %v1810 = vld [vmem:[%s1805 + $0x10] sm:$0xf]
      %v1811 = vld [vmem:[%s1805 + $0x14] sm:$0xf]
      %v1812 = vld [vmem:[%s1805 + $0x18] sm:$0xf]
      %v1813 = vld [vmem:[%s1805 + $0x1c] sm:$0xf]
      %v1814 = vld [vmem:[%s1805 + $0x20] sm:$0xf]
      %v1815 = vld [vmem:[%s1805 + $0x24] sm:$0xf]
      %v1816 = vld [vmem:[%s1805 + $0x28] sm:$0xf]
      %v1817 = vld [vmem:[%s1805 + $0x2c] sm:$0xf]
      %v1818 = vld [vmem:[%s1805 + $0x30] sm:$0xf]
      %v1819 = vld [vmem:[%s1805 + $0x34] sm:$0xf]
      %v1820 = vld [vmem:[%s1805 + $0x38] sm:$0xf]
      %v1821 = vld [vmem:[%s1805 + $0x3c] sm:$0xf]
      %v1839 = vunpack.c.l.b16 %v1788
      %v1840 = vunpack.c.l.b16 %v1789
      %v1841 = vunpack.c.l.b16 %v1790
      %v1842 = vunpack.c.l.b16 %v1791
      %v1843 = vunpack.c.l.b16 %v1792
      %v1844 = vunpack.c.l.b16 %v1793
      %v1845 = vunpack.c.l.b16 %v1794
      %v1846 = vunpack.c.l.b16 %v1795
      %v1847 = vunpack.c.l.b16 %v1796
      %v1848 = vunpack.c.l.b16 %v1797
      %v1849 = vunpack.c.l.b16 %v1798
      %v1850 = vunpack.c.l.b16 %v1799
      %v1851 = vunpack.c.l.b16 %v1800
      %v1852 = vunpack.c.l.b16 %v1801
      %v1853 = vunpack.c.l.b16 %v1802
      %v1854 = vunpack.c.l.b16 %v1803
      %v1855 = vunpack.c.l.b16 %v1804
      %v1856 = vpack.c.b16 %v1840, %v1839
      %v1857 = vpack.c.b16 %v1842, %v1841
      %v1858 = vpack.c.b16 %v1844, %v1843
      %v1859 = vpack.c.b16 %v1846, %v1845
      %v1860 = vpack.c.b16 %v1848, %v1847
      %v1861 = vpack.c.b16 %v1850, %v1849
      %v1862 = vpack.c.b16 %v1852, %v1851
      %v1863 = vpack.c.b16 %v1854, %v1853
      %v1864 = vpack.c.b16 %v1855, %v1855
      %vm1865 = vsmask.f32 7424
      %v1867 = vshrl.u32 %v1856, 16
      %v1869 = vshll.u32 %v1856, 16
      %v1871 = vrot.slane %v1869, 1
      %v1872 = vor.u32 %v1867, %v1871
      %v1874 = vshll.u32 %v1857, 16
      %v1876 = vrot.slane %v1874, 1
      %v1877 = vsel %vm1865, %v1872, %v1876
      %v1878 = vshrl.u32 %v1857, 16
      %v1880 = vor.u32 %v1878, %v1876
      %v1882 = vshll.u32 %v1858, 16
      %v1884 = vrot.slane %v1882, 1
      %v1885 = vsel %vm1865, %v1880, %v1884
      %v1886 = vshrl.u32 %v1858, 16
      %v1888 = vor.u32 %v1886, %v1884
      %v1890 = vshll.u32 %v1859, 16
      %v1892 = vrot.slane %v1890, 1
      %v1893 = vsel %vm1865, %v1888, %v1892
      %v1894 = vshrl.u32 %v1859, 16
      %v1896 = vor.u32 %v1894, %v1892
      %v1898 = vshll.u32 %v1860, 16
      %v1900 = vrot.slane %v1898, 1
      %v1901 = vsel %vm1865, %v1896, %v1900
      %v1902 = vshrl.u32 %v1860, 16
      %v1904 = vor.u32 %v1902, %v1900
      %v1906 = vshll.u32 %v1861, 16
      %v1908 = vrot.slane %v1906, 1
      %v1909 = vsel %vm1865, %v1904, %v1908
      %v1910 = vshrl.u32 %v1861, 16
      %v1912 = vor.u32 %v1910, %v1908
      %v1914 = vshll.u32 %v1862, 16
      %v1916 = vrot.slane %v1914, 1
      %v1917 = vsel %vm1865, %v1912, %v1916
      %v1918 = vshrl.u32 %v1862, 16
      %v1920 = vor.u32 %v1918, %v1916
      %v1922 = vshll.u32 %v1863, 16
      %v1924 = vrot.slane %v1922, 1
      %v1925 = vsel %vm1865, %v1920, %v1924
      %v1926 = vshrl.u32 %v1863, 16
      %v1928 = vor.u32 %v1926, %v1924
      %v1930 = vshll.u32 %v1864, 16
      %v1932 = vrot.slane %v1930, 1
      %v1933 = vsel %vm1865, %v1928, %v1932
      %v1958 = vunpack.c.l.b16 %v1806
      %v1959 = vunpack.c.l.b16 %v1807
      %v1960 = vunpack.c.l.b16 %v1808
      %v1961 = vunpack.c.l.b16 %v1809
      %v1962 = vunpack.c.l.b16 %v1810
      %v1963 = vunpack.c.l.b16 %v1811
      %v1964 = vunpack.c.l.b16 %v1812
      %v1965 = vunpack.c.l.b16 %v1813
      %v1966 = vunpack.c.l.b16 %v1814
      %v1967 = vunpack.c.l.b16 %v1815
      %v1968 = vunpack.c.l.b16 %v1816
      %v1969 = vunpack.c.l.b16 %v1817
      %v1970 = vunpack.c.l.b16 %v1818
      %v1971 = vunpack.c.l.b16 %v1819
      %v1972 = vunpack.c.l.b16 %v1820
      %v1973 = vunpack.c.l.b16 %v1821
      %v1974 = vpack.c.b16 %v1959, %v1958
      %v1975 = vpack.c.b16 %v1961, %v1960
      %v1976 = vpack.c.b16 %v1963, %v1962
      %v1977 = vpack.c.b16 %v1965, %v1964
      %v1978 = vpack.c.b16 %v1967, %v1966
      %v1979 = vpack.c.b16 %v1969, %v1968
      %v1980 = vpack.c.b16 %v1971, %v1970
      %v1981 = vpack.c.b16 %v1973, %v1972
      %1990 = vmatpush.bf16.msra.mxu0 %v1981
      %1991 = vmatpush.bf16.msra.mxu0 %v1980
      %1992 = vmatpush.bf16.msra.mxu0 %v1979
      %1993 = vmatpush.bf16.msra.mxu0 %v1978
      %1994 = vmatpush.bf16.msra.mxu0 %v1977
      %1995 = vmatpush.bf16.msra.mxu0 %v1976
      %1996 = vmatpush.bf16.msra.mxu0 %v1975
      %1997 = vmatpush.bf16.msra.mxu0 %v1974
      %1998 = vmatmul.bf16.gmra.mxu0 %v1877
      %v1999 = vpop.f32.mrf.mxu0
      %v2000 = vadd.f32 0.0, %v1999
      %v2001 = vpop.f32.mrf.mxu0
      %v2002 = vadd.f32 0.0, %v2001
      %2003 = vmatmul.bf16.gmra.mxu0 %v1885
      %v2004 = vpop.f32.mrf.mxu0
      %v2005 = vadd.f32 0.0, %v2004
      %v2006 = vpop.f32.mrf.mxu0
      %v2007 = vadd.f32 0.0, %v2006
      %2008 = vmatmul.bf16.gmra.mxu0 %v1893
      %v2009 = vpop.f32.mrf.mxu0
      %v2010 = vadd.f32 0.0, %v2009
      %v2011 = vpop.f32.mrf.mxu0
      %v2012 = vadd.f32 0.0, %v2011
      %2013 = vmatmul.bf16.gmra.mxu0 %v1901
      %v2014 = vpop.f32.mrf.mxu0
      %v2015 = vadd.f32 0.0, %v2014
      %v2016 = vpop.f32.mrf.mxu0
      %v2017 = vadd.f32 0.0, %v2016
      %2018 = vmatmul.bf16.gmra.mxu0 %v1909
      %v2019 = vpop.f32.mrf.mxu0
      %v2020 = vadd.f32 0.0, %v2019
      %v2021 = vpop.f32.mrf.mxu0
      %v2022 = vadd.f32 0.0, %v2021
      %2023 = vmatmul.bf16.gmra.mxu0 %v1917
      %v2024 = vpop.f32.mrf.mxu0
      %v2025 = vadd.f32 0.0, %v2024
      %v2026 = vpop.f32.mrf.mxu0
      %v2027 = vadd.f32 0.0, %v2026
      %2028 = vmatmul.bf16.gmra.mxu0 %v1925
      %v2029 = vpop.f32.mrf.mxu0
      %v2030 = vadd.f32 0.0, %v2029
      %v2031 = vpop.f32.mrf.mxu0
      %v2032 = vadd.f32 0.0, %v2031
      %2033 = vmatmul.bf16.gmra.mxu0 %v1933
      %v2034 = vpop.f32.mrf.mxu0
      %v2035 = vadd.f32 0.0, %v2034
      %v2036 = vpop.f32.mrf.mxu0
      %v2037 = vadd.f32 0.0, %v2036
      %2038 = vdwg.mxu0
      %v2039 = vadd.f32 %v1749, %v2000
      %v2040 = vadd.f32 %v1751, %v2002
      %v2041 = vadd.f32 %v1754, %v2005
      %v2042 = vadd.f32 %v1756, %v2007
      %v2043 = vadd.f32 %v1759, %v2010
      %v2044 = vadd.f32 %v1761, %v2012
      %v2045 = vadd.f32 %v1764, %v2015
      %v2046 = vadd.f32 %v1766, %v2017
      %v2047 = vadd.f32 %v1769, %v2020
      %v2048 = vadd.f32 %v1771, %v2022
      %v2049 = vadd.f32 %v1774, %v2025
      %v2050 = vadd.f32 %v1776, %v2027
      %v2051 = vadd.f32 %v1779, %v2030
      %v2052 = vadd.f32 %v1781, %v2032
      %v2053 = vadd.f32 %v1784, %v2035
      %v2054 = vadd.f32 %v1786, %v2037
      %v2055 = vld [vmem:[#allocation2 + $0x14] sm:$0x8]
      %v2056 = vld [vmem:[#allocation2 + $0x18] sm:$0xf]
      %v2057 = vld [vmem:[#allocation2 + $0x1c] sm:$0xf]
      %v2058 = vld [vmem:[#allocation2 + $0x20] sm:$0xf]
      %v2059 = vld [vmem:[#allocation2 + $0x24] sm:$0xf]
      %v2060 = vld [vmem:[#allocation2 + $0x28] sm:$0xf]
      %v2061 = vld [vmem:[#allocation2 + $0x2c] sm:$0xf]
      %v2062 = vld [vmem:[#allocation2 + $0x30] sm:$0xf]
      %v2063 = vld [vmem:[#allocation2 + $0x34] sm:$0xf]
      %v2064 = vld [vmem:[#allocation2 + $0x38] sm:$0xf]
      %v2065 = vld [vmem:[#allocation2 + $0x3c] sm:$0xf]
      %v2066 = vld [vmem:[#allocation2 + $0x40] sm:$0xf]
      %v2067 = vld [vmem:[#allocation2 + $0x44] sm:$0xf]
      %v2068 = vld [vmem:[#allocation2 + $0x48] sm:$0xf]
      %v2069 = vld [vmem:[#allocation2 + $0x4c] sm:$0xf]
      %v2070 = vld [vmem:[#allocation2 + $0x50] sm:$0xf]
      %v2071 = vld [vmem:[#allocation2 + $0x54] sm:$0xf]
      %s2072 = scalar_lea.vmem %s4, 192
      %v2073 = vld [vmem:[%s2072] sm:$0xf]
      %v2074 = vld [vmem:[%s2072 + $0x4] sm:$0xf]
      %v2075 = vld [vmem:[%s2072 + $0x8] sm:$0xf]
      %v2076 = vld [vmem:[%s2072 + $0xc] sm:$0xf]
      %v2077 = vld [vmem:[%s2072 + $0x10] sm:$0xf]
      %v2078 = vld [vmem:[%s2072 + $0x14] sm:$0xf]
      %v2079 = vld [vmem:[%s2072 + $0x18] sm:$0xf]
      %v2080 = vld [vmem:[%s2072 + $0x1c] sm:$0xf]
      %v2081 = vld [vmem:[%s2072 + $0x20] sm:$0xf]
      %v2082 = vld [vmem:[%s2072 + $0x24] sm:$0xf]
      %v2083 = vld [vmem:[%s2072 + $0x28] sm:$0xf]
      %v2084 = vld [vmem:[%s2072 + $0x2c] sm:$0xf]
      %v2085 = vld [vmem:[%s2072 + $0x30] sm:$0xf]
      %v2086 = vld [vmem:[%s2072 + $0x34] sm:$0xf]
      %v2087 = vld [vmem:[%s2072 + $0x38] sm:$0xf]
      %v2088 = vld [vmem:[%s2072 + $0x3c] sm:$0xf]
      %v2106 = vunpack.c.l.b16 %v2055
      %v2107 = vunpack.c.l.b16 %v2056
      %v2108 = vunpack.c.l.b16 %v2057
      %v2109 = vunpack.c.l.b16 %v2058
      %v2110 = vunpack.c.l.b16 %v2059
      %v2111 = vunpack.c.l.b16 %v2060
      %v2112 = vunpack.c.l.b16 %v2061
      %v2113 = vunpack.c.l.b16 %v2062
      %v2114 = vunpack.c.l.b16 %v2063
      %v2115 = vunpack.c.l.b16 %v2064
      %v2116 = vunpack.c.l.b16 %v2065
      %v2117 = vunpack.c.l.b16 %v2066
      %v2118 = vunpack.c.l.b16 %v2067
      %v2119 = vunpack.c.l.b16 %v2068
      %v2120 = vunpack.c.l.b16 %v2069
      %v2121 = vunpack.c.l.b16 %v2070
      %v2122 = vunpack.c.l.b16 %v2071
      %v2123 = vpack.c.b16 %v2107, %v2106
      %v2124 = vpack.c.b16 %v2109, %v2108
      %v2125 = vpack.c.b16 %v2111, %v2110
      %v2126 = vpack.c.b16 %v2113, %v2112
      %v2127 = vpack.c.b16 %v2115, %v2114
      %v2128 = vpack.c.b16 %v2117, %v2116
      %v2129 = vpack.c.b16 %v2119, %v2118
      %v2130 = vpack.c.b16 %v2121, %v2120
      %v2131 = vpack.c.b16 %v2122, %v2122
      %v2133 = vshrl.u32 %v2123, 16
      %v2135 = vrot.slane %v2133, 3
      %v2136 = vshll.u32 %v2123, 16
      %v2138 = vrot.slane %v2136, 4
      %v2139 = vor.u32 %v2135, %v2138
      %v2141 = vshrl.u32 %v2124, 16
      %v2143 = vrot.slane %v2141, 3
      %v2144 = vshll.u32 %v2124, 16
      %v2146 = vrot.slane %v2144, 4
      %v2147 = vor.u32 %v2143, %v2146
      %v2148 = vsel %vm1602, %v2139, %v2147
      %v2150 = vshrl.u32 %v2125, 16
      %v2152 = vrot.slane %v2150, 3
      %v2153 = vshll.u32 %v2125, 16
      %v2155 = vrot.slane %v2153, 4
      %v2156 = vor.u32 %v2152, %v2155
      %v2157 = vsel %vm1602, %v2147, %v2156
      %v2159 = vshrl.u32 %v2126, 16
      %v2161 = vrot.slane %v2159, 3
      %v2162 = vshll.u32 %v2126, 16
      %v2164 = vrot.slane %v2162, 4
      %v2165 = vor.u32 %v2161, %v2164
      %v2166 = vsel %vm1602, %v2156, %v2165
      %v2168 = vshrl.u32 %v2127, 16
      %v2170 = vrot.slane %v2168, 3
      %v2171 = vshll.u32 %v2127, 16
      %v2173 = vrot.slane %v2171, 4
      %v2174 = vor.u32 %v2170, %v2173
      %v2175 = vsel %vm1602, %v2165, %v2174
      %v2177 = vshrl.u32 %v2128, 16
      %v2179 = vrot.slane %v2177, 3
      %v2180 = vshll.u32 %v2128, 16
      %v2182 = vrot.slane %v2180, 4
      %v2183 = vor.u32 %v2179, %v2182
      %v2184 = vsel %vm1602, %v2174, %v2183
      %v2186 = vshrl.u32 %v2129, 16
      %v2188 = vrot.slane %v2186, 3
      %v2189 = vshll.u32 %v2129, 16
      %v2191 = vrot.slane %v2189, 4
      %v2192 = vor.u32 %v2188, %v2191
      %v2193 = vsel %vm1602, %v2183, %v2192
      %v2195 = vshrl.u32 %v2130, 16
      %v2197 = vrot.slane %v2195, 3
      %v2198 = vshll.u32 %v2130, 16
      %v2200 = vrot.slane %v2198, 4
      %v2201 = vor.u32 %v2197, %v2200
      %v2202 = vsel %vm1602, %v2192, %v2201
      %v2204 = vshrl.u32 %v2131, 16
      %v2206 = vrot.slane %v2204, 3
      %v2207 = vshll.u32 %v2131, 16
      %v2209 = vrot.slane %v2207, 4
      %v2210 = vor.u32 %v2206, %v2209
      %v2211 = vsel %vm1602, %v2201, %v2210
      %v2236 = vunpack.c.l.b16 %v2073
      %v2237 = vunpack.c.l.b16 %v2074
      %v2238 = vunpack.c.l.b16 %v2075
      %v2239 = vunpack.c.l.b16 %v2076
      %v2240 = vunpack.c.l.b16 %v2077
      %v2241 = vunpack.c.l.b16 %v2078
      %v2242 = vunpack.c.l.b16 %v2079
      %v2243 = vunpack.c.l.b16 %v2080
      %v2244 = vunpack.c.l.b16 %v2081
      %v2245 = vunpack.c.l.b16 %v2082
      %v2246 = vunpack.c.l.b16 %v2083
      %v2247 = vunpack.c.l.b16 %v2084
      %v2248 = vunpack.c.l.b16 %v2085
      %v2249 = vunpack.c.l.b16 %v2086
      %v2250 = vunpack.c.l.b16 %v2087
      %v2251 = vunpack.c.l.b16 %v2088
      %v2252 = vpack.c.b16 %v2237, %v2236
      %v2253 = vpack.c.b16 %v2239, %v2238
      %v2254 = vpack.c.b16 %v2241, %v2240
      %v2255 = vpack.c.b16 %v2243, %v2242
      %v2256 = vpack.c.b16 %v2245, %v2244
      %v2257 = vpack.c.b16 %v2247, %v2246
      %v2258 = vpack.c.b16 %v2249, %v2248
      %v2259 = vpack.c.b16 %v2251, %v2250
      %2268 = vmatpush.bf16.msra.mxu0 %v2259
      %2269 = vmatpush.bf16.msra.mxu0 %v2258
      %2270 = vmatpush.bf16.msra.mxu0 %v2257
      %2271 = vmatpush.bf16.msra.mxu0 %v2256
      %2272 = vmatpush.bf16.msra.mxu0 %v2255
      %2273 = vmatpush.bf16.msra.mxu0 %v2254
      %2274 = vmatpush.bf16.msra.mxu0 %v2253
      %2275 = vmatpush.bf16.msra.mxu0 %v2252
      %2276 = vmatmul.bf16.gmra.mxu0 %v2148
      %v2277 = vpop.f32.mrf.mxu0
      %v2278 = vadd.f32 0.0, %v2277
      %v2279 = vpop.f32.mrf.mxu0
      %v2280 = vadd.f32 0.0, %v2279
      %2281 = vmatmul.bf16.gmra.mxu0 %v2157
      %v2282 = vpop.f32.mrf.mxu0
      %v2283 = vadd.f32 0.0, %v2282
      %v2284 = vpop.f32.mrf.mxu0
      %v2285 = vadd.f32 0.0, %v2284
      %2286 = vmatmul.bf16.gmra.mxu0 %v2166
      %v2287 = vpop.f32.mrf.mxu0
      %v2288 = vadd.f32 0.0, %v2287
      %v2289 = vpop.f32.mrf.mxu0
      %v2290 = vadd.f32 0.0, %v2289
      %2291 = vmatmul.bf16.gmra.mxu0 %v2175
      %v2292 = vpop.f32.mrf.mxu0
      %v2293 = vadd.f32 0.0, %v2292
      %v2294 = vpop.f32.mrf.mxu0
      %v2295 = vadd.f32 0.0, %v2294
      %2296 = vmatmul.bf16.gmra.mxu0 %v2184
      %v2297 = vpop.f32.mrf.mxu0
      %v2298 = vadd.f32 0.0, %v2297
      %v2299 = vpop.f32.mrf.mxu0
      %v2300 = vadd.f32 0.0, %v2299
      %2301 = vmatmul.bf16.gmra.mxu0 %v2193
      %v2302 = vpop.f32.mrf.mxu0
      %v2303 = vadd.f32 0.0, %v2302
      %v2304 = vpop.f32.mrf.mxu0
      %v2305 = vadd.f32 0.0, %v2304
      %2306 = vmatmul.bf16.gmra.mxu0 %v2202
      %v2307 = vpop.f32.mrf.mxu0
      %v2308 = vadd.f32 0.0, %v2307
      %v2309 = vpop.f32.mrf.mxu0
      %v2310 = vadd.f32 0.0, %v2309
      %2311 = vmatmul.bf16.gmra.mxu0 %v2211
      %v2312 = vpop.f32.mrf.mxu0
      %v2313 = vadd.f32 0.0, %v2312
      %v2314 = vpop.f32.mrf.mxu0
      %v2315 = vadd.f32 0.0, %v2314
      %2316 = vdwg.mxu0
      %v2317 = vadd.f32 %v2039, %v2278
      %v2318 = vadd.f32 %v2040, %v2280
      %v2319 = vadd.f32 %v2041, %v2283
      %v2320 = vadd.f32 %v2042, %v2285
      %v2321 = vadd.f32 %v2043, %v2288
      %v2322 = vadd.f32 %v2044, %v2290
      %v2323 = vadd.f32 %v2045, %v2293
      %v2324 = vadd.f32 %v2046, %v2295
      %v2325 = vadd.f32 %v2047, %v2298
      %v2326 = vadd.f32 %v2048, %v2300
      %v2327 = vadd.f32 %v2049, %v2303
      %v2328 = vadd.f32 %v2050, %v2305
      %v2329 = vadd.f32 %v2051, %v2308
      %v2330 = vadd.f32 %v2052, %v2310
      %v2331 = vadd.f32 %v2053, %v2313
      %v2332 = vadd.f32 %v2054, %v2315
      %s2333 = scalar_lea.vmem %s4, 256
      %v2334 = vld [vmem:[%s2333] sm:$0xf]
      %v2335 = vld [vmem:[%s2333 + $0x4] sm:$0xf]
      %v2336 = vld [vmem:[%s2333 + $0x8] sm:$0xf]
      %v2337 = vld [vmem:[%s2333 + $0xc] sm:$0xf]
      %v2338 = vld [vmem:[%s2333 + $0x10] sm:$0xf]
      %v2339 = vld [vmem:[%s2333 + $0x14] sm:$0xf]
      %v2340 = vld [vmem:[%s2333 + $0x18] sm:$0xf]
      %v2341 = vld [vmem:[%s2333 + $0x1c] sm:$0xf]
      %v2342 = vld [vmem:[%s2333 + $0x20] sm:$0xf]
      %v2343 = vld [vmem:[%s2333 + $0x24] sm:$0xf]
      %v2344 = vld [vmem:[%s2333 + $0x28] sm:$0xf]
      %v2345 = vld [vmem:[%s2333 + $0x2c] sm:$0xf]
      %v2346 = vld [vmem:[%s2333 + $0x30] sm:$0xf]
      %v2347 = vld [vmem:[%s2333 + $0x34] sm:$0xf]
      %v2348 = vld [vmem:[%s2333 + $0x38] sm:$0xf]
      %v2349 = vld [vmem:[%s2333 + $0x3c] sm:$0xf]
      %v2350 = vpack.c.b16 %v2108, %v2107
      %v2351 = vpack.c.b16 %v2110, %v2109
      %v2352 = vpack.c.b16 %v2112, %v2111
      %v2353 = vpack.c.b16 %v2114, %v2113
      %v2354 = vpack.c.b16 %v2116, %v2115
      %v2355 = vpack.c.b16 %v2118, %v2117
      %v2356 = vpack.c.b16 %v2120, %v2119
      %v2357 = vpack.c.b16 %v2122, %v2121
      %v2382 = vunpack.c.l.b16 %v2334
      %v2383 = vunpack.c.l.b16 %v2335
      %v2384 = vunpack.c.l.b16 %v2336
      %v2385 = vunpack.c.l.b16 %v2337
      %v2386 = vunpack.c.l.b16 %v2338
      %v2387 = vunpack.c.l.b16 %v2339
      %v2388 = vunpack.c.l.b16 %v2340
      %v2389 = vunpack.c.l.b16 %v2341
      %v2390 = vunpack.c.l.b16 %v2342
      %v2391 = vunpack.c.l.b16 %v2343
      %v2392 = vunpack.c.l.b16 %v2344
      %v2393 = vunpack.c.l.b16 %v2345
      %v2394 = vunpack.c.l.b16 %v2346
      %v2395 = vunpack.c.l.b16 %v2347
      %v2396 = vunpack.c.l.b16 %v2348
      %v2397 = vunpack.c.l.b16 %v2349
      %v2398 = vpack.c.b16 %v2383, %v2382
      %v2399 = vpack.c.b16 %v2385, %v2384
      %v2400 = vpack.c.b16 %v2387, %v2386
      %v2401 = vpack.c.b16 %v2389, %v2388
      %v2402 = vpack.c.b16 %v2391, %v2390
      %v2403 = vpack.c.b16 %v2393, %v2392
      %v2404 = vpack.c.b16 %v2395, %v2394
      %v2405 = vpack.c.b16 %v2397, %v2396
      %2414 = vmatpush.bf16.msra.mxu0 %v2405
      %2415 = vmatpush.bf16.msra.mxu0 %v2404
      %2416 = vmatpush.bf16.msra.mxu0 %v2403
      %2417 = vmatpush.bf16.msra.mxu0 %v2402
      %2418 = vmatpush.bf16.msra.mxu0 %v2401
      %2419 = vmatpush.bf16.msra.mxu0 %v2400
      %2420 = vmatpush.bf16.msra.mxu0 %v2399
      %2421 = vmatpush.bf16.msra.mxu0 %v2398
      %2422 = vmatmul.bf16.gmra.mxu0 %v2350
      %v2423 = vpop.f32.mrf.mxu0
      %v2424 = vadd.f32 0.0, %v2423
      %v2425 = vpop.f32.mrf.mxu0
      %v2426 = vadd.f32 0.0, %v2425
      %2427 = vmatmul.bf16.gmra.mxu0 %v2351
      %v2428 = vpop.f32.mrf.mxu0
      %v2429 = vadd.f32 0.0, %v2428
      %v2430 = vpop.f32.mrf.mxu0
      %v2431 = vadd.f32 0.0, %v2430
      %2432 = vmatmul.bf16.gmra.mxu0 %v2352
      %v2433 = vpop.f32.mrf.mxu0
      %v2434 = vadd.f32 0.0, %v2433
      %v2435 = vpop.f32.mrf.mxu0
      %v2436 = vadd.f32 0.0, %v2435
      %2437 = vmatmul.bf16.gmra.mxu0 %v2353
      %v2438 = vpop.f32.mrf.mxu0
      %v2439 = vadd.f32 0.0, %v2438
      %v2440 = vpop.f32.mrf.mxu0
      %v2441 = vadd.f32 0.0, %v2440
      %2442 = vmatmul.bf16.gmra.mxu0 %v2354
      %v2443 = vpop.f32.mrf.mxu0
      %v2444 = vadd.f32 0.0, %v2443
      %v2445 = vpop.f32.mrf.mxu0
      %v2446 = vadd.f32 0.0, %v2445
      %2447 = vmatmul.bf16.gmra.mxu0 %v2355
      %v2448 = vpop.f32.mrf.mxu0
      %v2449 = vadd.f32 0.0, %v2448
      %v2450 = vpop.f32.mrf.mxu0
      %v2451 = vadd.f32 0.0, %v2450
      %2452 = vmatmul.bf16.gmra.mxu0 %v2356
      %v2453 = vpop.f32.mrf.mxu0
      %v2454 = vadd.f32 0.0, %v2453
      %v2455 = vpop.f32.mrf.mxu0
      %v2456 = vadd.f32 0.0, %v2455
      %2457 = vmatmul.bf16.gmra.mxu0 %v2357
      %v2458 = vpop.f32.mrf.mxu0
      %v2459 = vadd.f32 0.0, %v2458
      %v2460 = vpop.f32.mrf.mxu0
      %v2461 = vadd.f32 0.0, %v2460
      %2462 = vdwg.mxu0
      %v2463 = vadd.f32 %v2317, %v2424
      %v2464 = vadd.f32 %v2318, %v2426
      %v2465 = vadd.f32 %v2319, %v2429
      %v2466 = vadd.f32 %v2320, %v2431
      %v2467 = vadd.f32 %v2321, %v2434
      %v2468 = vadd.f32 %v2322, %v2436
      %v2469 = vadd.f32 %v2323, %v2439
      %v2470 = vadd.f32 %v2324, %v2441
      %v2471 = vadd.f32 %v2325, %v2444
      %v2472 = vadd.f32 %v2326, %v2446
      %v2473 = vadd.f32 %v2327, %v2449
      %v2474 = vadd.f32 %v2328, %v2451
      %v2475 = vadd.f32 %v2329, %v2454
      %v2476 = vadd.f32 %v2330, %v2456
      %v2477 = vadd.f32 %v2331, %v2459
      %v2478 = vadd.f32 %v2332, %v2461
      %v2479 = vld [vmem:[#allocation2 + $0x18] sm:$0xf]
      %v2480 = vld [vmem:[#allocation2 + $0x1c] sm:$0xf]
      %v2481 = vld [vmem:[#allocation2 + $0x20] sm:$0xf]
      %v2482 = vld [vmem:[#allocation2 + $0x24] sm:$0xf]
      %v2483 = vld [vmem:[#allocation2 + $0x28] sm:$0xf]
      %v2484 = vld [vmem:[#allocation2 + $0x2c] sm:$0xf]
      %v2485 = vld [vmem:[#allocation2 + $0x30] sm:$0xf]
      %v2486 = vld [vmem:[#allocation2 + $0x34] sm:$0xf]
      %v2487 = vld [vmem:[#allocation2 + $0x38] sm:$0xf]
      %v2488 = vld [vmem:[#allocation2 + $0x3c] sm:$0xf]
      %v2489 = vld [vmem:[#allocation2 + $0x40] sm:$0xf]
      %v2490 = vld [vmem:[#allocation2 + $0x44] sm:$0xf]
      %v2491 = vld [vmem:[#allocation2 + $0x48] sm:$0xf]
      %v2492 = vld [vmem:[#allocation2 + $0x4c] sm:$0xf]
      %v2493 = vld [vmem:[#allocation2 + $0x50] sm:$0xf]
      %v2494 = vld [vmem:[#allocation2 + $0x54] sm:$0xf]
      %v2495 = vld [vmem:[#allocation2 + $0x58] sm:$0x1]
      %s2496 = scalar_lea.vmem %s4, 320
      %v2497 = vld [vmem:[%s2496] sm:$0xf]
      %v2498 = vld [vmem:[%s2496 + $0x4] sm:$0xf]
      %v2499 = vld [vmem:[%s2496 + $0x8] sm:$0xf]
      %v2500 = vld [vmem:[%s2496 + $0xc] sm:$0xf]
      %v2501 = vld [vmem:[%s2496 + $0x10] sm:$0xf]
      %v2502 = vld [vmem:[%s2496 + $0x14] sm:$0xf]
      %v2503 = vld [vmem:[%s2496 + $0x18] sm:$0xf]
      %v2504 = vld [vmem:[%s2496 + $0x1c] sm:$0xf]
      %v2505 = vld [vmem:[%s2496 + $0x20] sm:$0xf]
      %v2506 = vld [vmem:[%s2496 + $0x24] sm:$0xf]
      %v2507 = vld [vmem:[%s2496 + $0x28] sm:$0xf]
      %v2508 = vld [vmem:[%s2496 + $0x2c] sm:$0xf]
      %v2509 = vld [vmem:[%s2496 + $0x30] sm:$0xf]
      %v2510 = vld [vmem:[%s2496 + $0x34] sm:$0xf]
      %v2511 = vld [vmem:[%s2496 + $0x38] sm:$0xf]
      %v2512 = vld [vmem:[%s2496 + $0x3c] sm:$0xf]
      %v2530 = vunpack.c.l.b16 %v2479
      %v2531 = vunpack.c.l.b16 %v2480
      %v2532 = vunpack.c.l.b16 %v2481
      %v2533 = vunpack.c.l.b16 %v2482
      %v2534 = vunpack.c.l.b16 %v2483
      %v2535 = vunpack.c.l.b16 %v2484
      %v2536 = vunpack.c.l.b16 %v2485
      %v2537 = vunpack.c.l.b16 %v2486
      %v2538 = vunpack.c.l.b16 %v2487
      %v2539 = vunpack.c.l.b16 %v2488
      %v2540 = vunpack.c.l.b16 %v2489
      %v2541 = vunpack.c.l.b16 %v2490
      %v2542 = vunpack.c.l.b16 %v2491
      %v2543 = vunpack.c.l.b16 %v2492
      %v2544 = vunpack.c.l.b16 %v2493
      %v2545 = vunpack.c.l.b16 %v2494
      %v2546 = vunpack.c.l.b16 %v2495
      %v2547 = vpack.c.b16 %v2531, %v2530
      %v2548 = vpack.c.b16 %v2533, %v2532
      %v2549 = vpack.c.b16 %v2535, %v2534
      %v2550 = vpack.c.b16 %v2537, %v2536
      %v2551 = vpack.c.b16 %v2539, %v2538
      %v2552 = vpack.c.b16 %v2541, %v2540
      %v2553 = vpack.c.b16 %v2543, %v2542
      %v2554 = vpack.c.b16 %v2545, %v2544
      %v2555 = vpack.c.b16 %v2546, %v2546
      %v2557 = vshrl.u32 %v2547, 16
      %v2559 = vshll.u32 %v2547, 16
      %v2561 = vrot.slane %v2559, 1
      %v2562 = vor.u32 %v2557, %v2561
      %v2564 = vshll.u32 %v2548, 16
      %v2566 = vrot.slane %v2564, 1
      %v2567 = vsel %vm1865, %v2562, %v2566
      %v2568 = vshrl.u32 %v2548, 16
      %v2570 = vor.u32 %v2568, %v2566
      %v2572 = vshll.u32 %v2549, 16
      %v2574 = vrot.slane %v2572, 1
      %v2575 = vsel %vm1865, %v2570, %v2574
      %v2576 = vshrl.u32 %v2549, 16
      %v2578 = vor.u32 %v2576, %v2574
      %v2580 = vshll.u32 %v2550, 16
      %v2582 = vrot.slane %v2580, 1
      %v2583 = vsel %vm1865, %v2578, %v2582
      %v2584 = vshrl.u32 %v2550, 16
      %v2586 = vor.u32 %v2584, %v2582
      %v2588 = vshll.u32 %v2551, 16
      %v2590 = vrot.slane %v2588, 1
      %v2591 = vsel %vm1865, %v2586, %v2590
      %v2592 = vshrl.u32 %v2551, 16
      %v2594 = vor.u32 %v2592, %v2590
      %v2596 = vshll.u32 %v2552, 16
      %v2598 = vrot.slane %v2596, 1
      %v2599 = vsel %vm1865, %v2594, %v2598
      %v2600 = vshrl.u32 %v2552, 16
      %v2602 = vor.u32 %v2600, %v2598
      %v2604 = vshll.u32 %v2553, 16
      %v2606 = vrot.slane %v2604, 1
      %v2607 = vsel %vm1865, %v2602, %v2606
      %v2608 = vshrl.u32 %v2553, 16
      %v2610 = vor.u32 %v2608, %v2606
      %v2612 = vshll.u32 %v2554, 16
      %v2614 = vrot.slane %v2612, 1
      %v2615 = vsel %vm1865, %v2610, %v2614
      %v2616 = vshrl.u32 %v2554, 16
      %v2618 = vor.u32 %v2616, %v2614
      %v2620 = vshll.u32 %v2555, 16
      %v2622 = vrot.slane %v2620, 1
      %v2623 = vsel %vm1865, %v2618, %v2622
      %v2648 = vunpack.c.l.b16 %v2497
      %v2649 = vunpack.c.l.b16 %v2498
      %v2650 = vunpack.c.l.b16 %v2499
      %v2651 = vunpack.c.l.b16 %v2500
      %v2652 = vunpack.c.l.b16 %v2501
      %v2653 = vunpack.c.l.b16 %v2502
      %v2654 = vunpack.c.l.b16 %v2503
      %v2655 = vunpack.c.l.b16 %v2504
      %v2656 = vunpack.c.l.b16 %v2505
      %v2657 = vunpack.c.l.b16 %v2506
      %v2658 = vunpack.c.l.b16 %v2507
      %v2659 = vunpack.c.l.b16 %v2508
      %v2660 = vunpack.c.l.b16 %v2509
      %v2661 = vunpack.c.l.b16 %v2510
      %v2662 = vunpack.c.l.b16 %v2511
      %v2663 = vunpack.c.l.b16 %v2512
      %v2664 = vpack.c.b16 %v2649, %v2648
      %v2665 = vpack.c.b16 %v2651, %v2650
      %v2666 = vpack.c.b16 %v2653, %v2652
      %v2667 = vpack.c.b16 %v2655, %v2654
      %v2668 = vpack.c.b16 %v2657, %v2656
      %v2669 = vpack.c.b16 %v2659, %v2658
      %v2670 = vpack.c.b16 %v2661, %v2660
      %v2671 = vpack.c.b16 %v2663, %v2662
      %2680 = vmatpush.bf16.msra.mxu0 %v2671
      %2681 = vmatpush.bf16.msra.mxu0 %v2670
      %2682 = vmatpush.bf16.msra.mxu0 %v2669
      %2683 = vmatpush.bf16.msra.mxu0 %v2668
      %2684 = vmatpush.bf16.msra.mxu0 %v2667
      %2685 = vmatpush.bf16.msra.mxu0 %v2666
      %2686 = vmatpush.bf16.msra.mxu0 %v2665
      %2687 = vmatpush.bf16.msra.mxu0 %v2664
      %2688 = vmatmul.bf16.gmra.mxu0 %v2567
      %v2689 = vpop.f32.mrf.mxu0
      %v2690 = vadd.f32 0.0, %v2689
      %v2691 = vpop.f32.mrf.mxu0
      %v2692 = vadd.f32 0.0, %v2691
      %2693 = vmatmul.bf16.gmra.mxu0 %v2575
      %v2694 = vpop.f32.mrf.mxu0
      %v2695 = vadd.f32 0.0, %v2694
      %v2696 = vpop.f32.mrf.mxu0
      %v2697 = vadd.f32 0.0, %v2696
      %2698 = vmatmul.bf16.gmra.mxu0 %v2583
      %v2699 = vpop.f32.mrf.mxu0
      %v2700 = vadd.f32 0.0, %v2699
      %v2701 = vpop.f32.mrf.mxu0
      %v2702 = vadd.f32 0.0, %v2701
      %2703 = vmatmul.bf16.gmra.mxu0 %v2591
      %v2704 = vpop.f32.mrf.mxu0
      %v2705 = vadd.f32 0.0, %v2704
      %v2706 = vpop.f32.mrf.mxu0
      %v2707 = vadd.f32 0.0, %v2706
      %2708 = vmatmul.bf16.gmra.mxu0 %v2599
      %v2709 = vpop.f32.mrf.mxu0
      %v2710 = vadd.f32 0.0, %v2709
      %v2711 = vpop.f32.mrf.mxu0
      %v2712 = vadd.f32 0.0, %v2711
      %2713 = vmatmul.bf16.gmra.mxu0 %v2607
      %v2714 = vpop.f32.mrf.mxu0
      %v2715 = vadd.f32 0.0, %v2714
      %v2716 = vpop.f32.mrf.mxu0
      %v2717 = vadd.f32 0.0, %v2716
      %2718 = vmatmul.bf16.gmra.mxu0 %v2615
      %v2719 = vpop.f32.mrf.mxu0
      %v2720 = vadd.f32 0.0, %v2719
      %v2721 = vpop.f32.mrf.mxu0
      %v2722 = vadd.f32 0.0, %v2721
      %2723 = vmatmul.bf16.gmra.mxu0 %v2623
      %v2724 = vpop.f32.mrf.mxu0
      %v2725 = vadd.f32 0.0, %v2724
      %v2726 = vpop.f32.mrf.mxu0
      %v2727 = vadd.f32 0.0, %v2726
      %2728 = vdwg.mxu0
      %v2729 = vadd.f32 %v2463, %v2690
      %v2730 = vadd.f32 %v2464, %v2692
      %v2731 = vadd.f32 %v2465, %v2695
      %v2732 = vadd.f32 %v2466, %v2697
      %v2733 = vadd.f32 %v2467, %v2700
      %v2734 = vadd.f32 %v2468, %v2702
      %v2735 = vadd.f32 %v2469, %v2705
      %v2736 = vadd.f32 %v2470, %v2707
      %v2737 = vadd.f32 %v2471, %v2710
      %v2738 = vadd.f32 %v2472, %v2712
      %v2739 = vadd.f32 %v2473, %v2715
      %v2740 = vadd.f32 %v2474, %v2717
      %v2741 = vadd.f32 %v2475, %v2720
      %v2742 = vadd.f32 %v2476, %v2722
      %v2743 = vadd.f32 %v2477, %v2725
      %v2744 = vadd.f32 %v2478, %v2727
      %v2745 = vld [vmem:[#allocation2 + $0x20] sm:$0x8]
      %v2746 = vld [vmem:[#allocation2 + $0x24] sm:$0xf]
      %v2747 = vld [vmem:[#allocation2 + $0x28] sm:$0xf]
      %v2748 = vld [vmem:[#allocation2 + $0x2c] sm:$0xf]
      %v2749 = vld [vmem:[#allocation2 + $0x30] sm:$0xf]
      %v2750 = vld [vmem:[#allocation2 + $0x34] sm:$0xf]
      %v2751 = vld [vmem:[#allocation2 + $0x38] sm:$0xf]
      %v2752 = vld [vmem:[#allocation2 + $0x3c] sm:$0xf]
      %v2753 = vld [vmem:[#allocation2 + $0x40] sm:$0xf]
      %v2754 = vld [vmem:[#allocation2 + $0x44] sm:$0xf]
      %v2755 = vld [vmem:[#allocation2 + $0x48] sm:$0xf]
      %v2756 = vld [vmem:[#allocation2 + $0x4c] sm:$0xf]
      %v2757 = vld [vmem:[#allocation2 + $0x50] sm:$0xf]
      %v2758 = vld [vmem:[#allocation2 + $0x54] sm:$0xf]
      %v2759 = vld [vmem:[#allocation2 + $0x58] sm:$0xf]
      %v2760 = vld [vmem:[#allocation2 + $0x5c] sm:$0xf]
      %v2761 = vld [vmem:[#allocation2 + $0x60] sm:$0xf]
      %s2762 = scalar_lea.vmem %s4, 384
      %v2763 = vld [vmem:[%s2762] sm:$0xf]
      %v2764 = vld [vmem:[%s2762 + $0x4] sm:$0xf]
      %v2765 = vld [vmem:[%s2762 + $0x8] sm:$0xf]
      %v2766 = vld [vmem:[%s2762 + $0xc] sm:$0xf]
      %v2767 = vld [vmem:[%s2762 + $0x10] sm:$0xf]
      %v2768 = vld [vmem:[%s2762 + $0x14] sm:$0xf]
      %v2769 = vld [vmem:[%s2762 + $0x18] sm:$0xf]
      %v2770 = vld [vmem:[%s2762 + $0x1c] sm:$0xf]
      %v2771 = vld [vmem:[%s2762 + $0x20] sm:$0xf]
      %v2772 = vld [vmem:[%s2762 + $0x24] sm:$0xf]
      %v2773 = vld [vmem:[%s2762 + $0x28] sm:$0xf]
      %v2774 = vld [vmem:[%s2762 + $0x2c] sm:$0xf]
      %v2775 = vld [vmem:[%s2762 + $0x30] sm:$0xf]
      %v2776 = vld [vmem:[%s2762 + $0x34] sm:$0xf]
      %v2777 = vld [vmem:[%s2762 + $0x38] sm:$0xf]
      %v2778 = vld [vmem:[%s2762 + $0x3c] sm:$0xf]
      %v2796 = vunpack.c.l.b16 %v2745
      %v2797 = vunpack.c.l.b16 %v2746
      %v2798 = vunpack.c.l.b16 %v2747
      %v2799 = vunpack.c.l.b16 %v2748
      %v2800 = vunpack.c.l.b16 %v2749
      %v2801 = vunpack.c.l.b16 %v2750
      %v2802 = vunpack.c.l.b16 %v2751
      %v2803 = vunpack.c.l.b16 %v2752
      %v2804 = vunpack.c.l.b16 %v2753
      %v2805 = vunpack.c.l.b16 %v2754
      %v2806 = vunpack.c.l.b16 %v2755
      %v2807 = vunpack.c.l.b16 %v2756
      %v2808 = vunpack.c.l.b16 %v2757
      %v2809 = vunpack.c.l.b16 %v2758
      %v2810 = vunpack.c.l.b16 %v2759
      %v2811 = vunpack.c.l.b16 %v2760
      %v2812 = vunpack.c.l.b16 %v2761
      %v2813 = vpack.c.b16 %v2797, %v2796
      %v2814 = vpack.c.b16 %v2799, %v2798
      %v2815 = vpack.c.b16 %v2801, %v2800
      %v2816 = vpack.c.b16 %v2803, %v2802
      %v2817 = vpack.c.b16 %v2805, %v2804
      %v2818 = vpack.c.b16 %v2807, %v2806
      %v2819 = vpack.c.b16 %v2809, %v2808
      %v2820 = vpack.c.b16 %v2811, %v2810
      %v2821 = vpack.c.b16 %v2812, %v2812
      %v2823 = vshrl.u32 %v2813, 16
      %v2825 = vrot.slane %v2823, 3
      %v2826 = vshll.u32 %v2813, 16
      %v2828 = vrot.slane %v2826, 4
      %v2829 = vor.u32 %v2825, %v2828
      %v2831 = vshrl.u32 %v2814, 16
      %v2833 = vrot.slane %v2831, 3
      %v2834 = vshll.u32 %v2814, 16
      %v2836 = vrot.slane %v2834, 4
      %v2837 = vor.u32 %v2833, %v2836
      %v2838 = vsel %vm1602, %v2829, %v2837
      %v2840 = vshrl.u32 %v2815, 16
      %v2842 = vrot.slane %v2840, 3
      %v2843 = vshll.u32 %v2815, 16
      %v2845 = vrot.slane %v2843, 4
      %v2846 = vor.u32 %v2842, %v2845
      %v2847 = vsel %vm1602, %v2837, %v2846
      %v2849 = vshrl.u32 %v2816, 16
      %v2851 = vrot.slane %v2849, 3
      %v2852 = vshll.u32 %v2816, 16
      %v2854 = vrot.slane %v2852, 4
      %v2855 = vor.u32 %v2851, %v2854
      %v2856 = vsel %vm1602, %v2846, %v2855
      %v2858 = vshrl.u32 %v2817, 16
      %v2860 = vrot.slane %v2858, 3
      %v2861 = vshll.u32 %v2817, 16
      %v2863 = vrot.slane %v2861, 4
      %v2864 = vor.u32 %v2860, %v2863
      %v2865 = vsel %vm1602, %v2855, %v2864
      %v2867 = vshrl.u32 %v2818, 16
      %v2869 = vrot.slane %v2867, 3
      %v2870 = vshll.u32 %v2818, 16
      %v2872 = vrot.slane %v2870, 4
      %v2873 = vor.u32 %v2869, %v2872
      %v2874 = vsel %vm1602, %v2864, %v2873
      %v2876 = vshrl.u32 %v2819, 16
      %v2878 = vrot.slane %v2876, 3
      %v2879 = vshll.u32 %v2819, 16
      %v2881 = vrot.slane %v2879, 4
      %v2882 = vor.u32 %v2878, %v2881
      %v2883 = vsel %vm1602, %v2873, %v2882
      %v2885 = vshrl.u32 %v2820, 16
      %v2887 = vrot.slane %v2885, 3
      %v2888 = vshll.u32 %v2820, 16
      %v2890 = vrot.slane %v2888, 4
      %v2891 = vor.u32 %v2887, %v2890
      %v2892 = vsel %vm1602, %v2882, %v2891
      %v2894 = vshrl.u32 %v2821, 16
      %v2896 = vrot.slane %v2894, 3
      %v2897 = vshll.u32 %v2821, 16
      %v2899 = vrot.slane %v2897, 4
      %v2900 = vor.u32 %v2896, %v2899
      %v2901 = vsel %vm1602, %v2891, %v2900
      %v2926 = vunpack.c.l.b16 %v2763
      %v2927 = vunpack.c.l.b16 %v2764
      %v2928 = vunpack.c.l.b16 %v2765
      %v2929 = vunpack.c.l.b16 %v2766
      %v2930 = vunpack.c.l.b16 %v2767
      %v2931 = vunpack.c.l.b16 %v2768
      %v2932 = vunpack.c.l.b16 %v2769
      %v2933 = vunpack.c.l.b16 %v2770
      %v2934 = vunpack.c.l.b16 %v2771
      %v2935 = vunpack.c.l.b16 %v2772
      %v2936 = vunpack.c.l.b16 %v2773
      %v2937 = vunpack.c.l.b16 %v2774
      %v2938 = vunpack.c.l.b16 %v2775
      %v2939 = vunpack.c.l.b16 %v2776
      %v2940 = vunpack.c.l.b16 %v2777
      %v2941 = vunpack.c.l.b16 %v2778
      %v2942 = vpack.c.b16 %v2927, %v2926
      %v2943 = vpack.c.b16 %v2929, %v2928
      %v2944 = vpack.c.b16 %v2931, %v2930
      %v2945 = vpack.c.b16 %v2933, %v2932
      %v2946 = vpack.c.b16 %v2935, %v2934
      %v2947 = vpack.c.b16 %v2937, %v2936
      %v2948 = vpack.c.b16 %v2939, %v2938
      %v2949 = vpack.c.b16 %v2941, %v2940
      %2958 = vmatpush.bf16.msra.mxu0 %v2949
      %2959 = vmatpush.bf16.msra.mxu0 %v2948
      %2960 = vmatpush.bf16.msra.mxu0 %v2947
      %2961 = vmatpush.bf16.msra.mxu0 %v2946
      %2962 = vmatpush.bf16.msra.mxu0 %v2945
      %2963 = vmatpush.bf16.msra.mxu0 %v2944
      %2964 = vmatpush.bf16.msra.mxu0 %v2943
      %2965 = vmatpush.bf16.msra.mxu0 %v2942
      %2966 = vmatmul.bf16.gmra.mxu0 %v2838
      %v2967 = vpop.f32.mrf.mxu0
      %v2968 = vadd.f32 0.0, %v2967
      %v2969 = vpop.f32.mrf.mxu0
      %v2970 = vadd.f32 0.0, %v2969
      %2971 = vmatmul.bf16.gmra.mxu0 %v2847
      %v2972 = vpop.f32.mrf.mxu0
      %v2973 = vadd.f32 0.0, %v2972
      %v2974 = vpop.f32.mrf.mxu0
      %v2975 = vadd.f32 0.0, %v2974
      %2976 = vmatmul.bf16.gmra.mxu0 %v2856
      %v2977 = vpop.f32.mrf.mxu0
      %v2978 = vadd.f32 0.0, %v2977
      %v2979 = vpop.f32.mrf.mxu0
      %v2980 = vadd.f32 0.0, %v2979
      %2981 = vmatmul.bf16.gmra.mxu0 %v2865
      %v2982 = vpop.f32.mrf.mxu0
      %v2983 = vadd.f32 0.0, %v2982
      %v2984 = vpop.f32.mrf.mxu0
      %v2985 = vadd.f32 0.0, %v2984
      %2986 = vmatmul.bf16.gmra.mxu0 %v2874
      %v2987 = vpop.f32.mrf.mxu0
      %v2988 = vadd.f32 0.0, %v2987
      %v2989 = vpop.f32.mrf.mxu0
      %v2990 = vadd.f32 0.0, %v2989
      %2991 = vmatmul.bf16.gmra.mxu0 %v2883
      %v2992 = vpop.f32.mrf.mxu0
      %v2993 = vadd.f32 0.0, %v2992
      %v2994 = vpop.f32.mrf.mxu0
      %v2995 = vadd.f32 0.0, %v2994
      %2996 = vmatmul.bf16.gmra.mxu0 %v2892
      %v2997 = vpop.f32.mrf.mxu0
      %v2998 = vadd.f32 0.0, %v2997
      %v2999 = vpop.f32.mrf.mxu0
      %v3000 = vadd.f32 0.0, %v2999
      %3001 = vmatmul.bf16.gmra.mxu0 %v2901
      %v3002 = vpop.f32.mrf.mxu0
      %v3003 = vadd.f32 0.0, %v3002
      %v3004 = vpop.f32.mrf.mxu0
      %v3005 = vadd.f32 0.0, %v3004
      %3006 = vdwg.mxu0
      %v3007 = vadd.f32 %v2729, %v2968
      %v3008 = vadd.f32 %v2730, %v2970
      %v3009 = vadd.f32 %v2731, %v2973
      %v3010 = vadd.f32 %v2732, %v2975
      %v3011 = vadd.f32 %v2733, %v2978
      %v3012 = vadd.f32 %v2734, %v2980
      %v3013 = vadd.f32 %v2735, %v2983
      %v3014 = vadd.f32 %v2736, %v2985
      %v3015 = vadd.f32 %v2737, %v2988
      %v3016 = vadd.f32 %v2738, %v2990
      %v3017 = vadd.f32 %v2739, %v2993
      %v3018 = vadd.f32 %v2740, %v2995
      %v3019 = vadd.f32 %v2741, %v2998
      %v3020 = vadd.f32 %v2742, %v3000
      %v3021 = vadd.f32 %v2743, %v3003
      %v3022 = vadd.f32 %v2744, %v3005
      %s3023 = scalar_lea.vmem %s4, 448
      %v3024 = vld [vmem:[%s3023] sm:$0xf]
      %v3025 = vld [vmem:[%s3023 + $0x4] sm:$0xf]
      %v3026 = vld [vmem:[%s3023 + $0x8] sm:$0xf]
      %v3027 = vld [vmem:[%s3023 + $0xc] sm:$0xf]
      %v3028 = vld [vmem:[%s3023 + $0x10] sm:$0xf]
      %v3029 = vld [vmem:[%s3023 + $0x14] sm:$0xf]
      %v3030 = vld [vmem:[%s3023 + $0x18] sm:$0xf]
      %v3031 = vld [vmem:[%s3023 + $0x1c] sm:$0xf]
      %v3032 = vld [vmem:[%s3023 + $0x20] sm:$0xf]
      %v3033 = vld [vmem:[%s3023 + $0x24] sm:$0xf]
      %v3034 = vld [vmem:[%s3023 + $0x28] sm:$0xf]
      %v3035 = vld [vmem:[%s3023 + $0x2c] sm:$0xf]
      %v3036 = vld [vmem:[%s3023 + $0x30] sm:$0xf]
      %v3037 = vld [vmem:[%s3023 + $0x34] sm:$0xf]
      %v3038 = vld [vmem:[%s3023 + $0x38] sm:$0xf]
      %v3039 = vld [vmem:[%s3023 + $0x3c] sm:$0xf]
      %v3040 = vpack.c.b16 %v2798, %v2797
      %v3041 = vpack.c.b16 %v2800, %v2799
      %v3042 = vpack.c.b16 %v2802, %v2801
      %v3043 = vpack.c.b16 %v2804, %v2803
      %v3044 = vpack.c.b16 %v2806, %v2805
      %v3045 = vpack.c.b16 %v2808, %v2807
      %v3046 = vpack.c.b16 %v2810, %v2809
      %v3047 = vpack.c.b16 %v2812, %v2811
      %v3072 = vunpack.c.l.b16 %v3024
      %v3073 = vunpack.c.l.b16 %v3025
      %v3074 = vunpack.c.l.b16 %v3026
      %v3075 = vunpack.c.l.b16 %v3027
      %v3076 = vunpack.c.l.b16 %v3028
      %v3077 = vunpack.c.l.b16 %v3029
      %v3078 = vunpack.c.l.b16 %v3030
      %v3079 = vunpack.c.l.b16 %v3031
      %v3080 = vunpack.c.l.b16 %v3032
      %v3081 = vunpack.c.l.b16 %v3033
      %v3082 = vunpack.c.l.b16 %v3034
      %v3083 = vunpack.c.l.b16 %v3035
      %v3084 = vunpack.c.l.b16 %v3036
      %v3085 = vunpack.c.l.b16 %v3037
      %v3086 = vunpack.c.l.b16 %v3038
      %v3087 = vunpack.c.l.b16 %v3039
      %v3088 = vpack.c.b16 %v3073, %v3072
      %v3089 = vpack.c.b16 %v3075, %v3074
      %v3090 = vpack.c.b16 %v3077, %v3076
      %v3091 = vpack.c.b16 %v3079, %v3078
      %v3092 = vpack.c.b16 %v3081, %v3080
      %v3093 = vpack.c.b16 %v3083, %v3082
      %v3094 = vpack.c.b16 %v3085, %v3084
      %v3095 = vpack.c.b16 %v3087, %v3086
      %3104 = vmatpush.bf16.msra.mxu0 %v3095
      %3105 = vmatpush.bf16.msra.mxu0 %v3094
      %3106 = vmatpush.bf16.msra.mxu0 %v3093
      %3107 = vmatpush.bf16.msra.mxu0 %v3092
      %3108 = vmatpush.bf16.msra.mxu0 %v3091
      %3109 = vmatpush.bf16.msra.mxu0 %v3090
      %3110 = vmatpush.bf16.msra.mxu0 %v3089
      %3111 = vmatpush.bf16.msra.mxu0 %v3088
      %3112 = vmatmul.bf16.gmra.mxu0 %v3040
      %v3113 = vpop.f32.mrf.mxu0
      %v3114 = vadd.f32 0.0, %v3113
      %v3115 = vpop.f32.mrf.mxu0
      %v3116 = vadd.f32 0.0, %v3115
      %3117 = vmatmul.bf16.gmra.mxu0 %v3041
      %v3118 = vpop.f32.mrf.mxu0
      %v3119 = vadd.f32 0.0, %v3118
      %v3120 = vpop.f32.mrf.mxu0
      %v3121 = vadd.f32 0.0, %v3120
      %3122 = vmatmul.bf16.gmra.mxu0 %v3042
      %v3123 = vpop.f32.mrf.mxu0
      %v3124 = vadd.f32 0.0, %v3123
      %v3125 = vpop.f32.mrf.mxu0
      %v3126 = vadd.f32 0.0, %v3125
      %3127 = vmatmul.bf16.gmra.mxu0 %v3043
      %v3128 = vpop.f32.mrf.mxu0
      %v3129 = vadd.f32 0.0, %v3128
      %v3130 = vpop.f32.mrf.mxu0
      %v3131 = vadd.f32 0.0, %v3130
      %3132 = vmatmul.bf16.gmra.mxu0 %v3044
      %v3133 = vpop.f32.mrf.mxu0
      %v3134 = vadd.f32 0.0, %v3133
      %v3135 = vpop.f32.mrf.mxu0
      %v3136 = vadd.f32 0.0, %v3135
      %3137 = vmatmul.bf16.gmra.mxu0 %v3045
      %v3138 = vpop.f32.mrf.mxu0
      %v3139 = vadd.f32 0.0, %v3138
      %v3140 = vpop.f32.mrf.mxu0
      %v3141 = vadd.f32 0.0, %v3140
      %3142 = vmatmul.bf16.gmra.mxu0 %v3046
      %v3143 = vpop.f32.mrf.mxu0
      %v3144 = vadd.f32 0.0, %v3143
      %v3145 = vpop.f32.mrf.mxu0
      %v3146 = vadd.f32 0.0, %v3145
      %3147 = vmatmul.bf16.gmra.mxu0 %v3047
      %v3148 = vpop.f32.mrf.mxu0
      %v3149 = vadd.f32 0.0, %v3148
      %v3150 = vpop.f32.mrf.mxu0
      %v3151 = vadd.f32 0.0, %v3150
      %3152 = vdwg.mxu0
      %v3153 = vadd.f32 %v3007, %v3114
      %v3154 = vadd.f32 %v3008, %v3116
      %v3155 = vadd.f32 %v3009, %v3119
      %v3156 = vadd.f32 %v3010, %v3121
      %v3157 = vadd.f32 %v3011, %v3124
      %v3158 = vadd.f32 %v3012, %v3126
      %v3159 = vadd.f32 %v3013, %v3129
      %v3160 = vadd.f32 %v3014, %v3131
      %v3161 = vadd.f32 %v3015, %v3134
      %v3162 = vadd.f32 %v3016, %v3136
      %v3163 = vadd.f32 %v3017, %v3139
      %v3164 = vadd.f32 %v3018, %v3141
      %v3165 = vadd.f32 %v3019, %v3144
      %v3166 = vadd.f32 %v3020, %v3146
      %v3167 = vadd.f32 %v3021, %v3149
      %v3168 = vadd.f32 %v3022, %v3151
      %v3169 = vld [vmem:[#allocation2 + $0x24] sm:$0xf]
      %v3170 = vld [vmem:[#allocation2 + $0x28] sm:$0xf]
      %v3171 = vld [vmem:[#allocation2 + $0x2c] sm:$0xf]
      %v3172 = vld [vmem:[#allocation2 + $0x30] sm:$0xf]
      %v3173 = vld [vmem:[#allocation2 + $0x34] sm:$0xf]
      %v3174 = vld [vmem:[#allocation2 + $0x38] sm:$0xf]
      %v3175 = vld [vmem:[#allocation2 + $0x3c] sm:$0xf]
      %v3176 = vld [vmem:[#allocation2 + $0x40] sm:$0xf]
      %v3177 = vld [vmem:[#allocation2 + $0x44] sm:$0xf]
      %v3178 = vld [vmem:[#allocation2 + $0x48] sm:$0xf]
      %v3179 = vld [vmem:[#allocation2 + $0x4c] sm:$0xf]
      %v3180 = vld [vmem:[#allocation2 + $0x50] sm:$0xf]
      %v3181 = vld [vmem:[#allocation2 + $0x54] sm:$0xf]
      %v3182 = vld [vmem:[#allocation2 + $0x58] sm:$0xf]
      %v3183 = vld [vmem:[#allocation2 + $0x5c] sm:$0xf]
      %v3184 = vld [vmem:[#allocation2 + $0x60] sm:$0xf]
      %v3185 = vld [vmem:[#allocation2 + $0x64] sm:$0x1]
      %s3186 = scalar_lea.vmem %s4, 512
      %v3187 = vld [vmem:[%s3186] sm:$0xf]
      %v3188 = vld [vmem:[%s3186 + $0x4] sm:$0xf]
      %v3189 = vld [vmem:[%s3186 + $0x8] sm:$0xf]
      %v3190 = vld [vmem:[%s3186 + $0xc] sm:$0xf]
      %v3191 = vld [vmem:[%s3186 + $0x10] sm:$0xf]
      %v3192 = vld [vmem:[%s3186 + $0x14] sm:$0xf]
      %v3193 = vld [vmem:[%s3186 + $0x18] sm:$0xf]
      %v3194 = vld [vmem:[%s3186 + $0x1c] sm:$0xf]
      %v3195 = vld [vmem:[%s3186 + $0x20] sm:$0xf]
      %v3196 = vld [vmem:[%s3186 + $0x24] sm:$0xf]
      %v3197 = vld [vmem:[%s3186 + $0x28] sm:$0xf]
      %v3198 = vld [vmem:[%s3186 + $0x2c] sm:$0xf]
      %v3199 = vld [vmem:[%s3186 + $0x30] sm:$0xf]
      %v3200 = vld [vmem:[%s3186 + $0x34] sm:$0xf]
      %v3201 = vld [vmem:[%s3186 + $0x38] sm:$0xf]
      %v3202 = vld [vmem:[%s3186 + $0x3c] sm:$0xf]
      %v3220 = vunpack.c.l.b16 %v3169
      %v3221 = vunpack.c.l.b16 %v3170
      %v3222 = vunpack.c.l.b16 %v3171
      %v3223 = vunpack.c.l.b16 %v3172
      %v3224 = vunpack.c.l.b16 %v3173
      %v3225 = vunpack.c.l.b16 %v3174
      %v3226 = vunpack.c.l.b16 %v3175
      %v3227 = vunpack.c.l.b16 %v3176
      %v3228 = vunpack.c.l.b16 %v3177
      %v3229 = vunpack.c.l.b16 %v3178
      %v3230 = vunpack.c.l.b16 %v3179
      %v3231 = vunpack.c.l.b16 %v3180
      %v3232 = vunpack.c.l.b16 %v3181
      %v3233 = vunpack.c.l.b16 %v3182
      %v3234 = vunpack.c.l.b16 %v3183
      %v3235 = vunpack.c.l.b16 %v3184
      %v3236 = vunpack.c.l.b16 %v3185
      %v3237 = vpack.c.b16 %v3221, %v3220
      %v3238 = vpack.c.b16 %v3223, %v3222
      %v3239 = vpack.c.b16 %v3225, %v3224
      %v3240 = vpack.c.b16 %v3227, %v3226
      %v3241 = vpack.c.b16 %v3229, %v3228
      %v3242 = vpack.c.b16 %v3231, %v3230
      %v3243 = vpack.c.b16 %v3233, %v3232
      %v3244 = vpack.c.b16 %v3235, %v3234
      %v3245 = vpack.c.b16 %v3236, %v3236
      %v3247 = vshrl.u32 %v3237, 16
      %v3249 = vshll.u32 %v3237, 16
      %v3251 = vrot.slane %v3249, 1
      %v3252 = vor.u32 %v3247, %v3251
      %v3254 = vshll.u32 %v3238, 16
      %v3256 = vrot.slane %v3254, 1
      %v3257 = vsel %vm1865, %v3252, %v3256
      %v3258 = vshrl.u32 %v3238, 16
      %v3260 = vor.u32 %v3258, %v3256
      %v3262 = vshll.u32 %v3239, 16
      %v3264 = vrot.slane %v3262, 1
      %v3265 = vsel %vm1865, %v3260, %v3264
      %v3266 = vshrl.u32 %v3239, 16
      %v3268 = vor.u32 %v3266, %v3264
      %v3270 = vshll.u32 %v3240, 16
      %v3272 = vrot.slane %v3270, 1
      %v3273 = vsel %vm1865, %v3268, %v3272
      %v3274 = vshrl.u32 %v3240, 16
      %v3276 = vor.u32 %v3274, %v3272
      %v3278 = vshll.u32 %v3241, 16
      %v3280 = vrot.slane %v3278, 1
      %v3281 = vsel %vm1865, %v3276, %v3280
      %v3282 = vshrl.u32 %v3241, 16
      %v3284 = vor.u32 %v3282, %v3280
      %v3286 = vshll.u32 %v3242, 16
      %v3288 = vrot.slane %v3286, 1
      %v3289 = vsel %vm1865, %v3284, %v3288
      %v3290 = vshrl.u32 %v3242, 16
      %v3292 = vor.u32 %v3290, %v3288
      %v3294 = vshll.u32 %v3243, 16
      %v3296 = vrot.slane %v3294, 1
      %v3297 = vsel %vm1865, %v3292, %v3296
      %v3298 = vshrl.u32 %v3243, 16
      %v3300 = vor.u32 %v3298, %v3296
      %v3302 = vshll.u32 %v3244, 16
      %v3304 = vrot.slane %v3302, 1
      %v3305 = vsel %vm1865, %v3300, %v3304
      %v3306 = vshrl.u32 %v3244, 16
      %v3308 = vor.u32 %v3306, %v3304
      %v3310 = vshll.u32 %v3245, 16
      %v3312 = vrot.slane %v3310, 1
      %v3313 = vsel %vm1865, %v3308, %v3312
      %v3338 = vunpack.c.l.b16 %v3187
      %v3339 = vunpack.c.l.b16 %v3188
      %v3340 = vunpack.c.l.b16 %v3189
      %v3341 = vunpack.c.l.b16 %v3190
      %v3342 = vunpack.c.l.b16 %v3191
      %v3343 = vunpack.c.l.b16 %v3192
      %v3344 = vunpack.c.l.b16 %v3193
      %v3345 = vunpack.c.l.b16 %v3194
      %v3346 = vunpack.c.l.b16 %v3195
      %v3347 = vunpack.c.l.b16 %v3196
      %v3348 = vunpack.c.l.b16 %v3197
      %v3349 = vunpack.c.l.b16 %v3198
      %v3350 = vunpack.c.l.b16 %v3199
      %v3351 = vunpack.c.l.b16 %v3200
      %v3352 = vunpack.c.l.b16 %v3201
      %v3353 = vunpack.c.l.b16 %v3202
      %v3354 = vpack.c.b16 %v3339, %v3338
      %v3355 = vpack.c.b16 %v3341, %v3340
      %v3356 = vpack.c.b16 %v3343, %v3342
      %v3357 = vpack.c.b16 %v3345, %v3344
      %v3358 = vpack.c.b16 %v3347, %v3346
      %v3359 = vpack.c.b16 %v3349, %v3348
      %v3360 = vpack.c.b16 %v3351, %v3350
      %v3361 = vpack.c.b16 %v3353, %v3352
      %3370 = vmatpush.bf16.msra.mxu0 %v3361
      %3371 = vmatpush.bf16.msra.mxu0 %v3360
      %3372 = vmatpush.bf16.msra.mxu0 %v3359
      %3373 = vmatpush.bf16.msra.mxu0 %v3358
      %3374 = vmatpush.bf16.msra.mxu0 %v3357
      %3375 = vmatpush.bf16.msra.mxu0 %v3356
      %3376 = vmatpush.bf16.msra.mxu0 %v3355
      %3377 = vmatpush.bf16.msra.mxu0 %v3354
      %3378 = vmatmul.bf16.gmra.mxu0 %v3257
      %v3379 = vpop.f32.mrf.mxu0
      %v3380 = vadd.f32 0.0, %v3379
      %v3381 = vpop.f32.mrf.mxu0
      %v3382 = vadd.f32 0.0, %v3381
      %3383 = vmatmul.bf16.gmra.mxu0 %v3265
      %v3384 = vpop.f32.mrf.mxu0
      %v3385 = vadd.f32 0.0, %v3384
      %v3386 = vpop.f32.mrf.mxu0
      %v3387 = vadd.f32 0.0, %v3386
      %3388 = vmatmul.bf16.gmra.mxu0 %v3273
      %v3389 = vpop.f32.mrf.mxu0
      %v3390 = vadd.f32 0.0, %v3389
      %v3391 = vpop.f32.mrf.mxu0
      %v3392 = vadd.f32 0.0, %v3391
      %3393 = vmatmul.bf16.gmra.mxu0 %v3281
      %v3394 = vpop.f32.mrf.mxu0
      %v3395 = vadd.f32 0.0, %v3394
      %v3396 = vpop.f32.mrf.mxu0
      %v3397 = vadd.f32 0.0, %v3396
      %3398 = vmatmul.bf16.gmra.mxu0 %v3289
      %v3399 = vpop.f32.mrf.mxu0
      %v3400 = vadd.f32 0.0, %v3399
      %v3401 = vpop.f32.mrf.mxu0
      %v3402 = vadd.f32 0.0, %v3401
      %3403 = vmatmul.bf16.gmra.mxu0 %v3297
      %v3404 = vpop.f32.mrf.mxu0
      %v3405 = vadd.f32 0.0, %v3404
      %v3406 = vpop.f32.mrf.mxu0
      %v3407 = vadd.f32 0.0, %v3406
      %3408 = vmatmul.bf16.gmra.mxu0 %v3305
      %v3409 = vpop.f32.mrf.mxu0
      %v3410 = vadd.f32 0.0, %v3409
      %v3411 = vpop.f32.mrf.mxu0
      %v3412 = vadd.f32 0.0, %v3411
      %3413 = vmatmul.bf16.gmra.mxu0 %v3313
      %v3414 = vpop.f32.mrf.mxu0
      %v3415 = vadd.f32 0.0, %v3414
      %v3416 = vpop.f32.mrf.mxu0
      %v3417 = vadd.f32 0.0, %v3416
      %3418 = vdwg.mxu0
      %v3419 = vadd.f32 %v3153, %v3380
      %v3420 = vadd.f32 %v3154, %v3382
      %v3421 = vadd.f32 %v3155, %v3385
      %v3422 = vadd.f32 %v3156, %v3387
      %v3423 = vadd.f32 %v3157, %v3390
      %v3424 = vadd.f32 %v3158, %v3392
      %v3425 = vadd.f32 %v3159, %v3395
      %v3426 = vadd.f32 %v3160, %v3397
      %v3427 = vadd.f32 %v3161, %v3400
      %v3428 = vadd.f32 %v3162, %v3402
      %v3429 = vadd.f32 %v3163, %v3405
      %v3430 = vadd.f32 %v3164, %v3407
      %v3431 = vadd.f32 %v3165, %v3410
      %v3432 = vadd.f32 %v3166, %v3412
      %v3433 = vadd.f32 %v3167, %v3415
      %v3434 = vadd.f32 %v3168, %v3417
      %v3435 = vld [vmem:[%s5] sm:$0x1]
      %v3437 = vperm.slane %v3435, 0
      %v3439 = vadd.f32 %v3419, %v3437
      %v3440 = vadd.f32 %v3420, %v3437
      %v3441 = vadd.f32 %v3421, %v3437
      %v3442 = vadd.f32 %v3422, %v3437
      %v3443 = vadd.f32 %v3423, %v3437
      %v3444 = vadd.f32 %v3424, %v3437
      %v3445 = vadd.f32 %v3425, %v3437
      %v3446 = vadd.f32 %v3426, %v3437
      %v3447 = vadd.f32 %v3427, %v3437
      %v3448 = vadd.f32 %v3428, %v3437
      %v3449 = vadd.f32 %v3429, %v3437
      %v3450 = vadd.f32 %v3430, %v3437
      %v3451 = vadd.f32 %v3431, %v3437
      %v3452 = vadd.f32 %v3432, %v3437
      %v3453 = vadd.f32 %v3433, %v3437
      %v3454 = vadd.f32 %v3434, %v3437
      %v3455 = vmax.f32 %v3439, 0.0
      %v3456 = vmax.f32 %v3440, 0.0
      %v3457 = vmax.f32 %v3441, 0.0
      %v3458 = vmax.f32 %v3442, 0.0
      %v3459 = vmax.f32 %v3443, 0.0
      %v3460 = vmax.f32 %v3444, 0.0
      %v3461 = vmax.f32 %v3445, 0.0
      %v3462 = vmax.f32 %v3446, 0.0
      %v3463 = vmax.f32 %v3447, 0.0
      %v3464 = vmax.f32 %v3448, 0.0
      %v3465 = vmax.f32 %v3449, 0.0
      %v3466 = vmax.f32 %v3450, 0.0
      %v3467 = vmax.f32 %v3451, 0.0
      %v3468 = vmax.f32 %v3452, 0.0
      %v3469 = vmax.f32 %v3453, 0.0
      %v3470 = vmax.f32 %v3454, 0.0
      %v3471 = vpack.c.bf16 %v3456, %v3455
      %v3472 = vpack.c.bf16 %v3458, %v3457
      %v3473 = vpack.c.bf16 %v3460, %v3459
      %v3474 = vpack.c.bf16 %v3462, %v3461
      %v3475 = vpack.c.bf16 %v3464, %v3463
      %v3476 = vpack.c.bf16 %v3466, %v3465
      %v3477 = vpack.c.bf16 %v3468, %v3467
      %v3478 = vpack.c.bf16 %v3470, %v3469
      %v3479 = vld [vmem:[%s6] sm:$0xf]
      %v3480 = vld [vmem:[%s6 + $0x4] sm:$0xf]
      %v3481 = vld [vmem:[%s6 + $0x8] sm:$0xf]
      %v3482 = vld [vmem:[%s6 + $0xc] sm:$0xf]
      %v3483 = vld [vmem:[%s6 + $0x10] sm:$0xf]
      %v3484 = vld [vmem:[%s6 + $0x14] sm:$0xf]
      %v3485 = vld [vmem:[%s6 + $0x18] sm:$0xf]
      %v3486 = vld [vmem:[%s6 + $0x1c] sm:$0xf]
      %v3487 = vld [vmem:[%s6 + $0x20] sm:$0xf]
      %v3488 = vld [vmem:[%s6 + $0x24] sm:$0xf]
      %v3489 = vld [vmem:[%s6 + $0x28] sm:$0xf]
      %v3490 = vld [vmem:[%s6 + $0x2c] sm:$0xf]
      %v3491 = vld [vmem:[%s6 + $0x30] sm:$0xf]
      %v3492 = vld [vmem:[%s6 + $0x34] sm:$0xf]
      %v3493 = vld [vmem:[%s6 + $0x38] sm:$0xf]
      %v3494 = vld [vmem:[%s6 + $0x3c] sm:$0xf]
      %v3495 = vld [vmem:[%s7] sm:$0x1]
      %v3497 = vperm.slane %v3495, 0
      %v3515 = vunpack.c.l.b16 %v3479
      %v3516 = vunpack.c.l.b16 %v3480
      %v3517 = vunpack.c.l.b16 %v3481
      %v3518 = vunpack.c.l.b16 %v3482
      %v3519 = vunpack.c.l.b16 %v3483
      %v3520 = vunpack.c.l.b16 %v3484
      %v3521 = vunpack.c.l.b16 %v3485
      %v3522 = vunpack.c.l.b16 %v3486
      %v3523 = vunpack.c.l.b16 %v3487
      %v3524 = vunpack.c.l.b16 %v3488
      %v3525 = vunpack.c.l.b16 %v3489
      %v3526 = vunpack.c.l.b16 %v3490
      %v3527 = vunpack.c.l.b16 %v3491
      %v3528 = vunpack.c.l.b16 %v3492
      %v3529 = vunpack.c.l.b16 %v3493
      %v3530 = vunpack.c.l.b16 %v3494
      %v3531 = vpack.c.b16 %v3516, %v3515
      %v3532 = vpack.c.b16 %v3518, %v3517
      %v3533 = vpack.c.b16 %v3520, %v3519
      %v3534 = vpack.c.b16 %v3522, %v3521
      %v3535 = vpack.c.b16 %v3524, %v3523
      %v3536 = vpack.c.b16 %v3526, %v3525
      %v3537 = vpack.c.b16 %v3528, %v3527
      %v3538 = vpack.c.b16 %v3530, %v3529
      %3547 = vmatpush.bf16.msra.mxu0 %v3538
      %3548 = vmatpush.bf16.msra.mxu0 %v3537
      %3549 = vmatpush.bf16.msra.mxu0 %v3536
      %3550 = vmatpush.bf16.msra.mxu0 %v3535
      %3551 = vmatpush.bf16.msra.mxu0 %v3534
      %3552 = vmatpush.bf16.msra.mxu0 %v3533
      %3553 = vmatpush.bf16.msra.mxu0 %v3532
      %3554 = vmatpush.bf16.msra.mxu0 %v3531
      %3555 = vmatmul.bf16.gmra.mxu0 %v3471
      %v3556 = vpop.f32.mrf.mxu0
      %v3557 = vadd.f32 %v3497, %v3556
      %v3558 = vpop.f32.mrf.mxu0
      %v3559 = vadd.f32 %v3497, %v3558
      %3560 = vmatmul.bf16.gmra.mxu0 %v3472
      %v3561 = vpop.f32.mrf.mxu0
      %v3562 = vadd.f32 %v3497, %v3561
      %v3563 = vpop.f32.mrf.mxu0
      %v3564 = vadd.f32 %v3497, %v3563
      %3565 = vmatmul.bf16.gmra.mxu0 %v3473
      %v3566 = vpop.f32.mrf.mxu0
      %v3567 = vadd.f32 %v3497, %v3566
      %v3568 = vpop.f32.mrf.mxu0
      %v3569 = vadd.f32 %v3497, %v3568
      %3570 = vmatmul.bf16.gmra.mxu0 %v3474
      %v3571 = vpop.f32.mrf.mxu0
      %v3572 = vadd.f32 %v3497, %v3571
      %v3573 = vpop.f32.mrf.mxu0
      %v3574 = vadd.f32 %v3497, %v3573
      %3575 = vmatmul.bf16.gmra.mxu0 %v3475
      %v3576 = vpop.f32.mrf.mxu0
      %v3577 = vadd.f32 %v3497, %v3576
      %v3578 = vpop.f32.mrf.mxu0
      %v3579 = vadd.f32 %v3497, %v3578
      %3580 = vmatmul.bf16.gmra.mxu0 %v3476
      %v3581 = vpop.f32.mrf.mxu0
      %v3582 = vadd.f32 %v3497, %v3581
      %v3583 = vpop.f32.mrf.mxu0
      %v3584 = vadd.f32 %v3497, %v3583
      %3585 = vmatmul.bf16.gmra.mxu0 %v3477
      %v3586 = vpop.f32.mrf.mxu0
      %v3587 = vadd.f32 %v3497, %v3586
      %v3588 = vpop.f32.mrf.mxu0
      %v3589 = vadd.f32 %v3497, %v3588
      %3590 = vmatmul.bf16.gmra.mxu0 %v3478
      %v3591 = vpop.f32.mrf.mxu0
      %v3592 = vadd.f32 %v3497, %v3591
      %v3593 = vpop.f32.mrf.mxu0
      %v3594 = vadd.f32 %v3497, %v3593
      %3595 = vdwg.mxu0
      %v3596 = vld [vmem:[%s354] sm:$0xf]
      %v3597 = vld [vmem:[%s354 + $0x4] sm:$0xf]
      %v3598 = vld [vmem:[%s354 + $0x8] sm:$0xf]
      %v3599 = vld [vmem:[%s354 + $0xc] sm:$0xf]
      %v3600 = vld [vmem:[%s354 + $0x10] sm:$0xf]
      %v3601 = vld [vmem:[%s354 + $0x14] sm:$0xf]
      %v3602 = vld [vmem:[%s354 + $0x18] sm:$0xf]
      %v3603 = vld [vmem:[%s354 + $0x1c] sm:$0xf]
      %v3604 = vld [vmem:[%s354 + $0x20] sm:$0xf]
      %v3605 = vld [vmem:[%s354 + $0x24] sm:$0xf]
      %v3606 = vld [vmem:[%s354 + $0x28] sm:$0xf]
      %v3607 = vld [vmem:[%s354 + $0x2c] sm:$0xf]
      %v3608 = vld [vmem:[%s354 + $0x30] sm:$0xf]
      %v3609 = vld [vmem:[%s354 + $0x34] sm:$0xf]
      %v3610 = vld [vmem:[%s354 + $0x38] sm:$0xf]
      %v3611 = vld [vmem:[%s354 + $0x3c] sm:$0xf]
      %v3612 = vld [vmem:[%s8] sm:$0xf]
      %v3613 = vld [vmem:[%s8 + $0x4] sm:$0xf]
      %v3614 = vld [vmem:[%s8 + $0x8] sm:$0xf]
      %v3615 = vld [vmem:[%s8 + $0xc] sm:$0xf]
      %v3616 = vld [vmem:[%s8 + $0x10] sm:$0xf]
      %v3617 = vld [vmem:[%s8 + $0x14] sm:$0xf]
      %v3618 = vld [vmem:[%s8 + $0x18] sm:$0xf]
      %v3619 = vld [vmem:[%s8 + $0x1c] sm:$0xf]
      %v3620 = vld [vmem:[%s8 + $0x20] sm:$0xf]
      %v3621 = vld [vmem:[%s8 + $0x24] sm:$0xf]
      %v3622 = vld [vmem:[%s8 + $0x28] sm:$0xf]
      %v3623 = vld [vmem:[%s8 + $0x2c] sm:$0xf]
      %v3624 = vld [vmem:[%s8 + $0x30] sm:$0xf]
      %v3625 = vld [vmem:[%s8 + $0x34] sm:$0xf]
      %v3626 = vld [vmem:[%s8 + $0x38] sm:$0xf]
      %v3627 = vld [vmem:[%s8 + $0x3c] sm:$0xf]
      %v3628 = vld [vmem:[%s9] sm:$0x1]
      %v3630 = vperm.slane %v3628, 0
      %v3648 = vunpack.c.l.b16 %v3596
      %v3649 = vunpack.c.l.b16 %v3597
      %v3650 = vunpack.c.l.b16 %v3598
      %v3651 = vunpack.c.l.b16 %v3599
      %v3652 = vunpack.c.l.b16 %v3600
      %v3653 = vunpack.c.l.b16 %v3601
      %v3654 = vunpack.c.l.b16 %v3602
      %v3655 = vunpack.c.l.b16 %v3603
      %v3656 = vunpack.c.l.b16 %v3604
      %v3657 = vunpack.c.l.b16 %v3605
      %v3658 = vunpack.c.l.b16 %v3606
      %v3659 = vunpack.c.l.b16 %v3607
      %v3660 = vunpack.c.l.b16 %v3608
      %v3661 = vunpack.c.l.b16 %v3609
      %v3662 = vunpack.c.l.b16 %v3610
      %v3663 = vunpack.c.l.b16 %v3611
      %v3664 = vpack.c.b16 %v3649, %v3648
      %v3665 = vpack.c.b16 %v3651, %v3650
      %v3666 = vpack.c.b16 %v3653, %v3652
      %v3667 = vpack.c.b16 %v3655, %v3654
      %v3668 = vpack.c.b16 %v3657, %v3656
      %v3669 = vpack.c.b16 %v3659, %v3658
      %v3670 = vpack.c.b16 %v3661, %v3660
      %v3671 = vpack.c.b16 %v3663, %v3662
      %v3696 = vunpack.c.l.b16 %v3612
      %v3697 = vunpack.c.l.b16 %v3613
      %v3698 = vunpack.c.l.b16 %v3614
      %v3699 = vunpack.c.l.b16 %v3615
      %v3700 = vunpack.c.l.b16 %v3616
      %v3701 = vunpack.c.l.b16 %v3617
      %v3702 = vunpack.c.l.b16 %v3618
      %v3703 = vunpack.c.l.b16 %v3619
      %v3704 = vunpack.c.l.b16 %v3620
      %v3705 = vunpack.c.l.b16 %v3621
      %v3706 = vunpack.c.l.b16 %v3622
      %v3707 = vunpack.c.l.b16 %v3623
      %v3708 = vunpack.c.l.b16 %v3624
      %v3709 = vunpack.c.l.b16 %v3625
      %v3710 = vunpack.c.l.b16 %v3626
      %v3711 = vunpack.c.l.b16 %v3627
      %v3712 = vpack.c.b16 %v3697, %v3696
      %v3713 = vpack.c.b16 %v3699, %v3698
      %v3714 = vpack.c.b16 %v3701, %v3700
      %v3715 = vpack.c.b16 %v3703, %v3702
      %v3716 = vpack.c.b16 %v3705, %v3704
      %v3717 = vpack.c.b16 %v3707, %v3706
      %v3718 = vpack.c.b16 %v3709, %v3708
      %v3719 = vpack.c.b16 %v3711, %v3710
      %3728 = vmatpush.bf16.msra.mxu0 %v3719
      %3729 = vmatpush.bf16.msra.mxu0 %v3718
      %3730 = vmatpush.bf16.msra.mxu0 %v3717
      %3731 = vmatpush.bf16.msra.mxu0 %v3716
      %3732 = vmatpush.bf16.msra.mxu0 %v3715
      %3733 = vmatpush.bf16.msra.mxu0 %v3714
      %3734 = vmatpush.bf16.msra.mxu0 %v3713
      %3735 = vmatpush.bf16.msra.mxu0 %v3712
      %3736 = vmatmul.bf16.gmra.mxu0 %v3664
      %v3737 = vpop.f32.mrf.mxu0
      %v3738 = vadd.f32 %v3630, %v3737
      %v3739 = vpop.f32.mrf.mxu0
      %v3740 = vadd.f32 %v3630, %v3739
      %3741 = vmatmul.bf16.gmra.mxu0 %v3665
      %v3742 = vpop.f32.mrf.mxu0
      %v3743 = vadd.f32 %v3630, %v3742
      %v3744 = vpop.f32.mrf.mxu0
      %v3745 = vadd.f32 %v3630, %v3744
      %3746 = vmatmul.bf16.gmra.mxu0 %v3666
      %v3747 = vpop.f32.mrf.mxu0
      %v3748 = vadd.f32 %v3630, %v3747
      %v3749 = vpop.f32.mrf.mxu0
      %v3750 = vadd.f32 %v3630, %v3749
      %3751 = vmatmul.bf16.gmra.mxu0 %v3667
      %v3752 = vpop.f32.mrf.mxu0
      %v3753 = vadd.f32 %v3630, %v3752
      %v3754 = vpop.f32.mrf.mxu0
      %v3755 = vadd.f32 %v3630, %v3754
      %3756 = vmatmul.bf16.gmra.mxu0 %v3668
      %v3757 = vpop.f32.mrf.mxu0
      %v3758 = vadd.f32 %v3630, %v3757
      %v3759 = vpop.f32.mrf.mxu0
      %v3760 = vadd.f32 %v3630, %v3759
      %3761 = vmatmul.bf16.gmra.mxu0 %v3669
      %v3762 = vpop.f32.mrf.mxu0
      %v3763 = vadd.f32 %v3630, %v3762
      %v3764 = vpop.f32.mrf.mxu0
      %v3765 = vadd.f32 %v3630, %v3764
      %3766 = vmatmul.bf16.gmra.mxu0 %v3670
      %v3767 = vpop.f32.mrf.mxu0
      %v3768 = vadd.f32 %v3630, %v3767
      %v3769 = vpop.f32.mrf.mxu0
      %v3770 = vadd.f32 %v3630, %v3769
      %3771 = vmatmul.bf16.gmra.mxu0 %v3671
      %v3772 = vpop.f32.mrf.mxu0
      %v3773 = vadd.f32 %v3630, %v3772
      %v3774 = vpop.f32.mrf.mxu0
      %v3775 = vadd.f32 %v3630, %v3774
      %3776 = vdwg.mxu0
      %v3777 = vadd.f32 %v3557, %v3738
      %v3778 = vadd.f32 %v3559, %v3740
      %v3779 = vadd.f32 %v3562, %v3743
      %v3780 = vadd.f32 %v3564, %v3745
      %v3781 = vadd.f32 %v3567, %v3748
      %v3782 = vadd.f32 %v3569, %v3750
      %v3783 = vadd.f32 %v3572, %v3753
      %v3784 = vadd.f32 %v3574, %v3755
      %v3785 = vadd.f32 %v3577, %v3758
      %v3786 = vadd.f32 %v3579, %v3760
      %v3787 = vadd.f32 %v3582, %v3763
      %v3788 = vadd.f32 %v3584, %v3765
      %v3789 = vadd.f32 %v3587, %v3768
      %v3790 = vadd.f32 %v3589, %v3770
      %v3791 = vadd.f32 %v3592, %v3773
      %v3792 = vadd.f32 %v3594, %v3775
      %v3793 = vmax.f32 %v3777, 0.0
      %v3794 = vmax.f32 %v3778, 0.0
      %v3795 = vmax.f32 %v3779, 0.0
      %v3796 = vmax.f32 %v3780, 0.0
      %v3797 = vmax.f32 %v3781, 0.0
      %v3798 = vmax.f32 %v3782, 0.0
      %v3799 = vmax.f32 %v3783, 0.0
      %v3800 = vmax.f32 %v3784, 0.0
      %v3801 = vmax.f32 %v3785, 0.0
      %v3802 = vmax.f32 %v3786, 0.0
      %v3803 = vmax.f32 %v3787, 0.0
      %v3804 = vmax.f32 %v3788, 0.0
      %v3805 = vmax.f32 %v3789, 0.0
      %v3806 = vmax.f32 %v3790, 0.0
      %v3807 = vmax.f32 %v3791, 0.0
      %v3808 = vmax.f32 %v3792, 0.0
      %v3809 = vpack.c.bf16 %v3793, %v3793
      %v3810 = vpack.c.bf16 %v3794, %v3794
      %v3811 = vpack.c.bf16 %v3795, %v3795
      %v3812 = vpack.c.bf16 %v3796, %v3796
      %v3813 = vpack.c.bf16 %v3797, %v3797
      %v3814 = vpack.c.bf16 %v3798, %v3798
      %v3815 = vpack.c.bf16 %v3799, %v3799
      %v3816 = vpack.c.bf16 %v3800, %v3800
      %v3817 = vpack.c.bf16 %v3801, %v3801
      %v3818 = vpack.c.bf16 %v3802, %v3802
      %v3819 = vpack.c.bf16 %v3803, %v3803
      %v3820 = vpack.c.bf16 %v3804, %v3804
      %v3821 = vpack.c.bf16 %v3805, %v3805
      %v3822 = vpack.c.bf16 %v3806, %v3806
      %v3823 = vpack.c.bf16 %v3807, %v3807
      %v3824 = vpack.c.bf16 %v3808, %v3808
      %3825 = vst [vmem:[%s359] sm:$0xf] %v3809
      %3826 = vst [vmem:[%s359 + $0x4] sm:$0xf] %v3810
      %3827 = vst [vmem:[%s359 + $0x8] sm:$0xf] %v3811
      %3828 = vst [vmem:[%s359 + $0xc] sm:$0xf] %v3812
      %3829 = vst [vmem:[%s359 + $0x10] sm:$0xf] %v3813
      %3830 = vst [vmem:[%s359 + $0x14] sm:$0xf] %v3814
      %3831 = vst [vmem:[%s359 + $0x18] sm:$0xf] %v3815
      %3832 = vst [vmem:[%s359 + $0x1c] sm:$0xf] %v3816
      %3833 = vst [vmem:[%s359 + $0x20] sm:$0xf] %v3817
      %3834 = vst [vmem:[%s359 + $0x24] sm:$0xf] %v3818
      %3835 = vst [vmem:[%s359 + $0x28] sm:$0xf] %v3819
      %3836 = vst [vmem:[%s359 + $0x2c] sm:$0xf] %v3820
      %3837 = vst [vmem:[%s359 + $0x30] sm:$0xf] %v3821
      %3838 = vst [vmem:[%s359 + $0x34] sm:$0xf] %v3822
      %3839 = vst [vmem:[%s359 + $0x38] sm:$0xf] %v3823
      %3840 = vst [vmem:[%s359 + $0x3c] sm:$0xf] %v3824
      %v3841 = vld [vmem:[#allocation2 + $0x48] sm:$0x8]
      %v3842 = vld [vmem:[#allocation2 + $0x4c] sm:$0xf]
      %v3843 = vld [vmem:[#allocation2 + $0x50] sm:$0xf]
      %v3844 = vld [vmem:[#allocation2 + $0x54] sm:$0xf]
      %v3845 = vld [vmem:[#allocation2 + $0x58] sm:$0xf]
      %v3846 = vld [vmem:[#allocation2 + $0x5c] sm:$0xf]
      %v3847 = vld [vmem:[#allocation2 + $0x60] sm:$0xf]
      %v3848 = vld [vmem:[#allocation2 + $0x64] sm:$0xf]
      %v3849 = vld [vmem:[#allocation2 + $0x68] sm:$0xf]
      %v3850 = vld [vmem:[#allocation2 + $0x6c] sm:$0xf]
      %v3851 = vld [vmem:[#allocation2 + $0x70] sm:$0xf]
      %v3852 = vld [vmem:[#allocation2 + $0x74] sm:$0xf]
      %v3853 = vld [vmem:[#allocation2 + $0x78] sm:$0xf]
      %v3854 = vld [vmem:[#allocation2 + $0x7c] sm:$0xf]
      %v3855 = vld [vmem:[#allocation2 + $0x80] sm:$0xf]
      %v3856 = vld [vmem:[#allocation2 + $0x84] sm:$0xf]
      %v3857 = vld [vmem:[#allocation2 + $0x88] sm:$0xf]
      %v3858 = vld [vmem:[%s4] sm:$0xf]
      %v3859 = vld [vmem:[%s4 + $0x4] sm:$0xf]
      %v3860 = vld [vmem:[%s4 + $0x8] sm:$0xf]
      %v3861 = vld [vmem:[%s4 + $0xc] sm:$0xf]
      %v3862 = vld [vmem:[%s4 + $0x10] sm:$0xf]
      %v3863 = vld [vmem:[%s4 + $0x14] sm:$0xf]
      %v3864 = vld [vmem:[%s4 + $0x18] sm:$0xf]
      %v3865 = vld [vmem:[%s4 + $0x1c] sm:$0xf]
      %v3866 = vld [vmem:[%s4 + $0x20] sm:$0xf]
      %v3867 = vld [vmem:[%s4 + $0x24] sm:$0xf]
      %v3868 = vld [vmem:[%s4 + $0x28] sm:$0xf]
      %v3869 = vld [vmem:[%s4 + $0x2c] sm:$0xf]
      %v3870 = vld [vmem:[%s4 + $0x30] sm:$0xf]
      %v3871 = vld [vmem:[%s4 + $0x34] sm:$0xf]
      %v3872 = vld [vmem:[%s4 + $0x38] sm:$0xf]
      %v3873 = vld [vmem:[%s4 + $0x3c] sm:$0xf]
      %v3874 = vld [vmem:[%s1429] sm:$0xf]
      %v3875 = vld [vmem:[%s1429 + $0x4] sm:$0xf]
      %v3876 = vld [vmem:[%s1429 + $0x8] sm:$0xf]
      %v3877 = vld [vmem:[%s1429 + $0xc] sm:$0xf]
      %v3878 = vld [vmem:[%s1429 + $0x10] sm:$0xf]
      %v3879 = vld [vmem:[%s1429 + $0x14] sm:$0xf]
      %v3880 = vld [vmem:[%s1429 + $0x18] sm:$0xf]
      %v3881 = vld [vmem:[%s1429 + $0x1c] sm:$0xf]
      %v3882 = vld [vmem:[%s1429 + $0x20] sm:$0xf]
      %v3883 = vld [vmem:[%s1429 + $0x24] sm:$0xf]
      %v3884 = vld [vmem:[%s1429 + $0x28] sm:$0xf]
      %v3885 = vld [vmem:[%s1429 + $0x2c] sm:$0xf]
      %v3886 = vld [vmem:[%s1429 + $0x30] sm:$0xf]
      %v3887 = vld [vmem:[%s1429 + $0x34] sm:$0xf]
      %v3888 = vld [vmem:[%s1429 + $0x38] sm:$0xf]
      %v3889 = vld [vmem:[%s1429 + $0x3c] sm:$0xf]
      %v3906 = vunpack.c.l.b16 %v3842
      %v3907 = vunpack.c.l.b16 %v3843
      %v3908 = vunpack.c.l.b16 %v3844
      %v3909 = vunpack.c.l.b16 %v3845
      %v3910 = vunpack.c.l.b16 %v3846
      %v3911 = vunpack.c.l.b16 %v3847
      %v3912 = vunpack.c.l.b16 %v3848
      %v3913 = vunpack.c.l.b16 %v3849
      %v3914 = vunpack.c.l.b16 %v3850
      %v3915 = vunpack.c.l.b16 %v3851
      %v3916 = vunpack.c.l.b16 %v3852
      %v3917 = vunpack.c.l.b16 %v3853
      %v3918 = vunpack.c.l.b16 %v3854
      %v3919 = vunpack.c.l.b16 %v3855
      %v3920 = vunpack.c.l.b16 %v3856
      %v3921 = vunpack.c.l.b16 %v3857
      %v3922 = vpack.c.b16 %v3907, %v3906
      %v3923 = vpack.c.b16 %v3909, %v3908
      %v3924 = vpack.c.b16 %v3911, %v3910
      %v3925 = vpack.c.b16 %v3913, %v3912
      %v3926 = vpack.c.b16 %v3915, %v3914
      %v3927 = vpack.c.b16 %v3917, %v3916
      %v3928 = vpack.c.b16 %v3919, %v3918
      %v3929 = vpack.c.b16 %v3921, %v3920
      %v3954 = vunpack.c.l.b16 %v3874
      %v3955 = vunpack.c.l.b16 %v3875
      %v3956 = vunpack.c.l.b16 %v3876
      %v3957 = vunpack.c.l.b16 %v3877
      %v3958 = vunpack.c.l.b16 %v3878
      %v3959 = vunpack.c.l.b16 %v3879
      %v3960 = vunpack.c.l.b16 %v3880
      %v3961 = vunpack.c.l.b16 %v3881
      %v3962 = vunpack.c.l.b16 %v3882
      %v3963 = vunpack.c.l.b16 %v3883
      %v3964 = vunpack.c.l.b16 %v3884
      %v3965 = vunpack.c.l.b16 %v3885
      %v3966 = vunpack.c.l.b16 %v3886
      %v3967 = vunpack.c.l.b16 %v3887
      %v3968 = vunpack.c.l.b16 %v3888
      %v3969 = vunpack.c.l.b16 %v3889
      %v3970 = vpack.c.b16 %v3955, %v3954
      %v3971 = vpack.c.b16 %v3957, %v3956
      %v3972 = vpack.c.b16 %v3959, %v3958
      %v3973 = vpack.c.b16 %v3961, %v3960
      %v3974 = vpack.c.b16 %v3963, %v3962
      %v3975 = vpack.c.b16 %v3965, %v3964
      %v3976 = vpack.c.b16 %v3967, %v3966
      %v3977 = vpack.c.b16 %v3969, %v3968
      %3986 = vmatpush.bf16.msra.mxu0 %v3977
      %3987 = vmatpush.bf16.msra.mxu0 %v3976
      %3988 = vmatpush.bf16.msra.mxu0 %v3975
      %3989 = vmatpush.bf16.msra.mxu0 %v3974
      %3990 = vmatpush.bf16.msra.mxu0 %v3973
      %3991 = vmatpush.bf16.msra.mxu0 %v3972
      %3992 = vmatpush.bf16.msra.mxu0 %v3971
      %3993 = vmatpush.bf16.msra.mxu0 %v3970
      %3994 = vmatmul.bf16.gmra.mxu0 %v3922
      %v3995 = vpop.f32.mrf.mxu0
      %v3996 = vadd.f32 0.0, %v3995
      %v3997 = vpop.f32.mrf.mxu0
      %v3998 = vadd.f32 0.0, %v3997
      %3999 = vmatmul.bf16.gmra.mxu0 %v3923
      %v4000 = vpop.f32.mrf.mxu0
      %v4001 = vadd.f32 0.0, %v4000
      %v4002 = vpop.f32.mrf.mxu0
      %v4003 = vadd.f32 0.0, %v4002
      %4004 = vmatmul.bf16.gmra.mxu0 %v3924
      %v4005 = vpop.f32.mrf.mxu0
      %v4006 = vadd.f32 0.0, %v4005
      %v4007 = vpop.f32.mrf.mxu0
      %v4008 = vadd.f32 0.0, %v4007
      %4009 = vmatmul.bf16.gmra.mxu0 %v3925
      %v4010 = vpop.f32.mrf.mxu0
      %v4011 = vadd.f32 0.0, %v4010
      %v4012 = vpop.f32.mrf.mxu0
      %v4013 = vadd.f32 0.0, %v4012
      %4014 = vmatmul.bf16.gmra.mxu0 %v3926
      %v4015 = vpop.f32.mrf.mxu0
      %v4016 = vadd.f32 0.0, %v4015
      %v4017 = vpop.f32.mrf.mxu0
      %v4018 = vadd.f32 0.0, %v4017
      %4019 = vmatmul.bf16.gmra.mxu0 %v3927
      %v4020 = vpop.f32.mrf.mxu0
      %v4021 = vadd.f32 0.0, %v4020
      %v4022 = vpop.f32.mrf.mxu0
      %v4023 = vadd.f32 0.0, %v4022
      %4024 = vmatmul.bf16.gmra.mxu0 %v3928
      %v4025 = vpop.f32.mrf.mxu0
      %v4026 = vadd.f32 0.0, %v4025
      %v4027 = vpop.f32.mrf.mxu0
      %v4028 = vadd.f32 0.0, %v4027
      %4029 = vmatmul.bf16.gmra.mxu0 %v3929
      %v4030 = vpop.f32.mrf.mxu0
      %v4031 = vadd.f32 0.0, %v4030
      %v4032 = vpop.f32.mrf.mxu0
      %v4033 = vadd.f32 0.0, %v4032
      %4034 = vdwg.mxu0
      %v4036 = vunpack.c.l.b16 %v3841
      %v4037 = vpack.c.b16 %v3906, %v4036
      %v4038 = vpack.c.b16 %v3908, %v3907
      %v4039 = vpack.c.b16 %v3910, %v3909
      %v4040 = vpack.c.b16 %v3912, %v3911
      %v4041 = vpack.c.b16 %v3914, %v3913
      %v4042 = vpack.c.b16 %v3916, %v3915
      %v4043 = vpack.c.b16 %v3918, %v3917
      %v4044 = vpack.c.b16 %v3920, %v3919
      %v4045 = vpack.c.b16 %v3921, %v3921
      %v4047 = vshrl.u32 %v4037, 16
      %v4049 = vrot.slane %v4047, 3
      %v4050 = vshll.u32 %v4037, 16
      %v4052 = vrot.slane %v4050, 4
      %v4053 = vor.u32 %v4049, %v4052
      %v4055 = vshrl.u32 %v4038, 16
      %v4057 = vrot.slane %v4055, 3
      %v4058 = vshll.u32 %v4038, 16
      %v4060 = vrot.slane %v4058, 4
      %v4061 = vor.u32 %v4057, %v4060
      %v4062 = vsel %vm1602, %v4053, %v4061
      %v4064 = vshrl.u32 %v4039, 16
      %v4066 = vrot.slane %v4064, 3
      %v4067 = vshll.u32 %v4039, 16
      %v4069 = vrot.slane %v4067, 4
      %v4070 = vor.u32 %v4066, %v4069
      %v4071 = vsel %vm1602, %v4061, %v4070
      %v4073 = vshrl.u32 %v4040, 16
      %v4075 = vrot.slane %v4073, 3
      %v4076 = vshll.u32 %v4040, 16
      %v4078 = vrot.slane %v4076, 4
      %v4079 = vor.u32 %v4075, %v4078
      %v4080 = vsel %vm1602, %v4070, %v4079
      %v4082 = vshrl.u32 %v4041, 16
      %v4084 = vrot.slane %v4082, 3
      %v4085 = vshll.u32 %v4041, 16
      %v4087 = vrot.slane %v4085, 4
      %v4088 = vor.u32 %v4084, %v4087
      %v4089 = vsel %vm1602, %v4079, %v4088
      %v4091 = vshrl.u32 %v4042, 16
      %v4093 = vrot.slane %v4091, 3
      %v4094 = vshll.u32 %v4042, 16
      %v4096 = vrot.slane %v4094, 4
      %v4097 = vor.u32 %v4093, %v4096
      %v4098 = vsel %vm1602, %v4088, %v4097
      %v4100 = vshrl.u32 %v4043, 16
      %v4102 = vrot.slane %v4100, 3
      %v4103 = vshll.u32 %v4043, 16
      %v4105 = vrot.slane %v4103, 4
      %v4106 = vor.u32 %v4102, %v4105
      %v4107 = vsel %vm1602, %v4097, %v4106
      %v4109 = vshrl.u32 %v4044, 16
      %v4111 = vrot.slane %v4109, 3
      %v4112 = vshll.u32 %v4044, 16
      %v4114 = vrot.slane %v4112, 4
      %v4115 = vor.u32 %v4111, %v4114
      %v4116 = vsel %vm1602, %v4106, %v4115
      %v4118 = vshrl.u32 %v4045, 16
      %v4120 = vrot.slane %v4118, 3
      %v4121 = vshll.u32 %v4045, 16
      %v4123 = vrot.slane %v4121, 4
      %v4124 = vor.u32 %v4120, %v4123
      %v4125 = vsel %vm1602, %v4115, %v4124
      %v4150 = vunpack.c.l.b16 %v3858
      %v4151 = vunpack.c.l.b16 %v3859
      %v4152 = vunpack.c.l.b16 %v3860
      %v4153 = vunpack.c.l.b16 %v3861
      %v4154 = vunpack.c.l.b16 %v3862
      %v4155 = vunpack.c.l.b16 %v3863
      %v4156 = vunpack.c.l.b16 %v3864
      %v4157 = vunpack.c.l.b16 %v3865
      %v4158 = vunpack.c.l.b16 %v3866
      %v4159 = vunpack.c.l.b16 %v3867
      %v4160 = vunpack.c.l.b16 %v3868
      %v4161 = vunpack.c.l.b16 %v3869
      %v4162 = vunpack.c.l.b16 %v3870
      %v4163 = vunpack.c.l.b16 %v3871
      %v4164 = vunpack.c.l.b16 %v3872
      %v4165 = vunpack.c.l.b16 %v3873
      %v4166 = vpack.c.b16 %v4151, %v4150
      %v4167 = vpack.c.b16 %v4153, %v4152
      %v4168 = vpack.c.b16 %v4155, %v4154
      %v4169 = vpack.c.b16 %v4157, %v4156
      %v4170 = vpack.c.b16 %v4159, %v4158
      %v4171 = vpack.c.b16 %v4161, %v4160
      %v4172 = vpack.c.b16 %v4163, %v4162
      %v4173 = vpack.c.b16 %v4165, %v4164
      %4182 = vmatpush.bf16.msra.mxu0 %v4173
      %4183 = vmatpush.bf16.msra.mxu0 %v4172
      %4184 = vmatpush.bf16.msra.mxu0 %v4171
      %4185 = vmatpush.bf16.msra.mxu0 %v4170
      %4186 = vmatpush.bf16.msra.mxu0 %v4169
      %4187 = vmatpush.bf16.msra.mxu0 %v4168
      %4188 = vmatpush.bf16.msra.mxu0 %v4167
      %4189 = vmatpush.bf16.msra.mxu0 %v4166
      %4190 = vmatmul.bf16.gmra.mxu0 %v4062
      %v4191 = vpop.f32.mrf.mxu0
      %v4192 = vadd.f32 %v3996, %v4191
      %v4193 = vpop.f32.mrf.mxu0
      %v4194 = vadd.f32 %v3998, %v4193
      %4195 = vmatmul.bf16.gmra.mxu0 %v4071
      %v4196 = vpop.f32.mrf.mxu0
      %v4197 = vadd.f32 %v4001, %v4196
      %v4198 = vpop.f32.mrf.mxu0
      %v4199 = vadd.f32 %v4003, %v4198
      %4200 = vmatmul.bf16.gmra.mxu0 %v4080
      %v4201 = vpop.f32.mrf.mxu0
      %v4202 = vadd.f32 %v4006, %v4201
      %v4203 = vpop.f32.mrf.mxu0
      %v4204 = vadd.f32 %v4008, %v4203
      %4205 = vmatmul.bf16.gmra.mxu0 %v4089
      %v4206 = vpop.f32.mrf.mxu0
      %v4207 = vadd.f32 %v4011, %v4206
      %v4208 = vpop.f32.mrf.mxu0
      %v4209 = vadd.f32 %v4013, %v4208
      %4210 = vmatmul.bf16.gmra.mxu0 %v4098
      %v4211 = vpop.f32.mrf.mxu0
      %v4212 = vadd.f32 %v4016, %v4211
      %v4213 = vpop.f32.mrf.mxu0
      %v4214 = vadd.f32 %v4018, %v4213
      %4215 = vmatmul.bf16.gmra.mxu0 %v4107
      %v4216 = vpop.f32.mrf.mxu0
      %v4217 = vadd.f32 %v4021, %v4216
      %v4218 = vpop.f32.mrf.mxu0
      %v4219 = vadd.f32 %v4023, %v4218
      %4220 = vmatmul.bf16.gmra.mxu0 %v4116
      %v4221 = vpop.f32.mrf.mxu0
      %v4222 = vadd.f32 %v4026, %v4221
      %v4223 = vpop.f32.mrf.mxu0
      %v4224 = vadd.f32 %v4028, %v4223
      %4225 = vmatmul.bf16.gmra.mxu0 %v4125
      %v4226 = vpop.f32.mrf.mxu0
      %v4227 = vadd.f32 %v4031, %v4226
      %v4228 = vpop.f32.mrf.mxu0
      %v4229 = vadd.f32 %v4033, %v4228
      %4230 = vdwg.mxu0
      %v4231 = vld [vmem:[#allocation2 + $0x4c] sm:$0xf]
      %v4232 = vld [vmem:[#allocation2 + $0x50] sm:$0xf]
      %v4233 = vld [vmem:[#allocation2 + $0x54] sm:$0xf]
      %v4234 = vld [vmem:[#allocation2 + $0x58] sm:$0xf]
      %v4235 = vld [vmem:[#allocation2 + $0x5c] sm:$0xf]
      %v4236 = vld [vmem:[#allocation2 + $0x60] sm:$0xf]
      %v4237 = vld [vmem:[#allocation2 + $0x64] sm:$0xf]
      %v4238 = vld [vmem:[#allocation2 + $0x68] sm:$0xf]
      %v4239 = vld [vmem:[#allocation2 + $0x6c] sm:$0xf]
      %v4240 = vld [vmem:[#allocation2 + $0x70] sm:$0xf]
      %v4241 = vld [vmem:[#allocation2 + $0x74] sm:$0xf]
      %v4242 = vld [vmem:[#allocation2 + $0x78] sm:$0xf]
      %v4243 = vld [vmem:[#allocation2 + $0x7c] sm:$0xf]
      %v4244 = vld [vmem:[#allocation2 + $0x80] sm:$0xf]
      %v4245 = vld [vmem:[#allocation2 + $0x84] sm:$0xf]
      %v4246 = vld [vmem:[#allocation2 + $0x88] sm:$0xf]
      %v4247 = vld [vmem:[#allocation2 + $0x8c] sm:$0x1]
      %v4248 = vld [vmem:[%s1805] sm:$0xf]
      %v4249 = vld [vmem:[%s1805 + $0x4] sm:$0xf]
      %v4250 = vld [vmem:[%s1805 + $0x8] sm:$0xf]
      %v4251 = vld [vmem:[%s1805 + $0xc] sm:$0xf]
      %v4252 = vld [vmem:[%s1805 + $0x10] sm:$0xf]
      %v4253 = vld [vmem:[%s1805 + $0x14] sm:$0xf]
      %v4254 = vld [vmem:[%s1805 + $0x18] sm:$0xf]
      %v4255 = vld [vmem:[%s1805 + $0x1c] sm:$0xf]
      %v4256 = vld [vmem:[%s1805 + $0x20] sm:$0xf]
      %v4257 = vld [vmem:[%s1805 + $0x24] sm:$0xf]
      %v4258 = vld [vmem:[%s1805 + $0x28] sm:$0xf]
      %v4259 = vld [vmem:[%s1805 + $0x2c] sm:$0xf]
      %v4260 = vld [vmem:[%s1805 + $0x30] sm:$0xf]
      %v4261 = vld [vmem:[%s1805 + $0x34] sm:$0xf]
      %v4262 = vld [vmem:[%s1805 + $0x38] sm:$0xf]
      %v4263 = vld [vmem:[%s1805 + $0x3c] sm:$0xf]
      %v4281 = vunpack.c.l.b16 %v4231
      %v4282 = vunpack.c.l.b16 %v4232
      %v4283 = vunpack.c.l.b16 %v4233
      %v4284 = vunpack.c.l.b16 %v4234
      %v4285 = vunpack.c.l.b16 %v4235
      %v4286 = vunpack.c.l.b16 %v4236
      %v4287 = vunpack.c.l.b16 %v4237
      %v4288 = vunpack.c.l.b16 %v4238
      %v4289 = vunpack.c.l.b16 %v4239
      %v4290 = vunpack.c.l.b16 %v4240
      %v4291 = vunpack.c.l.b16 %v4241
      %v4292 = vunpack.c.l.b16 %v4242
      %v4293 = vunpack.c.l.b16 %v4243
      %v4294 = vunpack.c.l.b16 %v4244
      %v4295 = vunpack.c.l.b16 %v4245
      %v4296 = vunpack.c.l.b16 %v4246
      %v4297 = vunpack.c.l.b16 %v4247
      %v4298 = vpack.c.b16 %v4282, %v4281
      %v4299 = vpack.c.b16 %v4284, %v4283
      %v4300 = vpack.c.b16 %v4286, %v4285
      %v4301 = vpack.c.b16 %v4288, %v4287
      %v4302 = vpack.c.b16 %v4290, %v4289
      %v4303 = vpack.c.b16 %v4292, %v4291
      %v4304 = vpack.c.b16 %v4294, %v4293
      %v4305 = vpack.c.b16 %v4296, %v4295
      %v4306 = vpack.c.b16 %v4297, %v4297
      %v4308 = vshrl.u32 %v4298, 16
      %v4310 = vshll.u32 %v4298, 16
      %v4312 = vrot.slane %v4310, 1
      %v4313 = vor.u32 %v4308, %v4312
      %v4315 = vshll.u32 %v4299, 16
      %v4317 = vrot.slane %v4315, 1
      %v4318 = vsel %vm1865, %v4313, %v4317
      %v4319 = vshrl.u32 %v4299, 16
      %v4321 = vor.u32 %v4319, %v4317
      %v4323 = vshll.u32 %v4300, 16
      %v4325 = vrot.slane %v4323, 1
      %v4326 = vsel %vm1865, %v4321, %v4325
      %v4327 = vshrl.u32 %v4300, 16
      %v4329 = vor.u32 %v4327, %v4325
      %v4331 = vshll.u32 %v4301, 16
      %v4333 = vrot.slane %v4331, 1
      %v4334 = vsel %vm1865, %v4329, %v4333
      %v4335 = vshrl.u32 %v4301, 16
      %v4337 = vor.u32 %v4335, %v4333
      %v4339 = vshll.u32 %v4302, 16
      %v4341 = vrot.slane %v4339, 1
      %v4342 = vsel %vm1865, %v4337, %v4341
      %v4343 = vshrl.u32 %v4302, 16
      %v4345 = vor.u32 %v4343, %v4341
      %v4347 = vshll.u32 %v4303, 16
      %v4349 = vrot.slane %v4347, 1
      %v4350 = vsel %vm1865, %v4345, %v4349
      %v4351 = vshrl.u32 %v4303, 16
      %v4353 = vor.u32 %v4351, %v4349
      %v4355 = vshll.u32 %v4304, 16
      %v4357 = vrot.slane %v4355, 1
      %v4358 = vsel %vm1865, %v4353, %v4357
      %v4359 = vshrl.u32 %v4304, 16
      %v4361 = vor.u32 %v4359, %v4357
      %v4363 = vshll.u32 %v4305, 16
      %v4365 = vrot.slane %v4363, 1
      %v4366 = vsel %vm1865, %v4361, %v4365
      %v4367 = vshrl.u32 %v4305, 16
      %v4369 = vor.u32 %v4367, %v4365
      %v4371 = vshll.u32 %v4306, 16
      %v4373 = vrot.slane %v4371, 1
      %v4374 = vsel %vm1865, %v4369, %v4373
      %v4399 = vunpack.c.l.b16 %v4248
      %v4400 = vunpack.c.l.b16 %v4249
      %v4401 = vunpack.c.l.b16 %v4250
      %v4402 = vunpack.c.l.b16 %v4251
      %v4403 = vunpack.c.l.b16 %v4252
      %v4404 = vunpack.c.l.b16 %v4253
      %v4405 = vunpack.c.l.b16 %v4254
      %v4406 = vunpack.c.l.b16 %v4255
      %v4407 = vunpack.c.l.b16 %v4256
      %v4408 = vunpack.c.l.b16 %v4257
      %v4409 = vunpack.c.l.b16 %v4258
      %v4410 = vunpack.c.l.b16 %v4259
      %v4411 = vunpack.c.l.b16 %v4260
      %v4412 = vunpack.c.l.b16 %v4261
      %v4413 = vunpack.c.l.b16 %v4262
      %v4414 = vunpack.c.l.b16 %v4263
      %v4415 = vpack.c.b16 %v4400, %v4399
      %v4416 = vpack.c.b16 %v4402, %v4401
      %v4417 = vpack.c.b16 %v4404, %v4403
      %v4418 = vpack.c.b16 %v4406, %v4405
      %v4419 = vpack.c.b16 %v4408, %v4407
      %v4420 = vpack.c.b16 %v4410, %v4409
      %v4421 = vpack.c.b16 %v4412, %v4411
      %v4422 = vpack.c.b16 %v4414, %v4413
      %4431 = vmatpush.bf16.msra.mxu0 %v4422
      %4432 = vmatpush.bf16.msra.mxu0 %v4421
      %4433 = vmatpush.bf16.msra.mxu0 %v4420
      %4434 = vmatpush.bf16.msra.mxu0 %v4419
      %4435 = vmatpush.bf16.msra.mxu0 %v4418
      %4436 = vmatpush.bf16.msra.mxu0 %v4417
      %4437 = vmatpush.bf16.msra.mxu0 %v4416
      %4438 = vmatpush.bf16.msra.mxu0 %v4415
      %4439 = vmatmul.bf16.gmra.mxu0 %v4318
      %v4440 = vpop.f32.mrf.mxu0
      %v4441 = vadd.f32 0.0, %v4440
      %v4442 = vpop.f32.mrf.mxu0
      %v4443 = vadd.f32 0.0, %v4442
      %4444 = vmatmul.bf16.gmra.mxu0 %v4326
      %v4445 = vpop.f32.mrf.mxu0
      %v4446 = vadd.f32 0.0, %v4445
      %v4447 = vpop.f32.mrf.mxu0
      %v4448 = vadd.f32 0.0, %v4447
      %4449 = vmatmul.bf16.gmra.mxu0 %v4334
      %v4450 = vpop.f32.mrf.mxu0
      %v4451 = vadd.f32 0.0, %v4450
      %v4452 = vpop.f32.mrf.mxu0
      %v4453 = vadd.f32 0.0, %v4452
      %4454 = vmatmul.bf16.gmra.mxu0 %v4342
      %v4455 = vpop.f32.mrf.mxu0
      %v4456 = vadd.f32 0.0, %v4455
      %v4457 = vpop.f32.mrf.mxu0
      %v4458 = vadd.f32 0.0, %v4457
      %4459 = vmatmul.bf16.gmra.mxu0 %v4350
      %v4460 = vpop.f32.mrf.mxu0
      %v4461 = vadd.f32 0.0, %v4460
      %v4462 = vpop.f32.mrf.mxu0
      %v4463 = vadd.f32 0.0, %v4462
      %4464 = vmatmul.bf16.gmra.mxu0 %v4358
      %v4465 = vpop.f32.mrf.mxu0
      %v4466 = vadd.f32 0.0, %v4465
      %v4467 = vpop.f32.mrf.mxu0
      %v4468 = vadd.f32 0.0, %v4467
      %4469 = vmatmul.bf16.gmra.mxu0 %v4366
      %v4470 = vpop.f32.mrf.mxu0
      %v4471 = vadd.f32 0.0, %v4470
      %v4472 = vpop.f32.mrf.mxu0
      %v4473 = vadd.f32 0.0, %v4472
      %4474 = vmatmul.bf16.gmra.mxu0 %v4374
      %v4475 = vpop.f32.mrf.mxu0
      %v4476 = vadd.f32 0.0, %v4475
      %v4477 = vpop.f32.mrf.mxu0
      %v4478 = vadd.f32 0.0, %v4477
      %4479 = vdwg.mxu0
      %v4480 = vadd.f32 %v4192, %v4441
      %v4481 = vadd.f32 %v4194, %v4443
      %v4482 = vadd.f32 %v4197, %v4446
      %v4483 = vadd.f32 %v4199, %v4448
      %v4484 = vadd.f32 %v4202, %v4451
      %v4485 = vadd.f32 %v4204, %v4453
      %v4486 = vadd.f32 %v4207, %v4456
      %v4487 = vadd.f32 %v4209, %v4458
      %v4488 = vadd.f32 %v4212, %v4461
      %v4489 = vadd.f32 %v4214, %v4463
      %v4490 = vadd.f32 %v4217, %v4466
      %v4491 = vadd.f32 %v4219, %v4468
      %v4492 = vadd.f32 %v4222, %v4471
      %v4493 = vadd.f32 %v4224, %v4473
      %v4494 = vadd.f32 %v4227, %v4476
      %v4495 = vadd.f32 %v4229, %v4478
      %v4496 = vld [vmem:[#allocation2 + $0x54] sm:$0x8]
      %v4497 = vld [vmem:[#allocation2 + $0x58] sm:$0xf]
      %v4498 = vld [vmem:[#allocation2 + $0x5c] sm:$0xf]
      %v4499 = vld [vmem:[#allocation2 + $0x60] sm:$0xf]
      %v4500 = vld [vmem:[#allocation2 + $0x64] sm:$0xf]
      %v4501 = vld [vmem:[#allocation2 + $0x68] sm:$0xf]
      %v4502 = vld [vmem:[#allocation2 + $0x6c] sm:$0xf]
      %v4503 = vld [vmem:[#allocation2 + $0x70] sm:$0xf]
      %v4504 = vld [vmem:[#allocation2 + $0x74] sm:$0xf]
      %v4505 = vld [vmem:[#allocation2 + $0x78] sm:$0xf]
      %v4506 = vld [vmem:[#allocation2 + $0x7c] sm:$0xf]
      %v4507 = vld [vmem:[#allocation2 + $0x80] sm:$0xf]
      %v4508 = vld [vmem:[#allocation2 + $0x84] sm:$0xf]
      %v4509 = vld [vmem:[#allocation2 + $0x88] sm:$0xf]
      %v4510 = vld [vmem:[#allocation2 + $0x8c] sm:$0xf]
      %v4511 = vld [vmem:[#allocation2 + $0x90] sm:$0xf]
      %v4512 = vld [vmem:[#allocation2 + $0x94] sm:$0xf]
      %v4513 = vld [vmem:[%s2072] sm:$0xf]
      %v4514 = vld [vmem:[%s2072 + $0x4] sm:$0xf]
      %v4515 = vld [vmem:[%s2072 + $0x8] sm:$0xf]
      %v4516 = vld [vmem:[%s2072 + $0xc] sm:$0xf]
      %v4517 = vld [vmem:[%s2072 + $0x10] sm:$0xf]
      %v4518 = vld [vmem:[%s2072 + $0x14] sm:$0xf]
      %v4519 = vld [vmem:[%s2072 + $0x18] sm:$0xf]
      %v4520 = vld [vmem:[%s2072 + $0x1c] sm:$0xf]
      %v4521 = vld [vmem:[%s2072 + $0x20] sm:$0xf]
      %v4522 = vld [vmem:[%s2072 + $0x24] sm:$0xf]
      %v4523 = vld [vmem:[%s2072 + $0x28] sm:$0xf]
      %v4524 = vld [vmem:[%s2072 + $0x2c] sm:$0xf]
      %v4525 = vld [vmem:[%s2072 + $0x30] sm:$0xf]
      %v4526 = vld [vmem:[%s2072 + $0x34] sm:$0xf]
      %v4527 = vld [vmem:[%s2072 + $0x38] sm:$0xf]
      %v4528 = vld [vmem:[%s2072 + $0x3c] sm:$0xf]
      %v4546 = vunpack.c.l.b16 %v4496
      %v4547 = vunpack.c.l.b16 %v4497
      %v4548 = vunpack.c.l.b16 %v4498
      %v4549 = vunpack.c.l.b16 %v4499
      %v4550 = vunpack.c.l.b16 %v4500
      %v4551 = vunpack.c.l.b16 %v4501
      %v4552 = vunpack.c.l.b16 %v4502
      %v4553 = vunpack.c.l.b16 %v4503
      %v4554 = vunpack.c.l.b16 %v4504
      %v4555 = vunpack.c.l.b16 %v4505
      %v4556 = vunpack.c.l.b16 %v4506
      %v4557 = vunpack.c.l.b16 %v4507
      %v4558 = vunpack.c.l.b16 %v4508
      %v4559 = vunpack.c.l.b16 %v4509
      %v4560 = vunpack.c.l.b16 %v4510
      %v4561 = vunpack.c.l.b16 %v4511
      %v4562 = vunpack.c.l.b16 %v4512
      %v4563 = vpack.c.b16 %v4547, %v4546
      %v4564 = vpack.c.b16 %v4549, %v4548
      %v4565 = vpack.c.b16 %v4551, %v4550
      %v4566 = vpack.c.b16 %v4553, %v4552
      %v4567 = vpack.c.b16 %v4555, %v4554
      %v4568 = vpack.c.b16 %v4557, %v4556
      %v4569 = vpack.c.b16 %v4559, %v4558
      %v4570 = vpack.c.b16 %v4561, %v4560
      %v4571 = vpack.c.b16 %v4562, %v4562
      %v4573 = vshrl.u32 %v4563, 16
      %v4575 = vrot.slane %v4573, 3
      %v4576 = vshll.u32 %v4563, 16
      %v4578 = vrot.slane %v4576, 4
      %v4579 = vor.u32 %v4575, %v4578
      %v4581 = vshrl.u32 %v4564, 16
      %v4583 = vrot.slane %v4581, 3
      %v4584 = vshll.u32 %v4564, 16
      %v4586 = vrot.slane %v4584, 4
      %v4587 = vor.u32 %v4583, %v4586
      %v4588 = vsel %vm1602, %v4579, %v4587
      %v4590 = vshrl.u32 %v4565, 16
      %v4592 = vrot.slane %v4590, 3
      %v4593 = vshll.u32 %v4565, 16
      %v4595 = vrot.slane %v4593, 4
      %v4596 = vor.u32 %v4592, %v4595
      %v4597 = vsel %vm1602, %v4587, %v4596
      %v4599 = vshrl.u32 %v4566, 16
      %v4601 = vrot.slane %v4599, 3
      %v4602 = vshll.u32 %v4566, 16
      %v4604 = vrot.slane %v4602, 4
      %v4605 = vor.u32 %v4601, %v4604
      %v4606 = vsel %vm1602, %v4596, %v4605
      %v4608 = vshrl.u32 %v4567, 16
      %v4610 = vrot.slane %v4608, 3
      %v4611 = vshll.u32 %v4567, 16
      %v4613 = vrot.slane %v4611, 4
      %v4614 = vor.u32 %v4610, %v4613
      %v4615 = vsel %vm1602, %v4605, %v4614
      %v4617 = vshrl.u32 %v4568, 16
      %v4619 = vrot.slane %v4617, 3
      %v4620 = vshll.u32 %v4568, 16
      %v4622 = vrot.slane %v4620, 4
      %v4623 = vor.u32 %v4619, %v4622
      %v4624 = vsel %vm1602, %v4614, %v4623
      %v4626 = vshrl.u32 %v4569, 16
      %v4628 = vrot.slane %v4626, 3
      %v4629 = vshll.u32 %v4569, 16
      %v4631 = vrot.slane %v4629, 4
      %v4632 = vor.u32 %v4628, %v4631
      %v4633 = vsel %vm1602, %v4623, %v4632
      %v4635 = vshrl.u32 %v4570, 16
      %v4637 = vrot.slane %v4635, 3
      %v4638 = vshll.u32 %v4570, 16
      %v4640 = vrot.slane %v4638, 4
      %v4641 = vor.u32 %v4637, %v4640
      %v4642 = vsel %vm1602, %v4632, %v4641
      %v4644 = vshrl.u32 %v4571, 16
      %v4646 = vrot.slane %v4644, 3
      %v4647 = vshll.u32 %v4571, 16
      %v4649 = vrot.slane %v4647, 4
      %v4650 = vor.u32 %v4646, %v4649
      %v4651 = vsel %vm1602, %v4641, %v4650
      %v4676 = vunpack.c.l.b16 %v4513
      %v4677 = vunpack.c.l.b16 %v4514
      %v4678 = vunpack.c.l.b16 %v4515
      %v4679 = vunpack.c.l.b16 %v4516
      %v4680 = vunpack.c.l.b16 %v4517
      %v4681 = vunpack.c.l.b16 %v4518
      %v4682 = vunpack.c.l.b16 %v4519
      %v4683 = vunpack.c.l.b16 %v4520
      %v4684 = vunpack.c.l.b16 %v4521
      %v4685 = vunpack.c.l.b16 %v4522
      %v4686 = vunpack.c.l.b16 %v4523
      %v4687 = vunpack.c.l.b16 %v4524
      %v4688 = vunpack.c.l.b16 %v4525
      %v4689 = vunpack.c.l.b16 %v4526
      %v4690 = vunpack.c.l.b16 %v4527
      %v4691 = vunpack.c.l.b16 %v4528
      %v4692 = vpack.c.b16 %v4677, %v4676
      %v4693 = vpack.c.b16 %v4679, %v4678
      %v4694 = vpack.c.b16 %v4681, %v4680
      %v4695 = vpack.c.b16 %v4683, %v4682
      %v4696 = vpack.c.b16 %v4685, %v4684
      %v4697 = vpack.c.b16 %v4687, %v4686
      %v4698 = vpack.c.b16 %v4689, %v4688
      %v4699 = vpack.c.b16 %v4691, %v4690
      %4708 = vmatpush.bf16.msra.mxu0 %v4699
      %4709 = vmatpush.bf16.msra.mxu0 %v4698
      %4710 = vmatpush.bf16.msra.mxu0 %v4697
      %4711 = vmatpush.bf16.msra.mxu0 %v4696
      %4712 = vmatpush.bf16.msra.mxu0 %v4695
      %4713 = vmatpush.bf16.msra.mxu0 %v4694
      %4714 = vmatpush.bf16.msra.mxu0 %v4693
      %4715 = vmatpush.bf16.msra.mxu0 %v4692
      %4716 = vmatmul.bf16.gmra.mxu0 %v4588
      %v4717 = vpop.f32.mrf.mxu0
      %v4718 = vadd.f32 0.0, %v4717
      %v4719 = vpop.f32.mrf.mxu0
      %v4720 = vadd.f32 0.0, %v4719
      %4721 = vmatmul.bf16.gmra.mxu0 %v4597
      %v4722 = vpop.f32.mrf.mxu0
      %v4723 = vadd.f32 0.0, %v4722
      %v4724 = vpop.f32.mrf.mxu0
      %v4725 = vadd.f32 0.0, %v4724
      %4726 = vmatmul.bf16.gmra.mxu0 %v4606
      %v4727 = vpop.f32.mrf.mxu0
      %v4728 = vadd.f32 0.0, %v4727
      %v4729 = vpop.f32.mrf.mxu0
      %v4730 = vadd.f32 0.0, %v4729
      %4731 = vmatmul.bf16.gmra.mxu0 %v4615
      %v4732 = vpop.f32.mrf.mxu0
      %v4733 = vadd.f32 0.0, %v4732
      %v4734 = vpop.f32.mrf.mxu0
      %v4735 = vadd.f32 0.0, %v4734
      %4736 = vmatmul.bf16.gmra.mxu0 %v4624
      %v4737 = vpop.f32.mrf.mxu0
      %v4738 = vadd.f32 0.0, %v4737
      %v4739 = vpop.f32.mrf.mxu0
      %v4740 = vadd.f32 0.0, %v4739
      %4741 = vmatmul.bf16.gmra.mxu0 %v4633
      %v4742 = vpop.f32.mrf.mxu0
      %v4743 = vadd.f32 0.0, %v4742
      %v4744 = vpop.f32.mrf.mxu0
      %v4745 = vadd.f32 0.0, %v4744
      %4746 = vmatmul.bf16.gmra.mxu0 %v4642
      %v4747 = vpop.f32.mrf.mxu0
      %v4748 = vadd.f32 0.0, %v4747
      %v4749 = vpop.f32.mrf.mxu0
      %v4750 = vadd.f32 0.0, %v4749
      %4751 = vmatmul.bf16.gmra.mxu0 %v4651
      %v4752 = vpop.f32.mrf.mxu0
      %v4753 = vadd.f32 0.0, %v4752
      %v4754 = vpop.f32.mrf.mxu0
      %v4755 = vadd.f32 0.0, %v4754
      %4756 = vdwg.mxu0
      %v4757 = vadd.f32 %v4480, %v4718
      %v4758 = vadd.f32 %v4481, %v4720
      %v4759 = vadd.f32 %v4482, %v4723
      %v4760 = vadd.f32 %v4483, %v4725
      %v4761 = vadd.f32 %v4484, %v4728
      %v4762 = vadd.f32 %v4485, %v4730
      %v4763 = vadd.f32 %v4486, %v4733
      %v4764 = vadd.f32 %v4487, %v4735
      %v4765 = vadd.f32 %v4488, %v4738
      %v4766 = vadd.f32 %v4489, %v4740
      %v4767 = vadd.f32 %v4490, %v4743
      %v4768 = vadd.f32 %v4491, %v4745
      %v4769 = vadd.f32 %v4492, %v4748
      %v4770 = vadd.f32 %v4493, %v4750
      %v4771 = vadd.f32 %v4494, %v4753
      %v4772 = vadd.f32 %v4495, %v4755
      %v4773 = vld [vmem:[%s2333] sm:$0xf]
      %v4774 = vld [vmem:[%s2333 + $0x4] sm:$0xf]
      %v4775 = vld [vmem:[%s2333 + $0x8] sm:$0xf]
      %v4776 = vld [vmem:[%s2333 + $0xc] sm:$0xf]
      %v4777 = vld [vmem:[%s2333 + $0x10] sm:$0xf]
      %v4778 = vld [vmem:[%s2333 + $0x14] sm:$0xf]
      %v4779 = vld [vmem:[%s2333 + $0x18] sm:$0xf]
      %v4780 = vld [vmem:[%s2333 + $0x1c] sm:$0xf]
      %v4781 = vld [vmem:[%s2333 + $0x20] sm:$0xf]
      %v4782 = vld [vmem:[%s2333 + $0x24] sm:$0xf]
      %v4783 = vld [vmem:[%s2333 + $0x28] sm:$0xf]
      %v4784 = vld [vmem:[%s2333 + $0x2c] sm:$0xf]
      %v4785 = vld [vmem:[%s2333 + $0x30] sm:$0xf]
      %v4786 = vld [vmem:[%s2333 + $0x34] sm:$0xf]
      %v4787 = vld [vmem:[%s2333 + $0x38] sm:$0xf]
      %v4788 = vld [vmem:[%s2333 + $0x3c] sm:$0xf]
      %v4789 = vpack.c.b16 %v4548, %v4547
      %v4790 = vpack.c.b16 %v4550, %v4549
      %v4791 = vpack.c.b16 %v4552, %v4551
      %v4792 = vpack.c.b16 %v4554, %v4553
      %v4793 = vpack.c.b16 %v4556, %v4555
      %v4794 = vpack.c.b16 %v4558, %v4557
      %v4795 = vpack.c.b16 %v4560, %v4559
      %v4796 = vpack.c.b16 %v4562, %v4561
      %v4821 = vunpack.c.l.b16 %v4773
      %v4822 = vunpack.c.l.b16 %v4774
      %v4823 = vunpack.c.l.b16 %v4775
      %v4824 = vunpack.c.l.b16 %v4776
      %v4825 = vunpack.c.l.b16 %v4777
      %v4826 = vunpack.c.l.b16 %v4778
      %v4827 = vunpack.c.l.b16 %v4779
      %v4828 = vunpack.c.l.b16 %v4780
      %v4829 = vunpack.c.l.b16 %v4781
      %v4830 = vunpack.c.l.b16 %v4782
      %v4831 = vunpack.c.l.b16 %v4783
      %v4832 = vunpack.c.l.b16 %v4784
      %v4833 = vunpack.c.l.b16 %v4785
      %v4834 = vunpack.c.l.b16 %v4786
      %v4835 = vunpack.c.l.b16 %v4787
      %v4836 = vunpack.c.l.b16 %v4788
      %v4837 = vpack.c.b16 %v4822, %v4821
      %v4838 = vpack.c.b16 %v4824, %v4823
      %v4839 = vpack.c.b16 %v4826, %v4825
      %v4840 = vpack.c.b16 %v4828, %v4827
      %v4841 = vpack.c.b16 %v4830, %v4829
      %v4842 = vpack.c.b16 %v4832, %v4831
      %v4843 = vpack.c.b16 %v4834, %v4833
      %v4844 = vpack.c.b16 %v4836, %v4835
      %4853 = vmatpush.bf16.msra.mxu0 %v4844
      %4854 = vmatpush.bf16.msra.mxu0 %v4843
      %4855 = vmatpush.bf16.msra.mxu0 %v4842
      %4856 = vmatpush.bf16.msra.mxu0 %v4841
      %4857 = vmatpush.bf16.msra.mxu0 %v4840
      %4858 = vmatpush.bf16.msra.mxu0 %v4839
      %4859 = vmatpush.bf16.msra.mxu0 %v4838
      %4860 = vmatpush.bf16.msra.mxu0 %v4837
      %4861 = vmatmul.bf16.gmra.mxu0 %v4789
      %v4862 = vpop.f32.mrf.mxu0
      %v4863 = vadd.f32 0.0, %v4862
      %v4864 = vpop.f32.mrf.mxu0
      %v4865 = vadd.f32 0.0, %v4864
      %4866 = vmatmul.bf16.gmra.mxu0 %v4790
      %v4867 = vpop.f32.mrf.mxu0
      %v4868 = vadd.f32 0.0, %v4867
      %v4869 = vpop.f32.mrf.mxu0
      %v4870 = vadd.f32 0.0, %v4869
      %4871 = vmatmul.bf16.gmra.mxu0 %v4791
      %v4872 = vpop.f32.mrf.mxu0
      %v4873 = vadd.f32 0.0, %v4872
      %v4874 = vpop.f32.mrf.mxu0
      %v4875 = vadd.f32 0.0, %v4874
      %4876 = vmatmul.bf16.gmra.mxu0 %v4792
      %v4877 = vpop.f32.mrf.mxu0
      %v4878 = vadd.f32 0.0, %v4877
      %v4879 = vpop.f32.mrf.mxu0
      %v4880 = vadd.f32 0.0, %v4879
      %4881 = vmatmul.bf16.gmra.mxu0 %v4793
      %v4882 = vpop.f32.mrf.mxu0
      %v4883 = vadd.f32 0.0, %v4882
      %v4884 = vpop.f32.mrf.mxu0
      %v4885 = vadd.f32 0.0, %v4884
      %4886 = vmatmul.bf16.gmra.mxu0 %v4794
      %v4887 = vpop.f32.mrf.mxu0
      %v4888 = vadd.f32 0.0, %v4887
      %v4889 = vpop.f32.mrf.mxu0
      %v4890 = vadd.f32 0.0, %v4889
      %4891 = vmatmul.bf16.gmra.mxu0 %v4795
      %v4892 = vpop.f32.mrf.mxu0
      %v4893 = vadd.f32 0.0, %v4892
      %v4894 = vpop.f32.mrf.mxu0
      %v4895 = vadd.f32 0.0, %v4894
      %4896 = vmatmul.bf16.gmra.mxu0 %v4796
      %v4897 = vpop.f32.mrf.mxu0
      %v4898 = vadd.f32 0.0, %v4897
      %v4899 = vpop.f32.mrf.mxu0
      %v4900 = vadd.f32 0.0, %v4899
      %4901 = vdwg.mxu0
      %v4902 = vadd.f32 %v4757, %v4863
      %v4903 = vadd.f32 %v4758, %v4865
      %v4904 = vadd.f32 %v4759, %v4868
      %v4905 = vadd.f32 %v4760, %v4870
      %v4906 = vadd.f32 %v4761, %v4873
      %v4907 = vadd.f32 %v4762, %v4875
      %v4908 = vadd.f32 %v4763, %v4878
      %v4909 = vadd.f32 %v4764, %v4880
      %v4910 = vadd.f32 %v4765, %v4883
      %v4911 = vadd.f32 %v4766, %v4885
      %v4912 = vadd.f32 %v4767, %v4888
      %v4913 = vadd.f32 %v4768, %v4890
      %v4914 = vadd.f32 %v4769, %v4893
      %v4915 = vadd.f32 %v4770, %v4895
      %v4916 = vadd.f32 %v4771, %v4898
      %v4917 = vadd.f32 %v4772, %v4900
      %v4918 = vld [vmem:[#allocation2 + $0x58] sm:$0xf]
      %v4919 = vld [vmem:[#allocation2 + $0x5c] sm:$0xf]
      %v4920 = vld [vmem:[#allocation2 + $0x60] sm:$0xf]
      %v4921 = vld [vmem:[#allocation2 + $0x64] sm:$0xf]
      %v4922 = vld [vmem:[#allocation2 + $0x68] sm:$0xf]
      %v4923 = vld [vmem:[#allocation2 + $0x6c] sm:$0xf]
      %v4924 = vld [vmem:[#allocation2 + $0x70] sm:$0xf]
      %v4925 = vld [vmem:[#allocation2 + $0x74] sm:$0xf]
      %v4926 = vld [vmem:[#allocation2 + $0x78] sm:$0xf]
      %v4927 = vld [vmem:[#allocation2 + $0x7c] sm:$0xf]
      %v4928 = vld [vmem:[#allocation2 + $0x80] sm:$0xf]
      %v4929 = vld [vmem:[#allocation2 + $0x84] sm:$0xf]
      %v4930 = vld [vmem:[#allocation2 + $0x88] sm:$0xf]
      %v4931 = vld [vmem:[#allocation2 + $0x8c] sm:$0xf]
      %v4932 = vld [vmem:[#allocation2 + $0x90] sm:$0xf]
      %v4933 = vld [vmem:[#allocation2 + $0x94] sm:$0xf]
      %v4934 = vld [vmem:[#allocation2 + $0x98] sm:$0x1]
      %v4935 = vld [vmem:[%s2496] sm:$0xf]
      %v4936 = vld [vmem:[%s2496 + $0x4] sm:$0xf]
      %v4937 = vld [vmem:[%s2496 + $0x8] sm:$0xf]
      %v4938 = vld [vmem:[%s2496 + $0xc] sm:$0xf]
      %v4939 = vld [vmem:[%s2496 + $0x10] sm:$0xf]
      %v4940 = vld [vmem:[%s2496 + $0x14] sm:$0xf]
      %v4941 = vld [vmem:[%s2496 + $0x18] sm:$0xf]
      %v4942 = vld [vmem:[%s2496 + $0x1c] sm:$0xf]
      %v4943 = vld [vmem:[%s2496 + $0x20] sm:$0xf]
      %v4944 = vld [vmem:[%s2496 + $0x24] sm:$0xf]
      %v4945 = vld [vmem:[%s2496 + $0x28] sm:$0xf]
      %v4946 = vld [vmem:[%s2496 + $0x2c] sm:$0xf]
      %v4947 = vld [vmem:[%s2496 + $0x30] sm:$0xf]
      %v4948 = vld [vmem:[%s2496 + $0x34] sm:$0xf]
      %v4949 = vld [vmem:[%s2496 + $0x38] sm:$0xf]
      %v4950 = vld [vmem:[%s2496 + $0x3c] sm:$0xf]
      %v4968 = vunpack.c.l.b16 %v4918
      %v4969 = vunpack.c.l.b16 %v4919
      %v4970 = vunpack.c.l.b16 %v4920
      %v4971 = vunpack.c.l.b16 %v4921
      %v4972 = vunpack.c.l.b16 %v4922
      %v4973 = vunpack.c.l.b16 %v4923
      %v4974 = vunpack.c.l.b16 %v4924
      %v4975 = vunpack.c.l.b16 %v4925
      %v4976 = vunpack.c.l.b16 %v4926
      %v4977 = vunpack.c.l.b16 %v4927
      %v4978 = vunpack.c.l.b16 %v4928
      %v4979 = vunpack.c.l.b16 %v4929
      %v4980 = vunpack.c.l.b16 %v4930
      %v4981 = vunpack.c.l.b16 %v4931
      %v4982 = vunpack.c.l.b16 %v4932
      %v4983 = vunpack.c.l.b16 %v4933
      %v4984 = vunpack.c.l.b16 %v4934
      %v4985 = vpack.c.b16 %v4969, %v4968
      %v4986 = vpack.c.b16 %v4971, %v4970
      %v4987 = vpack.c.b16 %v4973, %v4972
      %v4988 = vpack.c.b16 %v4975, %v4974
      %v4989 = vpack.c.b16 %v4977, %v4976
      %v4990 = vpack.c.b16 %v4979, %v4978
      %v4991 = vpack.c.b16 %v4981, %v4980
      %v4992 = vpack.c.b16 %v4983, %v4982
      %v4993 = vpack.c.b16 %v4984, %v4984
      %v4995 = vshrl.u32 %v4985, 16
      %v4997 = vshll.u32 %v4985, 16
      %v4999 = vrot.slane %v4997, 1
      %v5000 = vor.u32 %v4995, %v4999
      %v5002 = vshll.u32 %v4986, 16
      %v5004 = vrot.slane %v5002, 1
      %v5005 = vsel %vm1865, %v5000, %v5004
      %v5006 = vshrl.u32 %v4986, 16
      %v5008 = vor.u32 %v5006, %v5004
      %v5010 = vshll.u32 %v4987, 16
      %v5012 = vrot.slane %v5010, 1
      %v5013 = vsel %vm1865, %v5008, %v5012
      %v5014 = vshrl.u32 %v4987, 16
      %v5016 = vor.u32 %v5014, %v5012
      %v5018 = vshll.u32 %v4988, 16
      %v5020 = vrot.slane %v5018, 1
      %v5021 = vsel %vm1865, %v5016, %v5020
      %v5022 = vshrl.u32 %v4988, 16
      %v5024 = vor.u32 %v5022, %v5020
      %v5026 = vshll.u32 %v4989, 16
      %v5028 = vrot.slane %v5026, 1
      %v5029 = vsel %vm1865, %v5024, %v5028
      %v5030 = vshrl.u32 %v4989, 16
      %v5032 = vor.u32 %v5030, %v5028
      %v5034 = vshll.u32 %v4990, 16
      %v5036 = vrot.slane %v5034, 1
      %v5037 = vsel %vm1865, %v5032, %v5036
      %v5038 = vshrl.u32 %v4990, 16
      %v5040 = vor.u32 %v5038, %v5036
      %v5042 = vshll.u32 %v4991, 16
      %v5044 = vrot.slane %v5042, 1
      %v5045 = vsel %vm1865, %v5040, %v5044
      %v5046 = vshrl.u32 %v4991, 16
      %v5048 = vor.u32 %v5046, %v5044
      %v5050 = vshll.u32 %v4992, 16
      %v5052 = vrot.slane %v5050, 1
      %v5053 = vsel %vm1865, %v5048, %v5052
      %v5054 = vshrl.u32 %v4992, 16
      %v5056 = vor.u32 %v5054, %v5052
      %v5058 = vshll.u32 %v4993, 16
      %v5060 = vrot.slane %v5058, 1
      %v5061 = vsel %vm1865, %v5056, %v5060
      %v5086 = vunpack.c.l.b16 %v4935
      %v5087 = vunpack.c.l.b16 %v4936
      %v5088 = vunpack.c.l.b16 %v4937
      %v5089 = vunpack.c.l.b16 %v4938
      %v5090 = vunpack.c.l.b16 %v4939
      %v5091 = vunpack.c.l.b16 %v4940
      %v5092 = vunpack.c.l.b16 %v4941
      %v5093 = vunpack.c.l.b16 %v4942
      %v5094 = vunpack.c.l.b16 %v4943
      %v5095 = vunpack.c.l.b16 %v4944
      %v5096 = vunpack.c.l.b16 %v4945
      %v5097 = vunpack.c.l.b16 %v4946
      %v5098 = vunpack.c.l.b16 %v4947
      %v5099 = vunpack.c.l.b16 %v4948
      %v5100 = vunpack.c.l.b16 %v4949
      %v5101 = vunpack.c.l.b16 %v4950
      %v5102 = vpack.c.b16 %v5087, %v5086
      %v5103 = vpack.c.b16 %v5089, %v5088
      %v5104 = vpack.c.b16 %v5091, %v5090
      %v5105 = vpack.c.b16 %v5093, %v5092
      %v5106 = vpack.c.b16 %v5095, %v5094
      %v5107 = vpack.c.b16 %v5097, %v5096
      %v5108 = vpack.c.b16 %v5099, %v5098
      %v5109 = vpack.c.b16 %v5101, %v5100
      %5118 = vmatpush.bf16.msra.mxu0 %v5109
      %5119 = vmatpush.bf16.msra.mxu0 %v5108
      %5120 = vmatpush.bf16.msra.mxu0 %v5107
      %5121 = vmatpush.bf16.msra.mxu0 %v5106
      %5122 = vmatpush.bf16.msra.mxu0 %v5105
      %5123 = vmatpush.bf16.msra.mxu0 %v5104
      %5124 = vmatpush.bf16.msra.mxu0 %v5103
      %5125 = vmatpush.bf16.msra.mxu0 %v5102
      %5126 = vmatmul.bf16.gmra.mxu0 %v5005
      %v5127 = vpop.f32.mrf.mxu0
      %v5128 = vadd.f32 0.0, %v5127
      %v5129 = vpop.f32.mrf.mxu0
      %v5130 = vadd.f32 0.0, %v5129
      %5131 = vmatmul.bf16.gmra.mxu0 %v5013
      %v5132 = vpop.f32.mrf.mxu0
      %v5133 = vadd.f32 0.0, %v5132
      %v5134 = vpop.f32.mrf.mxu0
      %v5135 = vadd.f32 0.0, %v5134
      %5136 = vmatmul.bf16.gmra.mxu0 %v5021
      %v5137 = vpop.f32.mrf.mxu0
      %v5138 = vadd.f32 0.0, %v5137
      %v5139 = vpop.f32.mrf.mxu0
      %v5140 = vadd.f32 0.0, %v5139
      %5141 = vmatmul.bf16.gmra.mxu0 %v5029
      %v5142 = vpop.f32.mrf.mxu0
      %v5143 = vadd.f32 0.0, %v5142
      %v5144 = vpop.f32.mrf.mxu0
      %v5145 = vadd.f32 0.0, %v5144
      %5146 = vmatmul.bf16.gmra.mxu0 %v5037
      %v5147 = vpop.f32.mrf.mxu0
      %v5148 = vadd.f32 0.0, %v5147
      %v5149 = vpop.f32.mrf.mxu0
      %v5150 = vadd.f32 0.0, %v5149
      %5151 = vmatmul.bf16.gmra.mxu0 %v5045
      %v5152 = vpop.f32.mrf.mxu0
      %v5153 = vadd.f32 0.0, %v5152
      %v5154 = vpop.f32.mrf.mxu0
      %v5155 = vadd.f32 0.0, %v5154
      %5156 = vmatmul.bf16.gmra.mxu0 %v5053
      %v5157 = vpop.f32.mrf.mxu0
      %v5158 = vadd.f32 0.0, %v5157
      %v5159 = vpop.f32.mrf.mxu0
      %v5160 = vadd.f32 0.0, %v5159
      %5161 = vmatmul.bf16.gmra.mxu0 %v5061
      %v5162 = vpop.f32.mrf.mxu0
      %v5163 = vadd.f32 0.0, %v5162
      %v5164 = vpop.f32.mrf.mxu0
      %v5165 = vadd.f32 0.0, %v5164
      %5166 = vdwg.mxu0
      %v5167 = vadd.f32 %v4902, %v5128
      %v5168 = vadd.f32 %v4903, %v5130
      %v5169 = vadd.f32 %v4904, %v5133
      %v5170 = vadd.f32 %v4905, %v5135
      %v5171 = vadd.f32 %v4906, %v5138
      %v5172 = vadd.f32 %v4907, %v5140
      %v5173 = vadd.f32 %v4908, %v5143
      %v5174 = vadd.f32 %v4909, %v5145
      %v5175 = vadd.f32 %v4910, %v5148
      %v5176 = vadd.f32 %v4911, %v5150
      %v5177 = vadd.f32 %v4912, %v5153
      %v5178 = vadd.f32 %v4913, %v5155
      %v5179 = vadd.f32 %v4914, %v5158
      %v5180 = vadd.f32 %v4915, %v5160
      %v5181 = vadd.f32 %v4916, %v5163
      %v5182 = vadd.f32 %v4917, %v5165
      %v5183 = vld [vmem:[#allocation2 + $0x60] sm:$0x8]
      %v5184 = vld [vmem:[#allocation2 + $0x64] sm:$0xf]
      %v5185 = vld [vmem:[#allocation2 + $0x68] sm:$0xf]
      %v5186 = vld [vmem:[#allocation2 + $0x6c] sm:$0xf]
      %v5187 = vld [vmem:[#allocation2 + $0x70] sm:$0xf]
      %v5188 = vld [vmem:[#allocation2 + $0x74] sm:$0xf]
      %v5189 = vld [vmem:[#allocation2 + $0x78] sm:$0xf]
      %v5190 = vld [vmem:[#allocation2 + $0x7c] sm:$0xf]
      %v5191 = vld [vmem:[#allocation2 + $0x80] sm:$0xf]
      %v5192 = vld [vmem:[#allocation2 + $0x84] sm:$0xf]
      %v5193 = vld [vmem:[#allocation2 + $0x88] sm:$0xf]
      %v5194 = vld [vmem:[#allocation2 + $0x8c] sm:$0xf]
      %v5195 = vld [vmem:[#allocation2 + $0x90] sm:$0xf]
      %v5196 = vld [vmem:[#allocation2 + $0x94] sm:$0xf]
      %v5197 = vld [vmem:[#allocation2 + $0x98] sm:$0xf]
      %v5198 = vld [vmem:[#allocation2 + $0x9c] sm:$0xf]
      %v5199 = vld [vmem:[#allocation2 + $0xa0] sm:$0xf]
      %v5200 = vld [vmem:[%s2762] sm:$0xf]
      %v5201 = vld [vmem:[%s2762 + $0x4] sm:$0xf]
      %v5202 = vld [vmem:[%s2762 + $0x8] sm:$0xf]
      %v5203 = vld [vmem:[%s2762 + $0xc] sm:$0xf]
      %v5204 = vld [vmem:[%s2762 + $0x10] sm:$0xf]
      %v5205 = vld [vmem:[%s2762 + $0x14] sm:$0xf]
      %v5206 = vld [vmem:[%s2762 + $0x18] sm:$0xf]
      %v5207 = vld [vmem:[%s2762 + $0x1c] sm:$0xf]
      %v5208 = vld [vmem:[%s2762 + $0x20] sm:$0xf]
      %v5209 = vld [vmem:[%s2762 + $0x24] sm:$0xf]
      %v5210 = vld [vmem:[%s2762 + $0x28] sm:$0xf]
      %v5211 = vld [vmem:[%s2762 + $0x2c] sm:$0xf]
      %v5212 = vld [vmem:[%s2762 + $0x30] sm:$0xf]
      %v5213 = vld [vmem:[%s2762 + $0x34] sm:$0xf]
      %v5214 = vld [vmem:[%s2762 + $0x38] sm:$0xf]
      %v5215 = vld [vmem:[%s2762 + $0x3c] sm:$0xf]
      %v5233 = vunpack.c.l.b16 %v5183
      %v5234 = vunpack.c.l.b16 %v5184
      %v5235 = vunpack.c.l.b16 %v5185
      %v5236 = vunpack.c.l.b16 %v5186
      %v5237 = vunpack.c.l.b16 %v5187
      %v5238 = vunpack.c.l.b16 %v5188
      %v5239 = vunpack.c.l.b16 %v5189
      %v5240 = vunpack.c.l.b16 %v5190
      %v5241 = vunpack.c.l.b16 %v5191
      %v5242 = vunpack.c.l.b16 %v5192
      %v5243 = vunpack.c.l.b16 %v5193
      %v5244 = vunpack.c.l.b16 %v5194
      %v5245 = vunpack.c.l.b16 %v5195
      %v5246 = vunpack.c.l.b16 %v5196
      %v5247 = vunpack.c.l.b16 %v5197
      %v5248 = vunpack.c.l.b16 %v5198
      %v5249 = vunpack.c.l.b16 %v5199
      %v5250 = vpack.c.b16 %v5234, %v5233
      %v5251 = vpack.c.b16 %v5236, %v5235
      %v5252 = vpack.c.b16 %v5238, %v5237
      %v5253 = vpack.c.b16 %v5240, %v5239
      %v5254 = vpack.c.b16 %v5242, %v5241
      %v5255 = vpack.c.b16 %v5244, %v5243
      %v5256 = vpack.c.b16 %v5246, %v5245
      %v5257 = vpack.c.b16 %v5248, %v5247
      %v5258 = vpack.c.b16 %v5249, %v5249
      %v5260 = vshrl.u32 %v5250, 16
      %v5262 = vrot.slane %v5260, 3
      %v5263 = vshll.u32 %v5250, 16
      %v5265 = vrot.slane %v5263, 4
      %v5266 = vor.u32 %v5262, %v5265
      %v5268 = vshrl.u32 %v5251, 16
      %v5270 = vrot.slane %v5268, 3
      %v5271 = vshll.u32 %v5251, 16
      %v5273 = vrot.slane %v5271, 4
      %v5274 = vor.u32 %v5270, %v5273
      %v5275 = vsel %vm1602, %v5266, %v5274
      %v5277 = vshrl.u32 %v5252, 16
      %v5279 = vrot.slane %v5277, 3
      %v5280 = vshll.u32 %v5252, 16
      %v5282 = vrot.slane %v5280, 4
      %v5283 = vor.u32 %v5279, %v5282
      %v5284 = vsel %vm1602, %v5274, %v5283
      %v5286 = vshrl.u32 %v5253, 16
      %v5288 = vrot.slane %v5286, 3
      %v5289 = vshll.u32 %v5253, 16
      %v5291 = vrot.slane %v5289, 4
      %v5292 = vor.u32 %v5288, %v5291
      %v5293 = vsel %vm1602, %v5283, %v5292
      %v5295 = vshrl.u32 %v5254, 16
      %v5297 = vrot.slane %v5295, 3
      %v5298 = vshll.u32 %v5254, 16
      %v5300 = vrot.slane %v5298, 4
      %v5301 = vor.u32 %v5297, %v5300
      %v5302 = vsel %vm1602, %v5292, %v5301
      %v5304 = vshrl.u32 %v5255, 16
      %v5306 = vrot.slane %v5304, 3
      %v5307 = vshll.u32 %v5255, 16
      %v5309 = vrot.slane %v5307, 4
      %v5310 = vor.u32 %v5306, %v5309
      %v5311 = vsel %vm1602, %v5301, %v5310
      %v5313 = vshrl.u32 %v5256, 16
      %v5315 = vrot.slane %v5313, 3
      %v5316 = vshll.u32 %v5256, 16
      %v5318 = vrot.slane %v5316, 4
      %v5319 = vor.u32 %v5315, %v5318
      %v5320 = vsel %vm1602, %v5310, %v5319
      %v5322 = vshrl.u32 %v5257, 16
      %v5324 = vrot.slane %v5322, 3
      %v5325 = vshll.u32 %v5257, 16
      %v5327 = vrot.slane %v5325, 4
      %v5328 = vor.u32 %v5324, %v5327
      %v5329 = vsel %vm1602, %v5319, %v5328
      %v5331 = vshrl.u32 %v5258, 16
      %v5333 = vrot.slane %v5331, 3
      %v5334 = vshll.u32 %v5258, 16
      %v5336 = vrot.slane %v5334, 4
      %v5337 = vor.u32 %v5333, %v5336
      %v5338 = vsel %vm1602, %v5328, %v5337
      %v5363 = vunpack.c.l.b16 %v5200
      %v5364 = vunpack.c.l.b16 %v5201
      %v5365 = vunpack.c.l.b16 %v5202
      %v5366 = vunpack.c.l.b16 %v5203
      %v5367 = vunpack.c.l.b16 %v5204
      %v5368 = vunpack.c.l.b16 %v5205
      %v5369 = vunpack.c.l.b16 %v5206
      %v5370 = vunpack.c.l.b16 %v5207
      %v5371 = vunpack.c.l.b16 %v5208
      %v5372 = vunpack.c.l.b16 %v5209
      %v5373 = vunpack.c.l.b16 %v5210
      %v5374 = vunpack.c.l.b16 %v5211
      %v5375 = vunpack.c.l.b16 %v5212
      %v5376 = vunpack.c.l.b16 %v5213
      %v5377 = vunpack.c.l.b16 %v5214
      %v5378 = vunpack.c.l.b16 %v5215
      %v5379 = vpack.c.b16 %v5364, %v5363
      %v5380 = vpack.c.b16 %v5366, %v5365
      %v5381 = vpack.c.b16 %v5368, %v5367
      %v5382 = vpack.c.b16 %v5370, %v5369
      %v5383 = vpack.c.b16 %v5372, %v5371
      %v5384 = vpack.c.b16 %v5374, %v5373
      %v5385 = vpack.c.b16 %v5376, %v5375
      %v5386 = vpack.c.b16 %v5378, %v5377
      %5395 = vmatpush.bf16.msra.mxu0 %v5386
      %5396 = vmatpush.bf16.msra.mxu0 %v5385
      %5397 = vmatpush.bf16.msra.mxu0 %v5384
      %5398 = vmatpush.bf16.msra.mxu0 %v5383
      %5399 = vmatpush.bf16.msra.mxu0 %v5382
      %5400 = vmatpush.bf16.msra.mxu0 %v5381
      %5401 = vmatpush.bf16.msra.mxu0 %v5380
      %5402 = vmatpush.bf16.msra.mxu0 %v5379
      %5403 = vmatmul.bf16.gmra.mxu0 %v5275
      %v5404 = vpop.f32.mrf.mxu0
      %v5405 = vadd.f32 0.0, %v5404
      %v5406 = vpop.f32.mrf.mxu0
      %v5407 = vadd.f32 0.0, %v5406
      %5408 = vmatmul.bf16.gmra.mxu0 %v5284
      %v5409 = vpop.f32.mrf.mxu0
      %v5410 = vadd.f32 0.0, %v5409
      %v5411 = vpop.f32.mrf.mxu0
      %v5412 = vadd.f32 0.0, %v5411
      %5413 = vmatmul.bf16.gmra.mxu0 %v5293
      %v5414 = vpop.f32.mrf.mxu0
      %v5415 = vadd.f32 0.0, %v5414
      %v5416 = vpop.f32.mrf.mxu0
      %v5417 = vadd.f32 0.0, %v5416
      %5418 = vmatmul.bf16.gmra.mxu0 %v5302
      %v5419 = vpop.f32.mrf.mxu0
      %v5420 = vadd.f32 0.0, %v5419
      %v5421 = vpop.f32.mrf.mxu0
      %v5422 = vadd.f32 0.0, %v5421
      %5423 = vmatmul.bf16.gmra.mxu0 %v5311
      %v5424 = vpop.f32.mrf.mxu0
      %v5425 = vadd.f32 0.0, %v5424
      %v5426 = vpop.f32.mrf.mxu0
      %v5427 = vadd.f32 0.0, %v5426
      %5428 = vmatmul.bf16.gmra.mxu0 %v5320
      %v5429 = vpop.f32.mrf.mxu0
      %v5430 = vadd.f32 0.0, %v5429
      %v5431 = vpop.f32.mrf.mxu0
      %v5432 = vadd.f32 0.0, %v5431
      %5433 = vmatmul.bf16.gmra.mxu0 %v5329
      %v5434 = vpop.f32.mrf.mxu0
      %v5435 = vadd.f32 0.0, %v5434
      %v5436 = vpop.f32.mrf.mxu0
      %v5437 = vadd.f32 0.0, %v5436
      %5438 = vmatmul.bf16.gmra.mxu0 %v5338
      %v5439 = vpop.f32.mrf.mxu0
      %v5440 = vadd.f32 0.0, %v5439
      %v5441 = vpop.f32.mrf.mxu0
      %v5442 = vadd.f32 0.0, %v5441
      %5443 = vdwg.mxu0
      %v5444 = vadd.f32 %v5167, %v5405
      %v5445 = vadd.f32 %v5168, %v5407
      %v5446 = vadd.f32 %v5169, %v5410
      %v5447 = vadd.f32 %v5170, %v5412
      %v5448 = vadd.f32 %v5171, %v5415
      %v5449 = vadd.f32 %v5172, %v5417
      %v5450 = vadd.f32 %v5173, %v5420
      %v5451 = vadd.f32 %v5174, %v5422
      %v5452 = vadd.f32 %v5175, %v5425
      %v5453 = vadd.f32 %v5176, %v5427
      %v5454 = vadd.f32 %v5177, %v5430
      %v5455 = vadd.f32 %v5178, %v5432
      %v5456 = vadd.f32 %v5179, %v5435
      %v5457 = vadd.f32 %v5180, %v5437
      %v5458 = vadd.f32 %v5181, %v5440
      %v5459 = vadd.f32 %v5182, %v5442
      %v5460 = vld [vmem:[%s3023] sm:$0xf]
      %v5461 = vld [vmem:[%s3023 + $0x4] sm:$0xf]
      %v5462 = vld [vmem:[%s3023 + $0x8] sm:$0xf]
      %v5463 = vld [vmem:[%s3023 + $0xc] sm:$0xf]
      %v5464 = vld [vmem:[%s3023 + $0x10] sm:$0xf]
      %v5465 = vld [vmem:[%s3023 + $0x14] sm:$0xf]
      %v5466 = vld [vmem:[%s3023 + $0x18] sm:$0xf]
      %v5467 = vld [vmem:[%s3023 + $0x1c] sm:$0xf]
      %v5468 = vld [vmem:[%s3023 + $0x20] sm:$0xf]
      %v5469 = vld [vmem:[%s3023 + $0x24] sm:$0xf]
      %v5470 = vld [vmem:[%s3023 + $0x28] sm:$0xf]
      %v5471 = vld [vmem:[%s3023 + $0x2c] sm:$0xf]
      %v5472 = vld [vmem:[%s3023 + $0x30] sm:$0xf]
      %v5473 = vld [vmem:[%s3023 + $0x34] sm:$0xf]
      %v5474 = vld [vmem:[%s3023 + $0x38] sm:$0xf]
      %v5475 = vld [vmem:[%s3023 + $0x3c] sm:$0xf]
      %v5476 = vpack.c.b16 %v5235, %v5234
      %v5477 = vpack.c.b16 %v5237, %v5236
      %v5478 = vpack.c.b16 %v5239, %v5238
      %v5479 = vpack.c.b16 %v5241, %v5240
      %v5480 = vpack.c.b16 %v5243, %v5242
      %v5481 = vpack.c.b16 %v5245, %v5244
      %v5482 = vpack.c.b16 %v5247, %v5246
      %v5483 = vpack.c.b16 %v5249, %v5248
      %v5508 = vunpack.c.l.b16 %v5460
      %v5509 = vunpack.c.l.b16 %v5461
      %v5510 = vunpack.c.l.b16 %v5462
      %v5511 = vunpack.c.l.b16 %v5463
      %v5512 = vunpack.c.l.b16 %v5464
      %v5513 = vunpack.c.l.b16 %v5465
      %v5514 = vunpack.c.l.b16 %v5466
      %v5515 = vunpack.c.l.b16 %v5467
      %v5516 = vunpack.c.l.b16 %v5468
      %v5517 = vunpack.c.l.b16 %v5469
      %v5518 = vunpack.c.l.b16 %v5470
      %v5519 = vunpack.c.l.b16 %v5471
      %v5520 = vunpack.c.l.b16 %v5472
      %v5521 = vunpack.c.l.b16 %v5473
      %v5522 = vunpack.c.l.b16 %v5474
      %v5523 = vunpack.c.l.b16 %v5475
      %v5524 = vpack.c.b16 %v5509, %v5508
      %v5525 = vpack.c.b16 %v5511, %v5510
      %v5526 = vpack.c.b16 %v5513, %v5512
      %v5527 = vpack.c.b16 %v5515, %v5514
      %v5528 = vpack.c.b16 %v5517, %v5516
      %v5529 = vpack.c.b16 %v5519, %v5518
      %v5530 = vpack.c.b16 %v5521, %v5520
      %v5531 = vpack.c.b16 %v5523, %v5522
      %5540 = vmatpush.bf16.msra.mxu0 %v5531
      %5541 = vmatpush.bf16.msra.mxu0 %v5530
      %5542 = vmatpush.bf16.msra.mxu0 %v5529
      %5543 = vmatpush.bf16.msra.mxu0 %v5528
      %5544 = vmatpush.bf16.msra.mxu0 %v5527
      %5545 = vmatpush.bf16.msra.mxu0 %v5526
      %5546 = vmatpush.bf16.msra.mxu0 %v5525
      %5547 = vmatpush.bf16.msra.mxu0 %v5524
      %5548 = vmatmul.bf16.gmra.mxu0 %v5476
      %v5549 = vpop.f32.mrf.mxu0
      %v5550 = vadd.f32 0.0, %v5549
      %v5551 = vpop.f32.mrf.mxu0
      %v5552 = vadd.f32 0.0, %v5551
      %5553 = vmatmul.bf16.gmra.mxu0 %v5477
      %v5554 = vpop.f32.mrf.mxu0
      %v5555 = vadd.f32 0.0, %v5554
      %v5556 = vpop.f32.mrf.mxu0
      %v5557 = vadd.f32 0.0, %v5556
      %5558 = vmatmul.bf16.gmra.mxu0 %v5478
      %v5559 = vpop.f32.mrf.mxu0
      %v5560 = vadd.f32 0.0, %v5559
      %v5561 = vpop.f32.mrf.mxu0
      %v5562 = vadd.f32 0.0, %v5561
      %5563 = vmatmul.bf16.gmra.mxu0 %v5479
      %v5564 = vpop.f32.mrf.mxu0
      %v5565 = vadd.f32 0.0, %v5564
      %v5566 = vpop.f32.mrf.mxu0
      %v5567 = vadd.f32 0.0, %v5566
      %5568 = vmatmul.bf16.gmra.mxu0 %v5480
      %v5569 = vpop.f32.mrf.mxu0
      %v5570 = vadd.f32 0.0, %v5569
      %v5571 = vpop.f32.mrf.mxu0
      %v5572 = vadd.f32 0.0, %v5571
      %5573 = vmatmul.bf16.gmra.mxu0 %v5481
      %v5574 = vpop.f32.mrf.mxu0
      %v5575 = vadd.f32 0.0, %v5574
      %v5576 = vpop.f32.mrf.mxu0
      %v5577 = vadd.f32 0.0, %v5576
      %5578 = vmatmul.bf16.gmra.mxu0 %v5482
      %v5579 = vpop.f32.mrf.mxu0
      %v5580 = vadd.f32 0.0, %v5579
      %v5581 = vpop.f32.mrf.mxu0
      %v5582 = vadd.f32 0.0, %v5581
      %5583 = vmatmul.bf16.gmra.mxu0 %v5483
      %v5584 = vpop.f32.mrf.mxu0
      %v5585 = vadd.f32 0.0, %v5584
      %v5586 = vpop.f32.mrf.mxu0
      %v5587 = vadd.f32 0.0, %v5586
      %5588 = vdwg.mxu0
      %v5589 = vadd.f32 %v5444, %v5550
      %v5590 = vadd.f32 %v5445, %v5552
      %v5591 = vadd.f32 %v5446, %v5555
      %v5592 = vadd.f32 %v5447, %v5557
      %v5593 = vadd.f32 %v5448, %v5560
      %v5594 = vadd.f32 %v5449, %v5562
      %v5595 = vadd.f32 %v5450, %v5565
      %v5596 = vadd.f32 %v5451, %v5567
      %v5597 = vadd.f32 %v5452, %v5570
      %v5598 = vadd.f32 %v5453, %v5572
      %v5599 = vadd.f32 %v5454, %v5575
      %v5600 = vadd.f32 %v5455, %v5577
      %v5601 = vadd.f32 %v5456, %v5580
      %v5602 = vadd.f32 %v5457, %v5582
      %v5603 = vadd.f32 %v5458, %v5585
      %v5604 = vadd.f32 %v5459, %v5587
      %v5605 = vld [vmem:[#allocation2 + $0x64] sm:$0xf]
      %v5606 = vld [vmem:[#allocation2 + $0x68] sm:$0xf]
      %v5607 = vld [vmem:[#allocation2 + $0x6c] sm:$0xf]
      %v5608 = vld [vmem:[#allocation2 + $0x70] sm:$0xf]
      %v5609 = vld [vmem:[#allocation2 + $0x74] sm:$0xf]
      %v5610 = vld [vmem:[#allocation2 + $0x78] sm:$0xf]
      %v5611 = vld [vmem:[#allocation2 + $0x7c] sm:$0xf]
      %v5612 = vld [vmem:[#allocation2 + $0x80] sm:$0xf]
      %v5613 = vld [vmem:[#allocation2 + $0x84] sm:$0xf]
      %v5614 = vld [vmem:[#allocation2 + $0x88] sm:$0xf]
      %v5615 = vld [vmem:[#allocation2 + $0x8c] sm:$0xf]
      %v5616 = vld [vmem:[#allocation2 + $0x90] sm:$0xf]
      %v5617 = vld [vmem:[#allocation2 + $0x94] sm:$0xf]
      %v5618 = vld [vmem:[#allocation2 + $0x98] sm:$0xf]
      %v5619 = vld [vmem:[#allocation2 + $0x9c] sm:$0xf]
      %v5620 = vld [vmem:[#allocation2 + $0xa0] sm:$0xf]
      %v5621 = vld [vmem:[#allocation2 + $0xa4] sm:$0x1]
      %v5622 = vld [vmem:[%s3186] sm:$0xf]
      %v5623 = vld [vmem:[%s3186 + $0x4] sm:$0xf]
      %v5624 = vld [vmem:[%s3186 + $0x8] sm:$0xf]
      %v5625 = vld [vmem:[%s3186 + $0xc] sm:$0xf]
      %v5626 = vld [vmem:[%s3186 + $0x10] sm:$0xf]
      %v5627 = vld [vmem:[%s3186 + $0x14] sm:$0xf]
      %v5628 = vld [vmem:[%s3186 + $0x18] sm:$0xf]
      %v5629 = vld [vmem:[%s3186 + $0x1c] sm:$0xf]
      %v5630 = vld [vmem:[%s3186 + $0x20] sm:$0xf]
      %v5631 = vld [vmem:[%s3186 + $0x24] sm:$0xf]
      %v5632 = vld [vmem:[%s3186 + $0x28] sm:$0xf]
      %v5633 = vld [vmem:[%s3186 + $0x2c] sm:$0xf]
      %v5634 = vld [vmem:[%s3186 + $0x30] sm:$0xf]
      %v5635 = vld [vmem:[%s3186 + $0x34] sm:$0xf]
      %v5636 = vld [vmem:[%s3186 + $0x38] sm:$0xf]
      %v5637 = vld [vmem:[%s3186 + $0x3c] sm:$0xf]
      %v5655 = vunpack.c.l.b16 %v5605
      %v5656 = vunpack.c.l.b16 %v5606
      %v5657 = vunpack.c.l.b16 %v5607
      %v5658 = vunpack.c.l.b16 %v5608
      %v5659 = vunpack.c.l.b16 %v5609
      %v5660 = vunpack.c.l.b16 %v5610
      %v5661 = vunpack.c.l.b16 %v5611
      %v5662 = vunpack.c.l.b16 %v5612
      %v5663 = vunpack.c.l.b16 %v5613
      %v5664 = vunpack.c.l.b16 %v5614
      %v5665 = vunpack.c.l.b16 %v5615
      %v5666 = vunpack.c.l.b16 %v5616
      %v5667 = vunpack.c.l.b16 %v5617
      %v5668 = vunpack.c.l.b16 %v5618
      %v5669 = vunpack.c.l.b16 %v5619
      %v5670 = vunpack.c.l.b16 %v5620
      %v5671 = vunpack.c.l.b16 %v5621
      %v5672 = vpack.c.b16 %v5656, %v5655
      %v5673 = vpack.c.b16 %v5658, %v5657
      %v5674 = vpack.c.b16 %v5660, %v5659
      %v5675 = vpack.c.b16 %v5662, %v5661
      %v5676 = vpack.c.b16 %v5664, %v5663
      %v5677 = vpack.c.b16 %v5666, %v5665
      %v5678 = vpack.c.b16 %v5668, %v5667
      %v5679 = vpack.c.b16 %v5670, %v5669
      %v5680 = vpack.c.b16 %v5671, %v5671
      %v5682 = vshrl.u32 %v5672, 16
      %v5684 = vshll.u32 %v5672, 16
      %v5686 = vrot.slane %v5684, 1
      %v5687 = vor.u32 %v5682, %v5686
      %v5689 = vshll.u32 %v5673, 16
      %v5691 = vrot.slane %v5689, 1
      %v5692 = vsel %vm1865, %v5687, %v5691
      %v5693 = vshrl.u32 %v5673, 16
      %v5695 = vor.u32 %v5693, %v5691
      %v5697 = vshll.u32 %v5674, 16
      %v5699 = vrot.slane %v5697, 1
      %v5700 = vsel %vm1865, %v5695, %v5699
      %v5701 = vshrl.u32 %v5674, 16
      %v5703 = vor.u32 %v5701, %v5699
      %v5705 = vshll.u32 %v5675, 16
      %v5707 = vrot.slane %v5705, 1
      %v5708 = vsel %vm1865, %v5703, %v5707
      %v5709 = vshrl.u32 %v5675, 16
      %v5711 = vor.u32 %v5709, %v5707
      %v5713 = vshll.u32 %v5676, 16
      %v5715 = vrot.slane %v5713, 1
      %v5716 = vsel %vm1865, %v5711, %v5715
      %v5717 = vshrl.u32 %v5676, 16
      %v5719 = vor.u32 %v5717, %v5715
      %v5721 = vshll.u32 %v5677, 16
      %v5723 = vrot.slane %v5721, 1
      %v5724 = vsel %vm1865, %v5719, %v5723
      %v5725 = vshrl.u32 %v5677, 16
      %v5727 = vor.u32 %v5725, %v5723
      %v5729 = vshll.u32 %v5678, 16
      %v5731 = vrot.slane %v5729, 1
      %v5732 = vsel %vm1865, %v5727, %v5731
      %v5733 = vshrl.u32 %v5678, 16
      %v5735 = vor.u32 %v5733, %v5731
      %v5737 = vshll.u32 %v5679, 16
      %v5739 = vrot.slane %v5737, 1
      %v5740 = vsel %vm1865, %v5735, %v5739
      %v5741 = vshrl.u32 %v5679, 16
      %v5743 = vor.u32 %v5741, %v5739
      %v5745 = vshll.u32 %v5680, 16
      %v5747 = vrot.slane %v5745, 1
      %v5748 = vsel %vm1865, %v5743, %v5747
      %v5773 = vunpack.c.l.b16 %v5622
      %v5774 = vunpack.c.l.b16 %v5623
      %v5775 = vunpack.c.l.b16 %v5624
      %v5776 = vunpack.c.l.b16 %v5625
      %v5777 = vunpack.c.l.b16 %v5626
      %v5778 = vunpack.c.l.b16 %v5627
      %v5779 = vunpack.c.l.b16 %v5628
      %v5780 = vunpack.c.l.b16 %v5629
      %v5781 = vunpack.c.l.b16 %v5630
      %v5782 = vunpack.c.l.b16 %v5631
      %v5783 = vunpack.c.l.b16 %v5632
      %v5784 = vunpack.c.l.b16 %v5633
      %v5785 = vunpack.c.l.b16 %v5634
      %v5786 = vunpack.c.l.b16 %v5635
      %v5787 = vunpack.c.l.b16 %v5636
      %v5788 = vunpack.c.l.b16 %v5637
      %v5789 = vpack.c.b16 %v5774, %v5773
      %v5790 = vpack.c.b16 %v5776, %v5775
      %v5791 = vpack.c.b16 %v5778, %v5777
      %v5792 = vpack.c.b16 %v5780, %v5779
      %v5793 = vpack.c.b16 %v5782, %v5781
      %v5794 = vpack.c.b16 %v5784, %v5783
      %v5795 = vpack.c.b16 %v5786, %v5785
      %v5796 = vpack.c.b16 %v5788, %v5787
      %5805 = vmatpush.bf16.msra.mxu0 %v5796
      %5806 = vmatpush.bf16.msra.mxu0 %v5795
      %5807 = vmatpush.bf16.msra.mxu0 %v5794
      %5808 = vmatpush.bf16.msra.mxu0 %v5793
      %5809 = vmatpush.bf16.msra.mxu0 %v5792
      %5810 = vmatpush.bf16.msra.mxu0 %v5791
      %5811 = vmatpush.bf16.msra.mxu0 %v5790
      %5812 = vmatpush.bf16.msra.mxu0 %v5789
      %5813 = vmatmul.bf16.gmra.mxu0 %v5692
      %v5814 = vpop.f32.mrf.mxu0
      %v5815 = vadd.f32 0.0, %v5814
      %v5816 = vpop.f32.mrf.mxu0
      %v5817 = vadd.f32 0.0, %v5816
      %5818 = vmatmul.bf16.gmra.mxu0 %v5700
      %v5819 = vpop.f32.mrf.mxu0
      %v5820 = vadd.f32 0.0, %v5819
      %v5821 = vpop.f32.mrf.mxu0
      %v5822 = vadd.f32 0.0, %v5821
      %5823 = vmatmul.bf16.gmra.mxu0 %v5708
      %v5824 = vpop.f32.mrf.mxu0
      %v5825 = vadd.f32 0.0, %v5824
      %v5826 = vpop.f32.mrf.mxu0
      %v5827 = vadd.f32 0.0, %v5826
      %5828 = vmatmul.bf16.gmra.mxu0 %v5716
      %v5829 = vpop.f32.mrf.mxu0
      %v5830 = vadd.f32 0.0, %v5829
      %v5831 = vpop.f32.mrf.mxu0
      %v5832 = vadd.f32 0.0, %v5831
      %5833 = vmatmul.bf16.gmra.mxu0 %v5724
      %v5834 = vpop.f32.mrf.mxu0
      %v5835 = vadd.f32 0.0, %v5834
      %v5836 = vpop.f32.mrf.mxu0
      %v5837 = vadd.f32 0.0, %v5836
      %5838 = vmatmul.bf16.gmra.mxu0 %v5732
      %v5839 = vpop.f32.mrf.mxu0
      %v5840 = vadd.f32 0.0, %v5839
      %v5841 = vpop.f32.mrf.mxu0
      %v5842 = vadd.f32 0.0, %v5841
      %5843 = vmatmul.bf16.gmra.mxu0 %v5740
      %v5844 = vpop.f32.mrf.mxu0
      %v5845 = vadd.f32 0.0, %v5844
      %v5846 = vpop.f32.mrf.mxu0
      %v5847 = vadd.f32 0.0, %v5846
      %5848 = vmatmul.bf16.gmra.mxu0 %v5748
      %v5849 = vpop.f32.mrf.mxu0
      %v5850 = vadd.f32 0.0, %v5849
      %v5851 = vpop.f32.mrf.mxu0
      %v5852 = vadd.f32 0.0, %v5851
      %5853 = vdwg.mxu0
      %v5854 = vadd.f32 %v5589, %v5815
      %v5855 = vadd.f32 %v5590, %v5817
      %v5856 = vadd.f32 %v5591, %v5820
      %v5857 = vadd.f32 %v5592, %v5822
      %v5858 = vadd.f32 %v5593, %v5825
      %v5859 = vadd.f32 %v5594, %v5827
      %v5860 = vadd.f32 %v5595, %v5830
      %v5861 = vadd.f32 %v5596, %v5832
      %v5862 = vadd.f32 %v5597, %v5835
      %v5863 = vadd.f32 %v5598, %v5837
      %v5864 = vadd.f32 %v5599, %v5840
      %v5865 = vadd.f32 %v5600, %v5842
      %v5866 = vadd.f32 %v5601, %v5845
      %v5867 = vadd.f32 %v5602, %v5847
      %v5868 = vadd.f32 %v5603, %v5850
      %v5869 = vadd.f32 %v5604, %v5852
      %v5870 = vld [vmem:[%s5] sm:$0x1]
      %v5872 = vperm.slane %v5870, 0
      %v5874 = vadd.f32 %v5854, %v5872
      %v5875 = vadd.f32 %v5855, %v5872
      %v5876 = vadd.f32 %v5856, %v5872
      %v5877 = vadd.f32 %v5857, %v5872
      %v5878 = vadd.f32 %v5858, %v5872
      %v5879 = vadd.f32 %v5859, %v5872
      %v5880 = vadd.f32 %v5860, %v5872
      %v5881 = vadd.f32 %v5861, %v5872
      %v5882 = vadd.f32 %v5862, %v5872
      %v5883 = vadd.f32 %v5863, %v5872
      %v5884 = vadd.f32 %v5864, %v5872
      %v5885 = vadd.f32 %v5865, %v5872
      %v5886 = vadd.f32 %v5866, %v5872
      %v5887 = vadd.f32 %v5867, %v5872
      %v5888 = vadd.f32 %v5868, %v5872
      %v5889 = vadd.f32 %v5869, %v5872
      %v5890 = vmax.f32 %v5874, 0.0
      %v5891 = vmax.f32 %v5875, 0.0
      %v5892 = vmax.f32 %v5876, 0.0
      %v5893 = vmax.f32 %v5877, 0.0
      %v5894 = vmax.f32 %v5878, 0.0
      %v5895 = vmax.f32 %v5879, 0.0
      %v5896 = vmax.f32 %v5880, 0.0
      %v5897 = vmax.f32 %v5881, 0.0
      %v5898 = vmax.f32 %v5882, 0.0
      %v5899 = vmax.f32 %v5883, 0.0
      %v5900 = vmax.f32 %v5884, 0.0
      %v5901 = vmax.f32 %v5885, 0.0
      %v5902 = vmax.f32 %v5886, 0.0
      %v5903 = vmax.f32 %v5887, 0.0
      %v5904 = vmax.f32 %v5888, 0.0
      %v5905 = vmax.f32 %v5889, 0.0
      %v5906 = vpack.c.bf16 %v5891, %v5890
      %v5907 = vpack.c.bf16 %v5893, %v5892
      %v5908 = vpack.c.bf16 %v5895, %v5894
      %v5909 = vpack.c.bf16 %v5897, %v5896
      %v5910 = vpack.c.bf16 %v5899, %v5898
      %v5911 = vpack.c.bf16 %v5901, %v5900
      %v5912 = vpack.c.bf16 %v5903, %v5902
      %v5913 = vpack.c.bf16 %v5905, %v5904
      %v5914 = vld [vmem:[%s6] sm:$0xf]
      %v5915 = vld [vmem:[%s6 + $0x4] sm:$0xf]
      %v5916 = vld [vmem:[%s6 + $0x8] sm:$0xf]
      %v5917 = vld [vmem:[%s6 + $0xc] sm:$0xf]
      %v5918 = vld [vmem:[%s6 + $0x10] sm:$0xf]
      %v5919 = vld [vmem:[%s6 + $0x14] sm:$0xf]
      %v5920 = vld [vmem:[%s6 + $0x18] sm:$0xf]
      %v5921 = vld [vmem:[%s6 + $0x1c] sm:$0xf]
      %v5922 = vld [vmem:[%s6 + $0x20] sm:$0xf]
      %v5923 = vld [vmem:[%s6 + $0x24] sm:$0xf]
      %v5924 = vld [vmem:[%s6 + $0x28] sm:$0xf]
      %v5925 = vld [vmem:[%s6 + $0x2c] sm:$0xf]
      %v5926 = vld [vmem:[%s6 + $0x30] sm:$0xf]
      %v5927 = vld [vmem:[%s6 + $0x34] sm:$0xf]
      %v5928 = vld [vmem:[%s6 + $0x38] sm:$0xf]
      %v5929 = vld [vmem:[%s6 + $0x3c] sm:$0xf]
      %v5930 = vld [vmem:[%s7] sm:$0x1]
      %v5932 = vperm.slane %v5930, 0
      %v5950 = vunpack.c.l.b16 %v5914
      %v5951 = vunpack.c.l.b16 %v5915
      %v5952 = vunpack.c.l.b16 %v5916
      %v5953 = vunpack.c.l.b16 %v5917
      %v5954 = vunpack.c.l.b16 %v5918
      %v5955 = vunpack.c.l.b16 %v5919
      %v5956 = vunpack.c.l.b16 %v5920
      %v5957 = vunpack.c.l.b16 %v5921
      %v5958 = vunpack.c.l.b16 %v5922
      %v5959 = vunpack.c.l.b16 %v5923
      %v5960 = vunpack.c.l.b16 %v5924
      %v5961 = vunpack.c.l.b16 %v5925
      %v5962 = vunpack.c.l.b16 %v5926
      %v5963 = vunpack.c.l.b16 %v5927
      %v5964 = vunpack.c.l.b16 %v5928
      %v5965 = vunpack.c.l.b16 %v5929
      %v5966 = vpack.c.b16 %v5951, %v5950
      %v5967 = vpack.c.b16 %v5953, %v5952
      %v5968 = vpack.c.b16 %v5955, %v5954
      %v5969 = vpack.c.b16 %v5957, %v5956
      %v5970 = vpack.c.b16 %v5959, %v5958
      %v5971 = vpack.c.b16 %v5961, %v5960
      %v5972 = vpack.c.b16 %v5963, %v5962
      %v5973 = vpack.c.b16 %v5965, %v5964
      %5982 = vmatpush.bf16.msra.mxu0 %v5973
      %5983 = vmatpush.bf16.msra.mxu0 %v5972
      %5984 = vmatpush.bf16.msra.mxu0 %v5971
      %5985 = vmatpush.bf16.msra.mxu0 %v5970
      %5986 = vmatpush.bf16.msra.mxu0 %v5969
      %5987 = vmatpush.bf16.msra.mxu0 %v5968
      %5988 = vmatpush.bf16.msra.mxu0 %v5967
      %5989 = vmatpush.bf16.msra.mxu0 %v5966
      %5990 = vmatmul.bf16.gmra.mxu0 %v5906
      %v5991 = vpop.f32.mrf.mxu0
      %v5992 = vadd.f32 %v5932, %v5991
      %v5993 = vpop.f32.mrf.mxu0
      %v5994 = vadd.f32 %v5932, %v5993
      %5995 = vmatmul.bf16.gmra.mxu0 %v5907
      %v5996 = vpop.f32.mrf.mxu0
      %v5997 = vadd.f32 %v5932, %v5996
      %v5998 = vpop.f32.mrf.mxu0
      %v5999 = vadd.f32 %v5932, %v5998
      %6000 = vmatmul.bf16.gmra.mxu0 %v5908
      %v6001 = vpop.f32.mrf.mxu0
      %v6002 = vadd.f32 %v5932, %v6001
      %v6003 = vpop.f32.mrf.mxu0
      %v6004 = vadd.f32 %v5932, %v6003
      %6005 = vmatmul.bf16.gmra.mxu0 %v5909
      %v6006 = vpop.f32.mrf.mxu0
      %v6007 = vadd.f32 %v5932, %v6006
      %v6008 = vpop.f32.mrf.mxu0
      %v6009 = vadd.f32 %v5932, %v6008
      %6010 = vmatmul.bf16.gmra.mxu0 %v5910
      %v6011 = vpop.f32.mrf.mxu0
      %v6012 = vadd.f32 %v5932, %v6011
      %v6013 = vpop.f32.mrf.mxu0
      %v6014 = vadd.f32 %v5932, %v6013
      %6015 = vmatmul.bf16.gmra.mxu0 %v5911
      %v6016 = vpop.f32.mrf.mxu0
      %v6017 = vadd.f32 %v5932, %v6016
      %v6018 = vpop.f32.mrf.mxu0
      %v6019 = vadd.f32 %v5932, %v6018
      %6020 = vmatmul.bf16.gmra.mxu0 %v5912
      %v6021 = vpop.f32.mrf.mxu0
      %v6022 = vadd.f32 %v5932, %v6021
      %v6023 = vpop.f32.mrf.mxu0
      %v6024 = vadd.f32 %v5932, %v6023
      %6025 = vmatmul.bf16.gmra.mxu0 %v5913
      %v6026 = vpop.f32.mrf.mxu0
      %v6027 = vadd.f32 %v5932, %v6026
      %v6028 = vpop.f32.mrf.mxu0
      %v6029 = vadd.f32 %v5932, %v6028
      %6030 = vdwg.mxu0
      %v6031 = vld [vmem:[%s354 + $0x40] sm:$0xf]
      %v6032 = vld [vmem:[%s354 + $0x44] sm:$0xf]
      %v6033 = vld [vmem:[%s354 + $0x48] sm:$0xf]
      %v6034 = vld [vmem:[%s354 + $0x4c] sm:$0xf]
      %v6035 = vld [vmem:[%s354 + $0x50] sm:$0xf]
      %v6036 = vld [vmem:[%s354 + $0x54] sm:$0xf]
      %v6037 = vld [vmem:[%s354 + $0x58] sm:$0xf]
      %v6038 = vld [vmem:[%s354 + $0x5c] sm:$0xf]
      %v6039 = vld [vmem:[%s354 + $0x60] sm:$0xf]
      %v6040 = vld [vmem:[%s354 + $0x64] sm:$0xf]
      %v6041 = vld [vmem:[%s354 + $0x68] sm:$0xf]
      %v6042 = vld [vmem:[%s354 + $0x6c] sm:$0xf]
      %v6043 = vld [vmem:[%s354 + $0x70] sm:$0xf]
      %v6044 = vld [vmem:[%s354 + $0x74] sm:$0xf]
      %v6045 = vld [vmem:[%s354 + $0x78] sm:$0xf]
      %v6046 = vld [vmem:[%s354 + $0x7c] sm:$0xf]
      %v6047 = vld [vmem:[%s8] sm:$0xf]
      %v6048 = vld [vmem:[%s8 + $0x4] sm:$0xf]
      %v6049 = vld [vmem:[%s8 + $0x8] sm:$0xf]
      %v6050 = vld [vmem:[%s8 + $0xc] sm:$0xf]
      %v6051 = vld [vmem:[%s8 + $0x10] sm:$0xf]
      %v6052 = vld [vmem:[%s8 + $0x14] sm:$0xf]
      %v6053 = vld [vmem:[%s8 + $0x18] sm:$0xf]
      %v6054 = vld [vmem:[%s8 + $0x1c] sm:$0xf]
      %v6055 = vld [vmem:[%s8 + $0x20] sm:$0xf]
      %v6056 = vld [vmem:[%s8 + $0x24] sm:$0xf]
      %v6057 = vld [vmem:[%s8 + $0x28] sm:$0xf]
      %v6058 = vld [vmem:[%s8 + $0x2c] sm:$0xf]
      %v6059 = vld [vmem:[%s8 + $0x30] sm:$0xf]
      %v6060 = vld [vmem:[%s8 + $0x34] sm:$0xf]
      %v6061 = vld [vmem:[%s8 + $0x38] sm:$0xf]
      %v6062 = vld [vmem:[%s8 + $0x3c] sm:$0xf]
      %v6063 = vld [vmem:[%s9] sm:$0x1]
      %v6065 = vperm.slane %v6063, 0
      %v6083 = vunpack.c.l.b16 %v6031
      %v6084 = vunpack.c.l.b16 %v6032
      %v6085 = vunpack.c.l.b16 %v6033
      %v6086 = vunpack.c.l.b16 %v6034
      %v6087 = vunpack.c.l.b16 %v6035
      %v6088 = vunpack.c.l.b16 %v6036
      %v6089 = vunpack.c.l.b16 %v6037
      %v6090 = vunpack.c.l.b16 %v6038
      %v6091 = vunpack.c.l.b16 %v6039
      %v6092 = vunpack.c.l.b16 %v6040
      %v6093 = vunpack.c.l.b16 %v6041
      %v6094 = vunpack.c.l.b16 %v6042
      %v6095 = vunpack.c.l.b16 %v6043
      %v6096 = vunpack.c.l.b16 %v6044
      %v6097 = vunpack.c.l.b16 %v6045
      %v6098 = vunpack.c.l.b16 %v6046
      %v6099 = vpack.c.b16 %v6084, %v6083
      %v6100 = vpack.c.b16 %v6086, %v6085
      %v6101 = vpack.c.b16 %v6088, %v6087
      %v6102 = vpack.c.b16 %v6090, %v6089
      %v6103 = vpack.c.b16 %v6092, %v6091
      %v6104 = vpack.c.b16 %v6094, %v6093
      %v6105 = vpack.c.b16 %v6096, %v6095
      %v6106 = vpack.c.b16 %v6098, %v6097
      %v6131 = vunpack.c.l.b16 %v6047
      %v6132 = vunpack.c.l.b16 %v6048
      %v6133 = vunpack.c.l.b16 %v6049
      %v6134 = vunpack.c.l.b16 %v6050
      %v6135 = vunpack.c.l.b16 %v6051
      %v6136 = vunpack.c.l.b16 %v6052
      %v6137 = vunpack.c.l.b16 %v6053
      %v6138 = vunpack.c.l.b16 %v6054
      %v6139 = vunpack.c.l.b16 %v6055
      %v6140 = vunpack.c.l.b16 %v6056
      %v6141 = vunpack.c.l.b16 %v6057
      %v6142 = vunpack.c.l.b16 %v6058
      %v6143 = vunpack.c.l.b16 %v6059
      %v6144 = vunpack.c.l.b16 %v6060
      %v6145 = vunpack.c.l.b16 %v6061
      %v6146 = vunpack.c.l.b16 %v6062
      %v6147 = vpack.c.b16 %v6132, %v6131
      %v6148 = vpack.c.b16 %v6134, %v6133
      %v6149 = vpack.c.b16 %v6136, %v6135
      %v6150 = vpack.c.b16 %v6138, %v6137
      %v6151 = vpack.c.b16 %v6140, %v6139
      %v6152 = vpack.c.b16 %v6142, %v6141
      %v6153 = vpack.c.b16 %v6144, %v6143
      %v6154 = vpack.c.b16 %v6146, %v6145
      %6163 = vmatpush.bf16.msra.mxu0 %v6154
      %6164 = vmatpush.bf16.msra.mxu0 %v6153
      %6165 = vmatpush.bf16.msra.mxu0 %v6152
      %6166 = vmatpush.bf16.msra.mxu0 %v6151
      %6167 = vmatpush.bf16.msra.mxu0 %v6150
      %6168 = vmatpush.bf16.msra.mxu0 %v6149
      %6169 = vmatpush.bf16.msra.mxu0 %v6148
      %6170 = vmatpush.bf16.msra.mxu0 %v6147
      %6171 = vmatmul.bf16.gmra.mxu0 %v6099
      %v6172 = vpop.f32.mrf.mxu0
      %v6173 = vadd.f32 %v6065, %v6172
      %v6174 = vpop.f32.mrf.mxu0
      %v6175 = vadd.f32 %v6065, %v6174
      %6176 = vmatmul.bf16.gmra.mxu0 %v6100
      %v6177 = vpop.f32.mrf.mxu0
      %v6178 = vadd.f32 %v6065, %v6177
      %v6179 = vpop.f32.mrf.mxu0
      %v6180 = vadd.f32 %v6065, %v6179
      %6181 = vmatmul.bf16.gmra.mxu0 %v6101
      %v6182 = vpop.f32.mrf.mxu0
      %v6183 = vadd.f32 %v6065, %v6182
      %v6184 = vpop.f32.mrf.mxu0
      %v6185 = vadd.f32 %v6065, %v6184
      %6186 = vmatmul.bf16.gmra.mxu0 %v6102
      %v6187 = vpop.f32.mrf.mxu0
      %v6188 = vadd.f32 %v6065, %v6187
      %v6189 = vpop.f32.mrf.mxu0
      %v6190 = vadd.f32 %v6065, %v6189
      %6191 = vmatmul.bf16.gmra.mxu0 %v6103
      %v6192 = vpop.f32.mrf.mxu0
      %v6193 = vadd.f32 %v6065, %v6192
      %v6194 = vpop.f32.mrf.mxu0
      %v6195 = vadd.f32 %v6065, %v6194
      %6196 = vmatmul.bf16.gmra.mxu0 %v6104
      %v6197 = vpop.f32.mrf.mxu0
      %v6198 = vadd.f32 %v6065, %v6197
      %v6199 = vpop.f32.mrf.mxu0
      %v6200 = vadd.f32 %v6065, %v6199
      %6201 = vmatmul.bf16.gmra.mxu0 %v6105
      %v6202 = vpop.f32.mrf.mxu0
      %v6203 = vadd.f32 %v6065, %v6202
      %v6204 = vpop.f32.mrf.mxu0
      %v6205 = vadd.f32 %v6065, %v6204
      %6206 = vmatmul.bf16.gmra.mxu0 %v6106
      %v6207 = vpop.f32.mrf.mxu0
      %v6208 = vadd.f32 %v6065, %v6207
      %v6209 = vpop.f32.mrf.mxu0
      %v6210 = vadd.f32 %v6065, %v6209
      %6211 = vdwg.mxu0
      %v6212 = vadd.f32 %v5992, %v6173
      %v6213 = vadd.f32 %v5994, %v6175
      %v6214 = vadd.f32 %v5997, %v6178
      %v6215 = vadd.f32 %v5999, %v6180
      %v6216 = vadd.f32 %v6002, %v6183
      %v6217 = vadd.f32 %v6004, %v6185
      %v6218 = vadd.f32 %v6007, %v6188
      %v6219 = vadd.f32 %v6009, %v6190
      %v6220 = vadd.f32 %v6012, %v6193
      %v6221 = vadd.f32 %v6014, %v6195
      %v6222 = vadd.f32 %v6017, %v6198
      %v6223 = vadd.f32 %v6019, %v6200
      %v6224 = vadd.f32 %v6022, %v6203
      %v6225 = vadd.f32 %v6024, %v6205
      %v6226 = vadd.f32 %v6027, %v6208
      %v6227 = vadd.f32 %v6029, %v6210
      %v6228 = vmax.f32 %v6212, 0.0
      %v6229 = vmax.f32 %v6213, 0.0
      %v6230 = vmax.f32 %v6214, 0.0
      %v6231 = vmax.f32 %v6215, 0.0
      %v6232 = vmax.f32 %v6216, 0.0
      %v6233 = vmax.f32 %v6217, 0.0
      %v6234 = vmax.f32 %v6218, 0.0
      %v6235 = vmax.f32 %v6219, 0.0
      %v6236 = vmax.f32 %v6220, 0.0
      %v6237 = vmax.f32 %v6221, 0.0
      %v6238 = vmax.f32 %v6222, 0.0
      %v6239 = vmax.f32 %v6223, 0.0
      %v6240 = vmax.f32 %v6224, 0.0
      %v6241 = vmax.f32 %v6225, 0.0
      %v6242 = vmax.f32 %v6226, 0.0
      %v6243 = vmax.f32 %v6227, 0.0
      %v6244 = vpack.c.bf16 %v6228, %v6228
      %v6245 = vpack.c.bf16 %v6229, %v6229
      %v6246 = vpack.c.bf16 %v6230, %v6230
      %v6247 = vpack.c.bf16 %v6231, %v6231
      %v6248 = vpack.c.bf16 %v6232, %v6232
      %v6249 = vpack.c.bf16 %v6233, %v6233
      %v6250 = vpack.c.bf16 %v6234, %v6234
      %v6251 = vpack.c.bf16 %v6235, %v6235
      %v6252 = vpack.c.bf16 %v6236, %v6236
      %v6253 = vpack.c.bf16 %v6237, %v6237
      %v6254 = vpack.c.bf16 %v6238, %v6238
      %v6255 = vpack.c.bf16 %v6239, %v6239
      %v6256 = vpack.c.bf16 %v6240, %v6240
      %v6257 = vpack.c.bf16 %v6241, %v6241
      %v6258 = vpack.c.bf16 %v6242, %v6242
      %v6259 = vpack.c.bf16 %v6243, %v6243
      %6260 = vst [vmem:[%s359 + $0x40] sm:$0xf] %v6244
      %6261 = vst [vmem:[%s359 + $0x44] sm:$0xf] %v6245
      %6262 = vst [vmem:[%s359 + $0x48] sm:$0xf] %v6246
      %6263 = vst [vmem:[%s359 + $0x4c] sm:$0xf] %v6247
      %6264 = vst [vmem:[%s359 + $0x50] sm:$0xf] %v6248
      %6265 = vst [vmem:[%s359 + $0x54] sm:$0xf] %v6249
      %6266 = vst [vmem:[%s359 + $0x58] sm:$0xf] %v6250
      %6267 = vst [vmem:[%s359 + $0x5c] sm:$0xf] %v6251
      %6268 = vst [vmem:[%s359 + $0x60] sm:$0xf] %v6252
      %6269 = vst [vmem:[%s359 + $0x64] sm:$0xf] %v6253
      %6270 = vst [vmem:[%s359 + $0x68] sm:$0xf] %v6254
      %6271 = vst [vmem:[%s359 + $0x6c] sm:$0xf] %v6255
      %6272 = vst [vmem:[%s359 + $0x70] sm:$0xf] %v6256
      %6273 = vst [vmem:[%s359 + $0x74] sm:$0xf] %v6257
      %6274 = vst [vmem:[%s359 + $0x78] sm:$0xf] %v6258
      %6275 = vst [vmem:[%s359 + $0x7c] sm:$0xf] %v6259
      %v6276 = vld [vmem:[#allocation2 + $0x88] sm:$0x8]
      %v6277 = vld [vmem:[#allocation2 + $0x8c] sm:$0xf]
      %v6278 = vld [vmem:[#allocation2 + $0x90] sm:$0xf]
      %v6279 = vld [vmem:[#allocation2 + $0x94] sm:$0xf]
      %v6280 = vld [vmem:[#allocation2 + $0x98] sm:$0xf]
      %v6281 = vld [vmem:[#allocation2 + $0x9c] sm:$0xf]
      %v6282 = vld [vmem:[#allocation2 + $0xa0] sm:$0xf]
      %v6283 = vld [vmem:[#allocation2 + $0xa4] sm:$0xf]
      %v6284 = vld [vmem:[#allocation2 + $0xa8] sm:$0xf]
      %v6285 = vld [vmem:[#allocation2 + $0xac] sm:$0xf]
      %v6286 = vld [vmem:[#allocation2 + $0xb0] sm:$0xf]
      %v6287 = vld [vmem:[#allocation2 + $0xb4] sm:$0xf]
      %v6288 = vld [vmem:[#allocation2 + $0xb8] sm:$0xf]
      %v6289 = vld [vmem:[#allocation2 + $0xbc] sm:$0xf]
      %v6290 = vld [vmem:[#allocation2 + $0xc0] sm:$0xf]
      %v6291 = vld [vmem:[#allocation2 + $0xc4] sm:$0xf]
      %v6292 = vld [vmem:[#allocation2 + $0xc8] sm:$0xf]
      %v6293 = vld [vmem:[%s4] sm:$0xf]
      %v6294 = vld [vmem:[%s4 + $0x4] sm:$0xf]
      %v6295 = vld [vmem:[%s4 + $0x8] sm:$0xf]
      %v6296 = vld [vmem:[%s4 + $0xc] sm:$0xf]
      %v6297 = vld [vmem:[%s4 + $0x10] sm:$0xf]
      %v6298 = vld [vmem:[%s4 + $0x14] sm:$0xf]
      %v6299 = vld [vmem:[%s4 + $0x18] sm:$0xf]
      %v6300 = vld [vmem:[%s4 + $0x1c] sm:$0xf]
      %v6301 = vld [vmem:[%s4 + $0x20] sm:$0xf]
      %v6302 = vld [vmem:[%s4 + $0x24] sm:$0xf]
      %v6303 = vld [vmem:[%s4 + $0x28] sm:$0xf]
      %v6304 = vld [vmem:[%s4 + $0x2c] sm:$0xf]
      %v6305 = vld [vmem:[%s4 + $0x30] sm:$0xf]
      %v6306 = vld [vmem:[%s4 + $0x34] sm:$0xf]
      %v6307 = vld [vmem:[%s4 + $0x38] sm:$0xf]
      %v6308 = vld [vmem:[%s4 + $0x3c] sm:$0xf]
      %v6309 = vld [vmem:[%s1429] sm:$0xf]
      %v6310 = vld [vmem:[%s1429 + $0x4] sm:$0xf]
      %v6311 = vld [vmem:[%s1429 + $0x8] sm:$0xf]
      %v6312 = vld [vmem:[%s1429 + $0xc] sm:$0xf]
      %v6313 = vld [vmem:[%s1429 + $0x10] sm:$0xf]
      %v6314 = vld [vmem:[%s1429 + $0x14] sm:$0xf]
      %v6315 = vld [vmem:[%s1429 + $0x18] sm:$0xf]
      %v6316 = vld [vmem:[%s1429 + $0x1c] sm:$0xf]
      %v6317 = vld [vmem:[%s1429 + $0x20] sm:$0xf]
      %v6318 = vld [vmem:[%s1429 + $0x24] sm:$0xf]
      %v6319 = vld [vmem:[%s1429 + $0x28] sm:$0xf]
      %v6320 = vld [vmem:[%s1429 + $0x2c] sm:$0xf]
      %v6321 = vld [vmem:[%s1429 + $0x30] sm:$0xf]
      %v6322 = vld [vmem:[%s1429 + $0x34] sm:$0xf]
      %v6323 = vld [vmem:[%s1429 + $0x38] sm:$0xf]
      %v6324 = vld [vmem:[%s1429 + $0x3c] sm:$0xf]
      %v6341 = vunpack.c.l.b16 %v6277
      %v6342 = vunpack.c.l.b16 %v6278
      %v6343 = vunpack.c.l.b16 %v6279
      %v6344 = vunpack.c.l.b16 %v6280
      %v6345 = vunpack.c.l.b16 %v6281
      %v6346 = vunpack.c.l.b16 %v6282
      %v6347 = vunpack.c.l.b16 %v6283
      %v6348 = vunpack.c.l.b16 %v6284
      %v6349 = vunpack.c.l.b16 %v6285
      %v6350 = vunpack.c.l.b16 %v6286
      %v6351 = vunpack.c.l.b16 %v6287
      %v6352 = vunpack.c.l.b16 %v6288
      %v6353 = vunpack.c.l.b16 %v6289
      %v6354 = vunpack.c.l.b16 %v6290
      %v6355 = vunpack.c.l.b16 %v6291
      %v6356 = vunpack.c.l.b16 %v6292
      %v6357 = vpack.c.b16 %v6342, %v6341
      %v6358 = vpack.c.b16 %v6344, %v6343
      %v6359 = vpack.c.b16 %v6346, %v6345
      %v6360 = vpack.c.b16 %v6348, %v6347
      %v6361 = vpack.c.b16 %v6350, %v6349
      %v6362 = vpack.c.b16 %v6352, %v6351
      %v6363 = vpack.c.b16 %v6354, %v6353
      %v6364 = vpack.c.b16 %v6356, %v6355
      %v6389 = vunpack.c.l.b16 %v6309
      %v6390 = vunpack.c.l.b16 %v6310
      %v6391 = vunpack.c.l.b16 %v6311
      %v6392 = vunpack.c.l.b16 %v6312
      %v6393 = vunpack.c.l.b16 %v6313
      %v6394 = vunpack.c.l.b16 %v6314
      %v6395 = vunpack.c.l.b16 %v6315
      %v6396 = vunpack.c.l.b16 %v6316
      %v6397 = vunpack.c.l.b16 %v6317
      %v6398 = vunpack.c.l.b16 %v6318
      %v6399 = vunpack.c.l.b16 %v6319
      %v6400 = vunpack.c.l.b16 %v6320
      %v6401 = vunpack.c.l.b16 %v6321
      %v6402 = vunpack.c.l.b16 %v6322
      %v6403 = vunpack.c.l.b16 %v6323
      %v6404 = vunpack.c.l.b16 %v6324
      %v6405 = vpack.c.b16 %v6390, %v6389
      %v6406 = vpack.c.b16 %v6392, %v6391
      %v6407 = vpack.c.b16 %v6394, %v6393
      %v6408 = vpack.c.b16 %v6396, %v6395
      %v6409 = vpack.c.b16 %v6398, %v6397
      %v6410 = vpack.c.b16 %v6400, %v6399
      %v6411 = vpack.c.b16 %v6402, %v6401
      %v6412 = vpack.c.b16 %v6404, %v6403
      %6421 = vmatpush.bf16.msra.mxu0 %v6412
      %6422 = vmatpush.bf16.msra.mxu0 %v6411
      %6423 = vmatpush.bf16.msra.mxu0 %v6410
      %6424 = vmatpush.bf16.msra.mxu0 %v6409
      %6425 = vmatpush.bf16.msra.mxu0 %v6408
      %6426 = vmatpush.bf16.msra.mxu0 %v6407
      %6427 = vmatpush.bf16.msra.mxu0 %v6406
      %6428 = vmatpush.bf16.msra.mxu0 %v6405
      %6429 = vmatmul.bf16.gmra.mxu0 %v6357
      %v6430 = vpop.f32.mrf.mxu0
      %v6431 = vadd.f32 0.0, %v6430
      %v6432 = vpop.f32.mrf.mxu0
      %v6433 = vadd.f32 0.0, %v6432
      %6434 = vmatmul.bf16.gmra.mxu0 %v6358
      %v6435 = vpop.f32.mrf.mxu0
      %v6436 = vadd.f32 0.0, %v6435
      %v6437 = vpop.f32.mrf.mxu0
      %v6438 = vadd.f32 0.0, %v6437
      %6439 = vmatmul.bf16.gmra.mxu0 %v6359
      %v6440 = vpop.f32.mrf.mxu0
      %v6441 = vadd.f32 0.0, %v6440
      %v6442 = vpop.f32.mrf.mxu0
      %v6443 = vadd.f32 0.0, %v6442
      %6444 = vmatmul.bf16.gmra.mxu0 %v6360
      %v6445 = vpop.f32.mrf.mxu0
      %v6446 = vadd.f32 0.0, %v6445
      %v6447 = vpop.f32.mrf.mxu0
      %v6448 = vadd.f32 0.0, %v6447
      %6449 = vmatmul.bf16.gmra.mxu0 %v6361
      %v6450 = vpop.f32.mrf.mxu0
      %v6451 = vadd.f32 0.0, %v6450
      %v6452 = vpop.f32.mrf.mxu0
      %v6453 = vadd.f32 0.0, %v6452
      %6454 = vmatmul.bf16.gmra.mxu0 %v6362
      %v6455 = vpop.f32.mrf.mxu0
      %v6456 = vadd.f32 0.0, %v6455
      %v6457 = vpop.f32.mrf.mxu0
      %v6458 = vadd.f32 0.0, %v6457
      %6459 = vmatmul.bf16.gmra.mxu0 %v6363
      %v6460 = vpop.f32.mrf.mxu0
      %v6461 = vadd.f32 0.0, %v6460
      %v6462 = vpop.f32.mrf.mxu0
      %v6463 = vadd.f32 0.0, %v6462
      %6464 = vmatmul.bf16.gmra.mxu0 %v6364
      %v6465 = vpop.f32.mrf.mxu0
      %v6466 = vadd.f32 0.0, %v6465
      %v6467 = vpop.f32.mrf.mxu0
      %v6468 = vadd.f32 0.0, %v6467
      %6469 = vdwg.mxu0
      %v6471 = vunpack.c.l.b16 %v6276
      %v6472 = vpack.c.b16 %v6341, %v6471
      %v6473 = vpack.c.b16 %v6343, %v6342
      %v6474 = vpack.c.b16 %v6345, %v6344
      %v6475 = vpack.c.b16 %v6347, %v6346
      %v6476 = vpack.c.b16 %v6349, %v6348
      %v6477 = vpack.c.b16 %v6351, %v6350
      %v6478 = vpack.c.b16 %v6353, %v6352
      %v6479 = vpack.c.b16 %v6355, %v6354
      %v6480 = vpack.c.b16 %v6356, %v6356
      %v6482 = vshrl.u32 %v6472, 16
      %v6484 = vrot.slane %v6482, 3
      %v6485 = vshll.u32 %v6472, 16
      %v6487 = vrot.slane %v6485, 4
      %v6488 = vor.u32 %v6484, %v6487
      %v6490 = vshrl.u32 %v6473, 16
      %v6492 = vrot.slane %v6490, 3
      %v6493 = vshll.u32 %v6473, 16
      %v6495 = vrot.slane %v6493, 4
      %v6496 = vor.u32 %v6492, %v6495
      %v6497 = vsel %vm1602, %v6488, %v6496
      %v6499 = vshrl.u32 %v6474, 16
      %v6501 = vrot.slane %v6499, 3
      %v6502 = vshll.u32 %v6474, 16
      %v6504 = vrot.slane %v6502, 4
      %v6505 = vor.u32 %v6501, %v6504
      %v6506 = vsel %vm1602, %v6496, %v6505
      %v6508 = vshrl.u32 %v6475, 16
      %v6510 = vrot.slane %v6508, 3
      %v6511 = vshll.u32 %v6475, 16
      %v6513 = vrot.slane %v6511, 4
      %v6514 = vor.u32 %v6510, %v6513
      %v6515 = vsel %vm1602, %v6505, %v6514
      %v6517 = vshrl.u32 %v6476, 16
      %v6519 = vrot.slane %v6517, 3
      %v6520 = vshll.u32 %v6476, 16
      %v6522 = vrot.slane %v6520, 4
      %v6523 = vor.u32 %v6519, %v6522
      %v6524 = vsel %vm1602, %v6514, %v6523
      %v6526 = vshrl.u32 %v6477, 16
      %v6528 = vrot.slane %v6526, 3
      %v6529 = vshll.u32 %v6477, 16
      %v6531 = vrot.slane %v6529, 4
      %v6532 = vor.u32 %v6528, %v6531
      %v6533 = vsel %vm1602, %v6523, %v6532
      %v6535 = vshrl.u32 %v6478, 16
      %v6537 = vrot.slane %v6535, 3
      %v6538 = vshll.u32 %v6478, 16
      %v6540 = vrot.slane %v6538, 4
      %v6541 = vor.u32 %v6537, %v6540
      %v6542 = vsel %vm1602, %v6532, %v6541
      %v6544 = vshrl.u32 %v6479, 16
      %v6546 = vrot.slane %v6544, 3
      %v6547 = vshll.u32 %v6479, 16
      %v6549 = vrot.slane %v6547, 4
      %v6550 = vor.u32 %v6546, %v6549
      %v6551 = vsel %vm1602, %v6541, %v6550
      %v6553 = vshrl.u32 %v6480, 16
      %v6555 = vrot.slane %v6553, 3
      %v6556 = vshll.u32 %v6480, 16
      %v6558 = vrot.slane %v6556, 4
      %v6559 = vor.u32 %v6555, %v6558
      %v6560 = vsel %vm1602, %v6550, %v6559
      %v6585 = vunpack.c.l.b16 %v6293
      %v6586 = vunpack.c.l.b16 %v6294
      %v6587 = vunpack.c.l.b16 %v6295
      %v6588 = vunpack.c.l.b16 %v6296
      %v6589 = vunpack.c.l.b16 %v6297
      %v6590 = vunpack.c.l.b16 %v6298
      %v6591 = vunpack.c.l.b16 %v6299
      %v6592 = vunpack.c.l.b16 %v6300
      %v6593 = vunpack.c.l.b16 %v6301
      %v6594 = vunpack.c.l.b16 %v6302
      %v6595 = vunpack.c.l.b16 %v6303
      %v6596 = vunpack.c.l.b16 %v6304
      %v6597 = vunpack.c.l.b16 %v6305
      %v6598 = vunpack.c.l.b16 %v6306
      %v6599 = vunpack.c.l.b16 %v6307
      %v6600 = vunpack.c.l.b16 %v6308
      %v6601 = vpack.c.b16 %v6586, %v6585
      %v6602 = vpack.c.b16 %v6588, %v6587
      %v6603 = vpack.c.b16 %v6590, %v6589
      %v6604 = vpack.c.b16 %v6592, %v6591
      %v6605 = vpack.c.b16 %v6594, %v6593
      %v6606 = vpack.c.b16 %v6596, %v6595
      %v6607 = vpack.c.b16 %v6598, %v6597
      %v6608 = vpack.c.b16 %v6600, %v6599
      %6617 = vmatpush.bf16.msra.mxu0 %v6608
      %6618 = vmatpush.bf16.msra.mxu0 %v6607
      %6619 = vmatpush.bf16.msra.mxu0 %v6606
      %6620 = vmatpush.bf16.msra.mxu0 %v6605
      %6621 = vmatpush.bf16.msra.mxu0 %v6604
      %6622 = vmatpush.bf16.msra.mxu0 %v6603
      %6623 = vmatpush.bf16.msra.mxu0 %v6602
      %6624 = vmatpush.bf16.msra.mxu0 %v6601
      %6625 = vmatmul.bf16.gmra.mxu0 %v6497
      %v6626 = vpop.f32.mrf.mxu0
      %v6627 = vadd.f32 %v6431, %v6626
      %v6628 = vpop.f32.mrf.mxu0
      %v6629 = vadd.f32 %v6433, %v6628
      %6630 = vmatmul.bf16.gmra.mxu0 %v6506
      %v6631 = vpop.f32.mrf.mxu0
      %v6632 = vadd.f32 %v6436, %v6631
      %v6633 = vpop.f32.mrf.mxu0
      %v6634 = vadd.f32 %v6438, %v6633
      %6635 = vmatmul.bf16.gmra.mxu0 %v6515
      %v6636 = vpop.f32.mrf.mxu0
      %v6637 = vadd.f32 %v6441, %v6636
      %v6638 = vpop.f32.mrf.mxu0
      %v6639 = vadd.f32 %v6443, %v6638
      %6640 = vmatmul.bf16.gmra.mxu0 %v6524
      %v6641 = vpop.f32.mrf.mxu0
      %v6642 = vadd.f32 %v6446, %v6641
      %v6643 = vpop.f32.mrf.mxu0
      %v6644 = vadd.f32 %v6448, %v6643
      %6645 = vmatmul.bf16.gmra.mxu0 %v6533
      %v6646 = vpop.f32.mrf.mxu0
      %v6647 = vadd.f32 %v6451, %v6646
      %v6648 = vpop.f32.mrf.mxu0
      %v6649 = vadd.f32 %v6453, %v6648
      %6650 = vmatmul.bf16.gmra.mxu0 %v6542
      %v6651 = vpop.f32.mrf.mxu0
      %v6652 = vadd.f32 %v6456, %v6651
      %v6653 = vpop.f32.mrf.mxu0
      %v6654 = vadd.f32 %v6458, %v6653
      %6655 = vmatmul.bf16.gmra.mxu0 %v6551
      %v6656 = vpop.f32.mrf.mxu0
      %v6657 = vadd.f32 %v6461, %v6656
      %v6658 = vpop.f32.mrf.mxu0
      %v6659 = vadd.f32 %v6463, %v6658
      %6660 = vmatmul.bf16.gmra.mxu0 %v6560
      %v6661 = vpop.f32.mrf.mxu0
      %v6662 = vadd.f32 %v6466, %v6661
      %v6663 = vpop.f32.mrf.mxu0
      %v6664 = vadd.f32 %v6468, %v6663
      %6665 = vdwg.mxu0
      %v6666 = vld [vmem:[#allocation2 + $0x8c] sm:$0xf]
      %v6667 = vld [vmem:[#allocation2 + $0x90] sm:$0xf]
      %v6668 = vld [vmem:[#allocation2 + $0x94] sm:$0xf]
      %v6669 = vld [vmem:[#allocation2 + $0x98] sm:$0xf]
      %v6670 = vld [vmem:[#allocation2 + $0x9c] sm:$0xf]
      %v6671 = vld [vmem:[#allocation2 + $0xa0] sm:$0xf]
      %v6672 = vld [vmem:[#allocation2 + $0xa4] sm:$0xf]
      %v6673 = vld [vmem:[#allocation2 + $0xa8] sm:$0xf]
      %v6674 = vld [vmem:[#allocation2 + $0xac] sm:$0xf]
      %v6675 = vld [vmem:[#allocation2 + $0xb0] sm:$0xf]
      %v6676 = vld [vmem:[#allocation2 + $0xb4] sm:$0xf]
      %v6677 = vld [vmem:[#allocation2 + $0xb8] sm:$0xf]
      %v6678 = vld [vmem:[#allocation2 + $0xbc] sm:$0xf]
      %v6679 = vld [vmem:[#allocation2 + $0xc0] sm:$0xf]
      %v6680 = vld [vmem:[#allocation2 + $0xc4] sm:$0xf]
      %v6681 = vld [vmem:[#allocation2 + $0xc8] sm:$0xf]
      %v6682 = vld [vmem:[#allocation2 + $0xcc] sm:$0x1]
      %v6683 = vld [vmem:[%s1805] sm:$0xf]
      %v6684 = vld [vmem:[%s1805 + $0x4] sm:$0xf]
      %v6685 = vld [vmem:[%s1805 + $0x8] sm:$0xf]
      %v6686 = vld [vmem:[%s1805 + $0xc] sm:$0xf]
      %v6687 = vld [vmem:[%s1805 + $0x10] sm:$0xf]
      %v6688 = vld [vmem:[%s1805 + $0x14] sm:$0xf]
      %v6689 = vld [vmem:[%s1805 + $0x18] sm:$0xf]
      %v6690 = vld [vmem:[%s1805 + $0x1c] sm:$0xf]
      %v6691 = vld [vmem:[%s1805 + $0x20] sm:$0xf]
      %v6692 = vld [vmem:[%s1805 + $0x24] sm:$0xf]
      %v6693 = vld [vmem:[%s1805 + $0x28] sm:$0xf]
      %v6694 = vld [vmem:[%s1805 + $0x2c] sm:$0xf]
      %v6695 = vld [vmem:[%s1805 + $0x30] sm:$0xf]
      %v6696 = vld [vmem:[%s1805 + $0x34] sm:$0xf]
      %v6697 = vld [vmem:[%s1805 + $0x38] sm:$0xf]
      %v6698 = vld [vmem:[%s1805 + $0x3c] sm:$0xf]
      %v6716 = vunpack.c.l.b16 %v6666
      %v6717 = vunpack.c.l.b16 %v6667
      %v6718 = vunpack.c.l.b16 %v6668
      %v6719 = vunpack.c.l.b16 %v6669
      %v6720 = vunpack.c.l.b16 %v6670
      %v6721 = vunpack.c.l.b16 %v6671
      %v6722 = vunpack.c.l.b16 %v6672
      %v6723 = vunpack.c.l.b16 %v6673
      %v6724 = vunpack.c.l.b16 %v6674
      %v6725 = vunpack.c.l.b16 %v6675
      %v6726 = vunpack.c.l.b16 %v6676
      %v6727 = vunpack.c.l.b16 %v6677
      %v6728 = vunpack.c.l.b16 %v6678
      %v6729 = vunpack.c.l.b16 %v6679
      %v6730 = vunpack.c.l.b16 %v6680
      %v6731 = vunpack.c.l.b16 %v6681
      %v6732 = vunpack.c.l.b16 %v6682
      %v6733 = vpack.c.b16 %v6717, %v6716
      %v6734 = vpack.c.b16 %v6719, %v6718
      %v6735 = vpack.c.b16 %v6721, %v6720
      %v6736 = vpack.c.b16 %v6723, %v6722
      %v6737 = vpack.c.b16 %v6725, %v6724
      %v6738 = vpack.c.b16 %v6727, %v6726
      %v6739 = vpack.c.b16 %v6729, %v6728
      %v6740 = vpack.c.b16 %v6731, %v6730
      %v6741 = vpack.c.b16 %v6732, %v6732
      %v6743 = vshrl.u32 %v6733, 16
      %v6745 = vshll.u32 %v6733, 16
      %v6747 = vrot.slane %v6745, 1
      %v6748 = vor.u32 %v6743, %v6747
      %v6750 = vshll.u32 %v6734, 16
      %v6752 = vrot.slane %v6750, 1
      %v6753 = vsel %vm1865, %v6748, %v6752
      %v6754 = vshrl.u32 %v6734, 16
      %v6756 = vor.u32 %v6754, %v6752
      %v6758 = vshll.u32 %v6735, 16
      %v6760 = vrot.slane %v6758, 1
      %v6761 = vsel %vm1865, %v6756, %v6760
      %v6762 = vshrl.u32 %v6735, 16
      %v6764 = vor.u32 %v6762, %v6760
      %v6766 = vshll.u32 %v6736, 16
      %v6768 = vrot.slane %v6766, 1
      %v6769 = vsel %vm1865, %v6764, %v6768
      %v6770 = vshrl.u32 %v6736, 16
      %v6772 = vor.u32 %v6770, %v6768
      %v6774 = vshll.u32 %v6737, 16
      %v6776 = vrot.slane %v6774, 1
      %v6777 = vsel %vm1865, %v6772, %v6776
      %v6778 = vshrl.u32 %v6737, 16
      %v6780 = vor.u32 %v6778, %v6776
      %v6782 = vshll.u32 %v6738, 16
      %v6784 = vrot.slane %v6782, 1
      %v6785 = vsel %vm1865, %v6780, %v6784
      %v6786 = vshrl.u32 %v6738, 16
      %v6788 = vor.u32 %v6786, %v6784
      %v6790 = vshll.u32 %v6739, 16
      %v6792 = vrot.slane %v6790, 1
      %v6793 = vsel %vm1865, %v6788, %v6792
      %v6794 = vshrl.u32 %v6739, 16
      %v6796 = vor.u32 %v6794, %v6792
      %v6798 = vshll.u32 %v6740, 16
      %v6800 = vrot.slane %v6798, 1
      %v6801 = vsel %vm1865, %v6796, %v6800
      %v6802 = vshrl.u32 %v6740, 16
      %v6804 = vor.u32 %v6802, %v6800
      %v6806 = vshll.u32 %v6741, 16
      %v6808 = vrot.slane %v6806, 1
      %v6809 = vsel %vm1865, %v6804, %v6808
      %v6834 = vunpack.c.l.b16 %v6683
      %v6835 = vunpack.c.l.b16 %v6684
      %v6836 = vunpack.c.l.b16 %v6685
      %v6837 = vunpack.c.l.b16 %v6686
      %v6838 = vunpack.c.l.b16 %v6687
      %v6839 = vunpack.c.l.b16 %v6688
      %v6840 = vunpack.c.l.b16 %v6689
      %v6841 = vunpack.c.l.b16 %v6690
      %v6842 = vunpack.c.l.b16 %v6691
      %v6843 = vunpack.c.l.b16 %v6692
      %v6844 = vunpack.c.l.b16 %v6693
      %v6845 = vunpack.c.l.b16 %v6694
      %v6846 = vunpack.c.l.b16 %v6695
      %v6847 = vunpack.c.l.b16 %v6696
      %v6848 = vunpack.c.l.b16 %v6697
      %v6849 = vunpack.c.l.b16 %v6698
      %v6850 = vpack.c.b16 %v6835, %v6834
      %v6851 = vpack.c.b16 %v6837, %v6836
      %v6852 = vpack.c.b16 %v6839, %v6838
      %v6853 = vpack.c.b16 %v6841, %v6840
      %v6854 = vpack.c.b16 %v6843, %v6842
      %v6855 = vpack.c.b16 %v6845, %v6844
      %v6856 = vpack.c.b16 %v6847, %v6846
      %v6857 = vpack.c.b16 %v6849, %v6848
      %6866 = vmatpush.bf16.msra.mxu0 %v6857
      %6867 = vmatpush.bf16.msra.mxu0 %v6856
      %6868 = vmatpush.bf16.msra.mxu0 %v6855
      %6869 = vmatpush.bf16.msra.mxu0 %v6854
      %6870 = vmatpush.bf16.msra.mxu0 %v6853
      %6871 = vmatpush.bf16.msra.mxu0 %v6852
      %6872 = vmatpush.bf16.msra.mxu0 %v6851
      %6873 = vmatpush.bf16.msra.mxu0 %v6850
      %6874 = vmatmul.bf16.gmra.mxu0 %v6753
      %v6875 = vpop.f32.mrf.mxu0
      %v6876 = vadd.f32 0.0, %v6875
      %v6877 = vpop.f32.mrf.mxu0
      %v6878 = vadd.f32 0.0, %v6877
      %6879 = vmatmul.bf16.gmra.mxu0 %v6761
      %v6880 = vpop.f32.mrf.mxu0
      %v6881 = vadd.f32 0.0, %v6880
      %v6882 = vpop.f32.mrf.mxu0
      %v6883 = vadd.f32 0.0, %v6882
      %6884 = vmatmul.bf16.gmra.mxu0 %v6769
      %v6885 = vpop.f32.mrf.mxu0
      %v6886 = vadd.f32 0.0, %v6885
      %v6887 = vpop.f32.mrf.mxu0
      %v6888 = vadd.f32 0.0, %v6887
      %6889 = vmatmul.bf16.gmra.mxu0 %v6777
      %v6890 = vpop.f32.mrf.mxu0
      %v6891 = vadd.f32 0.0, %v6890
      %v6892 = vpop.f32.mrf.mxu0
      %v6893 = vadd.f32 0.0, %v6892
      %6894 = vmatmul.bf16.gmra.mxu0 %v6785
      %v6895 = vpop.f32.mrf.mxu0
      %v6896 = vadd.f32 0.0, %v6895
      %v6897 = vpop.f32.mrf.mxu0
      %v6898 = vadd.f32 0.0, %v6897
      %6899 = vmatmul.bf16.gmra.mxu0 %v6793
      %v6900 = vpop.f32.mrf.mxu0
      %v6901 = vadd.f32 0.0, %v6900
      %v6902 = vpop.f32.mrf.mxu0
      %v6903 = vadd.f32 0.0, %v6902
      %6904 = vmatmul.bf16.gmra.mxu0 %v6801
      %v6905 = vpop.f32.mrf.mxu0
      %v6906 = vadd.f32 0.0, %v6905
      %v6907 = vpop.f32.mrf.mxu0
      %v6908 = vadd.f32 0.0, %v6907
      %6909 = vmatmul.bf16.gmra.mxu0 %v6809
      %v6910 = vpop.f32.mrf.mxu0
      %v6911 = vadd.f32 0.0, %v6910
      %v6912 = vpop.f32.mrf.mxu0
      %v6913 = vadd.f32 0.0, %v6912
      %6914 = vdwg.mxu0
      %v6915 = vadd.f32 %v6627, %v6876
      %v6916 = vadd.f32 %v6629, %v6878
      %v6917 = vadd.f32 %v6632, %v6881
      %v6918 = vadd.f32 %v6634, %v6883
      %v6919 = vadd.f32 %v6637, %v6886
      %v6920 = vadd.f32 %v6639, %v6888
      %v6921 = vadd.f32 %v6642, %v6891
      %v6922 = vadd.f32 %v6644, %v6893
      %v6923 = vadd.f32 %v6647, %v6896
      %v6924 = vadd.f32 %v6649, %v6898
      %v6925 = vadd.f32 %v6652, %v6901
      %v6926 = vadd.f32 %v6654, %v6903
      %v6927 = vadd.f32 %v6657, %v6906
      %v6928 = vadd.f32 %v6659, %v6908
      %v6929 = vadd.f32 %v6662, %v6911
      %v6930 = vadd.f32 %v6664, %v6913
      %v6931 = vld [vmem:[#allocation2 + $0x94] sm:$0x8]
      %v6932 = vld [vmem:[#allocation2 + $0x98] sm:$0xf]
      %v6933 = vld [vmem:[#allocation2 + $0x9c] sm:$0xf]
      %v6934 = vld [vmem:[#allocation2 + $0xa0] sm:$0xf]
      %v6935 = vld [vmem:[#allocation2 + $0xa4] sm:$0xf]
      %v6936 = vld [vmem:[#allocation2 + $0xa8] sm:$0xf]
      %v6937 = vld [vmem:[#allocation2 + $0xac] sm:$0xf]
      %v6938 = vld [vmem:[#allocation2 + $0xb0] sm:$0xf]
      %v6939 = vld [vmem:[#allocation2 + $0xb4] sm:$0xf]
      %v6940 = vld [vmem:[#allocation2 + $0xb8] sm:$0xf]
      %v6941 = vld [vmem:[#allocation2 + $0xbc] sm:$0xf]
      %v6942 = vld [vmem:[#allocation2 + $0xc0] sm:$0xf]
      %v6943 = vld [vmem:[#allocation2 + $0xc4] sm:$0xf]
      %v6944 = vld [vmem:[#allocation2 + $0xc8] sm:$0xf]
      %v6945 = vld [vmem:[#allocation2 + $0xcc] sm:$0xf]
      %v6946 = vld [vmem:[#allocation2 + $0xd0] sm:$0xf]
      %v6947 = vld [vmem:[#allocation2 + $0xd4] sm:$0xf]
      %v6948 = vld [vmem:[%s2072] sm:$0xf]
      %v6949 = vld [vmem:[%s2072 + $0x4] sm:$0xf]
      %v6950 = vld [vmem:[%s2072 + $0x8] sm:$0xf]
      %v6951 = vld [vmem:[%s2072 + $0xc] sm:$0xf]
      %v6952 = vld [vmem:[%s2072 + $0x10] sm:$0xf]
      %v6953 = vld [vmem:[%s2072 + $0x14] sm:$0xf]
      %v6954 = vld [vmem:[%s2072 + $0x18] sm:$0xf]
      %v6955 = vld [vmem:[%s2072 + $0x1c] sm:$0xf]
      %v6956 = vld [vmem:[%s2072 + $0x20] sm:$0xf]
      %v6957 = vld [vmem:[%s2072 + $0x24] sm:$0xf]
      %v6958 = vld [vmem:[%s2072 + $0x28] sm:$0xf]
      %v6959 = vld [vmem:[%s2072 + $0x2c] sm:$0xf]
      %v6960 = vld [vmem:[%s2072 + $0x30] sm:$0xf]
      %v6961 = vld [vmem:[%s2072 + $0x34] sm:$0xf]
      %v6962 = vld [vmem:[%s2072 + $0x38] sm:$0xf]
      %v6963 = vld [vmem:[%s2072 + $0x3c] sm:$0xf]
      %v6981 = vunpack.c.l.b16 %v6931
      %v6982 = vunpack.c.l.b16 %v6932
      %v6983 = vunpack.c.l.b16 %v6933
      %v6984 = vunpack.c.l.b16 %v6934
      %v6985 = vunpack.c.l.b16 %v6935
      %v6986 = vunpack.c.l.b16 %v6936
      %v6987 = vunpack.c.l.b16 %v6937
      %v6988 = vunpack.c.l.b16 %v6938
      %v6989 = vunpack.c.l.b16 %v6939
      %v6990 = vunpack.c.l.b16 %v6940
      %v6991 = vunpack.c.l.b16 %v6941
      %v6992 = vunpack.c.l.b16 %v6942
      %v6993 = vunpack.c.l.b16 %v6943
      %v6994 = vunpack.c.l.b16 %v6944
      %v6995 = vunpack.c.l.b16 %v6945
      %v6996 = vunpack.c.l.b16 %v6946
      %v6997 = vunpack.c.l.b16 %v6947
      %v6998 = vpack.c.b16 %v6982, %v6981
      %v6999 = vpack.c.b16 %v6984, %v6983
      %v7000 = vpack.c.b16 %v6986, %v6985
      %v7001 = vpack.c.b16 %v6988, %v6987
      %v7002 = vpack.c.b16 %v6990, %v6989
      %v7003 = vpack.c.b16 %v6992, %v6991
      %v7004 = vpack.c.b16 %v6994, %v6993
      %v7005 = vpack.c.b16 %v6996, %v6995
      %v7006 = vpack.c.b16 %v6997, %v6997
      %v7008 = vshrl.u32 %v6998, 16
      %v7010 = vrot.slane %v7008, 3
      %v7011 = vshll.u32 %v6998, 16
      %v7013 = vrot.slane %v7011, 4
      %v7014 = vor.u32 %v7010, %v7013
      %v7016 = vshrl.u32 %v6999, 16
      %v7018 = vrot.slane %v7016, 3
      %v7019 = vshll.u32 %v6999, 16
      %v7021 = vrot.slane %v7019, 4
      %v7022 = vor.u32 %v7018, %v7021
      %v7023 = vsel %vm1602, %v7014, %v7022
      %v7025 = vshrl.u32 %v7000, 16
      %v7027 = vrot.slane %v7025, 3
      %v7028 = vshll.u32 %v7000, 16
      %v7030 = vrot.slane %v7028, 4
      %v7031 = vor.u32 %v7027, %v7030
      %v7032 = vsel %vm1602, %v7022, %v7031
      %v7034 = vshrl.u32 %v7001, 16
      %v7036 = vrot.slane %v7034, 3
      %v7037 = vshll.u32 %v7001, 16
      %v7039 = vrot.slane %v7037, 4
      %v7040 = vor.u32 %v7036, %v7039
      %v7041 = vsel %vm1602, %v7031, %v7040
      %v7043 = vshrl.u32 %v7002, 16
      %v7045 = vrot.slane %v7043, 3
      %v7046 = vshll.u32 %v7002, 16
      %v7048 = vrot.slane %v7046, 4
      %v7049 = vor.u32 %v7045, %v7048
      %v7050 = vsel %vm1602, %v7040, %v7049
      %v7052 = vshrl.u32 %v7003, 16
      %v7054 = vrot.slane %v7052, 3
      %v7055 = vshll.u32 %v7003, 16
      %v7057 = vrot.slane %v7055, 4
      %v7058 = vor.u32 %v7054, %v7057
      %v7059 = vsel %vm1602, %v7049, %v7058
      %v7061 = vshrl.u32 %v7004, 16
      %v7063 = vrot.slane %v7061, 3
      %v7064 = vshll.u32 %v7004, 16
      %v7066 = vrot.slane %v7064, 4
      %v7067 = vor.u32 %v7063, %v7066
      %v7068 = vsel %vm1602, %v7058, %v7067
      %v7070 = vshrl.u32 %v7005, 16
      %v7072 = vrot.slane %v7070, 3
      %v7073 = vshll.u32 %v7005, 16
      %v7075 = vrot.slane %v7073, 4
      %v7076 = vor.u32 %v7072, %v7075
      %v7077 = vsel %vm1602, %v7067, %v7076
      %v7079 = vshrl.u32 %v7006, 16
      %v7081 = vrot.slane %v7079, 3
      %v7082 = vshll.u32 %v7006, 16
      %v7084 = vrot.slane %v7082, 4
      %v7085 = vor.u32 %v7081, %v7084
      %v7086 = vsel %vm1602, %v7076, %v7085
      %v7111 = vunpack.c.l.b16 %v6948
      %v7112 = vunpack.c.l.b16 %v6949
      %v7113 = vunpack.c.l.b16 %v6950
      %v7114 = vunpack.c.l.b16 %v6951
      %v7115 = vunpack.c.l.b16 %v6952
      %v7116 = vunpack.c.l.b16 %v6953
      %v7117 = vunpack.c.l.b16 %v6954
      %v7118 = vunpack.c.l.b16 %v6955
      %v7119 = vunpack.c.l.b16 %v6956
      %v7120 = vunpack.c.l.b16 %v6957
      %v7121 = vunpack.c.l.b16 %v6958
      %v7122 = vunpack.c.l.b16 %v6959
      %v7123 = vunpack.c.l.b16 %v6960
      %v7124 = vunpack.c.l.b16 %v6961
      %v7125 = vunpack.c.l.b16 %v6962
      %v7126 = vunpack.c.l.b16 %v6963
      %v7127 = vpack.c.b16 %v7112, %v7111
      %v7128 = vpack.c.b16 %v7114, %v7113
      %v7129 = vpack.c.b16 %v7116, %v7115
      %v7130 = vpack.c.b16 %v7118, %v7117
      %v7131 = vpack.c.b16 %v7120, %v7119
      %v7132 = vpack.c.b16 %v7122, %v7121
      %v7133 = vpack.c.b16 %v7124, %v7123
      %v7134 = vpack.c.b16 %v7126, %v7125
      %7143 = vmatpush.bf16.msra.mxu0 %v7134
      %7144 = vmatpush.bf16.msra.mxu0 %v7133
      %7145 = vmatpush.bf16.msra.mxu0 %v7132
      %7146 = vmatpush.bf16.msra.mxu0 %v7131
      %7147 = vmatpush.bf16.msra.mxu0 %v7130
      %7148 = vmatpush.bf16.msra.mxu0 %v7129
      %7149 = vmatpush.bf16.msra.mxu0 %v7128
      %7150 = vmatpush.bf16.msra.mxu0 %v7127
      %7151 = vmatmul.bf16.gmra.mxu0 %v7023
      %v7152 = vpop.f32.mrf.mxu0
      %v7153 = vadd.f32 0.0, %v7152
      %v7154 = vpop.f32.mrf.mxu0
      %v7155 = vadd.f32 0.0, %v7154
      %7156 = vmatmul.bf16.gmra.mxu0 %v7032
      %v7157 = vpop.f32.mrf.mxu0
      %v7158 = vadd.f32 0.0, %v7157
      %v7159 = vpop.f32.mrf.mxu0
      %v7160 = vadd.f32 0.0, %v7159
      %7161 = vmatmul.bf16.gmra.mxu0 %v7041
      %v7162 = vpop.f32.mrf.mxu0
      %v7163 = vadd.f32 0.0, %v7162
      %v7164 = vpop.f32.mrf.mxu0
      %v7165 = vadd.f32 0.0, %v7164
      %7166 = vmatmul.bf16.gmra.mxu0 %v7050
      %v7167 = vpop.f32.mrf.mxu0
      %v7168 = vadd.f32 0.0, %v7167
      %v7169 = vpop.f32.mrf.mxu0
      %v7170 = vadd.f32 0.0, %v7169
      %7171 = vmatmul.bf16.gmra.mxu0 %v7059
      %v7172 = vpop.f32.mrf.mxu0
      %v7173 = vadd.f32 0.0, %v7172
      %v7174 = vpop.f32.mrf.mxu0
      %v7175 = vadd.f32 0.0, %v7174
      %7176 = vmatmul.bf16.gmra.mxu0 %v7068
      %v7177 = vpop.f32.mrf.mxu0
      %v7178 = vadd.f32 0.0, %v7177
      %v7179 = vpop.f32.mrf.mxu0
      %v7180 = vadd.f32 0.0, %v7179
      %7181 = vmatmul.bf16.gmra.mxu0 %v7077
      %v7182 = vpop.f32.mrf.mxu0
      %v7183 = vadd.f32 0.0, %v7182
      %v7184 = vpop.f32.mrf.mxu0
      %v7185 = vadd.f32 0.0, %v7184
      %7186 = vmatmul.bf16.gmra.mxu0 %v7086
      %v7187 = vpop.f32.mrf.mxu0
      %v7188 = vadd.f32 0.0, %v7187
      %v7189 = vpop.f32.mrf.mxu0
      %v7190 = vadd.f32 0.0, %v7189
      %7191 = vdwg.mxu0
      %v7192 = vadd.f32 %v6915, %v7153
      %v7193 = vadd.f32 %v6916, %v7155
      %v7194 = vadd.f32 %v6917, %v7158
      %v7195 = vadd.f32 %v6918, %v7160
      %v7196 = vadd.f32 %v6919, %v7163
      %v7197 = vadd.f32 %v6920, %v7165
      %v7198 = vadd.f32 %v6921, %v7168
      %v7199 = vadd.f32 %v6922, %v7170
      %v7200 = vadd.f32 %v6923, %v7173
      %v7201 = vadd.f32 %v6924, %v7175
      %v7202 = vadd.f32 %v6925, %v7178
      %v7203 = vadd.f32 %v6926, %v7180
      %v7204 = vadd.f32 %v6927, %v7183
      %v7205 = vadd.f32 %v6928, %v7185
      %v7206 = vadd.f32 %v6929, %v7188
      %v7207 = vadd.f32 %v6930, %v7190
      %v7208 = vld [vmem:[%s2333] sm:$0xf]
      %v7209 = vld [vmem:[%s2333 + $0x4] sm:$0xf]
      %v7210 = vld [vmem:[%s2333 + $0x8] sm:$0xf]
      %v7211 = vld [vmem:[%s2333 + $0xc] sm:$0xf]
      %v7212 = vld [vmem:[%s2333 + $0x10] sm:$0xf]
      %v7213 = vld [vmem:[%s2333 + $0x14] sm:$0xf]
      %v7214 = vld [vmem:[%s2333 + $0x18] sm:$0xf]
      %v7215 = vld [vmem:[%s2333 + $0x1c] sm:$0xf]
      %v7216 = vld [vmem:[%s2333 + $0x20] sm:$0xf]
      %v7217 = vld [vmem:[%s2333 + $0x24] sm:$0xf]
      %v7218 = vld [vmem:[%s2333 + $0x28] sm:$0xf]
      %v7219 = vld [vmem:[%s2333 + $0x2c] sm:$0xf]
      %v7220 = vld [vmem:[%s2333 + $0x30] sm:$0xf]
      %v7221 = vld [vmem:[%s2333 + $0x34] sm:$0xf]
      %v7222 = vld [vmem:[%s2333 + $0x38] sm:$0xf]
      %v7223 = vld [vmem:[%s2333 + $0x3c] sm:$0xf]
      %v7224 = vpack.c.b16 %v6983, %v6982
      %v7225 = vpack.c.b16 %v6985, %v6984
      %v7226 = vpack.c.b16 %v6987, %v6986
      %v7227 = vpack.c.b16 %v6989, %v6988
      %v7228 = vpack.c.b16 %v6991, %v6990
      %v7229 = vpack.c.b16 %v6993, %v6992
      %v7230 = vpack.c.b16 %v6995, %v6994
      %v7231 = vpack.c.b16 %v6997, %v6996
      %v7256 = vunpack.c.l.b16 %v7208
      %v7257 = vunpack.c.l.b16 %v7209
      %v7258 = vunpack.c.l.b16 %v7210
      %v7259 = vunpack.c.l.b16 %v7211
      %v7260 = vunpack.c.l.b16 %v7212
      %v7261 = vunpack.c.l.b16 %v7213
      %v7262 = vunpack.c.l.b16 %v7214
      %v7263 = vunpack.c.l.b16 %v7215
      %v7264 = vunpack.c.l.b16 %v7216
      %v7265 = vunpack.c.l.b16 %v7217
      %v7266 = vunpack.c.l.b16 %v7218
      %v7267 = vunpack.c.l.b16 %v7219
      %v7268 = vunpack.c.l.b16 %v7220
      %v7269 = vunpack.c.l.b16 %v7221
      %v7270 = vunpack.c.l.b16 %v7222
      %v7271 = vunpack.c.l.b16 %v7223
      %v7272 = vpack.c.b16 %v7257, %v7256
      %v7273 = vpack.c.b16 %v7259, %v7258
      %v7274 = vpack.c.b16 %v7261, %v7260
      %v7275 = vpack.c.b16 %v7263, %v7262
      %v7276 = vpack.c.b16 %v7265, %v7264
      %v7277 = vpack.c.b16 %v7267, %v7266
      %v7278 = vpack.c.b16 %v7269, %v7268
      %v7279 = vpack.c.b16 %v7271, %v7270
      %7288 = vmatpush.bf16.msra.mxu0 %v7279
      %7289 = vmatpush.bf16.msra.mxu0 %v7278
      %7290 = vmatpush.bf16.msra.mxu0 %v7277
      %7291 = vmatpush.bf16.msra.mxu0 %v7276
      %7292 = vmatpush.bf16.msra.mxu0 %v7275
      %7293 = vmatpush.bf16.msra.mxu0 %v7274
      %7294 = vmatpush.bf16.msra.mxu0 %v7273
      %7295 = vmatpush.bf16.msra.mxu0 %v7272
      %7296 = vmatmul.bf16.gmra.mxu0 %v7224
      %v7297 = vpop.f32.mrf.mxu0
      %v7298 = vadd.f32 0.0, %v7297
      %v7299 = vpop.f32.mrf.mxu0
      %v7300 = vadd.f32 0.0, %v7299
      %7301 = vmatmul.bf16.gmra.mxu0 %v7225
      %v7302 = vpop.f32.mrf.mxu0
      %v7303 = vadd.f32 0.0, %v7302
      %v7304 = vpop.f32.mrf.mxu0
      %v7305 = vadd.f32 0.0, %v7304
      %7306 = vmatmul.bf16.gmra.mxu0 %v7226
      %v7307 = vpop.f32.mrf.mxu0
      %v7308 = vadd.f32 0.0, %v7307
      %v7309 = vpop.f32.mrf.mxu0
      %v7310 = vadd.f32 0.0, %v7309
      %7311 = vmatmul.bf16.gmra.mxu0 %v7227
      %v7312 = vpop.f32.mrf.mxu0
      %v7313 = vadd.f32 0.0, %v7312
      %v7314 = vpop.f32.mrf.mxu0
      %v7315 = vadd.f32 0.0, %v7314
      %7316 = vmatmul.bf16.gmra.mxu0 %v7228
      %v7317 = vpop.f32.mrf.mxu0
      %v7318 = vadd.f32 0.0, %v7317
      %v7319 = vpop.f32.mrf.mxu0
      %v7320 = vadd.f32 0.0, %v7319
      %7321 = vmatmul.bf16.gmra.mxu0 %v7229
      %v7322 = vpop.f32.mrf.mxu0
      %v7323 = vadd.f32 0.0, %v7322
      %v7324 = vpop.f32.mrf.mxu0
      %v7325 = vadd.f32 0.0, %v7324
      %7326 = vmatmul.bf16.gmra.mxu0 %v7230
      %v7327 = vpop.f32.mrf.mxu0
      %v7328 = vadd.f32 0.0, %v7327
      %v7329 = vpop.f32.mrf.mxu0
      %v7330 = vadd.f32 0.0, %v7329
      %7331 = vmatmul.bf16.gmra.mxu0 %v7231
      %v7332 = vpop.f32.mrf.mxu0
      %v7333 = vadd.f32 0.0, %v7332
      %v7334 = vpop.f32.mrf.mxu0
      %v7335 = vadd.f32 0.0, %v7334
      %7336 = vdwg.mxu0
      %v7337 = vadd.f32 %v7192, %v7298
      %v7338 = vadd.f32 %v7193, %v7300
      %v7339 = vadd.f32 %v7194, %v7303
      %v7340 = vadd.f32 %v7195, %v7305
      %v7341 = vadd.f32 %v7196, %v7308
      %v7342 = vadd.f32 %v7197, %v7310
      %v7343 = vadd.f32 %v7198, %v7313
      %v7344 = vadd.f32 %v7199, %v7315
      %v7345 = vadd.f32 %v7200, %v7318
      %v7346 = vadd.f32 %v7201, %v7320
      %v7347 = vadd.f32 %v7202, %v7323
      %v7348 = vadd.f32 %v7203, %v7325
      %v7349 = vadd.f32 %v7204, %v7328
      %v7350 = vadd.f32 %v7205, %v7330
      %v7351 = vadd.f32 %v7206, %v7333
      %v7352 = vadd.f32 %v7207, %v7335
      %v7353 = vld [vmem:[#allocation2 + $0x98] sm:$0xf]
      %v7354 = vld [vmem:[#allocation2 + $0x9c] sm:$0xf]
      %v7355 = vld [vmem:[#allocation2 + $0xa0] sm:$0xf]
      %v7356 = vld [vmem:[#allocation2 + $0xa4] sm:$0xf]
      %v7357 = vld [vmem:[#allocation2 + $0xa8] sm:$0xf]
      %v7358 = vld [vmem:[#allocation2 + $0xac] sm:$0xf]
      %v7359 = vld [vmem:[#allocation2 + $0xb0] sm:$0xf]
      %v7360 = vld [vmem:[#allocation2 + $0xb4] sm:$0xf]
      %v7361 = vld [vmem:[#allocation2 + $0xb8] sm:$0xf]
      %v7362 = vld [vmem:[#allocation2 + $0xbc] sm:$0xf]
      %v7363 = vld [vmem:[#allocation2 + $0xc0] sm:$0xf]
      %v7364 = vld [vmem:[#allocation2 + $0xc4] sm:$0xf]
      %v7365 = vld [vmem:[#allocation2 + $0xc8] sm:$0xf]
      %v7366 = vld [vmem:[#allocation2 + $0xcc] sm:$0xf]
      %v7367 = vld [vmem:[#allocation2 + $0xd0] sm:$0xf]
      %v7368 = vld [vmem:[#allocation2 + $0xd4] sm:$0xf]
      %v7369 = vld [vmem:[#allocation2 + $0xd8] sm:$0x1]
      %v7370 = vld [vmem:[%s2496] sm:$0xf]
      %v7371 = vld [vmem:[%s2496 + $0x4] sm:$0xf]
      %v7372 = vld [vmem:[%s2496 + $0x8] sm:$0xf]
      %v7373 = vld [vmem:[%s2496 + $0xc] sm:$0xf]
      %v7374 = vld [vmem:[%s2496 + $0x10] sm:$0xf]
      %v7375 = vld [vmem:[%s2496 + $0x14] sm:$0xf]
      %v7376 = vld [vmem:[%s2496 + $0x18] sm:$0xf]
      %v7377 = vld [vmem:[%s2496 + $0x1c] sm:$0xf]
      %v7378 = vld [vmem:[%s2496 + $0x20] sm:$0xf]
      %v7379 = vld [vmem:[%s2496 + $0x24] sm:$0xf]
      %v7380 = vld [vmem:[%s2496 + $0x28] sm:$0xf]
      %v7381 = vld [vmem:[%s2496 + $0x2c] sm:$0xf]
      %v7382 = vld [vmem:[%s2496 + $0x30] sm:$0xf]
      %v7383 = vld [vmem:[%s2496 + $0x34] sm:$0xf]
      %v7384 = vld [vmem:[%s2496 + $0x38] sm:$0xf]
      %v7385 = vld [vmem:[%s2496 + $0x3c] sm:$0xf]
      %v7403 = vunpack.c.l.b16 %v7353
      %v7404 = vunpack.c.l.b16 %v7354
      %v7405 = vunpack.c.l.b16 %v7355
      %v7406 = vunpack.c.l.b16 %v7356
      %v7407 = vunpack.c.l.b16 %v7357
      %v7408 = vunpack.c.l.b16 %v7358
      %v7409 = vunpack.c.l.b16 %v7359
      %v7410 = vunpack.c.l.b16 %v7360
      %v7411 = vunpack.c.l.b16 %v7361
      %v7412 = vunpack.c.l.b16 %v7362
      %v7413 = vunpack.c.l.b16 %v7363
      %v7414 = vunpack.c.l.b16 %v7364
      %v7415 = vunpack.c.l.b16 %v7365
      %v7416 = vunpack.c.l.b16 %v7366
      %v7417 = vunpack.c.l.b16 %v7367
      %v7418 = vunpack.c.l.b16 %v7368
      %v7419 = vunpack.c.l.b16 %v7369
      %v7420 = vpack.c.b16 %v7404, %v7403
      %v7421 = vpack.c.b16 %v7406, %v7405
      %v7422 = vpack.c.b16 %v7408, %v7407
      %v7423 = vpack.c.b16 %v7410, %v7409
      %v7424 = vpack.c.b16 %v7412, %v7411
      %v7425 = vpack.c.b16 %v7414, %v7413
      %v7426 = vpack.c.b16 %v7416, %v7415
      %v7427 = vpack.c.b16 %v7418, %v7417
      %v7428 = vpack.c.b16 %v7419, %v7419
      %v7430 = vshrl.u32 %v7420, 16
      %v7432 = vshll.u32 %v7420, 16
      %v7434 = vrot.slane %v7432, 1
      %v7435 = vor.u32 %v7430, %v7434
      %v7437 = vshll.u32 %v7421, 16
      %v7439 = vrot.slane %v7437, 1
      %v7440 = vsel %vm1865, %v7435, %v7439
      %v7441 = vshrl.u32 %v7421, 16
      %v7443 = vor.u32 %v7441, %v7439
      %v7445 = vshll.u32 %v7422, 16
      %v7447 = vrot.slane %v7445, 1
      %v7448 = vsel %vm1865, %v7443, %v7447
      %v7449 = vshrl.u32 %v7422, 16
      %v7451 = vor.u32 %v7449, %v7447
      %v7453 = vshll.u32 %v7423, 16
      %v7455 = vrot.slane %v7453, 1
      %v7456 = vsel %vm1865, %v7451, %v7455
      %v7457 = vshrl.u32 %v7423, 16
      %v7459 = vor.u32 %v7457, %v7455
      %v7461 = vshll.u32 %v7424, 16
      %v7463 = vrot.slane %v7461, 1
      %v7464 = vsel %vm1865, %v7459, %v7463
      %v7465 = vshrl.u32 %v7424, 16
      %v7467 = vor.u32 %v7465, %v7463
      %v7469 = vshll.u32 %v7425, 16
      %v7471 = vrot.slane %v7469, 1
      %v7472 = vsel %vm1865, %v7467, %v7471
      %v7473 = vshrl.u32 %v7425, 16
      %v7475 = vor.u32 %v7473, %v7471
      %v7477 = vshll.u32 %v7426, 16
      %v7479 = vrot.slane %v7477, 1
      %v7480 = vsel %vm1865, %v7475, %v7479
      %v7481 = vshrl.u32 %v7426, 16
      %v7483 = vor.u32 %v7481, %v7479
      %v7485 = vshll.u32 %v7427, 16
      %v7487 = vrot.slane %v7485, 1
      %v7488 = vsel %vm1865, %v7483, %v7487
      %v7489 = vshrl.u32 %v7427, 16
      %v7491 = vor.u32 %v7489, %v7487
      %v7493 = vshll.u32 %v7428, 16
      %v7495 = vrot.slane %v7493, 1
      %v7496 = vsel %vm1865, %v7491, %v7495
      %v7521 = vunpack.c.l.b16 %v7370
      %v7522 = vunpack.c.l.b16 %v7371
      %v7523 = vunpack.c.l.b16 %v7372
      %v7524 = vunpack.c.l.b16 %v7373
      %v7525 = vunpack.c.l.b16 %v7374
      %v7526 = vunpack.c.l.b16 %v7375
      %v7527 = vunpack.c.l.b16 %v7376
      %v7528 = vunpack.c.l.b16 %v7377
      %v7529 = vunpack.c.l.b16 %v7378
      %v7530 = vunpack.c.l.b16 %v7379
      %v7531 = vunpack.c.l.b16 %v7380
      %v7532 = vunpack.c.l.b16 %v7381
      %v7533 = vunpack.c.l.b16 %v7382
      %v7534 = vunpack.c.l.b16 %v7383
      %v7535 = vunpack.c.l.b16 %v7384
      %v7536 = vunpack.c.l.b16 %v7385
      %v7537 = vpack.c.b16 %v7522, %v7521
      %v7538 = vpack.c.b16 %v7524, %v7523
      %v7539 = vpack.c.b16 %v7526, %v7525
      %v7540 = vpack.c.b16 %v7528, %v7527
      %v7541 = vpack.c.b16 %v7530, %v7529
      %v7542 = vpack.c.b16 %v7532, %v7531
      %v7543 = vpack.c.b16 %v7534, %v7533
      %v7544 = vpack.c.b16 %v7536, %v7535
      %7553 = vmatpush.bf16.msra.mxu0 %v7544
      %7554 = vmatpush.bf16.msra.mxu0 %v7543
      %7555 = vmatpush.bf16.msra.mxu0 %v7542
      %7556 = vmatpush.bf16.msra.mxu0 %v7541
      %7557 = vmatpush.bf16.msra.mxu0 %v7540
      %7558 = vmatpush.bf16.msra.mxu0 %v7539
      %7559 = vmatpush.bf16.msra.mxu0 %v7538
      %7560 = vmatpush.bf16.msra.mxu0 %v7537
      %7561 = vmatmul.bf16.gmra.mxu0 %v7440
      %v7562 = vpop.f32.mrf.mxu0
      %v7563 = vadd.f32 0.0, %v7562
      %v7564 = vpop.f32.mrf.mxu0
      %v7565 = vadd.f32 0.0, %v7564
      %7566 = vmatmul.bf16.gmra.mxu0 %v7448
      %v7567 = vpop.f32.mrf.mxu0
      %v7568 = vadd.f32 0.0, %v7567
      %v7569 = vpop.f32.mrf.mxu0
      %v7570 = vadd.f32 0.0, %v7569
      %7571 = vmatmul.bf16.gmra.mxu0 %v7456
      %v7572 = vpop.f32.mrf.mxu0
      %v7573 = vadd.f32 0.0, %v7572
      %v7574 = vpop.f32.mrf.mxu0
      %v7575 = vadd.f32 0.0, %v7574
      %7576 = vmatmul.bf16.gmra.mxu0 %v7464
      %v7577 = vpop.f32.mrf.mxu0
      %v7578 = vadd.f32 0.0, %v7577
      %v7579 = vpop.f32.mrf.mxu0
      %v7580 = vadd.f32 0.0, %v7579
      %7581 = vmatmul.bf16.gmra.mxu0 %v7472
      %v7582 = vpop.f32.mrf.mxu0
      %v7583 = vadd.f32 0.0, %v7582
      %v7584 = vpop.f32.mrf.mxu0
      %v7585 = vadd.f32 0.0, %v7584
      %7586 = vmatmul.bf16.gmra.mxu0 %v7480
      %v7587 = vpop.f32.mrf.mxu0
      %v7588 = vadd.f32 0.0, %v7587
      %v7589 = vpop.f32.mrf.mxu0
      %v7590 = vadd.f32 0.0, %v7589
      %7591 = vmatmul.bf16.gmra.mxu0 %v7488
      %v7592 = vpop.f32.mrf.mxu0
      %v7593 = vadd.f32 0.0, %v7592
      %v7594 = vpop.f32.mrf.mxu0
      %v7595 = vadd.f32 0.0, %v7594
      %7596 = vmatmul.bf16.gmra.mxu0 %v7496
      %v7597 = vpop.f32.mrf.mxu0
      %v7598 = vadd.f32 0.0, %v7597
      %v7599 = vpop.f32.mrf.mxu0
      %v7600 = vadd.f32 0.0, %v7599
      %7601 = vdwg.mxu0
      %v7602 = vadd.f32 %v7337, %v7563
      %v7603 = vadd.f32 %v7338, %v7565
      %v7604 = vadd.f32 %v7339, %v7568
      %v7605 = vadd.f32 %v7340, %v7570
      %v7606 = vadd.f32 %v7341, %v7573
      %v7607 = vadd.f32 %v7342, %v7575
      %v7608 = vadd.f32 %v7343, %v7578
      %v7609 = vadd.f32 %v7344, %v7580
      %v7610 = vadd.f32 %v7345, %v7583
      %v7611 = vadd.f32 %v7346, %v7585
      %v7612 = vadd.f32 %v7347, %v7588
      %v7613 = vadd.f32 %v7348, %v7590
      %v7614 = vadd.f32 %v7349, %v7593
      %v7615 = vadd.f32 %v7350, %v7595
      %v7616 = vadd.f32 %v7351, %v7598
      %v7617 = vadd.f32 %v7352, %v7600
      %v7618 = vld [vmem:[#allocation2 + $0xa0] sm:$0x8]
      %v7619 = vld [vmem:[#allocation2 + $0xa4] sm:$0xf]
      %v7620 = vld [vmem:[#allocation2 + $0xa8] sm:$0xf]
      %v7621 = vld [vmem:[#allocation2 + $0xac] sm:$0xf]
      %v7622 = vld [vmem:[#allocation2 + $0xb0] sm:$0xf]
      %v7623 = vld [vmem:[#allocation2 + $0xb4] sm:$0xf]
      %v7624 = vld [vmem:[#allocation2 + $0xb8] sm:$0xf]
      %v7625 = vld [vmem:[#allocation2 + $0xbc] sm:$0xf]
      %v7626 = vld [vmem:[#allocation2 + $0xc0] sm:$0xf]
      %v7627 = vld [vmem:[#allocation2 + $0xc4] sm:$0xf]
      %v7628 = vld [vmem:[#allocation2 + $0xc8] sm:$0xf]
      %v7629 = vld [vmem:[#allocation2 + $0xcc] sm:$0xf]
      %v7630 = vld [vmem:[#allocation2 + $0xd0] sm:$0xf]
      %v7631 = vld [vmem:[#allocation2 + $0xd4] sm:$0xf]
      %v7632 = vld [vmem:[#allocation2 + $0xd8] sm:$0xf]
      %v7633 = vld [vmem:[#allocation2 + $0xdc] sm:$0xf]
      %v7634 = vld [vmem:[#allocation2 + $0xe0] sm:$0xf]
      %v7635 = vld [vmem:[%s2762] sm:$0xf]
      %v7636 = vld [vmem:[%s2762 + $0x4] sm:$0xf]
      %v7637 = vld [vmem:[%s2762 + $0x8] sm:$0xf]
      %v7638 = vld [vmem:[%s2762 + $0xc] sm:$0xf]
      %v7639 = vld [vmem:[%s2762 + $0x10] sm:$0xf]
      %v7640 = vld [vmem:[%s2762 + $0x14] sm:$0xf]
      %v7641 = vld [vmem:[%s2762 + $0x18] sm:$0xf]
      %v7642 = vld [vmem:[%s2762 + $0x1c] sm:$0xf]
      %v7643 = vld [vmem:[%s2762 + $0x20] sm:$0xf]
      %v7644 = vld [vmem:[%s2762 + $0x24] sm:$0xf]
      %v7645 = vld [vmem:[%s2762 + $0x28] sm:$0xf]
      %v7646 = vld [vmem:[%s2762 + $0x2c] sm:$0xf]
      %v7647 = vld [vmem:[%s2762 + $0x30] sm:$0xf]
      %v7648 = vld [vmem:[%s2762 + $0x34] sm:$0xf]
      %v7649 = vld [vmem:[%s2762 + $0x38] sm:$0xf]
      %v7650 = vld [vmem:[%s2762 + $0x3c] sm:$0xf]
      %v7668 = vunpack.c.l.b16 %v7618
      %v7669 = vunpack.c.l.b16 %v7619
      %v7670 = vunpack.c.l.b16 %v7620
      %v7671 = vunpack.c.l.b16 %v7621
      %v7672 = vunpack.c.l.b16 %v7622
      %v7673 = vunpack.c.l.b16 %v7623
      %v7674 = vunpack.c.l.b16 %v7624
      %v7675 = vunpack.c.l.b16 %v7625
      %v7676 = vunpack.c.l.b16 %v7626
      %v7677 = vunpack.c.l.b16 %v7627
      %v7678 = vunpack.c.l.b16 %v7628
      %v7679 = vunpack.c.l.b16 %v7629
      %v7680 = vunpack.c.l.b16 %v7630
      %v7681 = vunpack.c.l.b16 %v7631
      %v7682 = vunpack.c.l.b16 %v7632
      %v7683 = vunpack.c.l.b16 %v7633
      %v7684 = vunpack.c.l.b16 %v7634
      %v7685 = vpack.c.b16 %v7669, %v7668
      %v7686 = vpack.c.b16 %v7671, %v7670
      %v7687 = vpack.c.b16 %v7673, %v7672
      %v7688 = vpack.c.b16 %v7675, %v7674
      %v7689 = vpack.c.b16 %v7677, %v7676
      %v7690 = vpack.c.b16 %v7679, %v7678
      %v7691 = vpack.c.b16 %v7681, %v7680
      %v7692 = vpack.c.b16 %v7683, %v7682
      %v7693 = vpack.c.b16 %v7684, %v7684
      %v7695 = vshrl.u32 %v7685, 16
      %v7697 = vrot.slane %v7695, 3
      %v7698 = vshll.u32 %v7685, 16
      %v7700 = vrot.slane %v7698, 4
      %v7701 = vor.u32 %v7697, %v7700
      %v7703 = vshrl.u32 %v7686, 16
      %v7705 = vrot.slane %v7703, 3
      %v7706 = vshll.u32 %v7686, 16
      %v7708 = vrot.slane %v7706, 4
      %v7709 = vor.u32 %v7705, %v7708
      %v7710 = vsel %vm1602, %v7701, %v7709
      %v7712 = vshrl.u32 %v7687, 16
      %v7714 = vrot.slane %v7712, 3
      %v7715 = vshll.u32 %v7687, 16
      %v7717 = vrot.slane %v7715, 4
      %v7718 = vor.u32 %v7714, %v7717
      %v7719 = vsel %vm1602, %v7709, %v7718
      %v7721 = vshrl.u32 %v7688, 16
      %v7723 = vrot.slane %v7721, 3
      %v7724 = vshll.u32 %v7688, 16
      %v7726 = vrot.slane %v7724, 4
      %v7727 = vor.u32 %v7723, %v7726
      %v7728 = vsel %vm1602, %v7718, %v7727
      %v7730 = vshrl.u32 %v7689, 16
      %v7732 = vrot.slane %v7730, 3
      %v7733 = vshll.u32 %v7689, 16
      %v7735 = vrot.slane %v7733, 4
      %v7736 = vor.u32 %v7732, %v7735
      %v7737 = vsel %vm1602, %v7727, %v7736
      %v7739 = vshrl.u32 %v7690, 16
      %v7741 = vrot.slane %v7739, 3
      %v7742 = vshll.u32 %v7690, 16
      %v7744 = vrot.slane %v7742, 4
      %v7745 = vor.u32 %v7741, %v7744
      %v7746 = vsel %vm1602, %v7736, %v7745
      %v7748 = vshrl.u32 %v7691, 16
      %v7750 = vrot.slane %v7748, 3
      %v7751 = vshll.u32 %v7691, 16
      %v7753 = vrot.slane %v7751, 4
      %v7754 = vor.u32 %v7750, %v7753
      %v7755 = vsel %vm1602, %v7745, %v7754
      %v7757 = vshrl.u32 %v7692, 16
      %v7759 = vrot.slane %v7757, 3
      %v7760 = vshll.u32 %v7692, 16
      %v7762 = vrot.slane %v7760, 4
      %v7763 = vor.u32 %v7759, %v7762
      %v7764 = vsel %vm1602, %v7754, %v7763
      %v7766 = vshrl.u32 %v7693, 16
      %v7768 = vrot.slane %v7766, 3
      %v7769 = vshll.u32 %v7693, 16
      %v7771 = vrot.slane %v7769, 4
      %v7772 = vor.u32 %v7768, %v7771
      %v7773 = vsel %vm1602, %v7763, %v7772
      %v7798 = vunpack.c.l.b16 %v7635
      %v7799 = vunpack.c.l.b16 %v7636
      %v7800 = vunpack.c.l.b16 %v7637
      %v7801 = vunpack.c.l.b16 %v7638
      %v7802 = vunpack.c.l.b16 %v7639
      %v7803 = vunpack.c.l.b16 %v7640
      %v7804 = vunpack.c.l.b16 %v7641
      %v7805 = vunpack.c.l.b16 %v7642
      %v7806 = vunpack.c.l.b16 %v7643
      %v7807 = vunpack.c.l.b16 %v7644
      %v7808 = vunpack.c.l.b16 %v7645
      %v7809 = vunpack.c.l.b16 %v7646
      %v7810 = vunpack.c.l.b16 %v7647
      %v7811 = vunpack.c.l.b16 %v7648
      %v7812 = vunpack.c.l.b16 %v7649
      %v7813 = vunpack.c.l.b16 %v7650
      %v7814 = vpack.c.b16 %v7799, %v7798
      %v7815 = vpack.c.b16 %v7801, %v7800
      %v7816 = vpack.c.b16 %v7803, %v7802
      %v7817 = vpack.c.b16 %v7805, %v7804
      %v7818 = vpack.c.b16 %v7807, %v7806
      %v7819 = vpack.c.b16 %v7809, %v7808
      %v7820 = vpack.c.b16 %v7811, %v7810
      %v7821 = vpack.c.b16 %v7813, %v7812
      %7830 = vmatpush.bf16.msra.mxu0 %v7821
      %7831 = vmatpush.bf16.msra.mxu0 %v7820
      %7832 = vmatpush.bf16.msra.mxu0 %v7819
      %7833 = vmatpush.bf16.msra.mxu0 %v7818
      %7834 = vmatpush.bf16.msra.mxu0 %v7817
      %7835 = vmatpush.bf16.msra.mxu0 %v7816
      %7836 = vmatpush.bf16.msra.mxu0 %v7815
      %7837 = vmatpush.bf16.msra.mxu0 %v7814
      %7838 = vmatmul.bf16.gmra.mxu0 %v7710
      %v7839 = vpop.f32.mrf.mxu0
      %v7840 = vadd.f32 0.0, %v7839
      %v7841 = vpop.f32.mrf.mxu0
      %v7842 = vadd.f32 0.0, %v7841
      %7843 = vmatmul.bf16.gmra.mxu0 %v7719
      %v7844 = vpop.f32.mrf.mxu0
      %v7845 = vadd.f32 0.0, %v7844
      %v7846 = vpop.f32.mrf.mxu0
      %v7847 = vadd.f32 0.0, %v7846
      %7848 = vmatmul.bf16.gmra.mxu0 %v7728
      %v7849 = vpop.f32.mrf.mxu0
      %v7850 = vadd.f32 0.0, %v7849
      %v7851 = vpop.f32.mrf.mxu0
      %v7852 = vadd.f32 0.0, %v7851
      %7853 = vmatmul.bf16.gmra.mxu0 %v7737
      %v7854 = vpop.f32.mrf.mxu0
      %v7855 = vadd.f32 0.0, %v7854
      %v7856 = vpop.f32.mrf.mxu0
      %v7857 = vadd.f32 0.0, %v7856
      %7858 = vmatmul.bf16.gmra.mxu0 %v7746
      %v7859 = vpop.f32.mrf.mxu0
      %v7860 = vadd.f32 0.0, %v7859
      %v7861 = vpop.f32.mrf.mxu0
      %v7862 = vadd.f32 0.0, %v7861
      %7863 = vmatmul.bf16.gmra.mxu0 %v7755
      %v7864 = vpop.f32.mrf.mxu0
      %v7865 = vadd.f32 0.0, %v7864
      %v7866 = vpop.f32.mrf.mxu0
      %v7867 = vadd.f32 0.0, %v7866
      %7868 = vmatmul.bf16.gmra.mxu0 %v7764
      %v7869 = vpop.f32.mrf.mxu0
      %v7870 = vadd.f32 0.0, %v7869
      %v7871 = vpop.f32.mrf.mxu0
      %v7872 = vadd.f32 0.0, %v7871
      %7873 = vmatmul.bf16.gmra.mxu0 %v7773
      %v7874 = vpop.f32.mrf.mxu0
      %v7875 = vadd.f32 0.0, %v7874
      %v7876 = vpop.f32.mrf.mxu0
      %v7877 = vadd.f32 0.0, %v7876
      %7878 = vdwg.mxu0
      %v7879 = vadd.f32 %v7602, %v7840
      %v7880 = vadd.f32 %v7603, %v7842
      %v7881 = vadd.f32 %v7604, %v7845
      %v7882 = vadd.f32 %v7605, %v7847
      %v7883 = vadd.f32 %v7606, %v7850
      %v7884 = vadd.f32 %v7607, %v7852
      %v7885 = vadd.f32 %v7608, %v7855
      %v7886 = vadd.f32 %v7609, %v7857
      %v7887 = vadd.f32 %v7610, %v7860
      %v7888 = vadd.f32 %v7611, %v7862
      %v7889 = vadd.f32 %v7612, %v7865
      %v7890 = vadd.f32 %v7613, %v7867
      %v7891 = vadd.f32 %v7614, %v7870
      %v7892 = vadd.f32 %v7615, %v7872
      %v7893 = vadd.f32 %v7616, %v7875
      %v7894 = vadd.f32 %v7617, %v7877
      %v7895 = vld [vmem:[%s3023] sm:$0xf]
      %v7896 = vld [vmem:[%s3023 + $0x4] sm:$0xf]
      %v7897 = vld [vmem:[%s3023 + $0x8] sm:$0xf]
      %v7898 = vld [vmem:[%s3023 + $0xc] sm:$0xf]
      %v7899 = vld [vmem:[%s3023 + $0x10] sm:$0xf]
      %v7900 = vld [vmem:[%s3023 + $0x14] sm:$0xf]
      %v7901 = vld [vmem:[%s3023 + $0x18] sm:$0xf]
      %v7902 = vld [vmem:[%s3023 + $0x1c] sm:$0xf]
      %v7903 = vld [vmem:[%s3023 + $0x20] sm:$0xf]
      %v7904 = vld [vmem:[%s3023 + $0x24] sm:$0xf]
      %v7905 = vld [vmem:[%s3023 + $0x28] sm:$0xf]
      %v7906 = vld [vmem:[%s3023 + $0x2c] sm:$0xf]
      %v7907 = vld [vmem:[%s3023 + $0x30] sm:$0xf]
      %v7908 = vld [vmem:[%s3023 + $0x34] sm:$0xf]
      %v7909 = vld [vmem:[%s3023 + $0x38] sm:$0xf]
      %v7910 = vld [vmem:[%s3023 + $0x3c] sm:$0xf]
      %v7911 = vpack.c.b16 %v7670, %v7669
      %v7912 = vpack.c.b16 %v7672, %v7671
      %v7913 = vpack.c.b16 %v7674, %v7673
      %v7914 = vpack.c.b16 %v7676, %v7675
      %v7915 = vpack.c.b16 %v7678, %v7677
      %v7916 = vpack.c.b16 %v7680, %v7679
      %v7917 = vpack.c.b16 %v7682, %v7681
      %v7918 = vpack.c.b16 %v7684, %v7683
      %v7943 = vunpack.c.l.b16 %v7895
      %v7944 = vunpack.c.l.b16 %v7896
      %v7945 = vunpack.c.l.b16 %v7897
      %v7946 = vunpack.c.l.b16 %v7898
      %v7947 = vunpack.c.l.b16 %v7899
      %v7948 = vunpack.c.l.b16 %v7900
      %v7949 = vunpack.c.l.b16 %v7901
      %v7950 = vunpack.c.l.b16 %v7902
      %v7951 = vunpack.c.l.b16 %v7903
      %v7952 = vunpack.c.l.b16 %v7904
      %v7953 = vunpack.c.l.b16 %v7905
      %v7954 = vunpack.c.l.b16 %v7906
      %v7955 = vunpack.c.l.b16 %v7907
      %v7956 = vunpack.c.l.b16 %v7908
      %v7957 = vunpack.c.l.b16 %v7909
      %v7958 = vunpack.c.l.b16 %v7910
      %v7959 = vpack.c.b16 %v7944, %v7943
      %v7960 = vpack.c.b16 %v7946, %v7945
      %v7961 = vpack.c.b16 %v7948, %v7947
      %v7962 = vpack.c.b16 %v7950, %v7949
      %v7963 = vpack.c.b16 %v7952, %v7951
      %v7964 = vpack.c.b16 %v7954, %v7953
      %v7965 = vpack.c.b16 %v7956, %v7955
      %v7966 = vpack.c.b16 %v7958, %v7957
      %7975 = vmatpush.bf16.msra.mxu0 %v7966
      %7976 = vmatpush.bf16.msra.mxu0 %v7965
      %7977 = vmatpush.bf16.msra.mxu0 %v7964
      %7978 = vmatpush.bf16.msra.mxu0 %v7963
      %7979 = vmatpush.bf16.msra.mxu0 %v7962
      %7980 = vmatpush.bf16.msra.mxu0 %v7961
      %7981 = vmatpush.bf16.msra.mxu0 %v7960
      %7982 = vmatpush.bf16.msra.mxu0 %v7959
      %7983 = vmatmul.bf16.gmra.mxu0 %v7911
      %v7984 = vpop.f32.mrf.mxu0
      %v7985 = vadd.f32 0.0, %v7984
      %v7986 = vpop.f32.mrf.mxu0
      %v7987 = vadd.f32 0.0, %v7986
      %7988 = vmatmul.bf16.gmra.mxu0 %v7912
      %v7989 = vpop.f32.mrf.mxu0
      %v7990 = vadd.f32 0.0, %v7989
      %v7991 = vpop.f32.mrf.mxu0
      %v7992 = vadd.f32 0.0, %v7991
      %7993 = vmatmul.bf16.gmra.mxu0 %v7913
      %v7994 = vpop.f32.mrf.mxu0
      %v7995 = vadd.f32 0.0, %v7994
      %v7996 = vpop.f32.mrf.mxu0
      %v7997 = vadd.f32 0.0, %v7996
      %7998 = vmatmul.bf16.gmra.mxu0 %v7914
      %v7999 = vpop.f32.mrf.mxu0
      %v8000 = vadd.f32 0.0, %v7999
      %v8001 = vpop.f32.mrf.mxu0
      %v8002 = vadd.f32 0.0, %v8001
      %8003 = vmatmul.bf16.gmra.mxu0 %v7915
      %v8004 = vpop.f32.mrf.mxu0
      %v8005 = vadd.f32 0.0, %v8004
      %v8006 = vpop.f32.mrf.mxu0
      %v8007 = vadd.f32 0.0, %v8006
      %8008 = vmatmul.bf16.gmra.mxu0 %v7916
      %v8009 = vpop.f32.mrf.mxu0
      %v8010 = vadd.f32 0.0, %v8009
      %v8011 = vpop.f32.mrf.mxu0
      %v8012 = vadd.f32 0.0, %v8011
      %8013 = vmatmul.bf16.gmra.mxu0 %v7917
      %v8014 = vpop.f32.mrf.mxu0
      %v8015 = vadd.f32 0.0, %v8014
      %v8016 = vpop.f32.mrf.mxu0
      %v8017 = vadd.f32 0.0, %v8016
      %8018 = vmatmul.bf16.gmra.mxu0 %v7918
      %v8019 = vpop.f32.mrf.mxu0
      %v8020 = vadd.f32 0.0, %v8019
      %v8021 = vpop.f32.mrf.mxu0
      %v8022 = vadd.f32 0.0, %v8021
      %8023 = vdwg.mxu0
      %v8024 = vadd.f32 %v7879, %v7985
      %v8025 = vadd.f32 %v7880, %v7987
      %v8026 = vadd.f32 %v7881, %v7990
      %v8027 = vadd.f32 %v7882, %v7992
      %v8028 = vadd.f32 %v7883, %v7995
      %v8029 = vadd.f32 %v7884, %v7997
      %v8030 = vadd.f32 %v7885, %v8000
      %v8031 = vadd.f32 %v7886, %v8002
      %v8032 = vadd.f32 %v7887, %v8005
      %v8033 = vadd.f32 %v7888, %v8007
      %v8034 = vadd.f32 %v7889, %v8010
      %v8035 = vadd.f32 %v7890, %v8012
      %v8036 = vadd.f32 %v7891, %v8015
      %v8037 = vadd.f32 %v7892, %v8017
      %v8038 = vadd.f32 %v7893, %v8020
      %v8039 = vadd.f32 %v7894, %v8022
      %v8040 = vld [vmem:[#allocation2 + $0xa4] sm:$0xf]
      %v8041 = vld [vmem:[#allocation2 + $0xa8] sm:$0xf]
      %v8042 = vld [vmem:[#allocation2 + $0xac] sm:$0xf]
      %v8043 = vld [vmem:[#allocation2 + $0xb0] sm:$0xf]
      %v8044 = vld [vmem:[#allocation2 + $0xb4] sm:$0xf]
      %v8045 = vld [vmem:[#allocation2 + $0xb8] sm:$0xf]
      %v8046 = vld [vmem:[#allocation2 + $0xbc] sm:$0xf]
      %v8047 = vld [vmem:[#allocation2 + $0xc0] sm:$0xf]
      %v8048 = vld [vmem:[#allocation2 + $0xc4] sm:$0xf]
      %v8049 = vld [vmem:[#allocation2 + $0xc8] sm:$0xf]
      %v8050 = vld [vmem:[#allocation2 + $0xcc] sm:$0xf]
      %v8051 = vld [vmem:[#allocation2 + $0xd0] sm:$0xf]
      %v8052 = vld [vmem:[#allocation2 + $0xd4] sm:$0xf]
      %v8053 = vld [vmem:[#allocation2 + $0xd8] sm:$0xf]
      %v8054 = vld [vmem:[#allocation2 + $0xdc] sm:$0xf]
      %v8055 = vld [vmem:[#allocation2 + $0xe0] sm:$0xf]
      %v8056 = vld [vmem:[#allocation2 + $0xe4] sm:$0x1]
      %v8057 = vld [vmem:[%s3186] sm:$0xf]
      %v8058 = vld [vmem:[%s3186 + $0x4] sm:$0xf]
      %v8059 = vld [vmem:[%s3186 + $0x8] sm:$0xf]
      %v8060 = vld [vmem:[%s3186 + $0xc] sm:$0xf]
      %v8061 = vld [vmem:[%s3186 + $0x10] sm:$0xf]
      %v8062 = vld [vmem:[%s3186 + $0x14] sm:$0xf]
      %v8063 = vld [vmem:[%s3186 + $0x18] sm:$0xf]
      %v8064 = vld [vmem:[%s3186 + $0x1c] sm:$0xf]
      %v8065 = vld [vmem:[%s3186 + $0x20] sm:$0xf]
      %v8066 = vld [vmem:[%s3186 + $0x24] sm:$0xf]
      %v8067 = vld [vmem:[%s3186 + $0x28] sm:$0xf]
      %v8068 = vld [vmem:[%s3186 + $0x2c] sm:$0xf]
      %v8069 = vld [vmem:[%s3186 + $0x30] sm:$0xf]
      %v8070 = vld [vmem:[%s3186 + $0x34] sm:$0xf]
      %v8071 = vld [vmem:[%s3186 + $0x38] sm:$0xf]
      %v8072 = vld [vmem:[%s3186 + $0x3c] sm:$0xf]
      %v8090 = vunpack.c.l.b16 %v8040
      %v8091 = vunpack.c.l.b16 %v8041
      %v8092 = vunpack.c.l.b16 %v8042
      %v8093 = vunpack.c.l.b16 %v8043
      %v8094 = vunpack.c.l.b16 %v8044
      %v8095 = vunpack.c.l.b16 %v8045
      %v8096 = vunpack.c.l.b16 %v8046
      %v8097 = vunpack.c.l.b16 %v8047
      %v8098 = vunpack.c.l.b16 %v8048
      %v8099 = vunpack.c.l.b16 %v8049
      %v8100 = vunpack.c.l.b16 %v8050
      %v8101 = vunpack.c.l.b16 %v8051
      %v8102 = vunpack.c.l.b16 %v8052
      %v8103 = vunpack.c.l.b16 %v8053
      %v8104 = vunpack.c.l.b16 %v8054
      %v8105 = vunpack.c.l.b16 %v8055
      %v8106 = vunpack.c.l.b16 %v8056
      %v8107 = vpack.c.b16 %v8091, %v8090
      %v8108 = vpack.c.b16 %v8093, %v8092
      %v8109 = vpack.c.b16 %v8095, %v8094
      %v8110 = vpack.c.b16 %v8097, %v8096
      %v8111 = vpack.c.b16 %v8099, %v8098
      %v8112 = vpack.c.b16 %v8101, %v8100
      %v8113 = vpack.c.b16 %v8103, %v8102
      %v8114 = vpack.c.b16 %v8105, %v8104
      %v8115 = vpack.c.b16 %v8106, %v8106
      %v8117 = vshrl.u32 %v8107, 16
      %v8119 = vshll.u32 %v8107, 16
      %v8121 = vrot.slane %v8119, 1
      %v8122 = vor.u32 %v8117, %v8121
      %v8124 = vshll.u32 %v8108, 16
      %v8126 = vrot.slane %v8124, 1
      %v8127 = vsel %vm1865, %v8122, %v8126
      %v8128 = vshrl.u32 %v8108, 16
      %v8130 = vor.u32 %v8128, %v8126
      %v8132 = vshll.u32 %v8109, 16
      %v8134 = vrot.slane %v8132, 1
      %v8135 = vsel %vm1865, %v8130, %v8134
      %v8136 = vshrl.u32 %v8109, 16
      %v8138 = vor.u32 %v8136, %v8134
      %v8140 = vshll.u32 %v8110, 16
      %v8142 = vrot.slane %v8140, 1
      %v8143 = vsel %vm1865, %v8138, %v8142
      %v8144 = vshrl.u32 %v8110, 16
      %v8146 = vor.u32 %v8144, %v8142
      %v8148 = vshll.u32 %v8111, 16
      %v8150 = vrot.slane %v8148, 1
      %v8151 = vsel %vm1865, %v8146, %v8150
      %v8152 = vshrl.u32 %v8111, 16
      %v8154 = vor.u32 %v8152, %v8150
      %v8156 = vshll.u32 %v8112, 16
      %v8158 = vrot.slane %v8156, 1
      %v8159 = vsel %vm1865, %v8154, %v8158
      %v8160 = vshrl.u32 %v8112, 16
      %v8162 = vor.u32 %v8160, %v8158
      %v8164 = vshll.u32 %v8113, 16
      %v8166 = vrot.slane %v8164, 1
      %v8167 = vsel %vm1865, %v8162, %v8166
      %v8168 = vshrl.u32 %v8113, 16
      %v8170 = vor.u32 %v8168, %v8166
      %v8172 = vshll.u32 %v8114, 16
      %v8174 = vrot.slane %v8172, 1
      %v8175 = vsel %vm1865, %v8170, %v8174
      %v8176 = vshrl.u32 %v8114, 16
      %v8178 = vor.u32 %v8176, %v8174
      %v8180 = vshll.u32 %v8115, 16
      %v8182 = vrot.slane %v8180, 1
      %v8183 = vsel %vm1865, %v8178, %v8182
      %v8208 = vunpack.c.l.b16 %v8057
      %v8209 = vunpack.c.l.b16 %v8058
      %v8210 = vunpack.c.l.b16 %v8059
      %v8211 = vunpack.c.l.b16 %v8060
      %v8212 = vunpack.c.l.b16 %v8061
      %v8213 = vunpack.c.l.b16 %v8062
      %v8214 = vunpack.c.l.b16 %v8063
      %v8215 = vunpack.c.l.b16 %v8064
      %v8216 = vunpack.c.l.b16 %v8065
      %v8217 = vunpack.c.l.b16 %v8066
      %v8218 = vunpack.c.l.b16 %v8067
      %v8219 = vunpack.c.l.b16 %v8068
      %v8220 = vunpack.c.l.b16 %v8069
      %v8221 = vunpack.c.l.b16 %v8070
      %v8222 = vunpack.c.l.b16 %v8071
      %v8223 = vunpack.c.l.b16 %v8072
      %v8224 = vpack.c.b16 %v8209, %v8208
      %v8225 = vpack.c.b16 %v8211, %v8210
      %v8226 = vpack.c.b16 %v8213, %v8212
      %v8227 = vpack.c.b16 %v8215, %v8214
      %v8228 = vpack.c.b16 %v8217, %v8216
      %v8229 = vpack.c.b16 %v8219, %v8218
      %v8230 = vpack.c.b16 %v8221, %v8220
      %v8231 = vpack.c.b16 %v8223, %v8222
      %8240 = vmatpush.bf16.msra.mxu0 %v8231
      %8241 = vmatpush.bf16.msra.mxu0 %v8230
      %8242 = vmatpush.bf16.msra.mxu0 %v8229
      %8243 = vmatpush.bf16.msra.mxu0 %v8228
      %8244 = vmatpush.bf16.msra.mxu0 %v8227
      %8245 = vmatpush.bf16.msra.mxu0 %v8226
      %8246 = vmatpush.bf16.msra.mxu0 %v8225
      %8247 = vmatpush.bf16.msra.mxu0 %v8224
      %8248 = vmatmul.bf16.gmra.mxu0 %v8127
      %v8249 = vpop.f32.mrf.mxu0
      %v8250 = vadd.f32 0.0, %v8249
      %v8251 = vpop.f32.mrf.mxu0
      %v8252 = vadd.f32 0.0, %v8251
      %8253 = vmatmul.bf16.gmra.mxu0 %v8135
      %v8254 = vpop.f32.mrf.mxu0
      %v8255 = vadd.f32 0.0, %v8254
      %v8256 = vpop.f32.mrf.mxu0
      %v8257 = vadd.f32 0.0, %v8256
      %8258 = vmatmul.bf16.gmra.mxu0 %v8143
      %v8259 = vpop.f32.mrf.mxu0
      %v8260 = vadd.f32 0.0, %v8259
      %v8261 = vpop.f32.mrf.mxu0
      %v8262 = vadd.f32 0.0, %v8261
      %8263 = vmatmul.bf16.gmra.mxu0 %v8151
      %v8264 = vpop.f32.mrf.mxu0
      %v8265 = vadd.f32 0.0, %v8264
      %v8266 = vpop.f32.mrf.mxu0
      %v8267 = vadd.f32 0.0, %v8266
      %8268 = vmatmul.bf16.gmra.mxu0 %v8159
      %v8269 = vpop.f32.mrf.mxu0
      %v8270 = vadd.f32 0.0, %v8269
      %v8271 = vpop.f32.mrf.mxu0
      %v8272 = vadd.f32 0.0, %v8271
      %8273 = vmatmul.bf16.gmra.mxu0 %v8167
      %v8274 = vpop.f32.mrf.mxu0
      %v8275 = vadd.f32 0.0, %v8274
      %v8276 = vpop.f32.mrf.mxu0
      %v8277 = vadd.f32 0.0, %v8276
      %8278 = vmatmul.bf16.gmra.mxu0 %v8175
      %v8279 = vpop.f32.mrf.mxu0
      %v8280 = vadd.f32 0.0, %v8279
      %v8281 = vpop.f32.mrf.mxu0
      %v8282 = vadd.f32 0.0, %v8281
      %8283 = vmatmul.bf16.gmra.mxu0 %v8183
      %v8284 = vpop.f32.mrf.mxu0
      %v8285 = vadd.f32 0.0, %v8284
      %v8286 = vpop.f32.mrf.mxu0
      %v8287 = vadd.f32 0.0, %v8286
      %8288 = vdwg.mxu0
      %v8289 = vadd.f32 %v8024, %v8250
      %v8290 = vadd.f32 %v8025, %v8252
      %v8291 = vadd.f32 %v8026, %v8255
      %v8292 = vadd.f32 %v8027, %v8257
      %v8293 = vadd.f32 %v8028, %v8260
      %v8294 = vadd.f32 %v8029, %v8262
      %v8295 = vadd.f32 %v8030, %v8265
      %v8296 = vadd.f32 %v8031, %v8267
      %v8297 = vadd.f32 %v8032, %v8270
      %v8298 = vadd.f32 %v8033, %v8272
      %v8299 = vadd.f32 %v8034, %v8275
      %v8300 = vadd.f32 %v8035, %v8277
      %v8301 = vadd.f32 %v8036, %v8280
      %v8302 = vadd.f32 %v8037, %v8282
      %v8303 = vadd.f32 %v8038, %v8285
      %v8304 = vadd.f32 %v8039, %v8287
      %v8305 = vld [vmem:[%s5] sm:$0x1]
      %v8307 = vperm.slane %v8305, 0
      %v8309 = vadd.f32 %v8289, %v8307
      %v8310 = vadd.f32 %v8290, %v8307
      %v8311 = vadd.f32 %v8291, %v8307
      %v8312 = vadd.f32 %v8292, %v8307
      %v8313 = vadd.f32 %v8293, %v8307
      %v8314 = vadd.f32 %v8294, %v8307
      %v8315 = vadd.f32 %v8295, %v8307
      %v8316 = vadd.f32 %v8296, %v8307
      %v8317 = vadd.f32 %v8297, %v8307
      %v8318 = vadd.f32 %v8298, %v8307
      %v8319 = vadd.f32 %v8299, %v8307
      %v8320 = vadd.f32 %v8300, %v8307
      %v8321 = vadd.f32 %v8301, %v8307
      %v8322 = vadd.f32 %v8302, %v8307
      %v8323 = vadd.f32 %v8303, %v8307
      %v8324 = vadd.f32 %v8304, %v8307
      %v8325 = vmax.f32 %v8309, 0.0
      %v8326 = vmax.f32 %v8310, 0.0
      %v8327 = vmax.f32 %v8311, 0.0
      %v8328 = vmax.f32 %v8312, 0.0
      %v8329 = vmax.f32 %v8313, 0.0
      %v8330 = vmax.f32 %v8314, 0.0
      %v8331 = vmax.f32 %v8315, 0.0
      %v8332 = vmax.f32 %v8316, 0.0
      %v8333 = vmax.f32 %v8317, 0.0
      %v8334 = vmax.f32 %v8318, 0.0
      %v8335 = vmax.f32 %v8319, 0.0
      %v8336 = vmax.f32 %v8320, 0.0
      %v8337 = vmax.f32 %v8321, 0.0
      %v8338 = vmax.f32 %v8322, 0.0
      %v8339 = vmax.f32 %v8323, 0.0
      %v8340 = vmax.f32 %v8324, 0.0
      %v8341 = vpack.c.bf16 %v8326, %v8325
      %v8342 = vpack.c.bf16 %v8328, %v8327
      %v8343 = vpack.c.bf16 %v8330, %v8329
      %v8344 = vpack.c.bf16 %v8332, %v8331
      %v8345 = vpack.c.bf16 %v8334, %v8333
      %v8346 = vpack.c.bf16 %v8336, %v8335
      %v8347 = vpack.c.bf16 %v8338, %v8337
      %v8348 = vpack.c.bf16 %v8340, %v8339
      %v8349 = vld [vmem:[%s6] sm:$0xf]
      %v8350 = vld [vmem:[%s6 + $0x4] sm:$0xf]
      %v8351 = vld [vmem:[%s6 + $0x8] sm:$0xf]
      %v8352 = vld [vmem:[%s6 + $0xc] sm:$0xf]
      %v8353 = vld [vmem:[%s6 + $0x10] sm:$0xf]
      %v8354 = vld [vmem:[%s6 + $0x14] sm:$0xf]
      %v8355 = vld [vmem:[%s6 + $0x18] sm:$0xf]
      %v8356 = vld [vmem:[%s6 + $0x1c] sm:$0xf]
      %v8357 = vld [vmem:[%s6 + $0x20] sm:$0xf]
      %v8358 = vld [vmem:[%s6 + $0x24] sm:$0xf]
      %v8359 = vld [vmem:[%s6 + $0x28] sm:$0xf]
      %v8360 = vld [vmem:[%s6 + $0x2c] sm:$0xf]
      %v8361 = vld [vmem:[%s6 + $0x30] sm:$0xf]
      %v8362 = vld [vmem:[%s6 + $0x34] sm:$0xf]
      %v8363 = vld [vmem:[%s6 + $0x38] sm:$0xf]
      %v8364 = vld [vmem:[%s6 + $0x3c] sm:$0xf]
      %v8365 = vld [vmem:[%s7] sm:$0x1]
      %v8367 = vperm.slane %v8365, 0
      %v8385 = vunpack.c.l.b16 %v8349
      %v8386 = vunpack.c.l.b16 %v8350
      %v8387 = vunpack.c.l.b16 %v8351
      %v8388 = vunpack.c.l.b16 %v8352
      %v8389 = vunpack.c.l.b16 %v8353
      %v8390 = vunpack.c.l.b16 %v8354
      %v8391 = vunpack.c.l.b16 %v8355
      %v8392 = vunpack.c.l.b16 %v8356
      %v8393 = vunpack.c.l.b16 %v8357
      %v8394 = vunpack.c.l.b16 %v8358
      %v8395 = vunpack.c.l.b16 %v8359
      %v8396 = vunpack.c.l.b16 %v8360
      %v8397 = vunpack.c.l.b16 %v8361
      %v8398 = vunpack.c.l.b16 %v8362
      %v8399 = vunpack.c.l.b16 %v8363
      %v8400 = vunpack.c.l.b16 %v8364
      %v8401 = vpack.c.b16 %v8386, %v8385
      %v8402 = vpack.c.b16 %v8388, %v8387
      %v8403 = vpack.c.b16 %v8390, %v8389
      %v8404 = vpack.c.b16 %v8392, %v8391
      %v8405 = vpack.c.b16 %v8394, %v8393
      %v8406 = vpack.c.b16 %v8396, %v8395
      %v8407 = vpack.c.b16 %v8398, %v8397
      %v8408 = vpack.c.b16 %v8400, %v8399
      %8417 = vmatpush.bf16.msra.mxu0 %v8408
      %8418 = vmatpush.bf16.msra.mxu0 %v8407
      %8419 = vmatpush.bf16.msra.mxu0 %v8406
      %8420 = vmatpush.bf16.msra.mxu0 %v8405
      %8421 = vmatpush.bf16.msra.mxu0 %v8404
      %8422 = vmatpush.bf16.msra.mxu0 %v8403
      %8423 = vmatpush.bf16.msra.mxu0 %v8402
      %8424 = vmatpush.bf16.msra.mxu0 %v8401
      %8425 = vmatmul.bf16.gmra.mxu0 %v8341
      %v8426 = vpop.f32.mrf.mxu0
      %v8427 = vadd.f32 %v8367, %v8426
      %v8428 = vpop.f32.mrf.mxu0
      %v8429 = vadd.f32 %v8367, %v8428
      %8430 = vmatmul.bf16.gmra.mxu0 %v8342
      %v8431 = vpop.f32.mrf.mxu0
      %v8432 = vadd.f32 %v8367, %v8431
      %v8433 = vpop.f32.mrf.mxu0
      %v8434 = vadd.f32 %v8367, %v8433
      %8435 = vmatmul.bf16.gmra.mxu0 %v8343
      %v8436 = vpop.f32.mrf.mxu0
      %v8437 = vadd.f32 %v8367, %v8436
      %v8438 = vpop.f32.mrf.mxu0
      %v8439 = vadd.f32 %v8367, %v8438
      %8440 = vmatmul.bf16.gmra.mxu0 %v8344
      %v8441 = vpop.f32.mrf.mxu0
      %v8442 = vadd.f32 %v8367, %v8441
      %v8443 = vpop.f32.mrf.mxu0
      %v8444 = vadd.f32 %v8367, %v8443
      %8445 = vmatmul.bf16.gmra.mxu0 %v8345
      %v8446 = vpop.f32.mrf.mxu0
      %v8447 = vadd.f32 %v8367, %v8446
      %v8448 = vpop.f32.mrf.mxu0
      %v8449 = vadd.f32 %v8367, %v8448
      %8450 = vmatmul.bf16.gmra.mxu0 %v8346
      %v8451 = vpop.f32.mrf.mxu0
      %v8452 = vadd.f32 %v8367, %v8451
      %v8453 = vpop.f32.mrf.mxu0
      %v8454 = vadd.f32 %v8367, %v8453
      %8455 = vmatmul.bf16.gmra.mxu0 %v8347
      %v8456 = vpop.f32.mrf.mxu0
      %v8457 = vadd.f32 %v8367, %v8456
      %v8458 = vpop.f32.mrf.mxu0
      %v8459 = vadd.f32 %v8367, %v8458
      %8460 = vmatmul.bf16.gmra.mxu0 %v8348
      %v8461 = vpop.f32.mrf.mxu0
      %v8462 = vadd.f32 %v8367, %v8461
      %v8463 = vpop.f32.mrf.mxu0
      %v8464 = vadd.f32 %v8367, %v8463
      %8465 = vdwg.mxu0
      %v8466 = vld [vmem:[%s354 + $0x80] sm:$0xf]
      %v8467 = vld [vmem:[%s354 + $0x84] sm:$0xf]
      %v8468 = vld [vmem:[%s354 + $0x88] sm:$0xf]
      %v8469 = vld [vmem:[%s354 + $0x8c] sm:$0xf]
      %v8470 = vld [vmem:[%s354 + $0x90] sm:$0xf]
      %v8471 = vld [vmem:[%s354 + $0x94] sm:$0xf]
      %v8472 = vld [vmem:[%s354 + $0x98] sm:$0xf]
      %v8473 = vld [vmem:[%s354 + $0x9c] sm:$0xf]
      %v8474 = vld [vmem:[%s354 + $0xa0] sm:$0xf]
      %v8475 = vld [vmem:[%s354 + $0xa4] sm:$0xf]
      %v8476 = vld [vmem:[%s354 + $0xa8] sm:$0xf]
      %v8477 = vld [vmem:[%s354 + $0xac] sm:$0xf]
      %v8478 = vld [vmem:[%s354 + $0xb0] sm:$0xf]
      %v8479 = vld [vmem:[%s354 + $0xb4] sm:$0xf]
      %v8480 = vld [vmem:[%s354 + $0xb8] sm:$0xf]
      %v8481 = vld [vmem:[%s354 + $0xbc] sm:$0xf]
      %v8482 = vld [vmem:[%s8] sm:$0xf]
      %v8483 = vld [vmem:[%s8 + $0x4] sm:$0xf]
      %v8484 = vld [vmem:[%s8 + $0x8] sm:$0xf]
      %v8485 = vld [vmem:[%s8 + $0xc] sm:$0xf]
      %v8486 = vld [vmem:[%s8 + $0x10] sm:$0xf]
      %v8487 = vld [vmem:[%s8 + $0x14] sm:$0xf]
      %v8488 = vld [vmem:[%s8 + $0x18] sm:$0xf]
      %v8489 = vld [vmem:[%s8 + $0x1c] sm:$0xf]
      %v8490 = vld [vmem:[%s8 + $0x20] sm:$0xf]
      %v8491 = vld [vmem:[%s8 + $0x24] sm:$0xf]
      %v8492 = vld [vmem:[%s8 + $0x28] sm:$0xf]
      %v8493 = vld [vmem:[%s8 + $0x2c] sm:$0xf]
      %v8494 = vld [vmem:[%s8 + $0x30] sm:$0xf]
      %v8495 = vld [vmem:[%s8 + $0x34] sm:$0xf]
      %v8496 = vld [vmem:[%s8 + $0x38] sm:$0xf]
      %v8497 = vld [vmem:[%s8 + $0x3c] sm:$0xf]
      %v8498 = vld [vmem:[%s9] sm:$0x1]
      %v8500 = vperm.slane %v8498, 0
      %v8518 = vunpack.c.l.b16 %v8466
      %v8519 = vunpack.c.l.b16 %v8467
      %v8520 = vunpack.c.l.b16 %v8468
      %v8521 = vunpack.c.l.b16 %v8469
      %v8522 = vunpack.c.l.b16 %v8470
      %v8523 = vunpack.c.l.b16 %v8471
      %v8524 = vunpack.c.l.b16 %v8472
      %v8525 = vunpack.c.l.b16 %v8473
      %v8526 = vunpack.c.l.b16 %v8474
      %v8527 = vunpack.c.l.b16 %v8475
      %v8528 = vunpack.c.l.b16 %v8476
      %v8529 = vunpack.c.l.b16 %v8477
      %v8530 = vunpack.c.l.b16 %v8478
      %v8531 = vunpack.c.l.b16 %v8479
      %v8532 = vunpack.c.l.b16 %v8480
      %v8533 = vunpack.c.l.b16 %v8481
      %v8534 = vpack.c.b16 %v8519, %v8518
      %v8535 = vpack.c.b16 %v8521, %v8520
      %v8536 = vpack.c.b16 %v8523, %v8522
      %v8537 = vpack.c.b16 %v8525, %v8524
      %v8538 = vpack.c.b16 %v8527, %v8526
      %v8539 = vpack.c.b16 %v8529, %v8528
      %v8540 = vpack.c.b16 %v8531, %v8530
      %v8541 = vpack.c.b16 %v8533, %v8532
      %v8566 = vunpack.c.l.b16 %v8482
      %v8567 = vunpack.c.l.b16 %v8483
      %v8568 = vunpack.c.l.b16 %v8484
      %v8569 = vunpack.c.l.b16 %v8485
      %v8570 = vunpack.c.l.b16 %v8486
      %v8571 = vunpack.c.l.b16 %v8487
      %v8572 = vunpack.c.l.b16 %v8488
      %v8573 = vunpack.c.l.b16 %v8489
      %v8574 = vunpack.c.l.b16 %v8490
      %v8575 = vunpack.c.l.b16 %v8491
      %v8576 = vunpack.c.l.b16 %v8492
      %v8577 = vunpack.c.l.b16 %v8493
      %v8578 = vunpack.c.l.b16 %v8494
      %v8579 = vunpack.c.l.b16 %v8495
      %v8580 = vunpack.c.l.b16 %v8496
      %v8581 = vunpack.c.l.b16 %v8497
      %v8582 = vpack.c.b16 %v8567, %v8566
      %v8583 = vpack.c.b16 %v8569, %v8568
      %v8584 = vpack.c.b16 %v8571, %v8570
      %v8585 = vpack.c.b16 %v8573, %v8572
      %v8586 = vpack.c.b16 %v8575, %v8574
      %v8587 = vpack.c.b16 %v8577, %v8576
      %v8588 = vpack.c.b16 %v8579, %v8578
      %v8589 = vpack.c.b16 %v8581, %v8580
      %8598 = vmatpush.bf16.msra.mxu0 %v8589
      %8599 = vmatpush.bf16.msra.mxu0 %v8588
      %8600 = vmatpush.bf16.msra.mxu0 %v8587
      %8601 = vmatpush.bf16.msra.mxu0 %v8586
      %8602 = vmatpush.bf16.msra.mxu0 %v8585
      %8603 = vmatpush.bf16.msra.mxu0 %v8584
      %8604 = vmatpush.bf16.msra.mxu0 %v8583
      %8605 = vmatpush.bf16.msra.mxu0 %v8582
      %8606 = vmatmul.bf16.gmra.mxu0 %v8534
      %v8607 = vpop.f32.mrf.mxu0
      %v8608 = vadd.f32 %v8500, %v8607
      %v8609 = vpop.f32.mrf.mxu0
      %v8610 = vadd.f32 %v8500, %v8609
      %8611 = vmatmul.bf16.gmra.mxu0 %v8535
      %v8612 = vpop.f32.mrf.mxu0
      %v8613 = vadd.f32 %v8500, %v8612
      %v8614 = vpop.f32.mrf.mxu0
      %v8615 = vadd.f32 %v8500, %v8614
      %8616 = vmatmul.bf16.gmra.mxu0 %v8536
      %v8617 = vpop.f32.mrf.mxu0
      %v8618 = vadd.f32 %v8500, %v8617
      %v8619 = vpop.f32.mrf.mxu0
      %v8620 = vadd.f32 %v8500, %v8619
      %8621 = vmatmul.bf16.gmra.mxu0 %v8537
      %v8622 = vpop.f32.mrf.mxu0
      %v8623 = vadd.f32 %v8500, %v8622
      %v8624 = vpop.f32.mrf.mxu0
      %v8625 = vadd.f32 %v8500, %v8624
      %8626 = vmatmul.bf16.gmra.mxu0 %v8538
      %v8627 = vpop.f32.mrf.mxu0
      %v8628 = vadd.f32 %v8500, %v8627
      %v8629 = vpop.f32.mrf.mxu0
      %v8630 = vadd.f32 %v8500, %v8629
      %8631 = vmatmul.bf16.gmra.mxu0 %v8539
      %v8632 = vpop.f32.mrf.mxu0
      %v8633 = vadd.f32 %v8500, %v8632
      %v8634 = vpop.f32.mrf.mxu0
      %v8635 = vadd.f32 %v8500, %v8634
      %8636 = vmatmul.bf16.gmra.mxu0 %v8540
      %v8637 = vpop.f32.mrf.mxu0
      %v8638 = vadd.f32 %v8500, %v8637
      %v8639 = vpop.f32.mrf.mxu0
      %v8640 = vadd.f32 %v8500, %v8639
      %8641 = vmatmul.bf16.gmra.mxu0 %v8541
      %v8642 = vpop.f32.mrf.mxu0
      %v8643 = vadd.f32 %v8500, %v8642
      %v8644 = vpop.f32.mrf.mxu0
      %v8645 = vadd.f32 %v8500, %v8644
      %8646 = vdwg.mxu0
      %v8647 = vadd.f32 %v8427, %v8608
      %v8648 = vadd.f32 %v8429, %v8610
      %v8649 = vadd.f32 %v8432, %v8613
      %v8650 = vadd.f32 %v8434, %v8615
      %v8651 = vadd.f32 %v8437, %v8618
      %v8652 = vadd.f32 %v8439, %v8620
      %v8653 = vadd.f32 %v8442, %v8623
      %v8654 = vadd.f32 %v8444, %v8625
      %v8655 = vadd.f32 %v8447, %v8628
      %v8656 = vadd.f32 %v8449, %v8630
      %v8657 = vadd.f32 %v8452, %v8633
      %v8658 = vadd.f32 %v8454, %v8635
      %v8659 = vadd.f32 %v8457, %v8638
      %v8660 = vadd.f32 %v8459, %v8640
      %v8661 = vadd.f32 %v8462, %v8643
      %v8662 = vadd.f32 %v8464, %v8645
      %v8663 = vmax.f32 %v8647, 0.0
      %v8664 = vmax.f32 %v8648, 0.0
      %v8665 = vmax.f32 %v8649, 0.0
      %v8666 = vmax.f32 %v8650, 0.0
      %v8667 = vmax.f32 %v8651, 0.0
      %v8668 = vmax.f32 %v8652, 0.0
      %v8669 = vmax.f32 %v8653, 0.0
      %v8670 = vmax.f32 %v8654, 0.0
      %v8671 = vmax.f32 %v8655, 0.0
      %v8672 = vmax.f32 %v8656, 0.0
      %v8673 = vmax.f32 %v8657, 0.0
      %v8674 = vmax.f32 %v8658, 0.0
      %v8675 = vmax.f32 %v8659, 0.0
      %v8676 = vmax.f32 %v8660, 0.0
      %v8677 = vmax.f32 %v8661, 0.0
      %v8678 = vmax.f32 %v8662, 0.0
      %v8679 = vpack.c.bf16 %v8663, %v8663
      %v8680 = vpack.c.bf16 %v8664, %v8664
      %v8681 = vpack.c.bf16 %v8665, %v8665
      %v8682 = vpack.c.bf16 %v8666, %v8666
      %v8683 = vpack.c.bf16 %v8667, %v8667
      %v8684 = vpack.c.bf16 %v8668, %v8668
      %v8685 = vpack.c.bf16 %v8669, %v8669
      %v8686 = vpack.c.bf16 %v8670, %v8670
      %v8687 = vpack.c.bf16 %v8671, %v8671
      %v8688 = vpack.c.bf16 %v8672, %v8672
      %v8689 = vpack.c.bf16 %v8673, %v8673
      %v8690 = vpack.c.bf16 %v8674, %v8674
      %v8691 = vpack.c.bf16 %v8675, %v8675
      %v8692 = vpack.c.bf16 %v8676, %v8676
      %v8693 = vpack.c.bf16 %v8677, %v8677
      %v8694 = vpack.c.bf16 %v8678, %v8678
      %8695 = vst [vmem:[%s359 + $0x80] sm:$0xf] %v8679
      %8696 = vst [vmem:[%s359 + $0x84] sm:$0xf] %v8680
      %8697 = vst [vmem:[%s359 + $0x88] sm:$0xf] %v8681
      %8698 = vst [vmem:[%s359 + $0x8c] sm:$0xf] %v8682
      %8699 = vst [vmem:[%s359 + $0x90] sm:$0xf] %v8683
      %8700 = vst [vmem:[%s359 + $0x94] sm:$0xf] %v8684
      %8701 = vst [vmem:[%s359 + $0x98] sm:$0xf] %v8685
      %8702 = vst [vmem:[%s359 + $0x9c] sm:$0xf] %v8686
      %8703 = vst [vmem:[%s359 + $0xa0] sm:$0xf] %v8687
      %8704 = vst [vmem:[%s359 + $0xa4] sm:$0xf] %v8688
      %8705 = vst [vmem:[%s359 + $0xa8] sm:$0xf] %v8689
      %8706 = vst [vmem:[%s359 + $0xac] sm:$0xf] %v8690
      %8707 = vst [vmem:[%s359 + $0xb0] sm:$0xf] %v8691
      %8708 = vst [vmem:[%s359 + $0xb4] sm:$0xf] %v8692
      %8709 = vst [vmem:[%s359 + $0xb8] sm:$0xf] %v8693
      %8710 = vst [vmem:[%s359 + $0xbc] sm:$0xf] %v8694
      %p8711 = scmp.lt.s32.totalorder %s21, 1
      %s8712 = scalar_select %p8711, %s21, 1
      %s8713 = smul.addr %s8712, 48
      %s8714 = smul.addr %s8713, 4
      %s8715 = scalar_lea.vmem %s10, %s8714
      // Predicated region
      $region61: #{bottleneck_forward.1} parent=59 // pred_check
        %p8716 = pneg %p254
      $region62: #{bottleneck_forward.1} parent=59 // pred_check_branch
        %8718 = sbr.rel (%p8716) target = $region64
      $region63: #{bottleneck_forward.1} parent=59 // pred_region
        _
      $region64: #{bottleneck_forward.1} parent=59 // pred_fallthru
        _
    $region60: #{bottleneck_forward.1} parent=5 // pred_fallthru
      _
    %p8719 = scmp.le.s32.totalorder 2, %s16
    // Predicated region
    $region65: #{bottleneck_forward.1} parent=5 // pred_check
      %p8720 = pneg %p8719
    $region66: #{bottleneck_forward.1} parent=5 // pred_check_branch
      %8722 = sbr.rel (%p8720) target = $region68
    $region67: #{bottleneck_forward.1} parent=5 // pred_region
      %s8723 = ssub.s32 %s16, 2
      // Predicated region
      $region69: #{bottleneck_forward.1} parent=67 // pred_check
        %p8724 = pneg %p260
      $region70: #{bottleneck_forward.1} parent=67 // pred_check_branch
        %8726 = sbr.rel (%p8724) target = $region72
      $region71: #{bottleneck_forward.1} parent=67 // pred_region
        %p8727 = scmp.lt.s32.totalorder %s22, 1
        %s8728 = scalar_select %p8727, %s22, 1
        %s8729 = smul.addr %s8728, 48
        %s8730 = smul.addr %s8729, 4
        %s8731 = scalar_lea.vmem %s10, %s8730
      $region72: #{bottleneck_forward.1} parent=67 // pred_fallthru
        _
    $region68: #{bottleneck_forward.1} parent=5 // pred_fallthru
      _
  $region6: #{bottleneck_forward.1} parent=0 // loop_footer
    %s20 = sadd.s32 1, %s16
  $region7: #{bottleneck_forward.1} parent=0 // loop_footer_branch
    %15 = sbr.rel target = $region3
  $region8: #{bottleneck_forward.1} parent=0 // loop_exit
    _

</llo_original>
